<compile_context>
chip_gen: v7x
topology: tpu7x:2x2x1
jax: 0.10.0
libtpu: 0.0.40
codegen_flags: <defaults>
</compile_context>

<pallas_src>
import functools

import jax
import jax.numpy as jnp
from jax.experimental import pallas as pl
from jax.experimental.pallas import tpu as pltpu

EPS = 1e-5  # torch.nn.LayerNorm default eps


# ----------------------------------------------------------------------------
# Exact JAX replicas of the module's patchify / unpatchify (layout glue only).
# ----------------------------------------------------------------------------
def patchify_batch(images, patch_size):
    batch_size, channels, height, width = images.shape
    n_patches_y = height // patch_size
    n_patches_x = width // patch_size
    n_patches = n_patches_y * n_patches_x
    channel_last = jnp.swapaxes(images, 1, -1)
    reshaped = channel_last.reshape(
        batch_size, n_patches_y, patch_size, n_patches_x, patch_size, channels)
    swaped = jnp.swapaxes(reshaped, 2, 3)
    blocks = swaped.reshape(batch_size, -1, patch_size, patch_size, channels)
    patches = blocks.reshape(batch_size, n_patches, -1)
    return patches


def unpatchify_batch(patches, chw, output_dim, patch_size):
    _, height, width = chw
    channels = output_dim
    batch_size, _n_patches, _ = patches.shape
    p = patches.reshape(batch_size, height // patch_size, width // patch_size,
                        patch_size, patch_size, channels)
    p = jnp.swapaxes(p, 2, 3)
    p = p.reshape(batch_size, height, width, channels)
    p = jnp.swapaxes(p, 1, -1)
    return p


def _round_up(n, m):
    return ((n + m - 1) // m) * m


def _vmem_limit_bytes():
    """Generation-aware scoped-VMEM cap: ~3/4 of physical, <= 100 MiB.
    (v5e/v6e: 128 MiB physical -> 96 MiB; v7x: 64 MiB -> 48 MiB.)"""
    try:
        cap = int(getattr(pltpu.get_tpu_info(), "vmem_capacity_bytes", 0) or 0)
    except Exception:
        cap = 0
    if cap <= 0:
        cap = 64 * 1024 * 1024
    return int(min(cap * 3 // 4, 100 * 1024 * 1024))


def _pick_row_tiling(rows, width, max_tile=1024):
    """Row tile for the dense kernels: multiple of 8, VMEM-bounded, and (when
    rows allow) at least two grid steps so both v7x TensorCores get work."""
    cap = max(8, ((2 * 1024 * 1024) // (4 * max(width, 1))) // 8 * 8)
    max_tile = max(8, min(max_tile, cap))
    rows8 = _round_up(rows, 8)
    if rows8 <= 8:
        return rows, 1, rows                     # single full-row block, no pad
    tile = min(max_tile, rows8)
    if rows8 // tile < 2:                        # force >=2 parallel grid steps
        tile = max(8, (_round_up(rows8, 16) // 2) // 8 * 8)
    rows_p = _round_up(rows8, tile)
    return tile, rows_p // tile, rows_p


# ----------------------------------------------------------------------------
# Pallas kernels
# ----------------------------------------------------------------------------
def _proj_out_norm_kernel(x_ref, w_ref, b_ref, g_ref, beta_ref, o_ref):
    """o = LayerNorm(x @ W_out + b_out) * gamma + beta (one-pass variance)."""
    xb = x_ref[...].astype(jnp.bfloat16)
    y = jnp.dot(xb, w_ref[...], preferred_element_type=jnp.float32) + b_ref[...]
    mu = jnp.mean(y, axis=-1, keepdims=True)
    var = jnp.maximum(jnp.mean(y * y, axis=-1, keepdims=True) - mu * mu, 0.0)
    o_ref[...] = ((y - mu) * jax.lax.rsqrt(var + EPS) * g_ref[...]
                  + beta_ref[...]).astype(o_ref.dtype)


def _token_mixer_kernel(x_ref, inv_ref, w_ref, b_ref, o_ref, *, S1, S2):
    """y = dwconv3x3(avgpool3x3(x, count_include_pad=False)) + bias - x.

    Layout: (bt, S1+4, S2+4, C), image at [2:2+S1, 2:2+S2], zeros elsewhere.
    Separable stencils: row taps are leading-axis slices (free); column taps
    need only a handful of sublane-offset slices of the partial sums.  inv_ref
    is the reciprocal pool-count map with a zero ring, so the pooled map is
    exactly zero where the 'same'-padded depthwise conv expects zero padding.
    """
    e = x_ref[...]  # f32, loaded once (no per-tap casts)

    # ---- 3x3 average pool (count_include_pad=False), separable ------------
    colsum = (e[:, :, 0:S2 + 2, :] + e[:, :, 1:S2 + 3, :] + e[:, :, 2:S2 + 4, :])
    box = (colsum[:, 0:S1 + 2, :, :] + colsum[:, 1:S1 + 3, :, :]
           + colsum[:, 2:S1 + 4, :, :])
    pooled = box * inv_ref[...]          # (bt, S1+2, S2+2, C); zero on the ring

    # ---- depthwise 3x3 conv ('same', zero pad), cross-correlation ----------
    conv = None
    for b in range(3):                   # column tap
        rb = (w_ref[0 + b:1 + b, :] * pooled[:, 0:S1, :, :]
              + w_ref[3 + b:4 + b, :] * pooled[:, 1:S1 + 1, :, :]
              + w_ref[6 + b:7 + b, :] * pooled[:, 2:S1 + 2, :, :])
        rb = rb[:, :, b:b + S2, :]
        conv = rb if conv is None else conv + rb

    center = e[:, 2:2 + S1, 2:2 + S2, :]
    o_ref[...] = (conv + b_ref[...] - center).astype(o_ref.dtype)


def _fused_tail_kernel(x_ref, p_ref, w_in_ref, b_in_ref, g_ref, beta_ref,
                       w1_ref, w2_ref, s_ref, ab_ref, o_ref):
    """x1 = x + patches @ W_in + b_in;  o = x1 + fc2(StarReLU(fc1(LN(x1))))."""
    x1 = (x_ref[...]
          + jnp.dot(p_ref[...], w_in_ref[...], preferred_element_type=jnp.float32)
          + b_in_ref[...])
    mu = jnp.mean(x1, axis=-1, keepdims=True)
    var = jnp.maximum(jnp.mean(x1 * x1, axis=-1, keepdims=True) - mu * mu, 0.0)
    xn = (x1 - mu) * jax.lax.rsqrt(var + EPS) * g_ref[...] + beta_ref[...]
    h = jnp.dot(xn.astype(jnp.bfloat16), w1_ref[...],
                preferred_element_type=jnp.float32)
    r = jnp.clip(h, 0.0, 6.0)                 # module's StarReLU uses nn.ReLU6
    a = s_ref[...] * (r * r) + ab_ref[...]    # scale * relu6(x)^2 + bias
    y = jnp.dot(a.astype(jnp.bfloat16), w2_ref[...],
                preferred_element_type=jnp.float32)
    o_ref[...] = (x1 + y).astype(o_ref.dtype)


# ----------------------------------------------------------------------------
# Forward wrapper
# ----------------------------------------------------------------------------
def metaformer_block_forward(x, prep, *, chw, patch_size, project_dim):
    B, N, dim = x.shape
    P = project_dim * patch_size ** 2
    hidden = prep["w1"].shape[1]
    rows = B * N
    vmem = _vmem_limit_bytes()

    tile_m, n_row_tiles, rows_p = _pick_row_tiling(rows, max(P, hidden))
    x2 = x.reshape(rows, dim).astype(jnp.float32)
    if rows_p != rows:
        x2 = jnp.pad(x2, ((0, rows_p - rows), (0, 0)))

    dense_cp = pltpu.CompilerParams(
        dimension_semantics=("parallel",), vmem_limit_bytes=vmem)

    # --- 1) out = norm1(project_out(x)) -------------------------------------
    out = pl.pallas_call(
        _proj_out_norm_kernel,
        out_shape=jax.ShapeDtypeStruct((rows_p, P), jnp.float32),
        grid=(n_row_tiles,),
        in_specs=[
            pl.BlockSpec((tile_m, dim), lambda i: (i, 0)),   # x (f32)
            pl.BlockSpec((dim, P), lambda i: (0, 0)),        # W_out (bf16), resident
            pl.BlockSpec((1, P), lambda i: (0, 0)),          # b_out
            pl.BlockSpec((1, P), lambda i: (0, 0)),          # gamma1
            pl.BlockSpec((1, P), lambda i: (0, 0)),          # beta1
        ],
        out_specs=pl.BlockSpec((tile_m, P), lambda i: (i, 0)),
        compiler_params=dense_cp,
    )(x2, prep["w_out"], prep["b_out"], prep["g1"], prep["beta1"])

    # --- 2) unpatchify -> token mixer -> patchify ----------------------------
    # TODO(synk): patchify/unpatchify permutations stay as XLA layout glue.
    out_tok = out[:rows].reshape(B, N, P)
    out1 = unpatchify_batch(out_tok, chw, project_dim, patch_size)
    _, C, S1, S2 = out1.shape

    bt = 1 if B < 2 else min(max(B // 2, 1), 8)   # >=2 parallel steps for B>=2
    nb = -(-B // bt)
    B_pad = nb * bt

    maps = jnp.transpose(out1, (0, 2, 3, 1))                         # (B,S1,S2,C)
    maps_pad = jnp.pad(maps, ((0, B_pad - B), (2, 2), (2, 2), (0, 0)))

    mixed = pl.pallas_call(
        functools.partial(_token_mixer_kernel, S1=S1, S2=S2),
        out_shape=jax.ShapeDtypeStruct((B_pad, S1, S2, C), jnp.float32),
        grid=(nb,),
        in_specs=[
            pl.BlockSpec((bt, S1 + 4, S2 + 4, C), lambda i: (i, 0, 0, 0)),
            pl.BlockSpec((S1 + 2, S2 + 2, C), lambda i: (0, 0, 0)),
            pl.BlockSpec((9, C), lambda i: (0, 0)),
            pl.BlockSpec((1, C), lambda i: (0, 0)),
        ],
        out_specs=pl.BlockSpec((bt, S1, S2, C), lambda i: (i, 0, 0, 0)),
        compiler_params=pltpu.CompilerParams(
            dimension_semantics=("parallel",), vmem_limit_bytes=vmem),
    )(maps_pad, prep["inv_pool"], prep["conv_w9"], prep["conv_b1"])

    out2 = jnp.transpose(mixed[:B], (0, 3, 1, 2))                    # (B,C,S1,S2)
    out3 = patchify_batch(out2, patch_size)                          # (B, N, P)
    patches = out3.astype(jnp.bfloat16).reshape(rows, P)
    if rows_p != rows:
        patches = jnp.pad(patches, ((0, rows_p - rows), (0, 0)))

    # --- 3+4) x += project_in(out3); x += mlp(norm2(x))  (one fused kernel) --
    y = pl.pallas_call(
        _fused_tail_kernel,
        out_shape=jax.ShapeDtypeStruct((rows_p, dim), jnp.float32),
        grid=(n_row_tiles,),
        in_specs=[
            pl.BlockSpec((tile_m, dim), lambda i: (i, 0)),     # x (f32 residual)
            pl.BlockSpec((tile_m, P), lambda i: (i, 0)),       # patches (bf16)
            pl.BlockSpec((P, dim), lambda i: (0, 0)),          # W_in (bf16)
            pl.BlockSpec((1, dim), lambda i: (0, 0)),          # b_in
            pl.BlockSpec((1, dim), lambda i: (0, 0)),          # gamma2
            pl.BlockSpec((1, dim), lambda i: (0, 0)),          # beta2
            pl.BlockSpec((dim, hidden), lambda i: (0, 0)),     # W1 (bf16)
            pl.BlockSpec((hidden, dim), lambda i: (0, 0)),     # W2 (bf16)
            pl.BlockSpec((1, 1), lambda i: (0, 0)),            # StarReLU scale
            pl.BlockSpec((1, 1), lambda i: (0, 0)),            # StarReLU bias
        ],
        out_specs=pl.BlockSpec((tile_m, dim), lambda i: (i, 0)),
        compiler_params=dense_cp,
    )(x2, patches, prep["w_in"], prep["b_in"], prep["g2"], prep["beta2"],
      prep["w1"], prep["w2"], prep["act_scale"], prep["act_bias"])

    return y[:rows].reshape(B, N, dim)


# ----------------------------------------------------------------------------
# Parameters: raw (f32) construction + one-time kernel-friendly packing
# ----------------------------------------------------------------------------
def make_params(key, dim, project_dim, patch_size):
    P = project_dim * patch_size ** 2
    hidden = 4 * dim
    ks = jax.random.split(key, 12)

    def init(k, shape, scale=0.02):
        return scale * jax.random.normal(k, shape, dtype=jnp.float32)

    return {
        "w_out": init(ks[0], (dim, P)),          # project_out (stored (in, out))
        "b_out": init(ks[1], (1, P)),
        "g1": 1.0 + init(ks[2], (1, P)),         # norm1
        "beta1": init(ks[3], (1, P)),
        "conv_w": init(ks[4], (project_dim, 9), scale=0.1),   # (C, kh*kw) row-major
        "conv_b": init(ks[5], (project_dim,), scale=0.1),
        "w_in": init(ks[6], (P, dim)),           # project_in (stored (in, out))
        "b_in": init(ks[7], (1, dim)),
        "g2": 1.0 + init(ks[8], (1, dim)),       # norm2
        "beta2": init(ks[9], (1, dim)),
        "w1": init(ks[10], (dim, hidden)),       # Mlp.fc1 (bias=False)
        "w2": init(ks[11], (hidden, dim)),       # Mlp.fc2 (bias=False)
        "act_scale": jnp.ones((1, 1), jnp.float32),
        "act_bias": jnp.zeros((1, 1), jnp.float32),
    }


def prepare_params(params, *, chw, patch_size, project_dim):
    """One-time packing (hoisted out of the per-call forward path): bf16 MXU
    weights, mixer conv weights as (9, C), bias as (1, C), and the reciprocal
    pool-count map (with zero ring) replicated across the mixer lane width."""
    C = project_dim
    S1, S2 = chw[2], chw[1]  # spatial dims as seen by the mixer (unpatchify quirk)

    ih = jnp.arange(S1 + 2)
    iw = jnp.arange(S2 + 2)
    in_r = (ih >= 1) & (ih <= S1)
    in_c = (iw >= 1) & (iw <= S2)
    cr = (1 + ((ih - 1) > 0).astype(jnp.int32) + ((ih - 1) < S1 - 1).astype(jnp.int32))
    cc = (1 + ((iw - 1) > 0).astype(jnp.int32) + ((iw - 1) < S2 - 1).astype(jnp.int32))
    inv = jnp.where(in_r[:, None] & in_c[None, :],
                    1.0 / (cr[:, None] * cc[None, :]).astype(jnp.float32), 0.0)

    prep = dict(params)
    prep["w_out"] = params["w_out"].astype(jnp.bfloat16)
    prep["w_in"] = params["w_in"].astype(jnp.bfloat16)
    prep["w1"] = params["w1"].astype(jnp.bfloat16)
    prep["w2"] = params["w2"].astype(jnp.bfloat16)
    prep["conv_w9"] = params["conv_w"].T.astype(jnp.float32)           # (9, C)
    prep["conv_b1"] = params["conv_b"].reshape(1, C).astype(jnp.float32)
    prep["inv_pool"] = jnp.broadcast_to(
        inv[:, :, None], (S1 + 2, S2 + 2, C)).astype(jnp.float32)
    return prep


# ----------------------------------------------------------------------------
# Pure-JAX reference (same bf16 matmul casts as the kernels) for self-checking
# ----------------------------------------------------------------------------
def reference_forward(x, params, *, chw, patch_size, project_dim):
    f32 = jnp.float32
    y = (jnp.dot(x.astype(jnp.bfloat16), params["w_out"].astype(jnp.bfloat16),
                 preferred_element_type=f32) + params["b_out"])
    mu = y.mean(-1, keepdims=True)
    var = y.var(-1, keepdims=True)
    out = (y - mu) * jax.lax.rsqrt(var + EPS) * params["g1"] + params["beta1"]

    out1 = unpatchify_batch(out, chw, project_dim, patch_size)
    _, C, H, W = out1.shape
    xpad = jnp.pad(out1, ((0, 0), (0, 0), (1, 1), (1, 1)))
    s = sum(xpad[:, :, a:a + H, b:b + W] for a in range(3) for b in range(3))
    cr = 1 + (jnp.arange(H) > 0).astype(f32) + (jnp.arange(H) < H - 1).astype(f32)
    cc = 1 + (jnp.arange(W) > 0).astype(f32) + (jnp.arange(W) < W - 1).astype(f32)
    pooled = s / (cr[:, None] * cc[None, :])[None, None]
    ppad = jnp.pad(pooled, ((0, 0), (0, 0), (1, 1), (1, 1)))
    wk = params["conv_w"].reshape(C, 3, 3)
    conv = sum(wk[:, a, b][None, :, None, None] * ppad[:, :, a:a + H, b:b + W]
               for a in range(3) for b in range(3))
    out2 = conv + params["conv_b"][None, :, None, None] - out1
    out3 = patchify_batch(out2, patch_size)

    proj = (jnp.dot(out3.astype(jnp.bfloat16), params["w_in"].astype(jnp.bfloat16),
                    preferred_element_type=f32) + params["b_in"])
    x1 = x + proj
    mu2 = x1.mean(-1, keepdims=True)
    var2 = x1.var(-1, keepdims=True)
    xn = (x1 - mu2) * jax.lax.rsqrt(var2 + EPS) * params["g2"] + params["beta2"]
    h = jnp.dot(xn.astype(jnp.bfloat16), params["w1"].astype(jnp.bfloat16),
                preferred_element_type=f32)
    r = jnp.clip(h, 0.0, 6.0)
    a = params["act_scale"][0, 0] * r * r + params["act_bias"][0, 0]
    y2 = jnp.dot(a.astype(jnp.bfloat16), params["w2"].astype(jnp.bfloat16),
                 preferred_element_type=f32)
    return x1 + y2


if __name__ == "__main__":
    # Small config consistent with the module's constructor math.
    dim = 32
    chw = (4, 32, 32)
    patch_size = 8
    project_dim = max(int(round(dim * patch_size ** 2 / (chw[1] * chw[2]))), 4)  # = 4
    n_patches = (chw[1] // patch_size) * (chw[2] // patch_size)                  # = 16
    batch = 2

    root = jax.random.PRNGKey(0)
    k_in, k_par = jax.random.split(root)
    x = jax.random.normal(k_in, (batch, n_patches, dim), dtype=jnp.float32)
    params = make_params(k_par, dim, project_dim, patch_size)
    prep = prepare_params(params, chw=chw, patch_size=patch_size,
                          project_dim=project_dim)

    fwd = jax.jit(functools.partial(
        metaformer_block_forward,
        chw=chw, patch_size=patch_size, project_dim=project_dim))
    y = jax.block_until_ready(fwd(x, prep))

    assert y.shape == (batch, n_patches, dim)
    assert bool(jnp.all(jnp.isfinite(y)))

    # Correctness self-check against the pure-JAX reference.
    ref_fn = jax.jit(functools.partial(
        reference_forward,
        chw=chw, patch_size=patch_size, project_dim=project_dim))
    y_ref = jax.block_until_ready(ref_fn(x, params))
    err = float(jnp.max(jnp.abs(y - y_ref)))
    assert err < 5e-3, f"max abs error vs reference: {err}"

    print("KERNEL_OK")
</pallas_src>

<mosaic_0001>
module attributes {stable_mosaic.version = 11 : i64} {
  func.func @_proj_out_norm_kernel(%arg0: i32, %arg1: memref<16x32xf32, #tpu.memory_space<vmem>>, %arg2: memref<32x256xbf16, #tpu.memory_space<vmem>>, %arg3: memref<1x256xf32, #tpu.memory_space<vmem>>, %arg4: memref<1x256xf32, #tpu.memory_space<vmem>>, %arg5: memref<1x256xf32, #tpu.memory_space<vmem>>, %arg6: memref<16x256xf32, #tpu.memory_space<vmem>>) attributes {dimension_semantics = [#tpu.dimension_semantics<parallel>], iteration_bounds = array<i64: 2>, scalar_prefetch = 0 : i64, scratch_operands = 0 : i64, tpu.core_type = #tpu.core_type<tc>, window_params = [{transform_indices = @transform_0, window_bounds = array<i64: 16, 32>}, {pipeline_mode = #tpu.pipeline_mode<synchronous>, transform_indices = @transform_1, window_bounds = array<i64: 32, 256>}, {pipeline_mode = #tpu.pipeline_mode<synchronous>, transform_indices = @transform_2, window_bounds = array<i64: 1, 256>}, {pipeline_mode = #tpu.pipeline_mode<synchronous>, transform_indices = @transform_3, window_bounds = array<i64: 1, 256>}, {pipeline_mode = #tpu.pipeline_mode<synchronous>, transform_indices = @transform_4, window_bounds = array<i64: 1, 256>}, {transform_indices = @transform_5, window_bounds = array<i64: 16, 256>}]} {
    %c0 = arith.constant 0 : index
    %c0_0 = arith.constant 0 : index
    %0 = vector.load %arg1[%c0, %c0_0] : memref<16x32xf32, #tpu.memory_space<vmem>>, vector<16x32xf32>
    %1 = arith.truncf %0 : vector<16x32xf32> to vector<16x32xbf16>
    %c0_1 = arith.constant 0 : index
    %c0_2 = arith.constant 0 : index
    %2 = vector.load %arg2[%c0_1, %c0_2] : memref<32x256xbf16, #tpu.memory_space<vmem>>, vector<32x256xbf16>
    %cst = arith.constant dense<0.000000e+00> : vector<16x256xf32>
    %3 = tpu.matmul %1, %2, %cst {dimension_numbers = #tpu.dot_dimension_numbers<[1], [0], [0], [1], [0, 0, 1, 1], [], []>} : vector<16x32xbf16>, vector<32x256xbf16>, vector<16x256xf32> -> vector<16x256xf32>
    %c0_3 = arith.constant 0 : index
    %c0_4 = arith.constant 0 : index
    %4 = vector.load %arg3[%c0_3, %c0_4] : memref<1x256xf32, #tpu.memory_space<vmem>>, vector<1x256xf32>
    %5 = vector.broadcast %4 : vector<1x256xf32> to vector<16x256xf32>
    %6 = arith.addf %3, %5 : vector<16x256xf32>
    %cst_5 = arith.constant dense<0.000000e+00> : vector<16xf32>
    %7 = vector.multi_reduction <add>, %6, %cst_5 [1] : vector<16x256xf32> to vector<16xf32>
    %8 = vector.shape_cast %7 : vector<16xf32> to vector<16x1xf32>
    %cst_6 = arith.constant 2.560000e+02 : f32
    %9 = vector.broadcast %cst_6 : f32 to vector<16x1xf32>
    %10 = arith.divf %8, %9 : vector<16x1xf32>
    %11 = arith.mulf %6, %6 : vector<16x256xf32>
    %cst_7 = arith.constant dense<0.000000e+00> : vector<16xf32>
    %12 = vector.multi_reduction <add>, %11, %cst_7 [1] : vector<16x256xf32> to vector<16xf32>
    %13 = vector.shape_cast %12 : vector<16xf32> to vector<16x1xf32>
    %cst_8 = arith.constant 2.560000e+02 : f32
    %14 = vector.broadcast %cst_8 : f32 to vector<16x1xf32>
    %15 = arith.divf %13, %14 : vector<16x1xf32>
    %16 = arith.mulf %10, %10 : vector<16x1xf32>
    %17 = arith.subf %15, %16 : vector<16x1xf32>
    %cst_9 = arith.constant 0.000000e+00 : f32
    %18 = vector.broadcast %cst_9 : f32 to vector<16x1xf32>
    %19 = arith.maximumf %17, %18 : vector<16x1xf32>
    %20 = vector.broadcast %10 : vector<16x1xf32> to vector<16x256xf32>
    %21 = arith.subf %6, %20 : vector<16x256xf32>
    %cst_10 = arith.constant 9.99999974E-6 : f32
    %22 = vector.broadcast %cst_10 : f32 to vector<16x1xf32>
    %23 = arith.addf %19, %22 : vector<16x1xf32>
    %24 = math.rsqrt %23 : vector<16x1xf32>
    %25 = vector.broadcast %24 : vector<16x1xf32> to vector<16x256xf32>
    %26 = arith.mulf %21, %25 : vector<16x256xf32>
    %c0_11 = arith.constant 0 : index
    %c0_12 = arith.constant 0 : index
    %27 = vector.load %arg4[%c0_11, %c0_12] : memref<1x256xf32, #tpu.memory_space<vmem>>, vector<1x256xf32>
    %28 = vector.broadcast %27 : vector<1x256xf32> to vector<16x256xf32>
    %29 = arith.mulf %26, %28 : vector<16x256xf32>
    %c0_13 = arith.constant 0 : index
    %c0_14 = arith.constant 0 : index
    %30 = vector.load %arg5[%c0_13, %c0_14] : memref<1x256xf32, #tpu.memory_space<vmem>>, vector<1x256xf32>
    %31 = vector.broadcast %30 : vector<1x256xf32> to vector<16x256xf32>
    %32 = arith.addf %29, %31 : vector<16x256xf32>
    %c0_15 = arith.constant 0 : index
    %c0_16 = arith.constant 0 : index
    %33 = vector.load %arg6[%c0_15, %c0_16] : memref<16x256xf32, #tpu.memory_space<vmem>>, vector<16x256xf32>
    tpu.vector_store %arg6[%c0_15, %c0_16], %32 {strides = array<i32>} : memref<16x256xf32, #tpu.memory_space<vmem>>, vector<16x256xf32>,
    return
  }
  func.func @transform_0(%arg0: i32) -> (i32, i32) {
    %c0_i32 = arith.constant 0 : i32
    %c0_i32_0 = arith.constant 0 : i32
    return %arg0, %c0_i32 : i32, i32
  }
  func.func @transform_1(%arg0: i32) -> (i32, i32) {
    %c0_i32 = arith.constant 0 : i32
    %c0_i32_0 = arith.constant 0 : i32
    %c0_i32_1 = arith.constant 0 : i32
    return %c0_i32, %c0_i32_0 : i32, i32
  }
  func.func @transform_2(%arg0: i32) -> (i32, i32) {
    %c0_i32 = arith.constant 0 : i32
    %c0_i32_0 = arith.constant 0 : i32
    %c0_i32_1 = arith.constant 0 : i32
    return %c0_i32, %c0_i32_0 : i32, i32
  }
  func.func @transform_3(%arg0: i32) -> (i32, i32) {
    %c0_i32 = arith.constant 0 : i32
    %c0_i32_0 = arith.constant 0 : i32
    %c0_i32_1 = arith.constant 0 : i32
    return %c0_i32, %c0_i32_0 : i32, i32
  }
  func.func @transform_4(%arg0: i32) -> (i32, i32) {
    %c0_i32 = arith.constant 0 : i32
    %c0_i32_0 = arith.constant 0 : i32
    %c0_i32_1 = arith.constant 0 : i32
    return %c0_i32, %c0_i32_0 : i32, i32
  }
  func.func @transform_5(%arg0: i32) -> (i32, i32) {
    %c0_i32 = arith.constant 0 : i32
    %c0_i32_0 = arith.constant 0 : i32
    return %arg0, %c0_i32 : i32, i32
  }
}

module attributes {stable_mosaic.version = 11 : i64} {
  func.func @_token_mixer_kernel(%arg0: i32, %arg1: memref<1x36x36x4xf32, #tpu.memory_space<vmem>>, %arg2: memref<34x34x4xf32, #tpu.memory_space<vmem>>, %arg3: memref<9x4xf32, #tpu.memory_space<vmem>>, %arg4: memref<1x4xf32, #tpu.memory_space<vmem>>, %arg5: memref<1x32x32x4xf32, #tpu.memory_space<vmem>>) attributes {dimension_semantics = [#tpu.dimension_semantics<parallel>], iteration_bounds = array<i64: 2>, scalar_prefetch = 0 : i64, scratch_operands = 0 : i64, tpu.core_type = #tpu.core_type<tc>, window_params = [{transform_indices = @transform_0, window_bounds = array<i64: 1, 36, 36, 4>}, {pipeline_mode = #tpu.pipeline_mode<synchronous>, transform_indices = @transform_1, window_bounds = array<i64: 34, 34, 4>}, {pipeline_mode = #tpu.pipeline_mode<synchronous>, transform_indices = @transform_2, window_bounds = array<i64: 9, 4>}, {pipeline_mode = #tpu.pipeline_mode<synchronous>, transform_indices = @transform_3, window_bounds = array<i64: 1, 4>}, {transform_indices = @transform_4, window_bounds = array<i64: 1, 32, 32, 4>}]} {
    %c0 = arith.constant 0 : index
    %c0_0 = arith.constant 0 : index
    %c0_1 = arith.constant 0 : index
    %c0_2 = arith.constant 0 : index
    %0 = vector.load %arg1[%c0, %c0_0, %c0_1, %c0_2] : memref<1x36x36x4xf32, #tpu.memory_space<vmem>>, vector<1x36x36x4xf32>
    %1 = vector.extract_strided_slice %0 {offsets = [0, 0, 0, 0], sizes = [1, 36, 34, 4], strides = [1, 1, 1, 1]} : vector<1x36x36x4xf32> to vector<1x36x34x4xf32>
    %2 = vector.extract_strided_slice %0 {offsets = [0, 0, 1, 0], sizes = [1, 36, 34, 4], strides = [1, 1, 1, 1]} : vector<1x36x36x4xf32> to vector<1x36x34x4xf32>
    %3 = arith.addf %1, %2 : vector<1x36x34x4xf32>
    %4 = vector.extract_strided_slice %0 {offsets = [0, 0, 2, 0], sizes = [1, 36, 34, 4], strides = [1, 1, 1, 1]} : vector<1x36x36x4xf32> to vector<1x36x34x4xf32>
    %5 = arith.addf %3, %4 : vector<1x36x34x4xf32>
    %6 = vector.extract_strided_slice %5 {offsets = [0, 0, 0, 0], sizes = [1, 34, 34, 4], strides = [1, 1, 1, 1]} : vector<1x36x34x4xf32> to vector<1x34x34x4xf32>
    %7 = vector.extract_strided_slice %5 {offsets = [0, 1, 0, 0], sizes = [1, 34, 34, 4], strides = [1, 1, 1, 1]} : vector<1x36x34x4xf32> to vector<1x34x34x4xf32>
    %8 = arith.addf %6, %7 : vector<1x34x34x4xf32>
    %9 = vector.extract_strided_slice %5 {offsets = [0, 2, 0, 0], sizes = [1, 34, 34, 4], strides = [1, 1, 1, 1]} : vector<1x36x34x4xf32> to vector<1x34x34x4xf32>
    %10 = arith.addf %8, %9 : vector<1x34x34x4xf32>
    %c0_3 = arith.constant 0 : index
    %c0_4 = arith.constant 0 : index
    %c0_5 = arith.constant 0 : index
    %11 = vector.load %arg2[%c0_3, %c0_4, %c0_5] : memref<34x34x4xf32, #tpu.memory_space<vmem>>, vector<34x34x4xf32>
    %12 = vector.shape_cast %11 : vector<34x34x4xf32> to vector<1x34x34x4xf32>
    %13 = arith.mulf %10, %12 : vector<1x34x34x4xf32>
    %c0_6 = arith.constant 0 : index
    %c0_7 = arith.constant 0 : index
    %14 = vector.load %arg3[%c0_6, %c0_7] : memref<9x4xf32, #tpu.memory_space<vmem>>, vector<1x4xf32>
    %15 = vector.extract_strided_slice %13 {offsets = [0, 0, 0, 0], sizes = [1, 32, 34, 4], strides = [1, 1, 1, 1]} : vector<1x34x34x4xf32> to vector<1x32x34x4xf32>
    %16 = vector.shape_cast %14 : vector<1x4xf32> to vector<1x1x1x4xf32>
    %17 = vector.broadcast %16 : vector<1x1x1x4xf32> to vector<1x32x34x4xf32>
    %18 = arith.mulf %17, %15 : vector<1x32x34x4xf32>
    %c3 = arith.constant 3 : index
    %c0_8 = arith.constant 0 : index
    %19 = vector.load %arg3[%c3, %c0_8] : memref<9x4xf32, #tpu.memory_space<vmem>>, vector<1x4xf32>
    %20 = vector.extract_strided_slice %13 {offsets = [0, 1, 0, 0], sizes = [1, 32, 34, 4], strides = [1, 1, 1, 1]} : vector<1x34x34x4xf32> to vector<1x32x34x4xf32>
    %21 = vector.shape_cast %19 : vector<1x4xf32> to vector<1x1x1x4xf32>
    %22 = vector.broadcast %21 : vector<1x1x1x4xf32> to vector<1x32x34x4xf32>
    %23 = arith.mulf %22, %20 : vector<1x32x34x4xf32>
    %24 = arith.addf %18, %23 : vector<1x32x34x4xf32>
    %c6 = arith.constant 6 : index
    %c0_9 = arith.constant 0 : index
    %25 = vector.load %arg3[%c6, %c0_9] : memref<9x4xf32, #tpu.memory_space<vmem>>, vector<1x4xf32>
    %26 = vector.extract_strided_slice %13 {offsets = [0, 2, 0, 0], sizes = [1, 32, 34, 4], strides = [1, 1, 1, 1]} : vector<1x34x34x4xf32> to vector<1x32x34x4xf32>
    %27 = vector.shape_cast %25 : vector<1x4xf32> to vector<1x1x1x4xf32>
    %28 = vector.broadcast %27 : vector<1x1x1x4xf32> to vector<1x32x34x4xf32>
    %29 = arith.mulf %28, %26 : vector<1x32x34x4xf32>
    %30 = arith.addf %24, %29 : vector<1x32x34x4xf32>
    %31 = vector.extract_strided_slice %30 {offsets = [0, 0, 0, 0], sizes = [1, 32, 32, 4], strides = [1, 1, 1, 1]} : vector<1x32x34x4xf32> to vector<1x32x32x4xf32>
    %c1 = arith.constant 1 : index
    %c0_10 = arith.constant 0 : index
    %32 = vector.load %arg3[%c1, %c0_10] : memref<9x4xf32, #tpu.memory_space<vmem>>, vector<1x4xf32>
    %33 = vector.extract_strided_slice %13 {offsets = [0, 0, 0, 0], sizes = [1, 32, 34, 4], strides = [1, 1, 1, 1]} : vector<1x34x34x4xf32> to vector<1x32x34x4xf32>
    %34 = vector.shape_cast %32 : vector<1x4xf32> to vector<1x1x1x4xf32>
    %35 = vector.broadcast %34 : vector<1x1x1x4xf32> to vector<1x32x34x4xf32>
    %36 = arith.mulf %35, %33 : vector<1x32x34x4xf32>
    %c4 = arith.constant 4 : index
    %c0_11 = arith.constant 0 : index
    %37 = vector.load %arg3[%c4, %c0_11] : memref<9x4xf32, #tpu.memory_space<vmem>>, vector<1x4xf32>
    %38 = vector.extract_strided_slice %13 {offsets = [0, 1, 0, 0], sizes = [1, 32, 34, 4], strides = [1, 1, 1, 1]} : vector<1x34x34x4xf32> to vector<1x32x34x4xf32>
    %39 = vector.shape_cast %37 : vector<1x4xf32> to vector<1x1x1x4xf32>
    %40 = vector.broadcast %39 : vector<1x1x1x4xf32> to vector<1x32x34x4xf32>
    %41 = arith.mulf %40, %38 : vector<1x32x34x4xf32>
    %42 = arith.addf %36, %41 : vector<1x32x34x4xf32>
    %c7 = arith.constant 7 : index
    %c0_12 = arith.constant 0 : index
    %43 = vector.load %arg3[%c7, %c0_12] : memref<9x4xf32, #tpu.memory_space<vmem>>, vector<1x4xf32>
    %44 = vector.extract_strided_slice %13 {offsets = [0, 2, 0, 0], sizes = [1, 32, 34, 4], strides = [1, 1, 1, 1]} : vector<1x34x34x4xf32> to vector<1x32x34x4xf32>
    %45 = vector.shape_cast %43 : vector<1x4xf32> to vector<1x1x1x4xf32>
    %46 = vector.broadcast %45 : vector<1x1x1x4xf32> to vector<1x32x34x4xf32>
    %47 = arith.mulf %46, %44 : vector<1x32x34x4xf32>
    %48 = arith.addf %42, %47 : vector<1x32x34x4xf32>
    %49 = vector.extract_strided_slice %48 {offsets = [0, 0, 1, 0], sizes = [1, 32, 32, 4], strides = [1, 1, 1, 1]} : vector<1x32x34x4xf32> to vector<1x32x32x4xf32>
    %50 = arith.addf %31, %49 : vector<1x32x32x4xf32>
    %c2 = arith.constant 2 : index
    %c0_13 = arith.constant 0 : index
    %51 = vector.load %arg3[%c2, %c0_13] : memref<9x4xf32, #tpu.memory_space<vmem>>, vector<1x4xf32>
    %52 = vector.extract_strided_slice %13 {offsets = [0, 0, 0, 0], sizes = [1, 32, 34, 4], strides = [1, 1, 1, 1]} : vector<1x34x34x4xf32> to vector<1x32x34x4xf32>
    %53 = vector.shape_cast %51 : vector<1x4xf32> to vector<1x1x1x4xf32>
    %54 = vector.broadcast %53 : vector<1x1x1x4xf32> to vector<1x32x34x4xf32>
    %55 = arith.mulf %54, %52 : vector<1x32x34x4xf32>
    %c5 = arith.constant 5 : index
    %c0_14 = arith.constant 0 : index
    %56 = vector.load %arg3[%c5, %c0_14] : memref<9x4xf32, #tpu.memory_space<vmem>>, vector<1x4xf32>
    %57 = vector.extract_strided_slice %13 {offsets = [0, 1, 0, 0], sizes = [1, 32, 34, 4], strides = [1, 1, 1, 1]} : vector<1x34x34x4xf32> to vector<1x32x34x4xf32>
    %58 = vector.shape_cast %56 : vector<1x4xf32> to vector<1x1x1x4xf32>
    %59 = vector.broadcast %58 : vector<1x1x1x4xf32> to vector<1x32x34x4xf32>
    %60 = arith.mulf %59, %57 : vector<1x32x34x4xf32>
    %61 = arith.addf %55, %60 : vector<1x32x34x4xf32>
    %c8 = arith.constant 8 : index
    %c0_15 = arith.constant 0 : index
    %62 = vector.load %arg3[%c8, %c0_15] : memref<9x4xf32, #tpu.memory_space<vmem>>, vector<1x4xf32>
    %63 = vector.extract_strided_slice %13 {offsets = [0, 2, 0, 0], sizes = [1, 32, 34, 4], strides = [1, 1, 1, 1]} : vector<1x34x34x4xf32> to vector<1x32x34x4xf32>
    %64 = vector.shape_cast %62 : vector<1x4xf32> to vector<1x1x1x4xf32>
    %65 = vector.broadcast %64 : vector<1x1x1x4xf32> to vector<1x32x34x4xf32>
    %66 = arith.mulf %65, %63 : vector<1x32x34x4xf32>
    %67 = arith.addf %61, %66 : vector<1x32x34x4xf32>
    %68 = vector.extract_strided_slice %67 {offsets = [0, 0, 2, 0], sizes = [1, 32, 32, 4], strides = [1, 1, 1, 1]} : vector<1x32x34x4xf32> to vector<1x32x32x4xf32>
    %69 = arith.addf %50, %68 : vector<1x32x32x4xf32>
    %70 = vector.extract_strided_slice %0 {offsets = [0, 2, 2, 0], sizes = [1, 32, 32, 4], strides = [1, 1, 1, 1]} : vector<1x36x36x4xf32> to vector<1x32x32x4xf32>
    %c0_16 = arith.constant 0 : index
    %c0_17 = arith.constant 0 : index
    %71 = vector.load %arg4[%c0_16, %c0_17] : memref<1x4xf32, #tpu.memory_space<vmem>>, vector<1x4xf32>
    %72 = vector.shape_cast %71 : vector<1x4xf32> to vector<1x1x1x4xf32>
    %73 = vector.broadcast %72 : vector<1x1x1x4xf32> to vector<1x32x32x4xf32>
    %74 = arith.addf %69, %73 : vector<1x32x32x4xf32>
    %75 = arith.subf %74, %70 : vector<1x32x32x4xf32>
    %c0_18 = arith.constant 0 : index
    %c0_19 = arith.constant 0 : index
    %c0_20 = arith.constant 0 : index
    %c0_21 = arith.constant 0 : index
    %76 = vector.load %arg5[%c0_18, %c0_19, %c0_20, %c0_21] : memref<1x32x32x4xf32, #tpu.memory_space<vmem>>, vector<1x32x32x4xf32>
    tpu.vector_store %arg5[%c0_18, %c0_19, %c0_20, %c0_21], %75 {strides = array<i32>} : memref<1x32x32x4xf32, #tpu.memory_space<vmem>>, vector<1x32x32x4xf32>,
    return
  }
  func.func @transform_0(%arg0: i32) -> (i32, i32, i32, i32) {
    %c0_i32 = arith.constant 0 : i32
    %c0_i32_0 = arith.constant 0 : i32
    %c0_i32_1 = arith.constant 0 : i32
    %c0_i32_2 = arith.constant 0 : i32
    return %arg0, %c0_i32, %c0_i32_0, %c0_i32_1 : i32, i32, i32, i32
  }
  func.func @transform_1(%arg0: i32) -> (i32, i32, i32) {
    %c0_i32 = arith.constant 0 : i32
    %c0_i32_0 = arith.constant 0 : i32
    %c0_i32_1 = arith.constant 0 : i32
    %c0_i32_2 = arith.constant 0 : i32
    return %c0_i32, %c0_i32_0, %c0_i32_1 : i32, i32, i32
  }
  func.func @transform_2(%arg0: i32) -> (i32, i32) {
    %c0_i32 = arith.constant 0 : i32
    %c0_i32_0 = arith.constant 0 : i32
    %c0_i32_1 = arith.constant 0 : i32
    return %c0_i32, %c0_i32_0 : i32, i32
  }
  func.func @transform_3(%arg0: i32) -> (i32, i32) {
    %c0_i32 = arith.constant 0 : i32
    %c0_i32_0 = arith.constant 0 : i32
    %c0_i32_1 = arith.constant 0 : i32
    return %c0_i32, %c0_i32_0 : i32, i32
  }
  func.func @transform_4(%arg0: i32) -> (i32, i32, i32, i32) {
    %c0_i32 = arith.constant 0 : i32
    %c0_i32_0 = arith.constant 0 : i32
    %c0_i32_1 = arith.constant 0 : i32
    %c0_i32_2 = arith.constant 0 : i32
    return %arg0, %c0_i32, %c0_i32_0, %c0_i32_1 : i32, i32, i32, i32
  }
}

module attributes {stable_mosaic.version = 11 : i64} {
  func.func @_fused_tail_kernel(%arg0: i32, %arg1: memref<16x32xf32, #tpu.memory_space<vmem>>, %arg2: memref<16x256xbf16, #tpu.memory_space<vmem>>, %arg3: memref<256x32xbf16, #tpu.memory_space<vmem>>, %arg4: memref<1x32xf32, #tpu.memory_space<vmem>>, %arg5: memref<1x32xf32, #tpu.memory_space<vmem>>, %arg6: memref<1x32xf32, #tpu.memory_space<vmem>>, %arg7: memref<32x128xbf16, #tpu.memory_space<vmem>>, %arg8: memref<128x32xbf16, #tpu.memory_space<vmem>>, %arg9: memref<1x1xf32, #tpu.memory_space<vmem>>, %arg10: memref<1x1xf32, #tpu.memory_space<vmem>>, %arg11: memref<16x32xf32, #tpu.memory_space<vmem>>) attributes {dimension_semantics = [#tpu.dimension_semantics<parallel>], iteration_bounds = array<i64: 2>, scalar_prefetch = 0 : i64, scratch_operands = 0 : i64, tpu.core_type = #tpu.core_type<tc>, window_params = [{transform_indices = @transform_0, window_bounds = array<i64: 16, 32>}, {transform_indices = @transform_1, window_bounds = array<i64: 16, 256>}, {pipeline_mode = #tpu.pipeline_mode<synchronous>, transform_indices = @transform_2, window_bounds = array<i64: 256, 32>}, {pipeline_mode = #tpu.pipeline_mode<synchronous>, transform_indices = @transform_3, window_bounds = array<i64: 1, 32>}, {pipeline_mode = #tpu.pipeline_mode<synchronous>, transform_indices = @transform_4, window_bounds = array<i64: 1, 32>}, {pipeline_mode = #tpu.pipeline_mode<synchronous>, transform_indices = @transform_5, window_bounds = array<i64: 1, 32>}, {pipeline_mode = #tpu.pipeline_mode<synchronous>, transform_indices = @transform_6, window_bounds = array<i64: 32, 128>}, {pipeline_mode = #tpu.pipeline_mode<synchronous>, transform_indices = @transform_7, window_bounds = array<i64: 128, 32>}, {pipeline_mode = #tpu.pipeline_mode<synchronous>, transform_indices = @transform_8, window_bounds = array<i64: 1, 1>}, {pipeline_mode = #tpu.pipeline_mode<synchronous>, transform_indices = @transform_9, window_bounds = array<i64: 1, 1>}, {transform_indices = @transform_10, window_bounds = array<i64: 16, 32>}]} {
    %c0 = arith.constant 0 : index
    %c0_0 = arith.constant 0 : index
    %0 = vector.load %arg1[%c0, %c0_0] : memref<16x32xf32, #tpu.memory_space<vmem>>, vector<16x32xf32>
    %c0_1 = arith.constant 0 : index
    %c0_2 = arith.constant 0 : index
    %1 = vector.load %arg2[%c0_1, %c0_2] : memref<16x256xbf16, #tpu.memory_space<vmem>>, vector<16x256xbf16>
    %c0_3 = arith.constant 0 : index
    %c0_4 = arith.constant 0 : index
    %2 = vector.load %arg3[%c0_3, %c0_4] : memref<256x32xbf16, #tpu.memory_space<vmem>>, vector<256x32xbf16>
    %cst = arith.constant dense<0.000000e+00> : vector<16x32xf32>
    %3 = tpu.matmul %1, %2, %cst {dimension_numbers = #tpu.dot_dimension_numbers<[1], [0], [0], [1], [0, 0, 1, 1], [], []>} : vector<16x256xbf16>, vector<256x32xbf16>, vector<16x32xf32> -> vector<16x32xf32>
    %4 = arith.addf %0, %3 : vector<16x32xf32>
    %c0_5 = arith.constant 0 : index
    %c0_6 = arith.constant 0 : index
    %5 = vector.load %arg4[%c0_5, %c0_6] : memref<1x32xf32, #tpu.memory_space<vmem>>, vector<1x32xf32>
    %6 = vector.broadcast %5 : vector<1x32xf32> to vector<16x32xf32>
    %7 = arith.addf %4, %6 : vector<16x32xf32>
    %cst_7 = arith.constant dense<0.000000e+00> : vector<16xf32>
    %8 = vector.multi_reduction <add>, %7, %cst_7 [1] : vector<16x32xf32> to vector<16xf32>
    %9 = vector.shape_cast %8 : vector<16xf32> to vector<16x1xf32>
    %cst_8 = arith.constant 3.200000e+01 : f32
    %10 = vector.broadcast %cst_8 : f32 to vector<16x1xf32>
    %11 = arith.divf %9, %10 : vector<16x1xf32>
    %12 = arith.mulf %7, %7 : vector<16x32xf32>
    %cst_9 = arith.constant dense<0.000000e+00> : vector<16xf32>
    %13 = vector.multi_reduction <add>, %12, %cst_9 [1] : vector<16x32xf32> to vector<16xf32>
    %14 = vector.shape_cast %13 : vector<16xf32> to vector<16x1xf32>
    %cst_10 = arith.constant 3.200000e+01 : f32
    %15 = vector.broadcast %cst_10 : f32 to vector<16x1xf32>
    %16 = arith.divf %14, %15 : vector<16x1xf32>
    %17 = arith.mulf %11, %11 : vector<16x1xf32>
    %18 = arith.subf %16, %17 : vector<16x1xf32>
    %cst_11 = arith.constant 0.000000e+00 : f32
    %19 = vector.broadcast %cst_11 : f32 to vector<16x1xf32>
    %20 = arith.maximumf %18, %19 : vector<16x1xf32>
    %21 = vector.broadcast %11 : vector<16x1xf32> to vector<16x32xf32>
    %22 = arith.subf %7, %21 : vector<16x32xf32>
    %cst_12 = arith.constant 9.99999974E-6 : f32
    %23 = vector.broadcast %cst_12 : f32 to vector<16x1xf32>
    %24 = arith.addf %20, %23 : vector<16x1xf32>
    %25 = math.rsqrt %24 : vector<16x1xf32>
    %26 = vector.broadcast %25 : vector<16x1xf32> to vector<16x32xf32>
    %27 = arith.mulf %22, %26 : vector<16x32xf32>
    %c0_13 = arith.constant 0 : index
    %c0_14 = arith.constant 0 : index
    %28 = vector.load %arg5[%c0_13, %c0_14] : memref<1x32xf32, #tpu.memory_space<vmem>>, vector<1x32xf32>
    %29 = vector.broadcast %28 : vector<1x32xf32> to vector<16x32xf32>
    %30 = arith.mulf %27, %29 : vector<16x32xf32>
    %c0_15 = arith.constant 0 : index
    %c0_16 = arith.constant 0 : index
    %31 = vector.load %arg6[%c0_15, %c0_16] : memref<1x32xf32, #tpu.memory_space<vmem>>, vector<1x32xf32>
    %32 = vector.broadcast %31 : vector<1x32xf32> to vector<16x32xf32>
    %33 = arith.addf %30, %32 : vector<16x32xf32>
    %34 = arith.truncf %33 : vector<16x32xf32> to vector<16x32xbf16>
    %c0_17 = arith.constant 0 : index
    %c0_18 = arith.constant 0 : index
    %35 = vector.load %arg7[%c0_17, %c0_18] : memref<32x128xbf16, #tpu.memory_space<vmem>>, vector<32x128xbf16>
    %cst_19 = arith.constant dense<0.000000e+00> : vector<16x128xf32>
    %36 = tpu.matmul %34, %35, %cst_19 {dimension_numbers = #tpu.dot_dimension_numbers<[1], [0], [0], [1], [0, 0, 1, 1], [], []>} : vector<16x32xbf16>, vector<32x128xbf16>, vector<16x128xf32> -> vector<16x128xf32>
    %cst_20 = arith.constant 0.000000e+00 : f32
    %cst_21 = arith.constant 6.000000e+00 : f32
    %37 = vector.broadcast %cst_20 : f32 to vector<16x128xf32>
    %38 = arith.maximumf %37, %36 : vector<16x128xf32>
    %39 = vector.broadcast %cst_21 : f32 to vector<16x128xf32>
    %40 = arith.minimumf %39, %38 : vector<16x128xf32>
    %c0_22 = arith.constant 0 : index
    %c0_23 = arith.constant 0 : index
    %41 = vector.load %arg9[%c0_22, %c0_23] : memref<1x1xf32, #tpu.memory_space<vmem>>, vector<1x1xf32>
    %42 = arith.mulf %40, %40 : vector<16x128xf32>
    %43 = vector.broadcast %41 : vector<1x1xf32> to vector<16x128xf32>
    %44 = arith.mulf %43, %42 : vector<16x128xf32>
    %c0_24 = arith.constant 0 : index
    %c0_25 = arith.constant 0 : index
    %45 = vector.load %arg10[%c0_24, %c0_25] : memref<1x1xf32, #tpu.memory_space<vmem>>, vector<1x1xf32>
    %46 = vector.broadcast %45 : vector<1x1xf32> to vector<16x128xf32>
    %47 = arith.addf %44, %46 : vector<16x128xf32>
    %48 = arith.truncf %47 : vector<16x128xf32> to vector<16x128xbf16>
    %c0_26 = arith.constant 0 : index
    %c0_27 = arith.constant 0 : index
    %49 = vector.load %arg8[%c0_26, %c0_27] : memref<128x32xbf16, #tpu.memory_space<vmem>>, vector<128x32xbf16>
    %cst_28 = arith.constant dense<0.000000e+00> : vector<16x32xf32>
    %50 = tpu.matmul %48, %49, %cst_28 {dimension_numbers = #tpu.dot_dimension_numbers<[1], [0], [0], [1], [0, 0, 1, 1], [], []>} : vector<16x128xbf16>, vector<128x32xbf16>, vector<16x32xf32> -> vector<16x32xf32>
    %51 = arith.addf %7, %50 : vector<16x32xf32>
    %c0_29 = arith.constant 0 : index
    %c0_30 = arith.constant 0 : index
    %52 = vector.load %arg11[%c0_29, %c0_30] : memref<16x32xf32, #tpu.memory_space<vmem>>, vector<16x32xf32>
    tpu.vector_store %arg11[%c0_29, %c0_30], %51 {strides = array<i32>} : memref<16x32xf32, #tpu.memory_space<vmem>>, vector<16x32xf32>,
    return
  }
  func.func @transform_0(%arg0: i32) -> (i32, i32) {
    %c0_i32 = arith.constant 0 : i32
    %c0_i32_0 = arith.constant 0 : i32
    return %arg0, %c0_i32 : i32, i32
  }
  func.func @transform_1(%arg0: i32) -> (i32, i32) {
    %c0_i32 = arith.constant 0 : i32
    %c0_i32_0 = arith.constant 0 : i32
    return %arg0, %c0_i32 : i32, i32
  }
  func.func @transform_2(%arg0: i32) -> (i32, i32) {
    %c0_i32 = arith.constant 0 : i32
    %c0_i32_0 = arith.constant 0 : i32
    %c0_i32_1 = arith.constant 0 : i32
    return %c0_i32, %c0_i32_0 : i32, i32
  }
  func.func @transform_3(%arg0: i32) -> (i32, i32) {
    %c0_i32 = arith.constant 0 : i32
    %c0_i32_0 = arith.constant 0 : i32
    %c0_i32_1 = arith.constant 0 : i32
    return %c0_i32, %c0_i32_0 : i32, i32
  }
  func.func @transform_4(%arg0: i32) -> (i32, i32) {
    %c0_i32 = arith.constant 0 : i32
    %c0_i32_0 = arith.constant 0 : i32
    %c0_i32_1 = arith.constant 0 : i32
    return %c0_i32, %c0_i32_0 : i32, i32
  }
  func.func @transform_5(%arg0: i32) -> (i32, i32) {
    %c0_i32 = arith.constant 0 : i32
    %c0_i32_0 = arith.constant 0 : i32
    %c0_i32_1 = arith.constant 0 : i32
    return %c0_i32, %c0_i32_0 : i32, i32
  }
  func.func @transform_6(%arg0: i32) -> (i32, i32) {
    %c0_i32 = arith.constant 0 : i32
    %c0_i32_0 = arith.constant 0 : i32
    %c0_i32_1 = arith.constant 0 : i32
    return %c0_i32, %c0_i32_0 : i32, i32
  }
  func.func @transform_7(%arg0: i32) -> (i32, i32) {
    %c0_i32 = arith.constant 0 : i32
    %c0_i32_0 = arith.constant 0 : i32
    %c0_i32_1 = arith.constant 0 : i32
    return %c0_i32, %c0_i32_0 : i32, i32
  }
  func.func @transform_8(%arg0: i32) -> (i32, i32) {
    %c0_i32 = arith.constant 0 : i32
    %c0_i32_0 = arith.constant 0 : i32
    %c0_i32_1 = arith.constant 0 : i32
    return %c0_i32, %c0_i32_0 : i32, i32
  }
  func.func @transform_9(%arg0: i32) -> (i32, i32) {
    %c0_i32 = arith.constant 0 : i32
    %c0_i32_0 = arith.constant 0 : i32
    %c0_i32_1 = arith.constant 0 : i32
    return %c0_i32, %c0_i32_0 : i32, i32
  }
  func.func @transform_10(%arg0: i32) -> (i32, i32) {
    %c0_i32 = arith.constant 0 : i32
    %c0_i32_0 = arith.constant 0 : i32
    return %arg0, %c0_i32 : i32, i32
  }
}

</mosaic_0001>

<llo_original>
// kernel: metaformer_block_forward.3
$region0: #{metaformer_block_forward.3}
  #allocation0 [shape = 'u32[]', space=smem, size = 0x4, offset = 0x4, fixed_abs, tag = 'smem constant byte address 0x4 - core index']
  #allocation1 [shape = 'u32[144,128]{1,0:T(1,128)}', space=vmem, size = 0x12000, scoped, tag = 'internal scratch']
  %s0 = inlined_call_operand.hbm [shape: f32[32,32], index: 0, kind: input, shape index: {}]
  %s1 = inlined_call_operand.hbm [shape: bf16[32,256], index: 1, kind: input, shape index: {}]
  %s2 = inlined_call_operand.hbm [shape: f32[1,256], index: 2, kind: input, shape index: {}]
  %s3 = inlined_call_operand.hbm [shape: f32[1,256], index: 3, kind: input, shape index: {}]
  %s4 = inlined_call_operand.hbm [shape: f32[1,256], index: 4, kind: input, shape index: {}]
  %s5 = inlined_call_operand.vmem [shape: f32[32,256], index: 5, kind: output, shape index: {}]
  %s6 = sld [smem:[#allocation0]]
  $region73: #{metaformer_block_forward.3} parent=0
    _
  %s8 = ssub.s32 1, %s6
  %s9 = scalar_select 0, %s8, %s6
  $region1: #{metaformer_block_forward.3} parent=0
    #allocation2 [shape = 'u8[16384]{0}', space=vmem, size = 0x4000, scoped, tag = 'input window, operand 0']
    #allocation3 [shape = 's32[2]{0}', space=sflag, size = 0x8, scoped, tag = 'scoped memory for metaformer_block_forward.3']
    #allocation4 [shape = 'u8[16384]{0}', space=vmem, size = 0x4000, scoped, tag = 'input window, operand 1, single buffered']
    #allocation5 [shape = 's32[1]{0}', space=sflag, size = 0x4, scoped, tag = 'scoped memory for metaformer_block_forward.3']
    #allocation6 [shape = 'u8[1024]{0}', space=vmem, size = 0x400, scoped, tag = 'input window, operand 2, single buffered']
    #allocation7 [shape = 'u8[1024]{0}', space=vmem, size = 0x400, scoped, tag = 'input window, operand 3, single buffered']
    #allocation8 [shape = 's32[1]{0}', space=sflag, size = 0x4, scoped, tag = 'scoped memory for metaformer_block_forward.3']
    #allocation9 [shape = 'u8[1024]{0}', space=vmem, size = 0x400, scoped, tag = 'input window, operand 4, single buffered']
    %10 = vsyncpa [#allocation3], 0
    %s11 = scalar_lea.sflag [#allocation3], 1
    %12 = vsyncpa %s11, 0
    %13 = vsyncpa [#allocation5], 0
    %14 = vsyncpa [#allocation8], 0
    loop: start=0, step=1, limit=4
    $region2: #{metaformer_block_forward.3} parent=1 // loop_pre_header
      _
    $region3: #{metaformer_block_forward.3} parent=1 // loop_header
      %s16 = sphi 0, %s20
      %p17 = scmp.ge.s32.totalorder %s16, 4
      %s26 = sphi 0, %s28
      %s29 = sphi 0, %s26
      %s30 = sphi 0, %s29
      %s46 = sphi 0, %s30
      %s50 = sphi 0, %s50
      %s52 = sphi 0, %s50
      %s53 = sphi 0, %s52
      %s67 = sphi 0, %s53
      %s71 = sphi 0, %s71
      %s73 = sphi 0, %s71
      %s74 = sphi 0, %s73
      %s88 = sphi 0, %s74
      %s92 = sphi 0, %s92
      %s94 = sphi 0, %s92
      %s95 = sphi 0, %s94
      %s109 = sphi 0, %s95
      %s113 = sphi 0, %s113
      %s115 = sphi 0, %s113
      %s116 = sphi 0, %s115
      %s130 = sphi 0, %s116
      %s136 = sphi 0, %s138
      %s139 = sphi 0, %s136
      %s140 = sphi 0, %s139
      %s156 = sphi 0, %s140
    $region4: #{metaformer_block_forward.3} parent=1 // loop_header_branch
      %19 = sbr.rel (%p17) target = $region8
    $region5: #{metaformer_block_forward.3} parent=1 // loop_body
      %s21 = ssub.s32 %s16, 1
      %s22 = ssub.s32 %s16, 2
      %s23 = sadd.s32 %s16, 1
      %s24 = ssub.s32 %s16, %s23
      %p25 = scmp.eq.s32.totalorder %s24, 0
      %s27 = sadd.s32 %s26, 1
      %s28 = scalar_select %p25, %s26, %s27
      %p31 = pneg %p25
      %p32 = scmp.eq.s32.totalorder %s16, 1
      %p33 = por %p31, %p32
      %p34 = scmp.ne.s32.totalorder %s26, %s29
      %p35 = scmp.eq.s32.totalorder %s16, 0
      %p36 = por %p34, %p35
      %p37 = scmp.ne.s32.totalorder %s26, %s29
      %p38 = scmp.eq.s32.totalorder %s21, 1
      %p39 = por %p37, %p38
      %p40 = scmp.ne.s32.totalorder %s29, %s30
      %p41 = scmp.eq.s32.totalorder %s21, 0
      %p42 = por %p40, %p41
      %p43 = scmp.ne.s32.totalorder %s29, %s30
      %p44 = scmp.eq.s32.totalorder %s22, 1
      %p45 = por %p43, %p44
      %p47 = scmp.ne.s32.totalorder %s30, %s46
      %p48 = scmp.eq.s32.totalorder %s22, 0
      %p49 = por %p47, %p48
      %s51 = sadd.s32 %s50, 1
      %p54 = scmp.eq.s32.totalorder %s16, 1
      %p55 = scmp.ne.s32.totalorder %s50, %s52
      %p56 = scmp.eq.s32.totalorder %s16, 0
      %p57 = por %p55, %p56
      %p58 = scmp.ne.s32.totalorder %s50, %s52
      %p59 = scmp.eq.s32.totalorder %s21, 1
      %p60 = por %p58, %p59
      %p61 = scmp.ne.s32.totalorder %s52, %s53
      %p62 = scmp.eq.s32.totalorder %s21, 0
      %p63 = por %p61, %p62
      %p64 = scmp.ne.s32.totalorder %s52, %s53
      %p65 = scmp.eq.s32.totalorder %s22, 1
      %p66 = por %p64, %p65
      %p68 = scmp.ne.s32.totalorder %s53, %s67
      %p69 = scmp.eq.s32.totalorder %s22, 0
      %p70 = por %p68, %p69
      %s72 = sadd.s32 %s71, 1
      %p75 = scmp.eq.s32.totalorder %s16, 1
      %p76 = scmp.ne.s32.totalorder %s71, %s73
      %p77 = scmp.eq.s32.totalorder %s16, 0
      %p78 = por %p76, %p77
      %p79 = scmp.ne.s32.totalorder %s71, %s73
      %p80 = scmp.eq.s32.totalorder %s21, 1
      %p81 = por %p79, %p80
      %p82 = scmp.ne.s32.totalorder %s73, %s74
      %p83 = scmp.eq.s32.totalorder %s21, 0
      %p84 = por %p82, %p83
      %p85 = scmp.ne.s32.totalorder %s73, %s74
      %p86 = scmp.eq.s32.totalorder %s22, 1
      %p87 = por %p85, %p86
      %p89 = scmp.ne.s32.totalorder %s74, %s88
      %p90 = scmp.eq.s32.totalorder %s22, 0
      %p91 = por %p89, %p90
      %s93 = sadd.s32 %s92, 1
      %p96 = scmp.eq.s32.totalorder %s16, 1
      %p97 = scmp.ne.s32.totalorder %s92, %s94
      %p98 = scmp.eq.s32.totalorder %s16, 0
      %p99 = por %p97, %p98
      %p100 = scmp.ne.s32.totalorder %s92, %s94
      %p101 = scmp.eq.s32.totalorder %s21, 1
      %p102 = por %p100, %p101
      %p103 = scmp.ne.s32.totalorder %s94, %s95
      %p104 = scmp.eq.s32.totalorder %s21, 0
      %p105 = por %p103, %p104
      %p106 = scmp.ne.s32.totalorder %s94, %s95
      %p107 = scmp.eq.s32.totalorder %s22, 1
      %p108 = por %p106, %p107
      %p110 = scmp.ne.s32.totalorder %s95, %s109
      %p111 = scmp.eq.s32.totalorder %s22, 0
      %p112 = por %p110, %p111
      %s114 = sadd.s32 %s113, 1
      %p117 = scmp.eq.s32.totalorder %s16, 1
      %p118 = scmp.ne.s32.totalorder %s113, %s115
      %p119 = scmp.eq.s32.totalorder %s16, 0
      %p120 = por %p118, %p119
      %p121 = scmp.ne.s32.totalorder %s113, %s115
      %p122 = scmp.eq.s32.totalorder %s21, 1
      %p123 = por %p121, %p122
      %p124 = scmp.ne.s32.totalorder %s115, %s116
      %p125 = scmp.eq.s32.totalorder %s21, 0
      %p126 = por %p124, %p125
      %p127 = scmp.ne.s32.totalorder %s115, %s116
      %p128 = scmp.eq.s32.totalorder %s22, 1
      %p129 = por %p127, %p128
      %p131 = scmp.ne.s32.totalorder %s116, %s130
      %p132 = scmp.eq.s32.totalorder %s22, 0
      %p133 = por %p131, %p132
      %s134 = ssub.s32 %s16, %s23
      %p135 = scmp.eq.s32.totalorder %s134, 0
      %s137 = sadd.s32 %s136, 1
      %s138 = scalar_select %p135, %s136, %s137
      %p141 = pneg %p135
      %p142 = scmp.eq.s32.totalorder %s16, 1
      %p143 = por %p141, %p142
      %p144 = scmp.ne.s32.totalorder %s136, %s139
      %p145 = scmp.eq.s32.totalorder %s16, 0
      %p146 = por %p144, %p145
      %p147 = scmp.ne.s32.totalorder %s136, %s139
      %p148 = scmp.eq.s32.totalorder %s21, 1
      %p149 = por %p147, %p148
      %p150 = scmp.ne.s32.totalorder %s139, %s140
      %p151 = scmp.eq.s32.totalorder %s21, 0
      %p152 = por %p150, %p151
      %p153 = scmp.ne.s32.totalorder %s139, %s140
      %p154 = scmp.eq.s32.totalorder %s22, 1
      %p155 = por %p153, %p154
      %p157 = scmp.ne.s32.totalorder %s140, %s156
      %p158 = scmp.eq.s32.totalorder %s22, 0
      %p159 = por %p157, %p158
      %p160 = scmp.le.s32.totalorder 1, %s16
      %p161 = scmp.lt.s32.totalorder %s16, 3
      %p162 = pnand %p160, %p161
      %p163 = pneg %p162
      // Predicated region
      $region9: #{metaformer_block_forward.3} parent=5 // pred_check
        _
      $region10: #{metaformer_block_forward.3} parent=5 // pred_check_branch
        %165 = sbr.rel (%p162) target = $region12
      $region11: #{metaformer_block_forward.3} parent=5 // pred_region
        %s166 = ssub.s32 %s16, 1
        // Predicated region
        $region13: #{metaformer_block_forward.3} parent=11 // pred_check
          %p167 = pneg %p63
        $region14: #{metaformer_block_forward.3} parent=11 // pred_check_branch
          %169 = sbr.rel (%p167) target = $region16
        $region15: #{metaformer_block_forward.3} parent=11 // pred_region
          %s171 = ssub.s32 512, 512
          %172 = vsyncadd [#allocation5], %s171
          %s173 = sshll.u32 [#allocation4], 4
          %s174 = int_to_ptr.vmem [resolvable:$true] %s173
          %179 = dma.hbm_to_vmem [thread:$0]  %s1, 512, %s174, [#allocation5], 128, 128, 8
        $region16: #{metaformer_block_forward.3} parent=11 // pred_fallthru
          _
        // Predicated region
        $region17: #{metaformer_block_forward.3} parent=11 // pred_check
          %p180 = pneg %p84
        $region18: #{metaformer_block_forward.3} parent=11 // pred_check_branch
          %182 = sbr.rel (%p180) target = $region20
        $region19: #{metaformer_block_forward.3} parent=11 // pred_region
          %s184 = ssub.s32 32, 32
          %185 = vsyncadd [#allocation5], %s184
          %s187 = sshll.u32 [#allocation6], 4
          %s188 = int_to_ptr.vmem [resolvable:$true] %s187
          %190 = dma.hbm_to_vmem [thread:$0]  %s2, 32, %s188, [#allocation5]
        $region20: #{metaformer_block_forward.3} parent=11 // pred_fallthru
          _
        // Predicated region
        $region21: #{metaformer_block_forward.3} parent=11 // pred_check
          %p191 = pneg %p105
        $region22: #{metaformer_block_forward.3} parent=11 // pred_check_branch
          %193 = sbr.rel (%p191) target = $region24
        $region23: #{metaformer_block_forward.3} parent=11 // pred_region
          %s195 = ssub.s32 32, 32
          %196 = vsyncadd [#allocation8], %s195
          %s198 = sshll.u32 [#allocation7], 4
          %s199 = int_to_ptr.vmem [resolvable:$true] %s198
          %201 = dma.hbm_to_vmem [thread:$0]  %s3, 32, %s199, [#allocation8]
        $region24: #{metaformer_block_forward.3} parent=11 // pred_fallthru
          _
        // Predicated region
        $region25: #{metaformer_block_forward.3} parent=11 // pred_check
          %p202 = pneg %p126
        $region26: #{metaformer_block_forward.3} parent=11 // pred_check_branch
          %204 = sbr.rel (%p202) target = $region28
        $region27: #{metaformer_block_forward.3} parent=11 // pred_region
          %s206 = ssub.s32 32, 32
          %207 = vsyncadd [#allocation8], %s206
          %s209 = sshll.u32 [#allocation9], 4
          %s210 = int_to_ptr.vmem [resolvable:$true] %s209
          %212 = dma.hbm_to_vmem [thread:$0]  %s4, 32, %s210, [#allocation8]
        $region28: #{metaformer_block_forward.3} parent=11 // pred_fallthru
          _
      $region12: #{metaformer_block_forward.3} parent=5 // pred_fallthru
        _
      %p213 = scmp.lt.s32.totalorder %s16, 2
      // Predicated region
      $region29: #{metaformer_block_forward.3} parent=5 // pred_check
        %p214 = pneg %p213
      $region30: #{metaformer_block_forward.3} parent=5 // pred_check_branch
        %216 = sbr.rel (%p214) target = $region32
      $region31: #{metaformer_block_forward.3} parent=5 // pred_region
        // Predicated region
        $region33: #{metaformer_block_forward.3} parent=31 // pred_check
          %p217 = pneg %p36
        $region34: #{metaformer_block_forward.3} parent=31 // pred_check_branch
          %219 = sbr.rel (%p217) target = $region36
        $region35: #{metaformer_block_forward.3} parent=31 // pred_region
          %s220 = sand.u32 %s26, 1
          %s221 = scalar_lea.sflag [#allocation3], %s220
          %s222 = sand.u32 %s26, 1
          %s223 = smul.addr %s222, 16
          %s224 = scalar_lea.vmem [#allocation2], %s223
          %s225 = smul.u32 2, %s16
          %s227 = ssub.s32 256, 256
          %228 = vsyncadd %s221, %s227
          %s229 = smul.addr %s225, 128
          %s230 = scalar_lea.hbm %s0, %s229
          %s231 = sshll.u32 %s224, 4
          %s232 = int_to_ptr.vmem [resolvable:$true] %s231
          %237 = dma.hbm_to_vmem [thread:$0]  %s230, 256, %s232, %s221, 128, 128, 8
        $region36: #{metaformer_block_forward.3} parent=31 // pred_fallthru
          _
      $region32: #{metaformer_block_forward.3} parent=5 // pred_fallthru
        _
      %p238 = scmp.le.s32.totalorder 1, %s16
      %p239 = scmp.lt.s32.totalorder %s16, 3
      %p240 = pnand %p238, %p239
      %p241 = pneg %p240
      // Predicated region
      $region37: #{metaformer_block_forward.3} parent=5 // pred_check
        _
      $region38: #{metaformer_block_forward.3} parent=5 // pred_check_branch
        %243 = sbr.rel (%p240) target = $region40
      $region39: #{metaformer_block_forward.3} parent=5 // pred_region
        %s244 = ssub.s32 %s16, 1
        %s245 = sand.u32 %s29, 1
        %s246 = scalar_lea.sflag [#allocation3], %s245
        %s247 = sand.u32 %s29, 1
        %s248 = smul.addr %s247, 16
        %s249 = scalar_lea.vmem [#allocation2], %s248
        // Predicated region
        $region41: #{metaformer_block_forward.3} parent=39 // pred_check
          %p250 = pneg %p42
        $region42: #{metaformer_block_forward.3} parent=39 // pred_check_branch
          %252 = sbr.rel (%p250) target = $region44
        $region43: #{metaformer_block_forward.3} parent=39 // pred_region
          %253 = dma.done %s246, 256
        $region44: #{metaformer_block_forward.3} parent=39 // pred_fallthru
          _
        // Predicated region
        $region45: #{metaformer_block_forward.3} parent=39 // pred_check
          %p254 = pneg %p63
        $region46: #{metaformer_block_forward.3} parent=39 // pred_check_branch
          %256 = sbr.rel (%p254) target = $region48
        $region47: #{metaformer_block_forward.3} parent=39 // pred_region
          %257 = dma.done [#allocation5], 512
        $region48: #{metaformer_block_forward.3} parent=39 // pred_fallthru
          _
        // Predicated region
        $region49: #{metaformer_block_forward.3} parent=39 // pred_check
          %p258 = pneg %p84
        $region50: #{metaformer_block_forward.3} parent=39 // pred_check_branch
          %260 = sbr.rel (%p258) target = $region52
        $region51: #{metaformer_block_forward.3} parent=39 // pred_region
          %261 = dma.done [#allocation5], 32
        $region52: #{metaformer_block_forward.3} parent=39 // pred_fallthru
          _
        // Predicated region
        $region53: #{metaformer_block_forward.3} parent=39 // pred_check
          %p262 = pneg %p105
        $region54: #{metaformer_block_forward.3} parent=39 // pred_check_branch
          %264 = sbr.rel (%p262) target = $region56
        $region55: #{metaformer_block_forward.3} parent=39 // pred_region
          %265 = dma.done [#allocation8], 32
        $region56: #{metaformer_block_forward.3} parent=39 // pred_fallthru
          _
        // Predicated region
        $region57: #{metaformer_block_forward.3} parent=39 // pred_check
          %p266 = pneg %p126
        $region58: #{metaformer_block_forward.3} parent=39 // pred_check_branch
          %268 = sbr.rel (%p266) target = $region60
        $region59: #{metaformer_block_forward.3} parent=39 // pred_region
          %269 = dma.done [#allocation8], 32
        $region60: #{metaformer_block_forward.3} parent=39 // pred_fallthru
          _
        %s270 = sand.u32 %s29, 1
        %s271 = scalar_lea.sflag [#allocation3], %s270
        %s272 = sand.u32 %s29, 1
        %s273 = smul.addr %s272, 16
        %s274 = scalar_lea.vmem [#allocation2], %s273
        %p275 = pneg %p42
        %p276 = pneg %p39
        %p277 = pneg %p63
        %p278 = pneg %p60
        %p279 = pneg %p84
        %p280 = pneg %p81
        %p281 = pneg %p105
        %p282 = pneg %p102
        %p283 = pneg %p126
        %p284 = pneg %p123
        %p285 = pneg %p152
        %p286 = pneg %p149
        %s287 = smul.u32 2, %s21
        %p288 = scmp.lt.s32.totalorder %s287, 3
        %s289 = scalar_select %p288, %s287, 3
        %s290 = smul.addr %s289, 2
        %s291 = smul.addr %s290, 8
        %s292 = scalar_lea.vmem %s5, %s291
        %s293 = smul.u32 2, %s21
        %s294 = smul.u32 2, %s21
        %p295 = scmp.lt.s32.totalorder %s294, 3
        %s296 = scalar_select %p295, %s294, 3
        %s297 = smul.addr %s296, 2
        %s298 = smul.addr %s297, 8
        %s299 = scalar_lea.vmem %s5, %s298
        %s300 = smul.u32 2, %s21
        %v302 = vld [vmem:[%s249] sm:$0xff]
        %v303 = vld [vmem:[%s249 + $0x8] sm:$0xff]
        %v304 = vpack.c.bf16 %v303, %v302
        %v305 = vld [vmem:[#allocation4] sm:$0xff]
        %v306 = vld [vmem:[#allocation4 + $0x8] sm:$0xff]
        %v307 = vld [vmem:[#allocation4 + $0x10] sm:$0xff]
        %v308 = vld [vmem:[#allocation4 + $0x18] sm:$0xff]
        %v309 = vld [vmem:[#allocation6] sm:$0x3]
        %v311 = vlaneseq
        %v312 = vshrl.u32 %v311, 7
        %v313 = vsub.s32 0, %v312
        %v314 = vrot.slane %v309, %v313
        %v315 = vlaneseq
        %v316 = vshrl.u32 %v315, 7
        %v317 = vsub.s32 1, %v316
        %v318 = vrot.slane %v309, %v317
        %v325 = vunpack.c.l.b16 %v305
        %v326 = vunpack.c.h.b16 %v305
        %v327 = vunpack.c.l.b16 %v306
        %v328 = vunpack.c.h.b16 %v306
        %v329 = vunpack.c.l.b16 %v307
        %v330 = vunpack.c.h.b16 %v307
        %v331 = vunpack.c.l.b16 %v308
        %v332 = vunpack.c.h.b16 %v308
        %v333 = vpack.c.b16 %v327, %v325
        %v334 = vpack.c.b16 %v328, %v326
        %v335 = vpack.c.b16 %v331, %v329
        %v336 = vpack.c.b16 %v332, %v330
        %vm341 = vcmask 261120
        %v343 = vsel %vm341, %v304, 0
        %345 = vmatprep.subr.bf16.mxu0 %v334
        %346 = vmatpush1.bf16.msra.mxu0 %v333
        %347 = vmatprep.subr.bf16.mxu0 %v336
        %348 = vmatpush1.bf16.msra.mxu0 %v335
        %349 = vmatprep.subr.bf16.mxu0 0
        %350 = vmatpush1.bf16.msra.mxu0 0
        %351 = vmatprep.subr.bf16.mxu0 0
        %352 = vmatpush1.bf16.msra.mxu0 0
        %353 = vmatprep.subr.bf16.mxu0 0
        %354 = vmatpush1.bf16.msra.mxu0 0
        %355 = vmatprep.subr.bf16.mxu0 0
        %356 = vmatpush1.bf16.msra.mxu0 0
        %357 = vmatprep.subr.bf16.mxu0 0
        %358 = vmatpush1.bf16.msra.mxu0 0
        %359 = vmatprep.subr.bf16.mxu0 0
        %360 = vmatpush1.bf16.msra.mxu0 0
        %361 = vmatprep.subr.bf16.mxu0 0
        %362 = vmatpush1.bf16.msra.mxu0 0
        %363 = vmatprep.subr.bf16.mxu0 0
        %364 = vmatpush1.bf16.msra.mxu0 0
        %365 = vmatprep.subr.bf16.mxu0 0
        %366 = vmatpush1.bf16.msra.mxu0 0
        %367 = vmatprep.subr.bf16.mxu0 0
        %368 = vmatpush1.bf16.msra.mxu0 0
        %369 = vmatprep.subr.bf16.mxu0 0
        %370 = vmatpush1.bf16.msra.mxu0 0
        %371 = vmatprep.subr.bf16.mxu0 0
        %372 = vmatpush1.bf16.msra.mxu0 0
        %373 = vmatprep.subr.bf16.mxu0 0
        %374 = vmatpush1.bf16.msra.mxu0 0
        %375 = vmatprep.subr.bf16.mxu0 0
        %376 = vmatpush1.bf16.msra.mxu0 0
        %377 = vmatprep.mubr.bf16.mxu0 0
        %378 = vmatmul.mubr.bf16.gmra.mrb[0].mxu0 %v343
        %v379 = vpop.f32.mrb[0].mxu0
        %v380 = vadd.f32 %v314, %v379
        %v381 = vpop.f32.mrb[0].mxu0
        %v382 = vadd.f32 %v318, %v381
        %v383 = vpop.f32.mrb[0].mxu0
        %v384 = vadd.f32 %v314, %v383
        %v385 = vpop.f32.mrb[0].mxu0
        %v386 = vadd.f32 %v318, %v385
        %387 = vdwg.mxu0
        %v388 = vadd.f32 %v380, %v382
        %389 = vadd.xlane.f32.xlu0 %v388
        %v390 = vpop.xlane.xlu0 %389
        %v391 = vadd.f32 %v384, %v386
        %392 = vadd.xlane.f32.xlu0 %v391
        %v393 = vpop.xlane.xlu0 %392
        %v394 = vrcp.pop 256.0
        %v395 = vmul.f32 %v390, %v394
        %v396 = vmul.f32 %v393, %v394
        %v397 = vmul.f32 %v380, %v380
        %v398 = vmul.f32 %v382, %v382
        %v399 = vmul.f32 %v384, %v384
        %v400 = vmul.f32 %v386, %v386
        %v401 = vadd.f32 %v397, %v398
        %402 = vadd.xlane.f32.xlu0 %v401
        %v403 = vpop.xlane.xlu0 %402
        %v404 = vadd.f32 %v399, %v400
        %405 = vadd.xlane.f32.xlu0 %v404
        %v406 = vpop.xlane.xlu0 %405
        %v407 = vmul.f32 %v403, %v394
        %v408 = vmul.f32 %v406, %v394
        %v409 = vmul.f32 %v395, %v395
        %v410 = vmul.f32 %v396, %v396
        %v411 = vsub.f32 %v407, %v409
        %v412 = vsub.f32 %v408, %v410
        %v413 = vmax.f32 %v411, 0.0
        %v414 = vmax.f32 %v412, 0.0
        %v415 = vsub.f32 %v380, %v395
        %v416 = vsub.f32 %v382, %v395
        %v417 = vsub.f32 %v384, %v396
        %v418 = vsub.f32 %v386, %v396
        %v419 = vadd.f32 %v413, 1e-05
        %v420 = vadd.f32 %v414, 1e-05
        %v421 = vrsqrt.pop %v419
        %v422 = vrsqrt.pop %v420
        %v423 = vmul.f32 %v415, %v421
        %v424 = vmul.f32 %v416, %v421
        %v425 = vmul.f32 %v417, %v422
        %v426 = vmul.f32 %v418, %v422
        %v427 = vld [vmem:[#allocation7] sm:$0x3]
        %v429 = vlaneseq
        %v430 = vshrl.u32 %v429, 7
        %v431 = vsub.s32 0, %v430
        %v432 = vrot.slane %v427, %v431
        %v433 = vlaneseq
        %v434 = vshrl.u32 %v433, 7
        %v435 = vsub.s32 1, %v434
        %v436 = vrot.slane %v427, %v435
        %v439 = vmul.f32 %v423, %v432
        %v440 = vmul.f32 %v424, %v436
        %v441 = vmul.f32 %v425, %v432
        %v442 = vmul.f32 %v426, %v436
        %v443 = vld [vmem:[#allocation9] sm:$0x3]
        %v445 = vlaneseq
        %v446 = vshrl.u32 %v445, 7
        %v447 = vsub.s32 0, %v446
        %v448 = vrot.slane %v443, %v447
        %v449 = vlaneseq
        %v450 = vshrl.u32 %v449, 7
        %v451 = vsub.s32 1, %v450
        %v452 = vrot.slane %v443, %v451
        %v455 = vadd.f32 %v439, %v448
        %v456 = vadd.f32 %v440, %v452
        %v457 = vadd.f32 %v441, %v448
        %v458 = vadd.f32 %v442, %v452
        %459 = vst [vmem:[%s299] sm:$0xff] %v455
        %460 = vst [vmem:[%s299 + $0x8] sm:$0xff] %v456
        %461 = vst [vmem:[%s299 + $0x10] sm:$0xff] %v457
        %462 = vst [vmem:[%s299 + $0x18] sm:$0xff] %v458
        %s463 = smul.u32 2, %s21
        %p464 = scmp.lt.s32.totalorder %s463, 3
        %s465 = scalar_select %p464, %s463, 3
        %s466 = smul.addr %s465, 2
        %s467 = smul.addr %s466, 8
        %s468 = scalar_lea.vmem %s5, %s467
        // Predicated region
        $region61: #{metaformer_block_forward.3} parent=39 // pred_check
          %p469 = pneg %p149
        $region62: #{metaformer_block_forward.3} parent=39 // pred_check_branch
          %471 = sbr.rel (%p469) target = $region64
        $region63: #{metaformer_block_forward.3} parent=39 // pred_region
          %s472 = smul.u32 2, %s21
        $region64: #{metaformer_block_forward.3} parent=39 // pred_fallthru
          _
      $region40: #{metaformer_block_forward.3} parent=5 // pred_fallthru
        _
      %p473 = scmp.le.s32.totalorder 2, %s16
      // Predicated region
      $region65: #{metaformer_block_forward.3} parent=5 // pred_check
        %p474 = pneg %p473
      $region66: #{metaformer_block_forward.3} parent=5 // pred_check_branch
        %476 = sbr.rel (%p474) target = $region68
      $region67: #{metaformer_block_forward.3} parent=5 // pred_region
        %s477 = ssub.s32 %s16, 2
        // Predicated region
        $region69: #{metaformer_block_forward.3} parent=67 // pred_check
          %p478 = pneg %p155
        $region70: #{metaformer_block_forward.3} parent=67 // pred_check_branch
          %480 = sbr.rel (%p478) target = $region72
        $region71: #{metaformer_block_forward.3} parent=67 // pred_region
          %s481 = smul.u32 2, %s22
          %p482 = scmp.lt.s32.totalorder %s481, 3
          %s483 = scalar_select %p482, %s481, 3
          %s484 = smul.addr %s483, 2
          %s485 = smul.addr %s484, 8
          %s486 = scalar_lea.vmem %s5, %s485
        $region72: #{metaformer_block_forward.3} parent=67 // pred_fallthru
          _
      $region68: #{metaformer_block_forward.3} parent=5 // pred_fallthru
        _
    $region6: #{metaformer_block_forward.3} parent=1 // loop_footer
      %s20 = sadd.s32 1, %s16
    $region7: #{metaformer_block_forward.3} parent=1 // loop_footer_branch
      %15 = sbr.rel target = $region3
    $region8: #{metaformer_block_forward.3} parent=1 // loop_exit
      _
    %487 = vsyncpa [#allocation3], 1
    %s488 = scalar_lea.sflag [#allocation3], 1
    %489 = vsyncpa %s488, 1
    %490 = vsyncpa [#allocation5], 1
    %491 = vsyncpa [#allocation8], 1

// kernel: metaformer_block_forward.5
$region0: #{metaformer_block_forward.5}
  #allocation0 [shape = 'u32[]', space=smem, size = 0x4, offset = 0x4, fixed_abs, tag = 'smem constant byte address 0x4 - core index']
  #allocation1 [shape = 'u32[144,128]{1,0:T(1,128)}', space=vmem, size = 0x12000, scoped, tag = 'internal scratch']
  #allocation2 [shape = 'f32[1,1]{1,0:T(1,128)S(1)}', space=vmem, size = 0x200, scoped, tag = 'scoped memory for metaformer_block_forward.5']
  #allocation3 [shape = 'f32[1,1]{1,0:T(1,128)S(1)}', space=vmem, size = 0x200, scoped, tag = 'scoped memory for metaformer_block_forward.5']
  %s0 = inlined_call_operand.vmem [shape: f32[32,32], index: 0, kind: input, shape index: {}]
  %s1 = inlined_call_operand.vmem [shape: bf16[32,256], index: 1, kind: input, shape index: {}]
  %s2 = inlined_call_operand.vmem [shape: bf16[256,32], index: 2, kind: input, shape index: {}]
  %s3 = inlined_call_operand.vmem [shape: f32[1,32], index: 3, kind: input, shape index: {}]
  %s4 = inlined_call_operand.vmem [shape: f32[1,32], index: 4, kind: input, shape index: {}]
  %s5 = inlined_call_operand.vmem [shape: f32[1,32], index: 5, kind: input, shape index: {}]
  %s6 = inlined_call_operand.vmem [shape: bf16[32,128], index: 6, kind: input, shape index: {}]
  %s7 = inlined_call_operand.vmem [shape: bf16[128,32], index: 7, kind: input, shape index: {}]
  %s8 = inlined_call_operand.<no memory space> [shape: f32[1,1], index: 8, kind: input, shape index: {}]
  %s9 = inlined_call_operand.<no memory space> [shape: f32[1,1], index: 9, kind: input, shape index: {}]
  %s10 = inlined_call_operand.hbm [shape: f32[32,32], index: 10, kind: output, shape index: {}]
  %s11 = sld [smem:[#allocation0]]
  $region73: #{metaformer_block_forward.5} parent=0
    _
  %s13 = ssub.s32 1, %s11
  %s14 = scalar_select 0, %s13, %s11
  %v15 = vstv %s8
  %16 = vst [vmem:[#allocation2] sm:$0x1] %v15
  %v17 = vstv %s9
  %18 = vst [vmem:[#allocation3] sm:$0x1] %v17
  $region1: #{metaformer_block_forward.5} parent=0
    #allocation4 [shape = 'u8[16384]{0}', space=vmem, size = 0x4000, scoped, tag = 'output window, operand 0']
    #allocation5 [shape = 's32[2]{0}', space=sflag, size = 0x8, scoped, tag = 'scoped memory for metaformer_block_forward.5']
    %19 = vsyncpa [#allocation5], 0
    %s20 = scalar_lea.sflag [#allocation5], 1
    %21 = vsyncpa %s20, 0
    loop: start=0, step=1, limit=4
    $region2: #{metaformer_block_forward.5} parent=1 // loop_pre_header
      _
    $region3: #{metaformer_block_forward.5} parent=1 // loop_header
      %s23 = sphi 0, %s27
      %p24 = scmp.ge.s32.totalorder %s23, 4
      %s33 = sphi 0, %s35
      %s36 = sphi 0, %s33
      %s37 = sphi 0, %s36
      %s53 = sphi 0, %s37
      %s59 = sphi 0, %s61
      %s62 = sphi 0, %s59
      %s63 = sphi 0, %s62
      %s79 = sphi 0, %s63
      %s83 = sphi 0, %s83
      %s85 = sphi 0, %s83
      %s86 = sphi 0, %s85
      %s100 = sphi 0, %s86
      %s104 = sphi 0, %s104
      %s106 = sphi 0, %s104
      %s107 = sphi 0, %s106
      %s121 = sphi 0, %s107
      %s125 = sphi 0, %s125
      %s127 = sphi 0, %s125
      %s128 = sphi 0, %s127
      %s142 = sphi 0, %s128
      %s146 = sphi 0, %s146
      %s148 = sphi 0, %s146
      %s149 = sphi 0, %s148
      %s163 = sphi 0, %s149
      %s167 = sphi 0, %s167
      %s169 = sphi 0, %s167
      %s170 = sphi 0, %s169
      %s184 = sphi 0, %s170
      %s188 = sphi 0, %s188
      %s190 = sphi 0, %s188
      %s191 = sphi 0, %s190
      %s205 = sphi 0, %s191
      %s209 = sphi 0, %s209
      %s211 = sphi 0, %s209
      %s212 = sphi 0, %s211
      %s226 = sphi 0, %s212
      %s230 = sphi 0, %s230
      %s232 = sphi 0, %s230
      %s233 = sphi 0, %s232
      %s247 = sphi 0, %s233
      %s253 = sphi 0, %s255
      %s256 = sphi 0, %s253
      %s257 = sphi 0, %s256
      %s273 = sphi 0, %s257
    $region4: #{metaformer_block_forward.5} parent=1 // loop_header_branch
      %26 = sbr.rel (%p24) target = $region8
    $region5: #{metaformer_block_forward.5} parent=1 // loop_body
      %s28 = ssub.s32 %s23, 1
      %s29 = ssub.s32 %s23, 2
      %s30 = sadd.s32 %s23, 1
      %s31 = ssub.s32 %s23, %s30
      %p32 = scmp.eq.s32.totalorder %s31, 0
      %s34 = sadd.s32 %s33, 1
      %s35 = scalar_select %p32, %s33, %s34
      %p38 = pneg %p32
      %p39 = scmp.eq.s32.totalorder %s23, 1
      %p40 = por %p38, %p39
      %p41 = scmp.ne.s32.totalorder %s33, %s36
      %p42 = scmp.eq.s32.totalorder %s23, 0
      %p43 = por %p41, %p42
      %p44 = scmp.ne.s32.totalorder %s33, %s36
      %p45 = scmp.eq.s32.totalorder %s28, 1
      %p46 = por %p44, %p45
      %p47 = scmp.ne.s32.totalorder %s36, %s37
      %p48 = scmp.eq.s32.totalorder %s28, 0
      %p49 = por %p47, %p48
      %p50 = scmp.ne.s32.totalorder %s36, %s37
      %p51 = scmp.eq.s32.totalorder %s29, 1
      %p52 = por %p50, %p51
      %p54 = scmp.ne.s32.totalorder %s37, %s53
      %p55 = scmp.eq.s32.totalorder %s29, 0
      %p56 = por %p54, %p55
      %s57 = ssub.s32 %s23, %s30
      %p58 = scmp.eq.s32.totalorder %s57, 0
      %s60 = sadd.s32 %s59, 1
      %s61 = scalar_select %p58, %s59, %s60
      %p64 = pneg %p58
      %p65 = scmp.eq.s32.totalorder %s23, 1
      %p66 = por %p64, %p65
      %p67 = scmp.ne.s32.totalorder %s59, %s62
      %p68 = scmp.eq.s32.totalorder %s23, 0
      %p69 = por %p67, %p68
      %p70 = scmp.ne.s32.totalorder %s59, %s62
      %p71 = scmp.eq.s32.totalorder %s28, 1
      %p72 = por %p70, %p71
      %p73 = scmp.ne.s32.totalorder %s62, %s63
      %p74 = scmp.eq.s32.totalorder %s28, 0
      %p75 = por %p73, %p74
      %p76 = scmp.ne.s32.totalorder %s62, %s63
      %p77 = scmp.eq.s32.totalorder %s29, 1
      %p78 = por %p76, %p77
      %p80 = scmp.ne.s32.totalorder %s63, %s79
      %p81 = scmp.eq.s32.totalorder %s29, 0
      %p82 = por %p80, %p81
      %s84 = sadd.s32 %s83, 1
      %p87 = scmp.eq.s32.totalorder %s23, 1
      %p88 = scmp.ne.s32.totalorder %s83, %s85
      %p89 = scmp.eq.s32.totalorder %s23, 0
      %p90 = por %p88, %p89
      %p91 = scmp.ne.s32.totalorder %s83, %s85
      %p92 = scmp.eq.s32.totalorder %s28, 1
      %p93 = por %p91, %p92
      %p94 = scmp.ne.s32.totalorder %s85, %s86
      %p95 = scmp.eq.s32.totalorder %s28, 0
      %p96 = por %p94, %p95
      %p97 = scmp.ne.s32.totalorder %s85, %s86
      %p98 = scmp.eq.s32.totalorder %s29, 1
      %p99 = por %p97, %p98
      %p101 = scmp.ne.s32.totalorder %s86, %s100
      %p102 = scmp.eq.s32.totalorder %s29, 0
      %p103 = por %p101, %p102
      %s105 = sadd.s32 %s104, 1
      %p108 = scmp.eq.s32.totalorder %s23, 1
      %p109 = scmp.ne.s32.totalorder %s104, %s106
      %p110 = scmp.eq.s32.totalorder %s23, 0
      %p111 = por %p109, %p110
      %p112 = scmp.ne.s32.totalorder %s104, %s106
      %p113 = scmp.eq.s32.totalorder %s28, 1
      %p114 = por %p112, %p113
      %p115 = scmp.ne.s32.totalorder %s106, %s107
      %p116 = scmp.eq.s32.totalorder %s28, 0
      %p117 = por %p115, %p116
      %p118 = scmp.ne.s32.totalorder %s106, %s107
      %p119 = scmp.eq.s32.totalorder %s29, 1
      %p120 = por %p118, %p119
      %p122 = scmp.ne.s32.totalorder %s107, %s121
      %p123 = scmp.eq.s32.totalorder %s29, 0
      %p124 = por %p122, %p123
      %s126 = sadd.s32 %s125, 1
      %p129 = scmp.eq.s32.totalorder %s23, 1
      %p130 = scmp.ne.s32.totalorder %s125, %s127
      %p131 = scmp.eq.s32.totalorder %s23, 0
      %p132 = por %p130, %p131
      %p133 = scmp.ne.s32.totalorder %s125, %s127
      %p134 = scmp.eq.s32.totalorder %s28, 1
      %p135 = por %p133, %p134
      %p136 = scmp.ne.s32.totalorder %s127, %s128
      %p137 = scmp.eq.s32.totalorder %s28, 0
      %p138 = por %p136, %p137
      %p139 = scmp.ne.s32.totalorder %s127, %s128
      %p140 = scmp.eq.s32.totalorder %s29, 1
      %p141 = por %p139, %p140
      %p143 = scmp.ne.s32.totalorder %s128, %s142
      %p144 = scmp.eq.s32.totalorder %s29, 0
      %p145 = por %p143, %p144
      %s147 = sadd.s32 %s146, 1
      %p150 = scmp.eq.s32.totalorder %s23, 1
      %p151 = scmp.ne.s32.totalorder %s146, %s148
      %p152 = scmp.eq.s32.totalorder %s23, 0
      %p153 = por %p151, %p152
      %p154 = scmp.ne.s32.totalorder %s146, %s148
      %p155 = scmp.eq.s32.totalorder %s28, 1
      %p156 = por %p154, %p155
      %p157 = scmp.ne.s32.totalorder %s148, %s149
      %p158 = scmp.eq.s32.totalorder %s28, 0
      %p159 = por %p157, %p158
      %p160 = scmp.ne.s32.totalorder %s148, %s149
      %p161 = scmp.eq.s32.totalorder %s29, 1
      %p162 = por %p160, %p161
      %p164 = scmp.ne.s32.totalorder %s149, %s163
      %p165 = scmp.eq.s32.totalorder %s29, 0
      %p166 = por %p164, %p165
      %s168 = sadd.s32 %s167, 1
      %p171 = scmp.eq.s32.totalorder %s23, 1
      %p172 = scmp.ne.s32.totalorder %s167, %s169
      %p173 = scmp.eq.s32.totalorder %s23, 0
      %p174 = por %p172, %p173
      %p175 = scmp.ne.s32.totalorder %s167, %s169
      %p176 = scmp.eq.s32.totalorder %s28, 1
      %p177 = por %p175, %p176
      %p178 = scmp.ne.s32.totalorder %s169, %s170
      %p179 = scmp.eq.s32.totalorder %s28, 0
      %p180 = por %p178, %p179
      %p181 = scmp.ne.s32.totalorder %s169, %s170
      %p182 = scmp.eq.s32.totalorder %s29, 1
      %p183 = por %p181, %p182
      %p185 = scmp.ne.s32.totalorder %s170, %s184
      %p186 = scmp.eq.s32.totalorder %s29, 0
      %p187 = por %p185, %p186
      %s189 = sadd.s32 %s188, 1
      %p192 = scmp.eq.s32.totalorder %s23, 1
      %p193 = scmp.ne.s32.totalorder %s188, %s190
      %p194 = scmp.eq.s32.totalorder %s23, 0
      %p195 = por %p193, %p194
      %p196 = scmp.ne.s32.totalorder %s188, %s190
      %p197 = scmp.eq.s32.totalorder %s28, 1
      %p198 = por %p196, %p197
      %p199 = scmp.ne.s32.totalorder %s190, %s191
      %p200 = scmp.eq.s32.totalorder %s28, 0
      %p201 = por %p199, %p200
      %p202 = scmp.ne.s32.totalorder %s190, %s191
      %p203 = scmp.eq.s32.totalorder %s29, 1
      %p204 = por %p202, %p203
      %p206 = scmp.ne.s32.totalorder %s191, %s205
      %p207 = scmp.eq.s32.totalorder %s29, 0
      %p208 = por %p206, %p207
      %s210 = sadd.s32 %s209, 1
      %p213 = scmp.eq.s32.totalorder %s23, 1
      %p214 = scmp.ne.s32.totalorder %s209, %s211
      %p215 = scmp.eq.s32.totalorder %s23, 0
      %p216 = por %p214, %p215
      %p217 = scmp.ne.s32.totalorder %s209, %s211
      %p218 = scmp.eq.s32.totalorder %s28, 1
      %p219 = por %p217, %p218
      %p220 = scmp.ne.s32.totalorder %s211, %s212
      %p221 = scmp.eq.s32.totalorder %s28, 0
      %p222 = por %p220, %p221
      %p223 = scmp.ne.s32.totalorder %s211, %s212
      %p224 = scmp.eq.s32.totalorder %s29, 1
      %p225 = por %p223, %p224
      %p227 = scmp.ne.s32.totalorder %s212, %s226
      %p228 = scmp.eq.s32.totalorder %s29, 0
      %p229 = por %p227, %p228
      %s231 = sadd.s32 %s230, 1
      %p234 = scmp.eq.s32.totalorder %s23, 1
      %p235 = scmp.ne.s32.totalorder %s230, %s232
      %p236 = scmp.eq.s32.totalorder %s23, 0
      %p237 = por %p235, %p236
      %p238 = scmp.ne.s32.totalorder %s230, %s232
      %p239 = scmp.eq.s32.totalorder %s28, 1
      %p240 = por %p238, %p239
      %p241 = scmp.ne.s32.totalorder %s232, %s233
      %p242 = scmp.eq.s32.totalorder %s28, 0
      %p243 = por %p241, %p242
      %p244 = scmp.ne.s32.totalorder %s232, %s233
      %p245 = scmp.eq.s32.totalorder %s29, 1
      %p246 = por %p244, %p245
      %p248 = scmp.ne.s32.totalorder %s233, %s247
      %p249 = scmp.eq.s32.totalorder %s29, 0
      %p250 = por %p248, %p249
      %s251 = ssub.s32 %s23, %s30
      %p252 = scmp.eq.s32.totalorder %s251, 0
      %s254 = sadd.s32 %s253, 1
      %s255 = scalar_select %p252, %s253, %s254
      %p258 = pneg %p252
      %p259 = scmp.eq.s32.totalorder %s23, 1
      %p260 = por %p258, %p259
      %p261 = scmp.ne.s32.totalorder %s253, %s256
      %p262 = scmp.eq.s32.totalorder %s23, 0
      %p263 = por %p261, %p262
      %p264 = scmp.ne.s32.totalorder %s253, %s256
      %p265 = scmp.eq.s32.totalorder %s28, 1
      %p266 = por %p264, %p265
      %p267 = scmp.ne.s32.totalorder %s256, %s257
      %p268 = scmp.eq.s32.totalorder %s28, 0
      %p269 = por %p267, %p268
      %p270 = scmp.ne.s32.totalorder %s256, %s257
      %p271 = scmp.eq.s32.totalorder %s29, 1
      %p272 = por %p270, %p271
      %p274 = scmp.ne.s32.totalorder %s257, %s273
      %p275 = scmp.eq.s32.totalorder %s29, 0
      %p276 = por %p274, %p275
      %p277 = scmp.le.s32.totalorder 1, %s23
      %p278 = scmp.lt.s32.totalorder %s23, 3
      %p279 = pnand %p277, %p278
      %p280 = pneg %p279
      // Predicated region
      $region9: #{metaformer_block_forward.5} parent=5 // pred_check
        _
      $region10: #{metaformer_block_forward.5} parent=5 // pred_check_branch
        %282 = sbr.rel (%p279) target = $region12
      $region11: #{metaformer_block_forward.5} parent=5 // pred_region
        %s283 = ssub.s32 %s23, 1
        // Predicated region
        $region13: #{metaformer_block_forward.5} parent=11 // pred_check
          %p284 = pneg %p96
        $region14: #{metaformer_block_forward.5} parent=11 // pred_check_branch
          %286 = sbr.rel (%p284) target = $region16
        $region15: #{metaformer_block_forward.5} parent=11 // pred_region
          _
        $region16: #{metaformer_block_forward.5} parent=11 // pred_fallthru
          _
        // Predicated region
        $region17: #{metaformer_block_forward.5} parent=11 // pred_check
          %p287 = pneg %p117
        $region18: #{metaformer_block_forward.5} parent=11 // pred_check_branch
          %289 = sbr.rel (%p287) target = $region20
        $region19: #{metaformer_block_forward.5} parent=11 // pred_region
          _
        $region20: #{metaformer_block_forward.5} parent=11 // pred_fallthru
          _
        // Predicated region
        $region21: #{metaformer_block_forward.5} parent=11 // pred_check
          %p290 = pneg %p138
        $region22: #{metaformer_block_forward.5} parent=11 // pred_check_branch
          %292 = sbr.rel (%p290) target = $region24
        $region23: #{metaformer_block_forward.5} parent=11 // pred_region
          _
        $region24: #{metaformer_block_forward.5} parent=11 // pred_fallthru
          _
        // Predicated region
        $region25: #{metaformer_block_forward.5} parent=11 // pred_check
          %p293 = pneg %p159
        $region26: #{metaformer_block_forward.5} parent=11 // pred_check_branch
          %295 = sbr.rel (%p293) target = $region28
        $region27: #{metaformer_block_forward.5} parent=11 // pred_region
          _
        $region28: #{metaformer_block_forward.5} parent=11 // pred_fallthru
          _
        // Predicated region
        $region29: #{metaformer_block_forward.5} parent=11 // pred_check
          %p296 = pneg %p180
        $region30: #{metaformer_block_forward.5} parent=11 // pred_check_branch
          %298 = sbr.rel (%p296) target = $region32
        $region31: #{metaformer_block_forward.5} parent=11 // pred_region
          _
        $region32: #{metaformer_block_forward.5} parent=11 // pred_fallthru
          _
        // Predicated region
        $region33: #{metaformer_block_forward.5} parent=11 // pred_check
          %p299 = pneg %p201
        $region34: #{metaformer_block_forward.5} parent=11 // pred_check_branch
          %301 = sbr.rel (%p299) target = $region36
        $region35: #{metaformer_block_forward.5} parent=11 // pred_region
          _
        $region36: #{metaformer_block_forward.5} parent=11 // pred_fallthru
          _
        // Predicated region
        $region37: #{metaformer_block_forward.5} parent=11 // pred_check
          %p302 = pneg %p222
        $region38: #{metaformer_block_forward.5} parent=11 // pred_check_branch
          %304 = sbr.rel (%p302) target = $region40
        $region39: #{metaformer_block_forward.5} parent=11 // pred_region
          _
        $region40: #{metaformer_block_forward.5} parent=11 // pred_fallthru
          _
        // Predicated region
        $region41: #{metaformer_block_forward.5} parent=11 // pred_check
          %p305 = pneg %p243
        $region42: #{metaformer_block_forward.5} parent=11 // pred_check_branch
          %307 = sbr.rel (%p305) target = $region44
        $region43: #{metaformer_block_forward.5} parent=11 // pred_region
          _
        $region44: #{metaformer_block_forward.5} parent=11 // pred_fallthru
          _
      $region12: #{metaformer_block_forward.5} parent=5 // pred_fallthru
        _
      %p308 = scmp.lt.s32.totalorder %s23, 2
      // Predicated region
      $region45: #{metaformer_block_forward.5} parent=5 // pred_check
        %p309 = pneg %p308
      $region46: #{metaformer_block_forward.5} parent=5 // pred_check_branch
        %311 = sbr.rel (%p309) target = $region48
      $region47: #{metaformer_block_forward.5} parent=5 // pred_region
        // Predicated region
        $region49: #{metaformer_block_forward.5} parent=47 // pred_check
          %p312 = pneg %p43
        $region50: #{metaformer_block_forward.5} parent=47 // pred_check_branch
          %314 = sbr.rel (%p312) target = $region52
        $region51: #{metaformer_block_forward.5} parent=47 // pred_region
          %s315 = smul.u32 2, %s23
          %p316 = scmp.lt.s32.totalorder %s315, 3
          %s317 = scalar_select %p316, %s315, 3
          %s318 = smul.addr %s317, 8
          %s319 = scalar_lea.vmem %s0, %s318
          %s320 = smul.u32 2, %s23
        $region52: #{metaformer_block_forward.5} parent=47 // pred_fallthru
          _
        // Predicated region
        $region53: #{metaformer_block_forward.5} parent=47 // pred_check
          %p321 = pneg %p69
        $region54: #{metaformer_block_forward.5} parent=47 // pred_check_branch
          %323 = sbr.rel (%p321) target = $region56
        $region55: #{metaformer_block_forward.5} parent=47 // pred_region
          %s324 = smul.u32 2, %s23
          %p325 = scmp.lt.s32.totalorder %s324, 3
          %s326 = scalar_select %p325, %s324, 3
          %s327 = smul.addr %s326, 2
          %s328 = smul.addr %s327, 4
          %s329 = scalar_lea.vmem %s1, %s328
          %s330 = smul.u32 2, %s23
        $region56: #{metaformer_block_forward.5} parent=47 // pred_fallthru
          _
      $region48: #{metaformer_block_forward.5} parent=5 // pred_fallthru
        _
      %p331 = scmp.le.s32.totalorder 1, %s23
      %p332 = scmp.lt.s32.totalorder %s23, 3
      %p333 = pnand %p331, %p332
      %p334 = pneg %p333
      // Predicated region
      $region57: #{metaformer_block_forward.5} parent=5 // pred_check
        _
      $region58: #{metaformer_block_forward.5} parent=5 // pred_check_branch
        %336 = sbr.rel (%p333) target = $region60
      $region59: #{metaformer_block_forward.5} parent=5 // pred_region
        %s337 = ssub.s32 %s23, 1
        %s338 = smul.u32 2, %s28
        %p339 = scmp.lt.s32.totalorder %s338, 3
        %s340 = scalar_select %p339, %s338, 3
        %s341 = smul.addr %s340, 8
        %s342 = scalar_lea.vmem %s0, %s341
        %p343 = pneg %p49
        %p344 = pneg %p46
        %s345 = smul.u32 2, %s28
        %p346 = scmp.lt.s32.totalorder %s345, 3
        %s347 = scalar_select %p346, %s345, 3
        %s348 = smul.addr %s347, 2
        %s349 = smul.addr %s348, 4
        %s350 = scalar_lea.vmem %s1, %s349
        %p351 = pneg %p75
        %p352 = pneg %p72
        %p353 = pneg %p96
        %p354 = pneg %p93
        %p355 = pneg %p117
        %p356 = pneg %p114
        %p357 = pneg %p138
        %p358 = pneg %p135
        %p359 = pneg %p159
        %p360 = pneg %p156
        %p361 = pneg %p180
        %p362 = pneg %p177
        %p363 = pneg %p201
        %p364 = pneg %p198
        %p365 = pneg %p222
        %p366 = pneg %p219
        %p367 = pneg %p243
        %p368 = pneg %p240
        %p369 = pneg %p269
        %p370 = pneg %p266
        %s371 = sand.u32 %s256, 1
        %s372 = scalar_lea.sflag [#allocation5], %s371
        %s373 = sand.u32 %s256, 1
        %s374 = smul.addr %s373, 16
        %s375 = scalar_lea.vmem [#allocation4], %s374
        %s376 = smul.u32 2, %s28
        %p377 = scmp.lt.s32.totalorder %s376, 3
        %s378 = scalar_select %p377, %s376, 3
        %s379 = smul.addr %s378, 8
        %s380 = scalar_lea.vmem %s0, %s379
        %s381 = smul.u32 2, %s28
        %s382 = smul.u32 2, %s28
        %p383 = scmp.lt.s32.totalorder %s382, 3
        %s384 = scalar_select %p383, %s382, 3
        %s385 = smul.addr %s384, 2
        %s386 = smul.addr %s385, 4
        %s387 = scalar_lea.vmem %s1, %s386
        %s388 = smul.u32 2, %s28
        %s389 = smul.u32 2, %s28
        %v391 = vld [vmem:[%s380] sm:$0xff]
        %v392 = vld [vmem:[%s380 + $0x8] sm:$0xff]
        %v393 = vld [vmem:[%s387] sm:$0xff]
        %v394 = vld [vmem:[%s387 + $0x8] sm:$0xff]
        %v395 = vld [vmem:[%s2] sm:$0xf]
        %v396 = vld [vmem:[%s2 + $0x4] sm:$0xf]
        %v397 = vld [vmem:[%s2 + $0x8] sm:$0xf]
        %v398 = vld [vmem:[%s2 + $0xc] sm:$0xf]
        %v399 = vld [vmem:[%s2 + $0x10] sm:$0xf]
        %v400 = vld [vmem:[%s2 + $0x14] sm:$0xf]
        %v401 = vld [vmem:[%s2 + $0x18] sm:$0xf]
        %v402 = vld [vmem:[%s2 + $0x1c] sm:$0xf]
        %v403 = vld [vmem:[%s2 + $0x20] sm:$0xf]
        %v404 = vld [vmem:[%s2 + $0x24] sm:$0xf]
        %v405 = vld [vmem:[%s2 + $0x28] sm:$0xf]
        %v406 = vld [vmem:[%s2 + $0x2c] sm:$0xf]
        %v407 = vld [vmem:[%s2 + $0x30] sm:$0xf]
        %v408 = vld [vmem:[%s2 + $0x34] sm:$0xf]
        %v409 = vld [vmem:[%s2 + $0x38] sm:$0xf]
        %v410 = vld [vmem:[%s2 + $0x3c] sm:$0xf]
        %v411 = vld [vmem:[%s2 + $0x40] sm:$0xf]
        %v412 = vld [vmem:[%s2 + $0x44] sm:$0xf]
        %v413 = vld [vmem:[%s2 + $0x48] sm:$0xf]
        %v414 = vld [vmem:[%s2 + $0x4c] sm:$0xf]
        %v415 = vld [vmem:[%s2 + $0x50] sm:$0xf]
        %v416 = vld [vmem:[%s2 + $0x54] sm:$0xf]
        %v417 = vld [vmem:[%s2 + $0x58] sm:$0xf]
        %v418 = vld [vmem:[%s2 + $0x5c] sm:$0xf]
        %v419 = vld [vmem:[%s2 + $0x60] sm:$0xf]
        %v420 = vld [vmem:[%s2 + $0x64] sm:$0xf]
        %v421 = vld [vmem:[%s2 + $0x68] sm:$0xf]
        %v422 = vld [vmem:[%s2 + $0x6c] sm:$0xf]
        %v423 = vld [vmem:[%s2 + $0x70] sm:$0xf]
        %v424 = vld [vmem:[%s2 + $0x74] sm:$0xf]
        %v425 = vld [vmem:[%s2 + $0x78] sm:$0xf]
        %v426 = vld [vmem:[%s2 + $0x7c] sm:$0xf]
        %v429 = vunpack.c.l.b16 %v393
        %v430 = vunpack.c.h.b16 %v393
        %v431 = vunpack.c.l.b16 %v394
        %v432 = vunpack.c.h.b16 %v394
        %v433 = vpack.c.b16 %v431, %v429
        %v434 = vpack.c.b16 %v432, %v430
        %v469 = vunpack.c.l.b16 %v395
        %v470 = vunpack.c.l.b16 %v396
        %v471 = vunpack.c.l.b16 %v397
        %v472 = vunpack.c.l.b16 %v398
        %v473 = vunpack.c.l.b16 %v399
        %v474 = vunpack.c.l.b16 %v400
        %v475 = vunpack.c.l.b16 %v401
        %v476 = vunpack.c.l.b16 %v402
        %v477 = vunpack.c.l.b16 %v403
        %v478 = vunpack.c.l.b16 %v404
        %v479 = vunpack.c.l.b16 %v405
        %v480 = vunpack.c.l.b16 %v406
        %v481 = vunpack.c.l.b16 %v407
        %v482 = vunpack.c.l.b16 %v408
        %v483 = vunpack.c.l.b16 %v409
        %v484 = vunpack.c.l.b16 %v410
        %v485 = vunpack.c.l.b16 %v411
        %v486 = vunpack.c.l.b16 %v412
        %v487 = vunpack.c.l.b16 %v413
        %v488 = vunpack.c.l.b16 %v414
        %v489 = vunpack.c.l.b16 %v415
        %v490 = vunpack.c.l.b16 %v416
        %v491 = vunpack.c.l.b16 %v417
        %v492 = vunpack.c.l.b16 %v418
        %v493 = vunpack.c.l.b16 %v419
        %v494 = vunpack.c.l.b16 %v420
        %v495 = vunpack.c.l.b16 %v421
        %v496 = vunpack.c.l.b16 %v422
        %v497 = vunpack.c.l.b16 %v423
        %v498 = vunpack.c.l.b16 %v424
        %v499 = vunpack.c.l.b16 %v425
        %v500 = vunpack.c.l.b16 %v426
        %v501 = vpack.c.b16 %v470, %v469
        %v502 = vpack.c.b16 %v472, %v471
        %v503 = vpack.c.b16 %v474, %v473
        %v504 = vpack.c.b16 %v476, %v475
        %v505 = vpack.c.b16 %v478, %v477
        %v506 = vpack.c.b16 %v480, %v479
        %v507 = vpack.c.b16 %v482, %v481
        %v508 = vpack.c.b16 %v484, %v483
        %v509 = vpack.c.b16 %v486, %v485
        %v510 = vpack.c.b16 %v488, %v487
        %v511 = vpack.c.b16 %v490, %v489
        %v512 = vpack.c.b16 %v492, %v491
        %v513 = vpack.c.b16 %v494, %v493
        %v514 = vpack.c.b16 %v496, %v495
        %v515 = vpack.c.b16 %v498, %v497
        %v516 = vpack.c.b16 %v500, %v499
        %533 = vmatprep.subr.bf16.mxu0 0
        %534 = vmatpush1.bf16.msra.mxu0 %v501
        %535 = vmatprep.subr.bf16.mxu0 0
        %536 = vmatpush1.bf16.msra.mxu0 %v502
        %537 = vmatprep.subr.bf16.mxu0 0
        %538 = vmatpush1.bf16.msra.mxu0 %v503
        %539 = vmatprep.subr.bf16.mxu0 0
        %540 = vmatpush1.bf16.msra.mxu0 %v504
        %541 = vmatprep.subr.bf16.mxu0 0
        %542 = vmatpush1.bf16.msra.mxu0 %v505
        %543 = vmatprep.subr.bf16.mxu0 0
        %544 = vmatpush1.bf16.msra.mxu0 %v506
        %545 = vmatprep.subr.bf16.mxu0 0
        %546 = vmatpush1.bf16.msra.mxu0 %v507
        %547 = vmatprep.subr.bf16.mxu0 0
        %548 = vmatpush1.bf16.msra.mxu0 %v508
        %549 = vmatprep.subr.bf16.mxu0 0
        %550 = vmatpush1.bf16.msra.mxu0 %v509
        %551 = vmatprep.subr.bf16.mxu0 0
        %552 = vmatpush1.bf16.msra.mxu0 %v510
        %553 = vmatprep.subr.bf16.mxu0 0
        %554 = vmatpush1.bf16.msra.mxu0 %v511
        %555 = vmatprep.subr.bf16.mxu0 0
        %556 = vmatpush1.bf16.msra.mxu0 %v512
        %557 = vmatprep.subr.bf16.mxu0 0
        %558 = vmatpush1.bf16.msra.mxu0 %v513
        %559 = vmatprep.subr.bf16.mxu0 0
        %560 = vmatpush1.bf16.msra.mxu0 %v514
        %561 = vmatprep.subr.bf16.mxu0 0
        %562 = vmatpush1.bf16.msra.mxu0 %v515
        %563 = vmatprep.subr.bf16.mxu0 0
        %564 = vmatpush1.bf16.msra.mxu0 %v516
        %565 = vmatprep.mubr.bf16.mxu0 %v434
        %566 = vmatmul.mubr.bf16.gmra.mrb[0].mxu0 %v433
        %v567 = vpop.f32.mrb[0].mxu0
        %v568 = vadd.f32 0.0, %v567
        %v569 = vpop.f32.mrb[0].mxu0
        %v570 = vpop.f32.mrb[0].mxu0
        %v571 = vadd.f32 0.0, %v570
        %v572 = vpop.f32.mrb[0].mxu0
        %573 = vdwg.mxu0
        %v574 = vadd.f32 %v391, %v568
        %v575 = vadd.f32 %v392, %v571
        %v576 = vld [vmem:[%s3] sm:$0x1]
        %v578 = vlaneseq
        %v579 = vshrl.u32 %v578, 7
        %v580 = vsub.s32 0, %v579
        %v581 = vrot.slane %v576, %v580
        %v583 = vadd.f32 %v574, %v581
        %v584 = vadd.f32 %v575, %v581
        %vm585 = vcmask 261120
        %v586 = vsel %vm585, %v583, 0.0
        %587 = vadd.xlane.f32.xlu0 %v586
        %v588 = vpop.xlane.xlu0 %587
        %v589 = vsel %vm585, %v584, 0.0
        %590 = vadd.xlane.f32.xlu0 %v589
        %v591 = vpop.xlane.xlu0 %590
        %v592 = vrcp.pop 32.0
        %v593 = vmul.f32 %v588, %v592
        %v594 = vmul.f32 %v591, %v592
        %v595 = vmul.f32 %v583, %v583
        %v596 = vmul.f32 %v584, %v584
        %v597 = vsel %vm585, %v595, 0.0
        %598 = vadd.xlane.f32.xlu0 %v597
        %v599 = vpop.xlane.xlu0 %598
        %v600 = vsel %vm585, %v596, 0.0
        %601 = vadd.xlane.f32.xlu0 %v600
        %v602 = vpop.xlane.xlu0 %601
        %v603 = vmul.f32 %v599, %v592
        %v604 = vmul.f32 %v602, %v592
        %v605 = vmul.f32 %v593, %v593
        %v606 = vmul.f32 %v594, %v594
        %v607 = vsub.f32 %v603, %v605
        %v608 = vsub.f32 %v604, %v606
        %v609 = vmax.f32 %v607, 0.0
        %v610 = vmax.f32 %v608, 0.0
        %v611 = vsub.f32 %v583, %v593
        %v612 = vsub.f32 %v584, %v594
        %v613 = vadd.f32 %v609, 1e-05
        %v614 = vadd.f32 %v610, 1e-05
        %v615 = vrsqrt.pop %v613
        %v616 = vrsqrt.pop %v614
        %v617 = vmul.f32 %v611, %v615
        %v618 = vmul.f32 %v612, %v616
        %v619 = vld [vmem:[%s4] sm:$0x1]
        %v621 = vlaneseq
        %v622 = vshrl.u32 %v621, 7
        %v623 = vsub.s32 0, %v622
        %v624 = vrot.slane %v619, %v623
        %v626 = vmul.f32 %v617, %v624
        %v627 = vmul.f32 %v618, %v624
        %v628 = vld [vmem:[%s5] sm:$0x1]
        %v630 = vlaneseq
        %v631 = vshrl.u32 %v630, 7
        %v632 = vsub.s32 0, %v631
        %v633 = vrot.slane %v628, %v632
        %v635 = vadd.f32 %v626, %v633
        %v636 = vadd.f32 %v627, %v633
        %v637 = vpack.c.bf16 %v636, %v635
        %v638 = vld [vmem:[%s6] sm:$0xf]
        %v639 = vld [vmem:[%s6 + $0x4] sm:$0xf]
        %v640 = vld [vmem:[%s6 + $0x8] sm:$0xf]
        %v641 = vld [vmem:[%s6 + $0xc] sm:$0xf]
        %v646 = vunpack.c.l.b16 %v638
        %v647 = vunpack.c.l.b16 %v639
        %v648 = vunpack.c.l.b16 %v640
        %v649 = vunpack.c.l.b16 %v641
        %v650 = vpack.c.b16 %v647, %v646
        %v651 = vpack.c.b16 %v649, %v648
        %v655 = vsel %vm585, %v637, 0
        %657 = vmatprep.subr.bf16.mxu0 0
        %658 = vmatpush1.bf16.msra.mxu0 %v650
        %659 = vmatprep.subr.bf16.mxu0 0
        %660 = vmatpush1.bf16.msra.mxu0 %v651
        %661 = vmatprep.subr.bf16.mxu0 0
        %662 = vmatpush1.bf16.msra.mxu0 0
        %663 = vmatprep.subr.bf16.mxu0 0
        %664 = vmatpush1.bf16.msra.mxu0 0
        %665 = vmatprep.subr.bf16.mxu0 0
        %666 = vmatpush1.bf16.msra.mxu0 0
        %667 = vmatprep.subr.bf16.mxu0 0
        %668 = vmatpush1.bf16.msra.mxu0 0
        %669 = vmatprep.subr.bf16.mxu0 0
        %670 = vmatpush1.bf16.msra.mxu0 0
        %671 = vmatprep.subr.bf16.mxu0 0
        %672 = vmatpush1.bf16.msra.mxu0 0
        %673 = vmatprep.subr.bf16.mxu0 0
        %674 = vmatpush1.bf16.msra.mxu0 0
        %675 = vmatprep.subr.bf16.mxu0 0
        %676 = vmatpush1.bf16.msra.mxu0 0
        %677 = vmatprep.subr.bf16.mxu0 0
        %678 = vmatpush1.bf16.msra.mxu0 0
        %679 = vmatprep.subr.bf16.mxu0 0
        %680 = vmatpush1.bf16.msra.mxu0 0
        %681 = vmatprep.subr.bf16.mxu0 0
        %682 = vmatpush1.bf16.msra.mxu0 0
        %683 = vmatprep.subr.bf16.mxu0 0
        %684 = vmatpush1.bf16.msra.mxu0 0
        %685 = vmatprep.subr.bf16.mxu0 0
        %686 = vmatpush1.bf16.msra.mxu0 0
        %687 = vmatprep.subr.bf16.mxu0 0
        %688 = vmatpush1.bf16.msra.mxu0 0
        %689 = vmatprep.mubr.bf16.mxu0 0
        %690 = vmatmul.mubr.bf16.gmra.mrb[0].mxu0 %v655
        %v691 = vpop.f32.mrb[0].mxu0
        %v692 = vadd.f32 0.0, %v691
        %v693 = vpop.f32.mrb[0].mxu0
        %v694 = vpop.f32.mrb[0].mxu0
        %v695 = vadd.f32 0.0, %v694
        %v696 = vpop.f32.mrb[0].mxu0
        %697 = vdwg.mxu0
        %v698 = vmax.f32 %v692, 0.0
        %v699 = vmax.f32 %v695, 0.0
        %v700 = vmin.f32 %v698, 6.0
        %v701 = vmin.f32 %v699, 6.0
        %v702 = vld [vmem:[#allocation2] sm:$0x1]
        %v703 = vmul.f32 %v700, %v700
        %v704 = vmul.f32 %v701, %v701
        %v706 = vlaneseq
        %v707 = vshrl.u32 %v706, 7
        %v708 = vsub.s32 0, %v707
        %v709 = vrot.slane %v702, %v708
        %710 = vset.pattern.permute.xlu0 0
        %711 = vperm.xlu0 %710, %v709
        %v712 = vpop.permute.xlu0 %711
        %v714 = vmul.f32 %v712, %v703
        %v715 = vmul.f32 %v712, %v704
        %v716 = vld [vmem:[#allocation3] sm:$0x1]
        %v718 = vlaneseq
        %v719 = vshrl.u32 %v718, 7
        %v720 = vsub.s32 0, %v719
        %v721 = vrot.slane %v716, %v720
        %722 = vset.pattern.permute.xlu0 0
        %723 = vperm.xlu0 %722, %v721
        %v724 = vpop.permute.xlu0 %723
        %v726 = vadd.f32 %v714, %v724
        %v727 = vadd.f32 %v715, %v724
        %v728 = vpack.c.bf16 %v727, %v726
        %v729 = vld [vmem:[%s7] sm:$0xf]
        %v730 = vld [vmem:[%s7 + $0x4] sm:$0xf]
        %v731 = vld [vmem:[%s7 + $0x8] sm:$0xf]
        %v732 = vld [vmem:[%s7 + $0xc] sm:$0xf]
        %v733 = vld [vmem:[%s7 + $0x10] sm:$0xf]
        %v734 = vld [vmem:[%s7 + $0x14] sm:$0xf]
        %v735 = vld [vmem:[%s7 + $0x18] sm:$0xf]
        %v736 = vld [vmem:[%s7 + $0x1c] sm:$0xf]
        %v737 = vld [vmem:[%s7 + $0x20] sm:$0xf]
        %v738 = vld [vmem:[%s7 + $0x24] sm:$0xf]
        %v739 = vld [vmem:[%s7 + $0x28] sm:$0xf]
        %v740 = vld [vmem:[%s7 + $0x2c] sm:$0xf]
        %v741 = vld [vmem:[%s7 + $0x30] sm:$0xf]
        %v742 = vld [vmem:[%s7 + $0x34] sm:$0xf]
        %v743 = vld [vmem:[%s7 + $0x38] sm:$0xf]
        %v744 = vld [vmem:[%s7 + $0x3c] sm:$0xf]
        %v761 = vunpack.c.l.b16 %v729
        %v762 = vunpack.c.l.b16 %v730
        %v763 = vunpack.c.l.b16 %v731
        %v764 = vunpack.c.l.b16 %v732
        %v765 = vunpack.c.l.b16 %v733
        %v766 = vunpack.c.l.b16 %v734
        %v767 = vunpack.c.l.b16 %v735
        %v768 = vunpack.c.l.b16 %v736
        %v769 = vunpack.c.l.b16 %v737
        %v770 = vunpack.c.l.b16 %v738
        %v771 = vunpack.c.l.b16 %v739
        %v772 = vunpack.c.l.b16 %v740
        %v773 = vunpack.c.l.b16 %v741
        %v774 = vunpack.c.l.b16 %v742
        %v775 = vunpack.c.l.b16 %v743
        %v776 = vunpack.c.l.b16 %v744
        %v777 = vpack.c.b16 %v762, %v761
        %v778 = vpack.c.b16 %v764, %v763
        %v779 = vpack.c.b16 %v766, %v765
        %v780 = vpack.c.b16 %v768, %v767
        %v781 = vpack.c.b16 %v770, %v769
        %v782 = vpack.c.b16 %v772, %v771
        %v783 = vpack.c.b16 %v774, %v773
        %v784 = vpack.c.b16 %v776, %v775
        %793 = vmatprep.subr.bf16.mxu0 0
        %794 = vmatpush1.bf16.msra.mxu0 %v777
        %795 = vmatprep.subr.bf16.mxu0 0
        %796 = vmatpush1.bf16.msra.mxu0 %v778
        %797 = vmatprep.subr.bf16.mxu0 0
        %798 = vmatpush1.bf16.msra.mxu0 %v779
        %799 = vmatprep.subr.bf16.mxu0 0
        %800 = vmatpush1.bf16.msra.mxu0 %v780
        %801 = vmatprep.subr.bf16.mxu0 0
        %802 = vmatpush1.bf16.msra.mxu0 %v781
        %803 = vmatprep.subr.bf16.mxu0 0
        %804 = vmatpush1.bf16.msra.mxu0 %v782
        %805 = vmatprep.subr.bf16.mxu0 0
        %806 = vmatpush1.bf16.msra.mxu0 %v783
        %807 = vmatprep.subr.bf16.mxu0 0
        %808 = vmatpush1.bf16.msra.mxu0 %v784
        %809 = vmatprep.subr.bf16.mxu0 0
        %810 = vmatpush1.bf16.msra.mxu0 0
        %811 = vmatprep.subr.bf16.mxu0 0
        %812 = vmatpush1.bf16.msra.mxu0 0
        %813 = vmatprep.subr.bf16.mxu0 0
        %814 = vmatpush1.bf16.msra.mxu0 0
        %815 = vmatprep.subr.bf16.mxu0 0
        %816 = vmatpush1.bf16.msra.mxu0 0
        %817 = vmatprep.subr.bf16.mxu0 0
        %818 = vmatpush1.bf16.msra.mxu0 0
        %819 = vmatprep.subr.bf16.mxu0 0
        %820 = vmatpush1.bf16.msra.mxu0 0
        %821 = vmatprep.subr.bf16.mxu0 0
        %822 = vmatpush1.bf16.msra.mxu0 0
        %823 = vmatprep.subr.bf16.mxu0 0
        %824 = vmatpush1.bf16.msra.mxu0 0
        %825 = vmatprep.mubr.bf16.mxu0 0
        %826 = vmatmul.mubr.bf16.gmra.mrb[0].mxu0 %v728
        %v827 = vpop.f32.mrb[0].mxu0
        %v828 = vadd.f32 0.0, %v827
        %v829 = vpop.f32.mrb[0].mxu0
        %v830 = vpop.f32.mrb[0].mxu0
        %v831 = vadd.f32 0.0, %v830
        %v832 = vpop.f32.mrb[0].mxu0
        %833 = vdwg.mxu0
        %v834 = vadd.f32 %v583, %v828
        %v835 = vadd.f32 %v584, %v831
        %836 = vst.msk [vmem:[%s375] sm:$0xff] %vm585, %v834
        %837 = vst.msk [vmem:[%s375 + $0x8] sm:$0xff] %vm585, %v835
        %s838 = sand.u32 %s256, 1
        %s839 = scalar_lea.sflag [#allocation5], %s838
        %s840 = sand.u32 %s256, 1
        %s841 = smul.addr %s840, 16
        %s842 = scalar_lea.vmem [#allocation4], %s841
        // Predicated region
        $region61: #{metaformer_block_forward.5} parent=59 // pred_check
          %p843 = pneg %p266
        $region62: #{metaformer_block_forward.5} parent=59 // pred_check_branch
          %845 = sbr.rel (%p843) target = $region64
        $region63: #{metaformer_block_forward.5} parent=59 // pred_region
          %s846 = smul.u32 2, %s28
          %s848 = ssub.s32 256, 256
          %849 = vsyncadd %s839, %s848
          %s850 = smul.addr %s846, 128
          %s851 = scalar_lea.hbm %s10, %s850
          %s852 = sshll.u32 %s842, 4
          %s853 = int_to_ptr.vmem [resolvable:$true] %s852
          %858 = dma.vmem_to_hbm [thread:$0]  %s853, 256, %s851, %s839, 128, 128, 8
        $region64: #{metaformer_block_forward.5} parent=59 // pred_fallthru
          _
      $region60: #{metaformer_block_forward.5} parent=5 // pred_fallthru
        _
      %p859 = scmp.le.s32.totalorder 2, %s23
      // Predicated region
      $region65: #{metaformer_block_forward.5} parent=5 // pred_check
        %p860 = pneg %p859
      $region66: #{metaformer_block_forward.5} parent=5 // pred_check_branch
        %862 = sbr.rel (%p860) target = $region68
      $region67: #{metaformer_block_forward.5} parent=5 // pred_region
        %s863 = ssub.s32 %s23, 2
        // Predicated region
        $region69: #{metaformer_block_forward.5} parent=67 // pred_check
          %p864 = pneg %p272
        $region70: #{metaformer_block_forward.5} parent=67 // pred_check_branch
          %866 = sbr.rel (%p864) target = $region72
        $region71: #{metaformer_block_forward.5} parent=67 // pred_region
          %s867 = sand.u32 %s257, 1
          %s868 = scalar_lea.sflag [#allocation5], %s867
          %s869 = sand.u32 %s257, 1
          %s870 = smul.addr %s869, 16
          %s871 = scalar_lea.vmem [#allocation4], %s870
          %872 = dma.done %s868, 256
        $region72: #{metaformer_block_forward.5} parent=67 // pred_fallthru
          _
      $region68: #{metaformer_block_forward.5} parent=5 // pred_fallthru
        _
    $region6: #{metaformer_block_forward.5} parent=1 // loop_footer
      %s27 = sadd.s32 1, %s23
    $region7: #{metaformer_block_forward.5} parent=1 // loop_footer_branch
      %22 = sbr.rel target = $region3
    $region8: #{metaformer_block_forward.5} parent=1 // loop_exit
      _
    %873 = vsyncpa [#allocation5], 1
    %s874 = scalar_lea.sflag [#allocation5], 1
    %875 = vsyncpa %s874, 1

// kernel: metaformer_block_forward.4
$region0: #{metaformer_block_forward.4}
  #allocation0 [shape = 'u32[]', space=smem, size = 0x4, offset = 0x4, fixed_abs, tag = 'smem constant byte address 0x4 - core index']
  #allocation1 [shape = 'u32[144,128]{1,0:T(1,128)}', space=vmem, size = 0x12000, scoped, tag = 'internal scratch']
  %s0 = inlined_call_operand.vmem [shape: f32[2,36,36,4], index: 0, kind: input, shape index: {}]
  %s1 = inlined_call_operand.vmem [shape: f32[34,34,4], index: 1, kind: input, shape index: {}]
  %s2 = inlined_call_operand.vmem [shape: f32[9,4], index: 2, kind: input, shape index: {}]
  %s3 = inlined_call_operand.vmem [shape: f32[1,4], index: 3, kind: input, shape index: {}]
  %s4 = inlined_call_operand.vmem [shape: f32[2,32,32,4], index: 4, kind: output, shape index: {}]
  %s5 = sld [smem:[#allocation0]]
  $region49: #{metaformer_block_forward.4} parent=0
    _
  %s7 = ssub.s32 1, %s5
  %s8 = scalar_select 0, %s7, %s5
  loop: start=0, step=1, limit=4
  $region2: #{metaformer_block_forward.4} parent=0 // loop_pre_header
    _
  $region3: #{metaformer_block_forward.4} parent=0 // loop_header
    %s10 = sphi 0, %s14
    %p11 = scmp.ge.s32.totalorder %s10, 4
    %s20 = sphi 0, %s22
    %s23 = sphi 0, %s20
    %s24 = sphi 0, %s23
    %s40 = sphi 0, %s24
    %s44 = sphi 0, %s44
    %s46 = sphi 0, %s44
    %s47 = sphi 0, %s46
    %s61 = sphi 0, %s47
    %s65 = sphi 0, %s65
    %s67 = sphi 0, %s65
    %s68 = sphi 0, %s67
    %s82 = sphi 0, %s68
    %s86 = sphi 0, %s86
    %s88 = sphi 0, %s86
    %s89 = sphi 0, %s88
    %s103 = sphi 0, %s89
    %s109 = sphi 0, %s111
    %s112 = sphi 0, %s109
    %s113 = sphi 0, %s112
    %s129 = sphi 0, %s113
  $region4: #{metaformer_block_forward.4} parent=0 // loop_header_branch
    %13 = sbr.rel (%p11) target = $region8
  $region5: #{metaformer_block_forward.4} parent=0 // loop_body
    %s15 = ssub.s32 %s10, 1
    %s16 = ssub.s32 %s10, 2
    %s17 = sadd.s32 %s10, 1
    %s18 = ssub.s32 %s10, %s17
    %p19 = scmp.eq.s32.totalorder %s18, 0
    %s21 = sadd.s32 %s20, 1
    %s22 = scalar_select %p19, %s20, %s21
    %p25 = pneg %p19
    %p26 = scmp.eq.s32.totalorder %s10, 1
    %p27 = por %p25, %p26
    %p28 = scmp.ne.s32.totalorder %s20, %s23
    %p29 = scmp.eq.s32.totalorder %s10, 0
    %p30 = por %p28, %p29
    %p31 = scmp.ne.s32.totalorder %s20, %s23
    %p32 = scmp.eq.s32.totalorder %s15, 1
    %p33 = por %p31, %p32
    %p34 = scmp.ne.s32.totalorder %s23, %s24
    %p35 = scmp.eq.s32.totalorder %s15, 0
    %p36 = por %p34, %p35
    %p37 = scmp.ne.s32.totalorder %s23, %s24
    %p38 = scmp.eq.s32.totalorder %s16, 1
    %p39 = por %p37, %p38
    %p41 = scmp.ne.s32.totalorder %s24, %s40
    %p42 = scmp.eq.s32.totalorder %s16, 0
    %p43 = por %p41, %p42
    %s45 = sadd.s32 %s44, 1
    %p48 = scmp.eq.s32.totalorder %s10, 1
    %p49 = scmp.ne.s32.totalorder %s44, %s46
    %p50 = scmp.eq.s32.totalorder %s10, 0
    %p51 = por %p49, %p50
    %p52 = scmp.ne.s32.totalorder %s44, %s46
    %p53 = scmp.eq.s32.totalorder %s15, 1
    %p54 = por %p52, %p53
    %p55 = scmp.ne.s32.totalorder %s46, %s47
    %p56 = scmp.eq.s32.totalorder %s15, 0
    %p57 = por %p55, %p56
    %p58 = scmp.ne.s32.totalorder %s46, %s47
    %p59 = scmp.eq.s32.totalorder %s16, 1
    %p60 = por %p58, %p59
    %p62 = scmp.ne.s32.totalorder %s47, %s61
    %p63 = scmp.eq.s32.totalorder %s16, 0
    %p64 = por %p62, %p63
    %s66 = sadd.s32 %s65, 1
    %p69 = scmp.eq.s32.totalorder %s10, 1
    %p70 = scmp.ne.s32.totalorder %s65, %s67
    %p71 = scmp.eq.s32.totalorder %s10, 0
    %p72 = por %p70, %p71
    %p73 = scmp.ne.s32.totalorder %s65, %s67
    %p74 = scmp.eq.s32.totalorder %s15, 1
    %p75 = por %p73, %p74
    %p76 = scmp.ne.s32.totalorder %s67, %s68
    %p77 = scmp.eq.s32.totalorder %s15, 0
    %p78 = por %p76, %p77
    %p79 = scmp.ne.s32.totalorder %s67, %s68
    %p80 = scmp.eq.s32.totalorder %s16, 1
    %p81 = por %p79, %p80
    %p83 = scmp.ne.s32.totalorder %s68, %s82
    %p84 = scmp.eq.s32.totalorder %s16, 0
    %p85 = por %p83, %p84
    %s87 = sadd.s32 %s86, 1
    %p90 = scmp.eq.s32.totalorder %s10, 1
    %p91 = scmp.ne.s32.totalorder %s86, %s88
    %p92 = scmp.eq.s32.totalorder %s10, 0
    %p93 = por %p91, %p92
    %p94 = scmp.ne.s32.totalorder %s86, %s88
    %p95 = scmp.eq.s32.totalorder %s15, 1
    %p96 = por %p94, %p95
    %p97 = scmp.ne.s32.totalorder %s88, %s89
    %p98 = scmp.eq.s32.totalorder %s15, 0
    %p99 = por %p97, %p98
    %p100 = scmp.ne.s32.totalorder %s88, %s89
    %p101 = scmp.eq.s32.totalorder %s16, 1
    %p102 = por %p100, %p101
    %p104 = scmp.ne.s32.totalorder %s89, %s103
    %p105 = scmp.eq.s32.totalorder %s16, 0
    %p106 = por %p104, %p105
    %s107 = ssub.s32 %s10, %s17
    %p108 = scmp.eq.s32.totalorder %s107, 0
    %s110 = sadd.s32 %s109, 1
    %s111 = scalar_select %p108, %s109, %s110
    %p114 = pneg %p108
    %p115 = scmp.eq.s32.totalorder %s10, 1
    %p116 = por %p114, %p115
    %p117 = scmp.ne.s32.totalorder %s109, %s112
    %p118 = scmp.eq.s32.totalorder %s10, 0
    %p119 = por %p117, %p118
    %p120 = scmp.ne.s32.totalorder %s109, %s112
    %p121 = scmp.eq.s32.totalorder %s15, 1
    %p122 = por %p120, %p121
    %p123 = scmp.ne.s32.totalorder %s112, %s113
    %p124 = scmp.eq.s32.totalorder %s15, 0
    %p125 = por %p123, %p124
    %p126 = scmp.ne.s32.totalorder %s112, %s113
    %p127 = scmp.eq.s32.totalorder %s16, 1
    %p128 = por %p126, %p127
    %p130 = scmp.ne.s32.totalorder %s113, %s129
    %p131 = scmp.eq.s32.totalorder %s16, 0
    %p132 = por %p130, %p131
    %p133 = scmp.le.s32.totalorder 1, %s10
    %p134 = scmp.lt.s32.totalorder %s10, 3
    %p135 = pnand %p133, %p134
    %p136 = pneg %p135
    // Predicated region
    $region9: #{metaformer_block_forward.4} parent=5 // pred_check
      _
    $region10: #{metaformer_block_forward.4} parent=5 // pred_check_branch
      %138 = sbr.rel (%p135) target = $region12
    $region11: #{metaformer_block_forward.4} parent=5 // pred_region
      %s139 = ssub.s32 %s10, 1
      // Predicated region
      $region13: #{metaformer_block_forward.4} parent=11 // pred_check
        %p140 = pneg %p57
      $region14: #{metaformer_block_forward.4} parent=11 // pred_check_branch
        %142 = sbr.rel (%p140) target = $region16
      $region15: #{metaformer_block_forward.4} parent=11 // pred_region
        _
      $region16: #{metaformer_block_forward.4} parent=11 // pred_fallthru
        _
      // Predicated region
      $region17: #{metaformer_block_forward.4} parent=11 // pred_check
        %p143 = pneg %p78
      $region18: #{metaformer_block_forward.4} parent=11 // pred_check_branch
        %145 = sbr.rel (%p143) target = $region20
      $region19: #{metaformer_block_forward.4} parent=11 // pred_region
        _
      $region20: #{metaformer_block_forward.4} parent=11 // pred_fallthru
        _
      // Predicated region
      $region21: #{metaformer_block_forward.4} parent=11 // pred_check
        %p146 = pneg %p99
      $region22: #{metaformer_block_forward.4} parent=11 // pred_check_branch
        %148 = sbr.rel (%p146) target = $region24
      $region23: #{metaformer_block_forward.4} parent=11 // pred_region
        _
      $region24: #{metaformer_block_forward.4} parent=11 // pred_fallthru
        _
    $region12: #{metaformer_block_forward.4} parent=5 // pred_fallthru
      _
    %p149 = scmp.lt.s32.totalorder %s10, 2
    // Predicated region
    $region25: #{metaformer_block_forward.4} parent=5 // pred_check
      %p150 = pneg %p149
    $region26: #{metaformer_block_forward.4} parent=5 // pred_check_branch
      %152 = sbr.rel (%p150) target = $region28
    $region27: #{metaformer_block_forward.4} parent=5 // pred_region
      // Predicated region
      $region29: #{metaformer_block_forward.4} parent=27 // pred_check
        %p153 = pneg %p30
      $region30: #{metaformer_block_forward.4} parent=27 // pred_check_branch
        %155 = sbr.rel (%p153) target = $region32
      $region31: #{metaformer_block_forward.4} parent=27 // pred_region
        %p156 = scmp.lt.s32.totalorder %s10, 1
        %s157 = scalar_select %p156, %s10, 1
        %s158 = smul.addr %s157, 180
        %s159 = smul.addr %s158, 8
        %s160 = scalar_lea.vmem %s0, %s159
      $region32: #{metaformer_block_forward.4} parent=27 // pred_fallthru
        _
    $region28: #{metaformer_block_forward.4} parent=5 // pred_fallthru
      _
    %p161 = scmp.le.s32.totalorder 1, %s10
    %p162 = scmp.lt.s32.totalorder %s10, 3
    %p163 = pnand %p161, %p162
    %p164 = pneg %p163
    // Predicated region
    $region33: #{metaformer_block_forward.4} parent=5 // pred_check
      _
    $region34: #{metaformer_block_forward.4} parent=5 // pred_check_branch
      %166 = sbr.rel (%p163) target = $region36
    $region35: #{metaformer_block_forward.4} parent=5 // pred_region
      %s167 = ssub.s32 %s10, 1
      %p168 = scmp.lt.s32.totalorder %s15, 1
      %s169 = scalar_select %p168, %s15, 1
      %s170 = smul.addr %s169, 180
      %s171 = smul.addr %s170, 8
      %s172 = scalar_lea.vmem %s0, %s171
      %p173 = pneg %p36
      %p174 = pneg %p33
      %p175 = pneg %p57
      %p176 = pneg %p54
      %p177 = pneg %p78
      %p178 = pneg %p75
      %p179 = pneg %p99
      %p180 = pneg %p96
      %p181 = pneg %p125
      %p182 = pneg %p122
      %p183 = scmp.lt.s32.totalorder %s15, 1
      %s184 = scalar_select %p183, %s15, 1
      %s185 = smul.addr %s184, 128
      %s186 = smul.addr %s185, 8
      %s187 = scalar_lea.vmem %s4, %s186
      %p188 = scmp.lt.s32.totalorder %s15, 1
      %s189 = scalar_select %p188, %s15, 1
      %s190 = smul.addr %s189, 180
      %s191 = smul.addr %s190, 8
      %s192 = scalar_lea.vmem %s0, %s191
      %p193 = scmp.lt.s32.totalorder %s15, 1
      %s194 = scalar_select %p193, %s15, 1
      %s195 = smul.addr %s194, 128
      %s196 = smul.addr %s195, 8
      %s197 = scalar_lea.vmem %s4, %s196
      %v198 = vld [vmem:[%s192] sm:$0xff]
      %v199 = vld [vmem:[%s192 + $0x8] sm:$0xff]
      %v200 = vld [vmem:[%s192 + $0x10] sm:$0xff]
      %v201 = vld [vmem:[%s192 + $0x18] sm:$0xff]
      %v202 = vld [vmem:[%s192 + $0x20] sm:$0xf]
      %v203 = vld [vmem:[%s192 + $0x28] sm:$0xff]
      %v204 = vld [vmem:[%s192 + $0x30] sm:$0xff]
      %v205 = vld [vmem:[%s192 + $0x38] sm:$0xff]
      %v206 = vld [vmem:[%s192 + $0x40] sm:$0xff]
      %v207 = vld [vmem:[%s192 + $0x48] sm:$0xf]
      %v208 = vld [vmem:[%s192 + $0x50] sm:$0xff]
      %v209 = vld [vmem:[%s192 + $0x58] sm:$0xff]
      %v210 = vld [vmem:[%s192 + $0x60] sm:$0xff]
      %v211 = vld [vmem:[%s192 + $0x68] sm:$0xff]
      %v212 = vld [vmem:[%s192 + $0x70] sm:$0xf]
      %v213 = vld [vmem:[%s192 + $0x78] sm:$0xff]
      %v214 = vld [vmem:[%s192 + $0x80] sm:$0xff]
      %v215 = vld [vmem:[%s192 + $0x88] sm:$0xff]
      %v216 = vld [vmem:[%s192 + $0x90] sm:$0xff]
      %v217 = vld [vmem:[%s192 + $0x98] sm:$0xf]
      %v218 = vld [vmem:[%s192 + $0xa0] sm:$0xff]
      %v219 = vld [vmem:[%s192 + $0xa8] sm:$0xff]
      %v220 = vld [vmem:[%s192 + $0xb0] sm:$0xff]
      %v221 = vld [vmem:[%s192 + $0xb8] sm:$0xff]
      %v222 = vld [vmem:[%s192 + $0xc0] sm:$0xf]
      %v223 = vld [vmem:[%s192 + $0xc8] sm:$0xff]
      %v224 = vld [vmem:[%s192 + $0xd0] sm:$0xff]
      %v225 = vld [vmem:[%s192 + $0xd8] sm:$0xff]
      %v226 = vld [vmem:[%s192 + $0xe0] sm:$0xff]
      %v227 = vld [vmem:[%s192 + $0xe8] sm:$0xf]
      %v228 = vld [vmem:[%s192 + $0xf0] sm:$0xff]
      %v229 = vld [vmem:[%s192 + $0xf8] sm:$0xff]
      %v230 = vld [vmem:[%s192 + $0x100] sm:$0xff]
      %v231 = vld [vmem:[%s192 + $0x108] sm:$0xff]
      %v232 = vld [vmem:[%s192 + $0x110] sm:$0xf]
      %v233 = vld [vmem:[%s192 + $0x118] sm:$0xff]
      %v234 = vld [vmem:[%s192 + $0x120] sm:$0xff]
      %v235 = vld [vmem:[%s192 + $0x128] sm:$0xff]
      %v236 = vld [vmem:[%s192 + $0x130] sm:$0xff]
      %v237 = vld [vmem:[%s192 + $0x138] sm:$0xf]
      %v238 = vld [vmem:[%s192 + $0x140] sm:$0xff]
      %v239 = vld [vmem:[%s192 + $0x148] sm:$0xff]
      %v240 = vld [vmem:[%s192 + $0x150] sm:$0xff]
      %v241 = vld [vmem:[%s192 + $0x158] sm:$0xff]
      %v242 = vld [vmem:[%s192 + $0x160] sm:$0xf]
      %v243 = vld [vmem:[%s192 + $0x168] sm:$0xff]
      %v244 = vld [vmem:[%s192 + $0x170] sm:$0xff]
      %v245 = vld [vmem:[%s192 + $0x178] sm:$0xff]
      %v246 = vld [vmem:[%s192 + $0x180] sm:$0xff]
      %v247 = vld [vmem:[%s192 + $0x188] sm:$0xf]
      %v248 = vld [vmem:[%s192 + $0x190] sm:$0xff]
      %v249 = vld [vmem:[%s192 + $0x198] sm:$0xff]
      %v250 = vld [vmem:[%s192 + $0x1a0] sm:$0xff]
      %v251 = vld [vmem:[%s192 + $0x1a8] sm:$0xff]
      %v252 = vld [vmem:[%s192 + $0x1b0] sm:$0xf]
      %v253 = vld [vmem:[%s192 + $0x1b8] sm:$0xff]
      %v254 = vld [vmem:[%s192 + $0x1c0] sm:$0xff]
      %v255 = vld [vmem:[%s192 + $0x1c8] sm:$0xff]
      %v256 = vld [vmem:[%s192 + $0x1d0] sm:$0xff]
      %v257 = vld [vmem:[%s192 + $0x1d8] sm:$0xf]
      %v258 = vld [vmem:[%s192 + $0x1e0] sm:$0xff]
      %v259 = vld [vmem:[%s192 + $0x1e8] sm:$0xff]
      %v260 = vld [vmem:[%s192 + $0x1f0] sm:$0xff]
      %v261 = vld [vmem:[%s192 + $0x1f8] sm:$0xff]
      %v262 = vld [vmem:[%s192 + $0x200] sm:$0xf]
      %v263 = vld [vmem:[%s192 + $0x208] sm:$0xff]
      %v264 = vld [vmem:[%s192 + $0x210] sm:$0xff]
      %v265 = vld [vmem:[%s192 + $0x218] sm:$0xff]
      %v266 = vld [vmem:[%s192 + $0x220] sm:$0xff]
      %v267 = vld [vmem:[%s192 + $0x228] sm:$0xf]
      %v268 = vld [vmem:[%s192 + $0x230] sm:$0xff]
      %v269 = vld [vmem:[%s192 + $0x238] sm:$0xff]
      %v270 = vld [vmem:[%s192 + $0x240] sm:$0xff]
      %v271 = vld [vmem:[%s192 + $0x248] sm:$0xff]
      %v272 = vld [vmem:[%s192 + $0x250] sm:$0xf]
      %v273 = vld [vmem:[%s192 + $0x258] sm:$0xff]
      %v274 = vld [vmem:[%s192 + $0x260] sm:$0xff]
      %v275 = vld [vmem:[%s192 + $0x268] sm:$0xff]
      %v276 = vld [vmem:[%s192 + $0x270] sm:$0xff]
      %v277 = vld [vmem:[%s192 + $0x278] sm:$0xf]
      %v278 = vld [vmem:[%s192 + $0x280] sm:$0xff]
      %v279 = vld [vmem:[%s192 + $0x288] sm:$0xff]
      %v280 = vld [vmem:[%s192 + $0x290] sm:$0xff]
      %v281 = vld [vmem:[%s192 + $0x298] sm:$0xff]
      %v282 = vld [vmem:[%s192 + $0x2a0] sm:$0xf]
      %v283 = vld [vmem:[%s192 + $0x2a8] sm:$0xff]
      %v284 = vld [vmem:[%s192 + $0x2b0] sm:$0xff]
      %v285 = vld [vmem:[%s192 + $0x2b8] sm:$0xff]
      %v286 = vld [vmem:[%s192 + $0x2c0] sm:$0xff]
      %v287 = vld [vmem:[%s192 + $0x2c8] sm:$0xf]
      %v288 = vld [vmem:[%s192 + $0x2d0] sm:$0xff]
      %v289 = vld [vmem:[%s192 + $0x2d8] sm:$0xff]
      %v290 = vld [vmem:[%s192 + $0x2e0] sm:$0xff]
      %v291 = vld [vmem:[%s192 + $0x2e8] sm:$0xff]
      %v292 = vld [vmem:[%s192 + $0x2f0] sm:$0xf]
      %v293 = vld [vmem:[%s192 + $0x2f8] sm:$0xff]
      %v294 = vld [vmem:[%s192 + $0x300] sm:$0xff]
      %v295 = vld [vmem:[%s192 + $0x308] sm:$0xff]
      %v296 = vld [vmem:[%s192 + $0x310] sm:$0xff]
      %v297 = vld [vmem:[%s192 + $0x318] sm:$0xf]
      %v298 = vld [vmem:[%s192 + $0x320] sm:$0xff]
      %v299 = vld [vmem:[%s192 + $0x328] sm:$0xff]
      %v300 = vld [vmem:[%s192 + $0x330] sm:$0xff]
      %v301 = vld [vmem:[%s192 + $0x338] sm:$0xff]
      %v302 = vld [vmem:[%s192 + $0x340] sm:$0xf]
      %v303 = vld [vmem:[%s192 + $0x348] sm:$0xff]
      %v304 = vld [vmem:[%s192 + $0x350] sm:$0xff]
      %v305 = vld [vmem:[%s192 + $0x358] sm:$0xff]
      %v306 = vld [vmem:[%s192 + $0x360] sm:$0xff]
      %v307 = vld [vmem:[%s192 + $0x368] sm:$0xf]
      %v308 = vld [vmem:[%s192 + $0x370] sm:$0xff]
      %v309 = vld [vmem:[%s192 + $0x378] sm:$0xff]
      %v310 = vld [vmem:[%s192 + $0x380] sm:$0xff]
      %v311 = vld [vmem:[%s192 + $0x388] sm:$0xff]
      %v312 = vld [vmem:[%s192 + $0x390] sm:$0xf]
      %v313 = vld [vmem:[%s192 + $0x398] sm:$0xff]
      %v314 = vld [vmem:[%s192 + $0x3a0] sm:$0xff]
      %v315 = vld [vmem:[%s192 + $0x3a8] sm:$0xff]
      %v316 = vld [vmem:[%s192 + $0x3b0] sm:$0xff]
      %v317 = vld [vmem:[%s192 + $0x3b8] sm:$0xf]
      %v318 = vld [vmem:[%s192 + $0x3c0] sm:$0xff]
      %v319 = vld [vmem:[%s192 + $0x3c8] sm:$0xff]
      %v320 = vld [vmem:[%s192 + $0x3d0] sm:$0xff]
      %v321 = vld [vmem:[%s192 + $0x3d8] sm:$0xff]
      %v322 = vld [vmem:[%s192 + $0x3e0] sm:$0xf]
      %v323 = vld [vmem:[%s192 + $0x3e8] sm:$0xff]
      %v324 = vld [vmem:[%s192 + $0x3f0] sm:$0xff]
      %v325 = vld [vmem:[%s192 + $0x3f8] sm:$0xff]
      %v326 = vld [vmem:[%s192 + $0x400] sm:$0xff]
      %v327 = vld [vmem:[%s192 + $0x408] sm:$0xf]
      %v328 = vld [vmem:[%s192 + $0x410] sm:$0xff]
      %v329 = vld [vmem:[%s192 + $0x418] sm:$0xff]
      %v330 = vld [vmem:[%s192 + $0x420] sm:$0xff]
      %v331 = vld [vmem:[%s192 + $0x428] sm:$0xff]
      %v332 = vld [vmem:[%s192 + $0x430] sm:$0xf]
      %v333 = vld [vmem:[%s192 + $0x438] sm:$0xff]
      %v334 = vld [vmem:[%s192 + $0x440] sm:$0xff]
      %v335 = vld [vmem:[%s192 + $0x448] sm:$0xff]
      %v336 = vld [vmem:[%s192 + $0x450] sm:$0xff]
      %v337 = vld [vmem:[%s192 + $0x458] sm:$0xf]
      %v338 = vld [vmem:[%s192 + $0x460] sm:$0xff]
      %v339 = vld [vmem:[%s192 + $0x468] sm:$0xff]
      %v340 = vld [vmem:[%s192 + $0x470] sm:$0xff]
      %v341 = vld [vmem:[%s192 + $0x478] sm:$0xff]
      %v342 = vld [vmem:[%s192 + $0x480] sm:$0xf]
      %v343 = vld [vmem:[%s192 + $0x488] sm:$0xff]
      %v344 = vld [vmem:[%s192 + $0x490] sm:$0xff]
      %v345 = vld [vmem:[%s192 + $0x498] sm:$0xff]
      %v346 = vld [vmem:[%s192 + $0x4a0] sm:$0xff]
      %v347 = vld [vmem:[%s192 + $0x4a8] sm:$0xf]
      %v348 = vld [vmem:[%s192 + $0x4b0] sm:$0xff]
      %v349 = vld [vmem:[%s192 + $0x4b8] sm:$0xff]
      %v350 = vld [vmem:[%s192 + $0x4c0] sm:$0xff]
      %v351 = vld [vmem:[%s192 + $0x4c8] sm:$0xff]
      %v352 = vld [vmem:[%s192 + $0x4d0] sm:$0xf]
      %v353 = vld [vmem:[%s192 + $0x4d8] sm:$0xff]
      %v354 = vld [vmem:[%s192 + $0x4e0] sm:$0xff]
      %v355 = vld [vmem:[%s192 + $0x4e8] sm:$0xff]
      %v356 = vld [vmem:[%s192 + $0x4f0] sm:$0xff]
      %v357 = vld [vmem:[%s192 + $0x4f8] sm:$0xf]
      %v358 = vld [vmem:[%s192 + $0x500] sm:$0xff]
      %v359 = vld [vmem:[%s192 + $0x508] sm:$0xff]
      %v360 = vld [vmem:[%s192 + $0x510] sm:$0xff]
      %v361 = vld [vmem:[%s192 + $0x518] sm:$0xff]
      %v362 = vld [vmem:[%s192 + $0x520] sm:$0xf]
      %v363 = vld [vmem:[%s192 + $0x528] sm:$0xff]
      %v364 = vld [vmem:[%s192 + $0x530] sm:$0xff]
      %v365 = vld [vmem:[%s192 + $0x538] sm:$0xff]
      %v366 = vld [vmem:[%s192 + $0x540] sm:$0xff]
      %v367 = vld [vmem:[%s192 + $0x548] sm:$0xf]
      %v368 = vld [vmem:[%s192 + $0x550] sm:$0xff]
      %v369 = vld [vmem:[%s192 + $0x558] sm:$0xff]
      %v370 = vld [vmem:[%s192 + $0x560] sm:$0xff]
      %v371 = vld [vmem:[%s192 + $0x568] sm:$0xff]
      %v372 = vld [vmem:[%s192 + $0x570] sm:$0xf]
      %v373 = vld [vmem:[%s192 + $0x578] sm:$0xff]
      %v374 = vld [vmem:[%s192 + $0x580] sm:$0xff]
      %v375 = vld [vmem:[%s192 + $0x588] sm:$0xff]
      %v376 = vld [vmem:[%s192 + $0x590] sm:$0xff]
      %v377 = vld [vmem:[%s192 + $0x598] sm:$0xf]
      %vm558 = vcmask 1046528
      %v559 = vrot.slane %v198, 1
      %v560 = vrot.slane %v199, 1
      %v561 = vsel %vm558, %v559, %v560
      %v562 = vrot.slane %v200, 1
      %v563 = vsel %vm558, %v560, %v562
      %v564 = vrot.slane %v201, 1
      %v565 = vsel %vm558, %v562, %v564
      %v566 = vrot.slane %v202, 1
      %v567 = vsel %vm558, %v564, %v566
      %v568 = vrot.slane %v203, 1
      %v569 = vrot.slane %v204, 1
      %v570 = vsel %vm558, %v568, %v569
      %v571 = vrot.slane %v205, 1
      %v572 = vsel %vm558, %v569, %v571
      %v573 = vrot.slane %v206, 1
      %v574 = vsel %vm558, %v571, %v573
      %v575 = vrot.slane %v207, 1
      %v576 = vsel %vm558, %v573, %v575
      %v577 = vrot.slane %v208, 1
      %v578 = vrot.slane %v209, 1
      %v579 = vsel %vm558, %v577, %v578
      %v580 = vrot.slane %v210, 1
      %v581 = vsel %vm558, %v578, %v580
      %v582 = vrot.slane %v211, 1
      %v583 = vsel %vm558, %v580, %v582
      %v584 = vrot.slane %v212, 1
      %v585 = vsel %vm558, %v582, %v584
      %v586 = vrot.slane %v213, 1
      %v587 = vrot.slane %v214, 1
      %v588 = vsel %vm558, %v586, %v587
      %v589 = vrot.slane %v215, 1
      %v590 = vsel %vm558, %v587, %v589
      %v591 = vrot.slane %v216, 1
      %v592 = vsel %vm558, %v589, %v591
      %v593 = vrot.slane %v217, 1
      %v594 = vsel %vm558, %v591, %v593
      %v595 = vrot.slane %v218, 1
      %v596 = vrot.slane %v219, 1
      %v597 = vsel %vm558, %v595, %v596
      %v598 = vrot.slane %v220, 1
      %v599 = vsel %vm558, %v596, %v598
      %v600 = vrot.slane %v221, 1
      %v601 = vsel %vm558, %v598, %v600
      %v602 = vrot.slane %v222, 1
      %v603 = vsel %vm558, %v600, %v602
      %v604 = vrot.slane %v223, 1
      %v605 = vrot.slane %v224, 1
      %v606 = vsel %vm558, %v604, %v605
      %v607 = vrot.slane %v225, 1
      %v608 = vsel %vm558, %v605, %v607
      %v609 = vrot.slane %v226, 1
      %v610 = vsel %vm558, %v607, %v609
      %v611 = vrot.slane %v227, 1
      %v612 = vsel %vm558, %v609, %v611
      %v613 = vrot.slane %v228, 1
      %v614 = vrot.slane %v229, 1
      %v615 = vsel %vm558, %v613, %v614
      %v616 = vrot.slane %v230, 1
      %v617 = vsel %vm558, %v614, %v616
      %v618 = vrot.slane %v231, 1
      %v619 = vsel %vm558, %v616, %v618
      %v620 = vrot.slane %v232, 1
      %v621 = vsel %vm558, %v618, %v620
      %v622 = vrot.slane %v233, 1
      %v623 = vrot.slane %v234, 1
      %v624 = vsel %vm558, %v622, %v623
      %v625 = vrot.slane %v235, 1
      %v626 = vsel %vm558, %v623, %v625
      %v627 = vrot.slane %v236, 1
      %v628 = vsel %vm558, %v625, %v627
      %v629 = vrot.slane %v237, 1
      %v630 = vsel %vm558, %v627, %v629
      %v631 = vrot.slane %v238, 1
      %v632 = vrot.slane %v239, 1
      %v633 = vsel %vm558, %v631, %v632
      %v634 = vrot.slane %v240, 1
      %v635 = vsel %vm558, %v632, %v634
      %v636 = vrot.slane %v241, 1
      %v637 = vsel %vm558, %v634, %v636
      %v638 = vrot.slane %v242, 1
      %v639 = vsel %vm558, %v636, %v638
      %v640 = vrot.slane %v243, 1
      %v641 = vrot.slane %v244, 1
      %v642 = vsel %vm558, %v640, %v641
      %v643 = vrot.slane %v245, 1
      %v644 = vsel %vm558, %v641, %v643
      %v645 = vrot.slane %v246, 1
      %v646 = vsel %vm558, %v643, %v645
      %v647 = vrot.slane %v247, 1
      %v648 = vsel %vm558, %v645, %v647
      %v649 = vrot.slane %v248, 1
      %v650 = vrot.slane %v249, 1
      %v651 = vsel %vm558, %v649, %v650
      %v652 = vrot.slane %v250, 1
      %v653 = vsel %vm558, %v650, %v652
      %v654 = vrot.slane %v251, 1
      %v655 = vsel %vm558, %v652, %v654
      %v656 = vrot.slane %v252, 1
      %v657 = vsel %vm558, %v654, %v656
      %v658 = vrot.slane %v253, 1
      %v659 = vrot.slane %v254, 1
      %v660 = vsel %vm558, %v658, %v659
      %v661 = vrot.slane %v255, 1
      %v662 = vsel %vm558, %v659, %v661
      %v663 = vrot.slane %v256, 1
      %v664 = vsel %vm558, %v661, %v663
      %v665 = vrot.slane %v257, 1
      %v666 = vsel %vm558, %v663, %v665
      %v667 = vrot.slane %v258, 1
      %v668 = vrot.slane %v259, 1
      %v669 = vsel %vm558, %v667, %v668
      %v670 = vrot.slane %v260, 1
      %v671 = vsel %vm558, %v668, %v670
      %v672 = vrot.slane %v261, 1
      %v673 = vsel %vm558, %v670, %v672
      %v674 = vrot.slane %v262, 1
      %v675 = vsel %vm558, %v672, %v674
      %v676 = vrot.slane %v263, 1
      %v677 = vrot.slane %v264, 1
      %v678 = vsel %vm558, %v676, %v677
      %v679 = vrot.slane %v265, 1
      %v680 = vsel %vm558, %v677, %v679
      %v681 = vrot.slane %v266, 1
      %v682 = vsel %vm558, %v679, %v681
      %v683 = vrot.slane %v267, 1
      %v684 = vsel %vm558, %v681, %v683
      %v685 = vrot.slane %v268, 1
      %v686 = vrot.slane %v269, 1
      %v687 = vsel %vm558, %v685, %v686
      %v688 = vrot.slane %v270, 1
      %v689 = vsel %vm558, %v686, %v688
      %v690 = vrot.slane %v271, 1
      %v691 = vsel %vm558, %v688, %v690
      %v692 = vrot.slane %v272, 1
      %v693 = vsel %vm558, %v690, %v692
      %v694 = vrot.slane %v273, 1
      %v695 = vrot.slane %v274, 1
      %v696 = vsel %vm558, %v694, %v695
      %v697 = vrot.slane %v275, 1
      %v698 = vsel %vm558, %v695, %v697
      %v699 = vrot.slane %v276, 1
      %v700 = vsel %vm558, %v697, %v699
      %v701 = vrot.slane %v277, 1
      %v702 = vsel %vm558, %v699, %v701
      %v703 = vrot.slane %v278, 1
      %v704 = vrot.slane %v279, 1
      %v705 = vsel %vm558, %v703, %v704
      %v706 = vrot.slane %v280, 1
      %v707 = vsel %vm558, %v704, %v706
      %v708 = vrot.slane %v281, 1
      %v709 = vsel %vm558, %v706, %v708
      %v710 = vrot.slane %v282, 1
      %v711 = vsel %vm558, %v708, %v710
      %v712 = vrot.slane %v283, 1
      %v713 = vrot.slane %v284, 1
      %v714 = vsel %vm558, %v712, %v713
      %v715 = vrot.slane %v285, 1
      %v716 = vsel %vm558, %v713, %v715
      %v717 = vrot.slane %v286, 1
      %v718 = vsel %vm558, %v715, %v717
      %v719 = vrot.slane %v287, 1
      %v720 = vsel %vm558, %v717, %v719
      %v721 = vrot.slane %v288, 1
      %v722 = vrot.slane %v289, 1
      %v723 = vsel %vm558, %v721, %v722
      %v724 = vrot.slane %v290, 1
      %v725 = vsel %vm558, %v722, %v724
      %v726 = vrot.slane %v291, 1
      %v727 = vsel %vm558, %v724, %v726
      %v728 = vrot.slane %v292, 1
      %v729 = vsel %vm558, %v726, %v728
      %v730 = vrot.slane %v293, 1
      %v731 = vrot.slane %v294, 1
      %v732 = vsel %vm558, %v730, %v731
      %v733 = vrot.slane %v295, 1
      %v734 = vsel %vm558, %v731, %v733
      %v735 = vrot.slane %v296, 1
      %v736 = vsel %vm558, %v733, %v735
      %v737 = vrot.slane %v297, 1
      %v738 = vsel %vm558, %v735, %v737
      %v739 = vrot.slane %v298, 1
      %v740 = vrot.slane %v299, 1
      %v741 = vsel %vm558, %v739, %v740
      %v742 = vrot.slane %v300, 1
      %v743 = vsel %vm558, %v740, %v742
      %v744 = vrot.slane %v301, 1
      %v745 = vsel %vm558, %v742, %v744
      %v746 = vrot.slane %v302, 1
      %v747 = vsel %vm558, %v744, %v746
      %v748 = vrot.slane %v303, 1
      %v749 = vrot.slane %v304, 1
      %v750 = vsel %vm558, %v748, %v749
      %v751 = vrot.slane %v305, 1
      %v752 = vsel %vm558, %v749, %v751
      %v753 = vrot.slane %v306, 1
      %v754 = vsel %vm558, %v751, %v753
      %v755 = vrot.slane %v307, 1
      %v756 = vsel %vm558, %v753, %v755
      %v757 = vrot.slane %v308, 1
      %v758 = vrot.slane %v309, 1
      %v759 = vsel %vm558, %v757, %v758
      %v760 = vrot.slane %v310, 1
      %v761 = vsel %vm558, %v758, %v760
      %v762 = vrot.slane %v311, 1
      %v763 = vsel %vm558, %v760, %v762
      %v764 = vrot.slane %v312, 1
      %v765 = vsel %vm558, %v762, %v764
      %v766 = vrot.slane %v313, 1
      %v767 = vrot.slane %v314, 1
      %v768 = vsel %vm558, %v766, %v767
      %v769 = vrot.slane %v315, 1
      %v770 = vsel %vm558, %v767, %v769
      %v771 = vrot.slane %v316, 1
      %v772 = vsel %vm558, %v769, %v771
      %v773 = vrot.slane %v317, 1
      %v774 = vsel %vm558, %v771, %v773
      %v775 = vrot.slane %v318, 1
      %v776 = vrot.slane %v319, 1
      %v777 = vsel %vm558, %v775, %v776
      %v778 = vrot.slane %v320, 1
      %v779 = vsel %vm558, %v776, %v778
      %v780 = vrot.slane %v321, 1
      %v781 = vsel %vm558, %v778, %v780
      %v782 = vrot.slane %v322, 1
      %v783 = vsel %vm558, %v780, %v782
      %v784 = vrot.slane %v323, 1
      %v785 = vrot.slane %v324, 1
      %v786 = vsel %vm558, %v784, %v785
      %v787 = vrot.slane %v325, 1
      %v788 = vsel %vm558, %v785, %v787
      %v789 = vrot.slane %v326, 1
      %v790 = vsel %vm558, %v787, %v789
      %v791 = vrot.slane %v327, 1
      %v792 = vsel %vm558, %v789, %v791
      %v793 = vrot.slane %v328, 1
      %v794 = vrot.slane %v329, 1
      %v795 = vsel %vm558, %v793, %v794
      %v796 = vrot.slane %v330, 1
      %v797 = vsel %vm558, %v794, %v796
      %v798 = vrot.slane %v331, 1
      %v799 = vsel %vm558, %v796, %v798
      %v800 = vrot.slane %v332, 1
      %v801 = vsel %vm558, %v798, %v800
      %v802 = vrot.slane %v333, 1
      %v803 = vrot.slane %v334, 1
      %v804 = vsel %vm558, %v802, %v803
      %v805 = vrot.slane %v335, 1
      %v806 = vsel %vm558, %v803, %v805
      %v807 = vrot.slane %v336, 1
      %v808 = vsel %vm558, %v805, %v807
      %v809 = vrot.slane %v337, 1
      %v810 = vsel %vm558, %v807, %v809
      %v811 = vrot.slane %v338, 1
      %v812 = vrot.slane %v339, 1
      %v813 = vsel %vm558, %v811, %v812
      %v814 = vrot.slane %v340, 1
      %v815 = vsel %vm558, %v812, %v814
      %v816 = vrot.slane %v341, 1
      %v817 = vsel %vm558, %v814, %v816
      %v818 = vrot.slane %v342, 1
      %v819 = vsel %vm558, %v816, %v818
      %v820 = vrot.slane %v343, 1
      %v821 = vrot.slane %v344, 1
      %v822 = vsel %vm558, %v820, %v821
      %v823 = vrot.slane %v345, 1
      %v824 = vsel %vm558, %v821, %v823
      %v825 = vrot.slane %v346, 1
      %v826 = vsel %vm558, %v823, %v825
      %v827 = vrot.slane %v347, 1
      %v828 = vsel %vm558, %v825, %v827
      %v829 = vrot.slane %v348, 1
      %v830 = vrot.slane %v349, 1
      %v831 = vsel %vm558, %v829, %v830
      %v832 = vrot.slane %v350, 1
      %v833 = vsel %vm558, %v830, %v832
      %v834 = vrot.slane %v351, 1
      %v835 = vsel %vm558, %v832, %v834
      %v836 = vrot.slane %v352, 1
      %v837 = vsel %vm558, %v834, %v836
      %v838 = vrot.slane %v353, 1
      %v839 = vrot.slane %v354, 1
      %v840 = vsel %vm558, %v838, %v839
      %v841 = vrot.slane %v355, 1
      %v842 = vsel %vm558, %v839, %v841
      %v843 = vrot.slane %v356, 1
      %v844 = vsel %vm558, %v841, %v843
      %v845 = vrot.slane %v357, 1
      %v846 = vsel %vm558, %v843, %v845
      %v847 = vrot.slane %v358, 1
      %v848 = vrot.slane %v359, 1
      %v849 = vsel %vm558, %v847, %v848
      %v850 = vrot.slane %v360, 1
      %v851 = vsel %vm558, %v848, %v850
      %v852 = vrot.slane %v361, 1
      %v853 = vsel %vm558, %v850, %v852
      %v854 = vrot.slane %v362, 1
      %v855 = vsel %vm558, %v852, %v854
      %v856 = vrot.slane %v363, 1
      %v857 = vrot.slane %v364, 1
      %v858 = vsel %vm558, %v856, %v857
      %v859 = vrot.slane %v365, 1
      %v860 = vsel %vm558, %v857, %v859
      %v861 = vrot.slane %v366, 1
      %v862 = vsel %vm558, %v859, %v861
      %v863 = vrot.slane %v367, 1
      %v864 = vsel %vm558, %v861, %v863
      %v865 = vrot.slane %v368, 1
      %v866 = vrot.slane %v369, 1
      %v867 = vsel %vm558, %v865, %v866
      %v868 = vrot.slane %v370, 1
      %v869 = vsel %vm558, %v866, %v868
      %v870 = vrot.slane %v371, 1
      %v871 = vsel %vm558, %v868, %v870
      %v872 = vrot.slane %v372, 1
      %v873 = vsel %vm558, %v870, %v872
      %v874 = vrot.slane %v373, 1
      %v875 = vrot.slane %v374, 1
      %v876 = vsel %vm558, %v874, %v875
      %v877 = vrot.slane %v375, 1
      %v878 = vsel %vm558, %v875, %v877
      %v879 = vrot.slane %v376, 1
      %v880 = vsel %vm558, %v877, %v879
      %v881 = vrot.slane %v377, 1
      %v882 = vsel %vm558, %v879, %v881
      %v1063 = vadd.f32 %v198, %v561
      %v1064 = vadd.f32 %v199, %v563
      %v1065 = vadd.f32 %v200, %v565
      %v1066 = vadd.f32 %v201, %v567
      %v1067 = vadd.f32 %v202, %v566
      %v1068 = vadd.f32 %v203, %v570
      %v1069 = vadd.f32 %v204, %v572
      %v1070 = vadd.f32 %v205, %v574
      %v1071 = vadd.f32 %v206, %v576
      %v1072 = vadd.f32 %v207, %v575
      %v1073 = vadd.f32 %v208, %v579
      %v1074 = vadd.f32 %v209, %v581
      %v1075 = vadd.f32 %v210, %v583
      %v1076 = vadd.f32 %v211, %v585
      %v1077 = vadd.f32 %v212, %v584
      %v1078 = vadd.f32 %v213, %v588
      %v1079 = vadd.f32 %v214, %v590
      %v1080 = vadd.f32 %v215, %v592
      %v1081 = vadd.f32 %v216, %v594
      %v1082 = vadd.f32 %v217, %v593
      %v1083 = vadd.f32 %v218, %v597
      %v1084 = vadd.f32 %v219, %v599
      %v1085 = vadd.f32 %v220, %v601
      %v1086 = vadd.f32 %v221, %v603
      %v1087 = vadd.f32 %v222, %v602
      %v1088 = vadd.f32 %v223, %v606
      %v1089 = vadd.f32 %v224, %v608
      %v1090 = vadd.f32 %v225, %v610
      %v1091 = vadd.f32 %v226, %v612
      %v1092 = vadd.f32 %v227, %v611
      %v1093 = vadd.f32 %v228, %v615
      %v1094 = vadd.f32 %v229, %v617
      %v1095 = vadd.f32 %v230, %v619
      %v1096 = vadd.f32 %v231, %v621
      %v1097 = vadd.f32 %v232, %v620
      %v1098 = vadd.f32 %v233, %v624
      %v1099 = vadd.f32 %v234, %v626
      %v1100 = vadd.f32 %v235, %v628
      %v1101 = vadd.f32 %v236, %v630
      %v1102 = vadd.f32 %v237, %v629
      %v1103 = vadd.f32 %v238, %v633
      %v1104 = vadd.f32 %v239, %v635
      %v1105 = vadd.f32 %v240, %v637
      %v1106 = vadd.f32 %v241, %v639
      %v1107 = vadd.f32 %v242, %v638
      %v1108 = vadd.f32 %v243, %v642
      %v1109 = vadd.f32 %v244, %v644
      %v1110 = vadd.f32 %v245, %v646
      %v1111 = vadd.f32 %v246, %v648
      %v1112 = vadd.f32 %v247, %v647
      %v1113 = vadd.f32 %v248, %v651
      %v1114 = vadd.f32 %v249, %v653
      %v1115 = vadd.f32 %v250, %v655
      %v1116 = vadd.f32 %v251, %v657
      %v1117 = vadd.f32 %v252, %v656
      %v1118 = vadd.f32 %v253, %v660
      %v1119 = vadd.f32 %v254, %v662
      %v1120 = vadd.f32 %v255, %v664
      %v1121 = vadd.f32 %v256, %v666
      %v1122 = vadd.f32 %v257, %v665
      %v1123 = vadd.f32 %v258, %v669
      %v1124 = vadd.f32 %v259, %v671
      %v1125 = vadd.f32 %v260, %v673
      %v1126 = vadd.f32 %v261, %v675
      %v1127 = vadd.f32 %v262, %v674
      %v1128 = vadd.f32 %v263, %v678
      %v1129 = vadd.f32 %v264, %v680
      %v1130 = vadd.f32 %v265, %v682
      %v1131 = vadd.f32 %v266, %v684
      %v1132 = vadd.f32 %v267, %v683
      %v1133 = vadd.f32 %v268, %v687
      %v1134 = vadd.f32 %v269, %v689
      %v1135 = vadd.f32 %v270, %v691
      %v1136 = vadd.f32 %v271, %v693
      %v1137 = vadd.f32 %v272, %v692
      %v1138 = vadd.f32 %v273, %v696
      %v1139 = vadd.f32 %v274, %v698
      %v1140 = vadd.f32 %v275, %v700
      %v1141 = vadd.f32 %v276, %v702
      %v1142 = vadd.f32 %v277, %v701
      %v1143 = vadd.f32 %v278, %v705
      %v1144 = vadd.f32 %v279, %v707
      %v1145 = vadd.f32 %v280, %v709
      %v1146 = vadd.f32 %v281, %v711
      %v1147 = vadd.f32 %v282, %v710
      %v1148 = vadd.f32 %v283, %v714
      %v1149 = vadd.f32 %v284, %v716
      %v1150 = vadd.f32 %v285, %v718
      %v1151 = vadd.f32 %v286, %v720
      %v1152 = vadd.f32 %v287, %v719
      %v1153 = vadd.f32 %v288, %v723
      %v1154 = vadd.f32 %v289, %v725
      %v1155 = vadd.f32 %v290, %v727
      %v1156 = vadd.f32 %v291, %v729
      %v1157 = vadd.f32 %v292, %v728
      %v1158 = vadd.f32 %v293, %v732
      %v1159 = vadd.f32 %v294, %v734
      %v1160 = vadd.f32 %v295, %v736
      %v1161 = vadd.f32 %v296, %v738
      %v1162 = vadd.f32 %v297, %v737
      %v1163 = vadd.f32 %v298, %v741
      %v1164 = vadd.f32 %v299, %v743
      %v1165 = vadd.f32 %v300, %v745
      %v1166 = vadd.f32 %v301, %v747
      %v1167 = vadd.f32 %v302, %v746
      %v1168 = vadd.f32 %v303, %v750
      %v1169 = vadd.f32 %v304, %v752
      %v1170 = vadd.f32 %v305, %v754
      %v1171 = vadd.f32 %v306, %v756
      %v1172 = vadd.f32 %v307, %v755
      %v1173 = vadd.f32 %v308, %v759
      %v1174 = vadd.f32 %v309, %v761
      %v1175 = vadd.f32 %v310, %v763
      %v1176 = vadd.f32 %v311, %v765
      %v1177 = vadd.f32 %v312, %v764
      %v1178 = vadd.f32 %v313, %v768
      %v1179 = vadd.f32 %v314, %v770
      %v1180 = vadd.f32 %v315, %v772
      %v1181 = vadd.f32 %v316, %v774
      %v1182 = vadd.f32 %v317, %v773
      %v1183 = vadd.f32 %v318, %v777
      %v1184 = vadd.f32 %v319, %v779
      %v1185 = vadd.f32 %v320, %v781
      %v1186 = vadd.f32 %v321, %v783
      %v1187 = vadd.f32 %v322, %v782
      %v1188 = vadd.f32 %v323, %v786
      %v1189 = vadd.f32 %v324, %v788
      %v1190 = vadd.f32 %v325, %v790
      %v1191 = vadd.f32 %v326, %v792
      %v1192 = vadd.f32 %v327, %v791
      %v1193 = vadd.f32 %v328, %v795
      %v1194 = vadd.f32 %v329, %v797
      %v1195 = vadd.f32 %v330, %v799
      %v1196 = vadd.f32 %v331, %v801
      %v1197 = vadd.f32 %v332, %v800
      %v1198 = vadd.f32 %v333, %v804
      %v1199 = vadd.f32 %v334, %v806
      %v1200 = vadd.f32 %v335, %v808
      %v1201 = vadd.f32 %v336, %v810
      %v1202 = vadd.f32 %v337, %v809
      %v1203 = vadd.f32 %v338, %v813
      %v1204 = vadd.f32 %v339, %v815
      %v1205 = vadd.f32 %v340, %v817
      %v1206 = vadd.f32 %v341, %v819
      %v1207 = vadd.f32 %v342, %v818
      %v1208 = vadd.f32 %v343, %v822
      %v1209 = vadd.f32 %v344, %v824
      %v1210 = vadd.f32 %v345, %v826
      %v1211 = vadd.f32 %v346, %v828
      %v1212 = vadd.f32 %v347, %v827
      %v1213 = vadd.f32 %v348, %v831
      %v1214 = vadd.f32 %v349, %v833
      %v1215 = vadd.f32 %v350, %v835
      %v1216 = vadd.f32 %v351, %v837
      %v1217 = vadd.f32 %v352, %v836
      %v1218 = vadd.f32 %v353, %v840
      %v1219 = vadd.f32 %v354, %v842
      %v1220 = vadd.f32 %v355, %v844
      %v1221 = vadd.f32 %v356, %v846
      %v1222 = vadd.f32 %v357, %v845
      %v1223 = vadd.f32 %v358, %v849
      %v1224 = vadd.f32 %v359, %v851
      %v1225 = vadd.f32 %v360, %v853
      %v1226 = vadd.f32 %v361, %v855
      %v1227 = vadd.f32 %v362, %v854
      %v1228 = vadd.f32 %v363, %v858
      %v1229 = vadd.f32 %v364, %v860
      %v1230 = vadd.f32 %v365, %v862
      %v1231 = vadd.f32 %v366, %v864
      %v1232 = vadd.f32 %v367, %v863
      %v1233 = vadd.f32 %v368, %v867
      %v1234 = vadd.f32 %v369, %v869
      %v1235 = vadd.f32 %v370, %v871
      %v1236 = vadd.f32 %v371, %v873
      %v1237 = vadd.f32 %v372, %v872
      %v1238 = vadd.f32 %v373, %v876
      %v1239 = vadd.f32 %v374, %v878
      %v1240 = vadd.f32 %v375, %v880
      %v1241 = vadd.f32 %v376, %v882
      %v1242 = vadd.f32 %v377, %v881
      %vm1243 = vcmask 1045504
      %v1244 = vrot.slane %v198, 2
      %v1245 = vrot.slane %v199, 2
      %v1246 = vsel %vm1243, %v1244, %v1245
      %v1247 = vrot.slane %v200, 2
      %v1248 = vsel %vm1243, %v1245, %v1247
      %v1249 = vrot.slane %v201, 2
      %v1250 = vsel %vm1243, %v1247, %v1249
      %v1251 = vrot.slane %v202, 2
      %v1252 = vsel %vm1243, %v1249, %v1251
      %v1253 = vrot.slane %v203, 2
      %v1254 = vrot.slane %v204, 2
      %v1255 = vsel %vm1243, %v1253, %v1254
      %v1256 = vrot.slane %v205, 2
      %v1257 = vsel %vm1243, %v1254, %v1256
      %v1258 = vrot.slane %v206, 2
      %v1259 = vsel %vm1243, %v1256, %v1258
      %v1260 = vrot.slane %v207, 2
      %v1261 = vsel %vm1243, %v1258, %v1260
      %v1262 = vrot.slane %v208, 2
      %v1263 = vrot.slane %v209, 2
      %v1264 = vsel %vm1243, %v1262, %v1263
      %v1265 = vrot.slane %v210, 2
      %v1266 = vsel %vm1243, %v1263, %v1265
      %v1267 = vrot.slane %v211, 2
      %v1268 = vsel %vm1243, %v1265, %v1267
      %v1269 = vrot.slane %v212, 2
      %v1270 = vsel %vm1243, %v1267, %v1269
      %v1271 = vrot.slane %v213, 2
      %v1272 = vrot.slane %v214, 2
      %v1273 = vsel %vm1243, %v1271, %v1272
      %v1274 = vrot.slane %v215, 2
      %v1275 = vsel %vm1243, %v1272, %v1274
      %v1276 = vrot.slane %v216, 2
      %v1277 = vsel %vm1243, %v1274, %v1276
      %v1278 = vrot.slane %v217, 2
      %v1279 = vsel %vm1243, %v1276, %v1278
      %v1280 = vrot.slane %v218, 2
      %v1281 = vrot.slane %v219, 2
      %v1282 = vsel %vm1243, %v1280, %v1281
      %v1283 = vrot.slane %v220, 2
      %v1284 = vsel %vm1243, %v1281, %v1283
      %v1285 = vrot.slane %v221, 2
      %v1286 = vsel %vm1243, %v1283, %v1285
      %v1287 = vrot.slane %v222, 2
      %v1288 = vsel %vm1243, %v1285, %v1287
      %v1289 = vrot.slane %v223, 2
      %v1290 = vrot.slane %v224, 2
      %v1291 = vsel %vm1243, %v1289, %v1290
      %v1292 = vrot.slane %v225, 2
      %v1293 = vsel %vm1243, %v1290, %v1292
      %v1294 = vrot.slane %v226, 2
      %v1295 = vsel %vm1243, %v1292, %v1294
      %v1296 = vrot.slane %v227, 2
      %v1297 = vsel %vm1243, %v1294, %v1296
      %v1298 = vrot.slane %v228, 2
      %v1299 = vrot.slane %v229, 2
      %v1300 = vsel %vm1243, %v1298, %v1299
      %v1301 = vrot.slane %v230, 2
      %v1302 = vsel %vm1243, %v1299, %v1301
      %v1303 = vrot.slane %v231, 2
      %v1304 = vsel %vm1243, %v1301, %v1303
      %v1305 = vrot.slane %v232, 2
      %v1306 = vsel %vm1243, %v1303, %v1305
      %v1307 = vrot.slane %v233, 2
      %v1308 = vrot.slane %v234, 2
      %v1309 = vsel %vm1243, %v1307, %v1308
      %v1310 = vrot.slane %v235, 2
      %v1311 = vsel %vm1243, %v1308, %v1310
      %v1312 = vrot.slane %v236, 2
      %v1313 = vsel %vm1243, %v1310, %v1312
      %v1314 = vrot.slane %v237, 2
      %v1315 = vsel %vm1243, %v1312, %v1314
      %v1316 = vrot.slane %v238, 2
      %v1317 = vrot.slane %v239, 2
      %v1318 = vsel %vm1243, %v1316, %v1317
      %v1319 = vrot.slane %v240, 2
      %v1320 = vsel %vm1243, %v1317, %v1319
      %v1321 = vrot.slane %v241, 2
      %v1322 = vsel %vm1243, %v1319, %v1321
      %v1323 = vrot.slane %v242, 2
      %v1324 = vsel %vm1243, %v1321, %v1323
      %v1325 = vrot.slane %v243, 2
      %v1326 = vrot.slane %v244, 2
      %v1327 = vsel %vm1243, %v1325, %v1326
      %v1328 = vrot.slane %v245, 2
      %v1329 = vsel %vm1243, %v1326, %v1328
      %v1330 = vrot.slane %v246, 2
      %v1331 = vsel %vm1243, %v1328, %v1330
      %v1332 = vrot.slane %v247, 2
      %v1333 = vsel %vm1243, %v1330, %v1332
      %v1334 = vrot.slane %v248, 2
      %v1335 = vrot.slane %v249, 2
      %v1336 = vsel %vm1243, %v1334, %v1335
      %v1337 = vrot.slane %v250, 2
      %v1338 = vsel %vm1243, %v1335, %v1337
      %v1339 = vrot.slane %v251, 2
      %v1340 = vsel %vm1243, %v1337, %v1339
      %v1341 = vrot.slane %v252, 2
      %v1342 = vsel %vm1243, %v1339, %v1341
      %v1343 = vrot.slane %v253, 2
      %v1344 = vrot.slane %v254, 2
      %v1345 = vsel %vm1243, %v1343, %v1344
      %v1346 = vrot.slane %v255, 2
      %v1347 = vsel %vm1243, %v1344, %v1346
      %v1348 = vrot.slane %v256, 2
      %v1349 = vsel %vm1243, %v1346, %v1348
      %v1350 = vrot.slane %v257, 2
      %v1351 = vsel %vm1243, %v1348, %v1350
      %v1352 = vrot.slane %v258, 2
      %v1353 = vrot.slane %v259, 2
      %v1354 = vsel %vm1243, %v1352, %v1353
      %v1355 = vrot.slane %v260, 2
      %v1356 = vsel %vm1243, %v1353, %v1355
      %v1357 = vrot.slane %v261, 2
      %v1358 = vsel %vm1243, %v1355, %v1357
      %v1359 = vrot.slane %v262, 2
      %v1360 = vsel %vm1243, %v1357, %v1359
      %v1361 = vrot.slane %v263, 2
      %v1362 = vrot.slane %v264, 2
      %v1363 = vsel %vm1243, %v1361, %v1362
      %v1364 = vrot.slane %v265, 2
      %v1365 = vsel %vm1243, %v1362, %v1364
      %v1366 = vrot.slane %v266, 2
      %v1367 = vsel %vm1243, %v1364, %v1366
      %v1368 = vrot.slane %v267, 2
      %v1369 = vsel %vm1243, %v1366, %v1368
      %v1370 = vrot.slane %v268, 2
      %v1371 = vrot.slane %v269, 2
      %v1372 = vsel %vm1243, %v1370, %v1371
      %v1373 = vrot.slane %v270, 2
      %v1374 = vsel %vm1243, %v1371, %v1373
      %v1375 = vrot.slane %v271, 2
      %v1376 = vsel %vm1243, %v1373, %v1375
      %v1377 = vrot.slane %v272, 2
      %v1378 = vsel %vm1243, %v1375, %v1377
      %v1379 = vrot.slane %v273, 2
      %v1380 = vrot.slane %v274, 2
      %v1381 = vsel %vm1243, %v1379, %v1380
      %v1382 = vrot.slane %v275, 2
      %v1383 = vsel %vm1243, %v1380, %v1382
      %v1384 = vrot.slane %v276, 2
      %v1385 = vsel %vm1243, %v1382, %v1384
      %v1386 = vrot.slane %v277, 2
      %v1387 = vsel %vm1243, %v1384, %v1386
      %v1388 = vrot.slane %v278, 2
      %v1389 = vrot.slane %v279, 2
      %v1390 = vsel %vm1243, %v1388, %v1389
      %v1391 = vrot.slane %v280, 2
      %v1392 = vsel %vm1243, %v1389, %v1391
      %v1393 = vrot.slane %v281, 2
      %v1394 = vsel %vm1243, %v1391, %v1393
      %v1395 = vrot.slane %v282, 2
      %v1396 = vsel %vm1243, %v1393, %v1395
      %v1397 = vrot.slane %v283, 2
      %v1398 = vrot.slane %v284, 2
      %v1399 = vsel %vm1243, %v1397, %v1398
      %v1400 = vrot.slane %v285, 2
      %v1401 = vsel %vm1243, %v1398, %v1400
      %v1402 = vrot.slane %v286, 2
      %v1403 = vsel %vm1243, %v1400, %v1402
      %v1404 = vrot.slane %v287, 2
      %v1405 = vsel %vm1243, %v1402, %v1404
      %v1406 = vrot.slane %v288, 2
      %v1407 = vrot.slane %v289, 2
      %v1408 = vsel %vm1243, %v1406, %v1407
      %v1409 = vrot.slane %v290, 2
      %v1410 = vsel %vm1243, %v1407, %v1409
      %v1411 = vrot.slane %v291, 2
      %v1412 = vsel %vm1243, %v1409, %v1411
      %v1413 = vrot.slane %v292, 2
      %v1414 = vsel %vm1243, %v1411, %v1413
      %v1415 = vrot.slane %v293, 2
      %v1416 = vrot.slane %v294, 2
      %v1417 = vsel %vm1243, %v1415, %v1416
      %v1418 = vrot.slane %v295, 2
      %v1419 = vsel %vm1243, %v1416, %v1418
      %v1420 = vrot.slane %v296, 2
      %v1421 = vsel %vm1243, %v1418, %v1420
      %v1422 = vrot.slane %v297, 2
      %v1423 = vsel %vm1243, %v1420, %v1422
      %v1424 = vrot.slane %v298, 2
      %v1425 = vrot.slane %v299, 2
      %v1426 = vsel %vm1243, %v1424, %v1425
      %v1427 = vrot.slane %v300, 2
      %v1428 = vsel %vm1243, %v1425, %v1427
      %v1429 = vrot.slane %v301, 2
      %v1430 = vsel %vm1243, %v1427, %v1429
      %v1431 = vrot.slane %v302, 2
      %v1432 = vsel %vm1243, %v1429, %v1431
      %v1433 = vrot.slane %v303, 2
      %v1434 = vrot.slane %v304, 2
      %v1435 = vsel %vm1243, %v1433, %v1434
      %v1436 = vrot.slane %v305, 2
      %v1437 = vsel %vm1243, %v1434, %v1436
      %v1438 = vrot.slane %v306, 2
      %v1439 = vsel %vm1243, %v1436, %v1438
      %v1440 = vrot.slane %v307, 2
      %v1441 = vsel %vm1243, %v1438, %v1440
      %v1442 = vrot.slane %v308, 2
      %v1443 = vrot.slane %v309, 2
      %v1444 = vsel %vm1243, %v1442, %v1443
      %v1445 = vrot.slane %v310, 2
      %v1446 = vsel %vm1243, %v1443, %v1445
      %v1447 = vrot.slane %v311, 2
      %v1448 = vsel %vm1243, %v1445, %v1447
      %v1449 = vrot.slane %v312, 2
      %v1450 = vsel %vm1243, %v1447, %v1449
      %v1451 = vrot.slane %v313, 2
      %v1452 = vrot.slane %v314, 2
      %v1453 = vsel %vm1243, %v1451, %v1452
      %v1454 = vrot.slane %v315, 2
      %v1455 = vsel %vm1243, %v1452, %v1454
      %v1456 = vrot.slane %v316, 2
      %v1457 = vsel %vm1243, %v1454, %v1456
      %v1458 = vrot.slane %v317, 2
      %v1459 = vsel %vm1243, %v1456, %v1458
      %v1460 = vrot.slane %v318, 2
      %v1461 = vrot.slane %v319, 2
      %v1462 = vsel %vm1243, %v1460, %v1461
      %v1463 = vrot.slane %v320, 2
      %v1464 = vsel %vm1243, %v1461, %v1463
      %v1465 = vrot.slane %v321, 2
      %v1466 = vsel %vm1243, %v1463, %v1465
      %v1467 = vrot.slane %v322, 2
      %v1468 = vsel %vm1243, %v1465, %v1467
      %v1469 = vrot.slane %v323, 2
      %v1470 = vrot.slane %v324, 2
      %v1471 = vsel %vm1243, %v1469, %v1470
      %v1472 = vrot.slane %v325, 2
      %v1473 = vsel %vm1243, %v1470, %v1472
      %v1474 = vrot.slane %v326, 2
      %v1475 = vsel %vm1243, %v1472, %v1474
      %v1476 = vrot.slane %v327, 2
      %v1477 = vsel %vm1243, %v1474, %v1476
      %v1478 = vrot.slane %v328, 2
      %v1479 = vrot.slane %v329, 2
      %v1480 = vsel %vm1243, %v1478, %v1479
      %v1481 = vrot.slane %v330, 2
      %v1482 = vsel %vm1243, %v1479, %v1481
      %v1483 = vrot.slane %v331, 2
      %v1484 = vsel %vm1243, %v1481, %v1483
      %v1485 = vrot.slane %v332, 2
      %v1486 = vsel %vm1243, %v1483, %v1485
      %v1487 = vrot.slane %v333, 2
      %v1488 = vrot.slane %v334, 2
      %v1489 = vsel %vm1243, %v1487, %v1488
      %v1490 = vrot.slane %v335, 2
      %v1491 = vsel %vm1243, %v1488, %v1490
      %v1492 = vrot.slane %v336, 2
      %v1493 = vsel %vm1243, %v1490, %v1492
      %v1494 = vrot.slane %v337, 2
      %v1495 = vsel %vm1243, %v1492, %v1494
      %v1496 = vrot.slane %v338, 2
      %v1497 = vrot.slane %v339, 2
      %v1498 = vsel %vm1243, %v1496, %v1497
      %v1499 = vrot.slane %v340, 2
      %v1500 = vsel %vm1243, %v1497, %v1499
      %v1501 = vrot.slane %v341, 2
      %v1502 = vsel %vm1243, %v1499, %v1501
      %v1503 = vrot.slane %v342, 2
      %v1504 = vsel %vm1243, %v1501, %v1503
      %v1505 = vrot.slane %v343, 2
      %v1506 = vrot.slane %v344, 2
      %v1507 = vsel %vm1243, %v1505, %v1506
      %v1508 = vrot.slane %v345, 2
      %v1509 = vsel %vm1243, %v1506, %v1508
      %v1510 = vrot.slane %v346, 2
      %v1511 = vsel %vm1243, %v1508, %v1510
      %v1512 = vrot.slane %v347, 2
      %v1513 = vsel %vm1243, %v1510, %v1512
      %v1514 = vrot.slane %v348, 2
      %v1515 = vrot.slane %v349, 2
      %v1516 = vsel %vm1243, %v1514, %v1515
      %v1517 = vrot.slane %v350, 2
      %v1518 = vsel %vm1243, %v1515, %v1517
      %v1519 = vrot.slane %v351, 2
      %v1520 = vsel %vm1243, %v1517, %v1519
      %v1521 = vrot.slane %v352, 2
      %v1522 = vsel %vm1243, %v1519, %v1521
      %v1523 = vrot.slane %v353, 2
      %v1524 = vrot.slane %v354, 2
      %v1525 = vsel %vm1243, %v1523, %v1524
      %v1526 = vrot.slane %v355, 2
      %v1527 = vsel %vm1243, %v1524, %v1526
      %v1528 = vrot.slane %v356, 2
      %v1529 = vsel %vm1243, %v1526, %v1528
      %v1530 = vrot.slane %v357, 2
      %v1531 = vsel %vm1243, %v1528, %v1530
      %v1532 = vrot.slane %v358, 2
      %v1533 = vrot.slane %v359, 2
      %v1534 = vsel %vm1243, %v1532, %v1533
      %v1535 = vrot.slane %v360, 2
      %v1536 = vsel %vm1243, %v1533, %v1535
      %v1537 = vrot.slane %v361, 2
      %v1538 = vsel %vm1243, %v1535, %v1537
      %v1539 = vrot.slane %v362, 2
      %v1540 = vsel %vm1243, %v1537, %v1539
      %v1541 = vrot.slane %v363, 2
      %v1542 = vrot.slane %v364, 2
      %v1543 = vsel %vm1243, %v1541, %v1542
      %v1544 = vrot.slane %v365, 2
      %v1545 = vsel %vm1243, %v1542, %v1544
      %v1546 = vrot.slane %v366, 2
      %v1547 = vsel %vm1243, %v1544, %v1546
      %v1548 = vrot.slane %v367, 2
      %v1549 = vsel %vm1243, %v1546, %v1548
      %v1550 = vrot.slane %v368, 2
      %v1551 = vrot.slane %v369, 2
      %v1552 = vsel %vm1243, %v1550, %v1551
      %v1553 = vrot.slane %v370, 2
      %v1554 = vsel %vm1243, %v1551, %v1553
      %v1555 = vrot.slane %v371, 2
      %v1556 = vsel %vm1243, %v1553, %v1555
      %v1557 = vrot.slane %v372, 2
      %v1558 = vsel %vm1243, %v1555, %v1557
      %v1559 = vrot.slane %v373, 2
      %v1560 = vrot.slane %v374, 2
      %v1561 = vsel %vm1243, %v1559, %v1560
      %v1562 = vrot.slane %v375, 2
      %v1563 = vsel %vm1243, %v1560, %v1562
      %v1564 = vrot.slane %v376, 2
      %v1565 = vsel %vm1243, %v1562, %v1564
      %v1566 = vrot.slane %v377, 2
      %v1567 = vsel %vm1243, %v1564, %v1566
      %v1748 = vadd.f32 %v1063, %v1246
      %v1749 = vadd.f32 %v1064, %v1248
      %v1750 = vadd.f32 %v1065, %v1250
      %v1751 = vadd.f32 %v1066, %v1252
      %v1752 = vadd.f32 %v1067, %v1251
      %v1753 = vadd.f32 %v1068, %v1255
      %v1754 = vadd.f32 %v1069, %v1257
      %v1755 = vadd.f32 %v1070, %v1259
      %v1756 = vadd.f32 %v1071, %v1261
      %v1757 = vadd.f32 %v1072, %v1260
      %v1758 = vadd.f32 %v1073, %v1264
      %v1759 = vadd.f32 %v1074, %v1266
      %v1760 = vadd.f32 %v1075, %v1268
      %v1761 = vadd.f32 %v1076, %v1270
      %v1762 = vadd.f32 %v1077, %v1269
      %v1763 = vadd.f32 %v1078, %v1273
      %v1764 = vadd.f32 %v1079, %v1275
      %v1765 = vadd.f32 %v1080, %v1277
      %v1766 = vadd.f32 %v1081, %v1279
      %v1767 = vadd.f32 %v1082, %v1278
      %v1768 = vadd.f32 %v1083, %v1282
      %v1769 = vadd.f32 %v1084, %v1284
      %v1770 = vadd.f32 %v1085, %v1286
      %v1771 = vadd.f32 %v1086, %v1288
      %v1772 = vadd.f32 %v1087, %v1287
      %v1773 = vadd.f32 %v1088, %v1291
      %v1774 = vadd.f32 %v1089, %v1293
      %v1775 = vadd.f32 %v1090, %v1295
      %v1776 = vadd.f32 %v1091, %v1297
      %v1777 = vadd.f32 %v1092, %v1296
      %v1778 = vadd.f32 %v1093, %v1300
      %v1779 = vadd.f32 %v1094, %v1302
      %v1780 = vadd.f32 %v1095, %v1304
      %v1781 = vadd.f32 %v1096, %v1306
      %v1782 = vadd.f32 %v1097, %v1305
      %v1783 = vadd.f32 %v1098, %v1309
      %v1784 = vadd.f32 %v1099, %v1311
      %v1785 = vadd.f32 %v1100, %v1313
      %v1786 = vadd.f32 %v1101, %v1315
      %v1787 = vadd.f32 %v1102, %v1314
      %v1788 = vadd.f32 %v1103, %v1318
      %v1789 = vadd.f32 %v1104, %v1320
      %v1790 = vadd.f32 %v1105, %v1322
      %v1791 = vadd.f32 %v1106, %v1324
      %v1792 = vadd.f32 %v1107, %v1323
      %v1793 = vadd.f32 %v1108, %v1327
      %v1794 = vadd.f32 %v1109, %v1329
      %v1795 = vadd.f32 %v1110, %v1331
      %v1796 = vadd.f32 %v1111, %v1333
      %v1797 = vadd.f32 %v1112, %v1332
      %v1798 = vadd.f32 %v1113, %v1336
      %v1799 = vadd.f32 %v1114, %v1338
      %v1800 = vadd.f32 %v1115, %v1340
      %v1801 = vadd.f32 %v1116, %v1342
      %v1802 = vadd.f32 %v1117, %v1341
      %v1803 = vadd.f32 %v1118, %v1345
      %v1804 = vadd.f32 %v1119, %v1347
      %v1805 = vadd.f32 %v1120, %v1349
      %v1806 = vadd.f32 %v1121, %v1351
      %v1807 = vadd.f32 %v1122, %v1350
      %v1808 = vadd.f32 %v1123, %v1354
      %v1809 = vadd.f32 %v1124, %v1356
      %v1810 = vadd.f32 %v1125, %v1358
      %v1811 = vadd.f32 %v1126, %v1360
      %v1812 = vadd.f32 %v1127, %v1359
      %v1813 = vadd.f32 %v1128, %v1363
      %v1814 = vadd.f32 %v1129, %v1365
      %v1815 = vadd.f32 %v1130, %v1367
      %v1816 = vadd.f32 %v1131, %v1369
      %v1817 = vadd.f32 %v1132, %v1368
      %v1818 = vadd.f32 %v1133, %v1372
      %v1819 = vadd.f32 %v1134, %v1374
      %v1820 = vadd.f32 %v1135, %v1376
      %v1821 = vadd.f32 %v1136, %v1378
      %v1822 = vadd.f32 %v1137, %v1377
      %v1823 = vadd.f32 %v1138, %v1381
      %v1824 = vadd.f32 %v1139, %v1383
      %v1825 = vadd.f32 %v1140, %v1385
      %v1826 = vadd.f32 %v1141, %v1387
      %v1827 = vadd.f32 %v1142, %v1386
      %v1828 = vadd.f32 %v1143, %v1390
      %v1829 = vadd.f32 %v1144, %v1392
      %v1830 = vadd.f32 %v1145, %v1394
      %v1831 = vadd.f32 %v1146, %v1396
      %v1832 = vadd.f32 %v1147, %v1395
      %v1833 = vadd.f32 %v1148, %v1399
      %v1834 = vadd.f32 %v1149, %v1401
      %v1835 = vadd.f32 %v1150, %v1403
      %v1836 = vadd.f32 %v1151, %v1405
      %v1837 = vadd.f32 %v1152, %v1404
      %v1838 = vadd.f32 %v1153, %v1408
      %v1839 = vadd.f32 %v1154, %v1410
      %v1840 = vadd.f32 %v1155, %v1412
      %v1841 = vadd.f32 %v1156, %v1414
      %v1842 = vadd.f32 %v1157, %v1413
      %v1843 = vadd.f32 %v1158, %v1417
      %v1844 = vadd.f32 %v1159, %v1419
      %v1845 = vadd.f32 %v1160, %v1421
      %v1846 = vadd.f32 %v1161, %v1423
      %v1847 = vadd.f32 %v1162, %v1422
      %v1848 = vadd.f32 %v1163, %v1426
      %v1849 = vadd.f32 %v1164, %v1428
      %v1850 = vadd.f32 %v1165, %v1430
      %v1851 = vadd.f32 %v1166, %v1432
      %v1852 = vadd.f32 %v1167, %v1431
      %v1853 = vadd.f32 %v1168, %v1435
      %v1854 = vadd.f32 %v1169, %v1437
      %v1855 = vadd.f32 %v1170, %v1439
      %v1856 = vadd.f32 %v1171, %v1441
      %v1857 = vadd.f32 %v1172, %v1440
      %v1858 = vadd.f32 %v1173, %v1444
      %v1859 = vadd.f32 %v1174, %v1446
      %v1860 = vadd.f32 %v1175, %v1448
      %v1861 = vadd.f32 %v1176, %v1450
      %v1862 = vadd.f32 %v1177, %v1449
      %v1863 = vadd.f32 %v1178, %v1453
      %v1864 = vadd.f32 %v1179, %v1455
      %v1865 = vadd.f32 %v1180, %v1457
      %v1866 = vadd.f32 %v1181, %v1459
      %v1867 = vadd.f32 %v1182, %v1458
      %v1868 = vadd.f32 %v1183, %v1462
      %v1869 = vadd.f32 %v1184, %v1464
      %v1870 = vadd.f32 %v1185, %v1466
      %v1871 = vadd.f32 %v1186, %v1468
      %v1872 = vadd.f32 %v1187, %v1467
      %v1873 = vadd.f32 %v1188, %v1471
      %v1874 = vadd.f32 %v1189, %v1473
      %v1875 = vadd.f32 %v1190, %v1475
      %v1876 = vadd.f32 %v1191, %v1477
      %v1877 = vadd.f32 %v1192, %v1476
      %v1878 = vadd.f32 %v1193, %v1480
      %v1879 = vadd.f32 %v1194, %v1482
      %v1880 = vadd.f32 %v1195, %v1484
      %v1881 = vadd.f32 %v1196, %v1486
      %v1882 = vadd.f32 %v1197, %v1485
      %v1883 = vadd.f32 %v1198, %v1489
      %v1884 = vadd.f32 %v1199, %v1491
      %v1885 = vadd.f32 %v1200, %v1493
      %v1886 = vadd.f32 %v1201, %v1495
      %v1887 = vadd.f32 %v1202, %v1494
      %v1888 = vadd.f32 %v1203, %v1498
      %v1889 = vadd.f32 %v1204, %v1500
      %v1890 = vadd.f32 %v1205, %v1502
      %v1891 = vadd.f32 %v1206, %v1504
      %v1892 = vadd.f32 %v1207, %v1503
      %v1893 = vadd.f32 %v1208, %v1507
      %v1894 = vadd.f32 %v1209, %v1509
      %v1895 = vadd.f32 %v1210, %v1511
      %v1896 = vadd.f32 %v1211, %v1513
      %v1897 = vadd.f32 %v1212, %v1512
      %v1898 = vadd.f32 %v1213, %v1516
      %v1899 = vadd.f32 %v1214, %v1518
      %v1900 = vadd.f32 %v1215, %v1520
      %v1901 = vadd.f32 %v1216, %v1522
      %v1902 = vadd.f32 %v1217, %v1521
      %v1903 = vadd.f32 %v1218, %v1525
      %v1904 = vadd.f32 %v1219, %v1527
      %v1905 = vadd.f32 %v1220, %v1529
      %v1906 = vadd.f32 %v1221, %v1531
      %v1907 = vadd.f32 %v1222, %v1530
      %v1908 = vadd.f32 %v1223, %v1534
      %v1909 = vadd.f32 %v1224, %v1536
      %v1910 = vadd.f32 %v1225, %v1538
      %v1911 = vadd.f32 %v1226, %v1540
      %v1912 = vadd.f32 %v1227, %v1539
      %v1913 = vadd.f32 %v1228, %v1543
      %v1914 = vadd.f32 %v1229, %v1545
      %v1915 = vadd.f32 %v1230, %v1547
      %v1916 = vadd.f32 %v1231, %v1549
      %v1917 = vadd.f32 %v1232, %v1548
      %v1918 = vadd.f32 %v1233, %v1552
      %v1919 = vadd.f32 %v1234, %v1554
      %v1920 = vadd.f32 %v1235, %v1556
      %v1921 = vadd.f32 %v1236, %v1558
      %v1922 = vadd.f32 %v1237, %v1557
      %v1923 = vadd.f32 %v1238, %v1561
      %v1924 = vadd.f32 %v1239, %v1563
      %v1925 = vadd.f32 %v1240, %v1565
      %v1926 = vadd.f32 %v1241, %v1567
      %v1927 = vadd.f32 %v1242, %v1566
      %v1928 = vadd.f32 %v1748, %v1753
      %v1929 = vadd.f32 %v1749, %v1754
      %v1930 = vadd.f32 %v1750, %v1755
      %v1931 = vadd.f32 %v1751, %v1756
      %v1932 = vadd.f32 %v1752, %v1757
      %v1933 = vadd.f32 %v1753, %v1758
      %v1934 = vadd.f32 %v1754, %v1759
      %v1935 = vadd.f32 %v1755, %v1760
      %v1936 = vadd.f32 %v1756, %v1761
      %v1937 = vadd.f32 %v1757, %v1762
      %v1938 = vadd.f32 %v1758, %v1763
      %v1939 = vadd.f32 %v1759, %v1764
      %v1940 = vadd.f32 %v1760, %v1765
      %v1941 = vadd.f32 %v1761, %v1766
      %v1942 = vadd.f32 %v1762, %v1767
      %v1943 = vadd.f32 %v1763, %v1768
      %v1944 = vadd.f32 %v1764, %v1769
      %v1945 = vadd.f32 %v1765, %v1770
      %v1946 = vadd.f32 %v1766, %v1771
      %v1947 = vadd.f32 %v1767, %v1772
      %v1948 = vadd.f32 %v1768, %v1773
      %v1949 = vadd.f32 %v1769, %v1774
      %v1950 = vadd.f32 %v1770, %v1775
      %v1951 = vadd.f32 %v1771, %v1776
      %v1952 = vadd.f32 %v1772, %v1777
      %v1953 = vadd.f32 %v1773, %v1778
      %v1954 = vadd.f32 %v1774, %v1779
      %v1955 = vadd.f32 %v1775, %v1780
      %v1956 = vadd.f32 %v1776, %v1781
      %v1957 = vadd.f32 %v1777, %v1782
      %v1958 = vadd.f32 %v1778, %v1783
      %v1959 = vadd.f32 %v1779, %v1784
      %v1960 = vadd.f32 %v1780, %v1785
      %v1961 = vadd.f32 %v1781, %v1786
      %v1962 = vadd.f32 %v1782, %v1787
      %v1963 = vadd.f32 %v1783, %v1788
      %v1964 = vadd.f32 %v1784, %v1789
      %v1965 = vadd.f32 %v1785, %v1790
      %v1966 = vadd.f32 %v1786, %v1791
      %v1967 = vadd.f32 %v1787, %v1792
      %v1968 = vadd.f32 %v1788, %v1793
      %v1969 = vadd.f32 %v1789, %v1794
      %v1970 = vadd.f32 %v1790, %v1795
      %v1971 = vadd.f32 %v1791, %v1796
      %v1972 = vadd.f32 %v1792, %v1797
      %v1973 = vadd.f32 %v1793, %v1798
      %v1974 = vadd.f32 %v1794, %v1799
      %v1975 = vadd.f32 %v1795, %v1800
      %v1976 = vadd.f32 %v1796, %v1801
      %v1977 = vadd.f32 %v1797, %v1802
      %v1978 = vadd.f32 %v1798, %v1803
      %v1979 = vadd.f32 %v1799, %v1804
      %v1980 = vadd.f32 %v1800, %v1805
      %v1981 = vadd.f32 %v1801, %v1806
      %v1982 = vadd.f32 %v1802, %v1807
      %v1983 = vadd.f32 %v1803, %v1808
      %v1984 = vadd.f32 %v1804, %v1809
      %v1985 = vadd.f32 %v1805, %v1810
      %v1986 = vadd.f32 %v1806, %v1811
      %v1987 = vadd.f32 %v1807, %v1812
      %v1988 = vadd.f32 %v1808, %v1813
      %v1989 = vadd.f32 %v1809, %v1814
      %v1990 = vadd.f32 %v1810, %v1815
      %v1991 = vadd.f32 %v1811, %v1816
      %v1992 = vadd.f32 %v1812, %v1817
      %v1993 = vadd.f32 %v1813, %v1818
      %v1994 = vadd.f32 %v1814, %v1819
      %v1995 = vadd.f32 %v1815, %v1820
      %v1996 = vadd.f32 %v1816, %v1821
      %v1997 = vadd.f32 %v1817, %v1822
      %v1998 = vadd.f32 %v1818, %v1823
      %v1999 = vadd.f32 %v1819, %v1824
      %v2000 = vadd.f32 %v1820, %v1825
      %v2001 = vadd.f32 %v1821, %v1826
      %v2002 = vadd.f32 %v1822, %v1827
      %v2003 = vadd.f32 %v1823, %v1828
      %v2004 = vadd.f32 %v1824, %v1829
      %v2005 = vadd.f32 %v1825, %v1830
      %v2006 = vadd.f32 %v1826, %v1831
      %v2007 = vadd.f32 %v1827, %v1832
      %v2008 = vadd.f32 %v1828, %v1833
      %v2009 = vadd.f32 %v1829, %v1834
      %v2010 = vadd.f32 %v1830, %v1835
      %v2011 = vadd.f32 %v1831, %v1836
      %v2012 = vadd.f32 %v1832, %v1837
      %v2013 = vadd.f32 %v1833, %v1838
      %v2014 = vadd.f32 %v1834, %v1839
      %v2015 = vadd.f32 %v1835, %v1840
      %v2016 = vadd.f32 %v1836, %v1841
      %v2017 = vadd.f32 %v1837, %v1842
      %v2018 = vadd.f32 %v1838, %v1843
      %v2019 = vadd.f32 %v1839, %v1844
      %v2020 = vadd.f32 %v1840, %v1845
      %v2021 = vadd.f32 %v1841, %v1846
      %v2022 = vadd.f32 %v1842, %v1847
      %v2023 = vadd.f32 %v1843, %v1848
      %v2024 = vadd.f32 %v1844, %v1849
      %v2025 = vadd.f32 %v1845, %v1850
      %v2026 = vadd.f32 %v1846, %v1851
      %v2027 = vadd.f32 %v1847, %v1852
      %v2028 = vadd.f32 %v1848, %v1853
      %v2029 = vadd.f32 %v1849, %v1854
      %v2030 = vadd.f32 %v1850, %v1855
      %v2031 = vadd.f32 %v1851, %v1856
      %v2032 = vadd.f32 %v1852, %v1857
      %v2033 = vadd.f32 %v1853, %v1858
      %v2034 = vadd.f32 %v1854, %v1859
      %v2035 = vadd.f32 %v1855, %v1860
      %v2036 = vadd.f32 %v1856, %v1861
      %v2037 = vadd.f32 %v1857, %v1862
      %v2038 = vadd.f32 %v1858, %v1863
      %v2039 = vadd.f32 %v1859, %v1864
      %v2040 = vadd.f32 %v1860, %v1865
      %v2041 = vadd.f32 %v1861, %v1866
      %v2042 = vadd.f32 %v1862, %v1867
      %v2043 = vadd.f32 %v1863, %v1868
      %v2044 = vadd.f32 %v1864, %v1869
      %v2045 = vadd.f32 %v1865, %v1870
      %v2046 = vadd.f32 %v1866, %v1871
      %v2047 = vadd.f32 %v1867, %v1872
      %v2048 = vadd.f32 %v1868, %v1873
      %v2049 = vadd.f32 %v1869, %v1874
      %v2050 = vadd.f32 %v1870, %v1875
      %v2051 = vadd.f32 %v1871, %v1876
      %v2052 = vadd.f32 %v1872, %v1877
      %v2053 = vadd.f32 %v1873, %v1878
      %v2054 = vadd.f32 %v1874, %v1879
      %v2055 = vadd.f32 %v1875, %v1880
      %v2056 = vadd.f32 %v1876, %v1881
      %v2057 = vadd.f32 %v1877, %v1882
      %v2058 = vadd.f32 %v1878, %v1883
      %v2059 = vadd.f32 %v1879, %v1884
      %v2060 = vadd.f32 %v1880, %v1885
      %v2061 = vadd.f32 %v1881, %v1886
      %v2062 = vadd.f32 %v1882, %v1887
      %v2063 = vadd.f32 %v1883, %v1888
      %v2064 = vadd.f32 %v1884, %v1889
      %v2065 = vadd.f32 %v1885, %v1890
      %v2066 = vadd.f32 %v1886, %v1891
      %v2067 = vadd.f32 %v1887, %v1892
      %v2068 = vadd.f32 %v1888, %v1893
      %v2069 = vadd.f32 %v1889, %v1894
      %v2070 = vadd.f32 %v1890, %v1895
      %v2071 = vadd.f32 %v1891, %v1896
      %v2072 = vadd.f32 %v1892, %v1897
      %v2073 = vadd.f32 %v1893, %v1898
      %v2074 = vadd.f32 %v1894, %v1899
      %v2075 = vadd.f32 %v1895, %v1900
      %v2076 = vadd.f32 %v1896, %v1901
      %v2077 = vadd.f32 %v1897, %v1902
      %v2078 = vadd.f32 %v1898, %v1903
      %v2079 = vadd.f32 %v1899, %v1904
      %v2080 = vadd.f32 %v1900, %v1905
      %v2081 = vadd.f32 %v1901, %v1906
      %v2082 = vadd.f32 %v1902, %v1907
      %v2083 = vadd.f32 %v1903, %v1908
      %v2084 = vadd.f32 %v1904, %v1909
      %v2085 = vadd.f32 %v1905, %v1910
      %v2086 = vadd.f32 %v1906, %v1911
      %v2087 = vadd.f32 %v1907, %v1912
      %v2088 = vadd.f32 %v1908, %v1913
      %v2089 = vadd.f32 %v1909, %v1914
      %v2090 = vadd.f32 %v1910, %v1915
      %v2091 = vadd.f32 %v1911, %v1916
      %v2092 = vadd.f32 %v1912, %v1917
      %v2093 = vadd.f32 %v1913, %v1918
      %v2094 = vadd.f32 %v1914, %v1919
      %v2095 = vadd.f32 %v1915, %v1920
      %v2096 = vadd.f32 %v1916, %v1921
      %v2097 = vadd.f32 %v1917, %v1922
      %v2098 = vadd.f32 %v1928, %v1758
      %v2099 = vadd.f32 %v1929, %v1759
      %v2100 = vadd.f32 %v1930, %v1760
      %v2101 = vadd.f32 %v1931, %v1761
      %v2102 = vadd.f32 %v1932, %v1762
      %v2103 = vadd.f32 %v1933, %v1763
      %v2104 = vadd.f32 %v1934, %v1764
      %v2105 = vadd.f32 %v1935, %v1765
      %v2106 = vadd.f32 %v1936, %v1766
      %v2107 = vadd.f32 %v1937, %v1767
      %v2108 = vadd.f32 %v1938, %v1768
      %v2109 = vadd.f32 %v1939, %v1769
      %v2110 = vadd.f32 %v1940, %v1770
      %v2111 = vadd.f32 %v1941, %v1771
      %v2112 = vadd.f32 %v1942, %v1772
      %v2113 = vadd.f32 %v1943, %v1773
      %v2114 = vadd.f32 %v1944, %v1774
      %v2115 = vadd.f32 %v1945, %v1775
      %v2116 = vadd.f32 %v1946, %v1776
      %v2117 = vadd.f32 %v1947, %v1777
      %v2118 = vadd.f32 %v1948, %v1778
      %v2119 = vadd.f32 %v1949, %v1779
      %v2120 = vadd.f32 %v1950, %v1780
      %v2121 = vadd.f32 %v1951, %v1781
      %v2122 = vadd.f32 %v1952, %v1782
      %v2123 = vadd.f32 %v1953, %v1783
      %v2124 = vadd.f32 %v1954, %v1784
      %v2125 = vadd.f32 %v1955, %v1785
      %v2126 = vadd.f32 %v1956, %v1786
      %v2127 = vadd.f32 %v1957, %v1787
      %v2128 = vadd.f32 %v1958, %v1788
      %v2129 = vadd.f32 %v1959, %v1789
      %v2130 = vadd.f32 %v1960, %v1790
      %v2131 = vadd.f32 %v1961, %v1791
      %v2132 = vadd.f32 %v1962, %v1792
      %v2133 = vadd.f32 %v1963, %v1793
      %v2134 = vadd.f32 %v1964, %v1794
      %v2135 = vadd.f32 %v1965, %v1795
      %v2136 = vadd.f32 %v1966, %v1796
      %v2137 = vadd.f32 %v1967, %v1797
      %v2138 = vadd.f32 %v1968, %v1798
      %v2139 = vadd.f32 %v1969, %v1799
      %v2140 = vadd.f32 %v1970, %v1800
      %v2141 = vadd.f32 %v1971, %v1801
      %v2142 = vadd.f32 %v1972, %v1802
      %v2143 = vadd.f32 %v1973, %v1803
      %v2144 = vadd.f32 %v1974, %v1804
      %v2145 = vadd.f32 %v1975, %v1805
      %v2146 = vadd.f32 %v1976, %v1806
      %v2147 = vadd.f32 %v1977, %v1807
      %v2148 = vadd.f32 %v1978, %v1808
      %v2149 = vadd.f32 %v1979, %v1809
      %v2150 = vadd.f32 %v1980, %v1810
      %v2151 = vadd.f32 %v1981, %v1811
      %v2152 = vadd.f32 %v1982, %v1812
      %v2153 = vadd.f32 %v1983, %v1813
      %v2154 = vadd.f32 %v1984, %v1814
      %v2155 = vadd.f32 %v1985, %v1815
      %v2156 = vadd.f32 %v1986, %v1816
      %v2157 = vadd.f32 %v1987, %v1817
      %v2158 = vadd.f32 %v1988, %v1818
      %v2159 = vadd.f32 %v1989, %v1819
      %v2160 = vadd.f32 %v1990, %v1820
      %v2161 = vadd.f32 %v1991, %v1821
      %v2162 = vadd.f32 %v1992, %v1822
      %v2163 = vadd.f32 %v1993, %v1823
      %v2164 = vadd.f32 %v1994, %v1824
      %v2165 = vadd.f32 %v1995, %v1825
      %v2166 = vadd.f32 %v1996, %v1826
      %v2167 = vadd.f32 %v1997, %v1827
      %v2168 = vadd.f32 %v1998, %v1828
      %v2169 = vadd.f32 %v1999, %v1829
      %v2170 = vadd.f32 %v2000, %v1830
      %v2171 = vadd.f32 %v2001, %v1831
      %v2172 = vadd.f32 %v2002, %v1832
      %v2173 = vadd.f32 %v2003, %v1833
      %v2174 = vadd.f32 %v2004, %v1834
      %v2175 = vadd.f32 %v2005, %v1835
      %v2176 = vadd.f32 %v2006, %v1836
      %v2177 = vadd.f32 %v2007, %v1837
      %v2178 = vadd.f32 %v2008, %v1838
      %v2179 = vadd.f32 %v2009, %v1839
      %v2180 = vadd.f32 %v2010, %v1840
      %v2181 = vadd.f32 %v2011, %v1841
      %v2182 = vadd.f32 %v2012, %v1842
      %v2183 = vadd.f32 %v2013, %v1843
      %v2184 = vadd.f32 %v2014, %v1844
      %v2185 = vadd.f32 %v2015, %v1845
      %v2186 = vadd.f32 %v2016, %v1846
      %v2187 = vadd.f32 %v2017, %v1847
      %v2188 = vadd.f32 %v2018, %v1848
      %v2189 = vadd.f32 %v2019, %v1849
      %v2190 = vadd.f32 %v2020, %v1850
      %v2191 = vadd.f32 %v2021, %v1851
      %v2192 = vadd.f32 %v2022, %v1852
      %v2193 = vadd.f32 %v2023, %v1853
      %v2194 = vadd.f32 %v2024, %v1854
      %v2195 = vadd.f32 %v2025, %v1855
      %v2196 = vadd.f32 %v2026, %v1856
      %v2197 = vadd.f32 %v2027, %v1857
      %v2198 = vadd.f32 %v2028, %v1858
      %v2199 = vadd.f32 %v2029, %v1859
      %v2200 = vadd.f32 %v2030, %v1860
      %v2201 = vadd.f32 %v2031, %v1861
      %v2202 = vadd.f32 %v2032, %v1862
      %v2203 = vadd.f32 %v2033, %v1863
      %v2204 = vadd.f32 %v2034, %v1864
      %v2205 = vadd.f32 %v2035, %v1865
      %v2206 = vadd.f32 %v2036, %v1866
      %v2207 = vadd.f32 %v2037, %v1867
      %v2208 = vadd.f32 %v2038, %v1868
      %v2209 = vadd.f32 %v2039, %v1869
      %v2210 = vadd.f32 %v2040, %v1870
      %v2211 = vadd.f32 %v2041, %v1871
      %v2212 = vadd.f32 %v2042, %v1872
      %v2213 = vadd.f32 %v2043, %v1873
      %v2214 = vadd.f32 %v2044, %v1874
      %v2215 = vadd.f32 %v2045, %v1875
      %v2216 = vadd.f32 %v2046, %v1876
      %v2217 = vadd.f32 %v2047, %v1877
      %v2218 = vadd.f32 %v2048, %v1878
      %v2219 = vadd.f32 %v2049, %v1879
      %v2220 = vadd.f32 %v2050, %v1880
      %v2221 = vadd.f32 %v2051, %v1881
      %v2222 = vadd.f32 %v2052, %v1882
      %v2223 = vadd.f32 %v2053, %v1883
      %v2224 = vadd.f32 %v2054, %v1884
      %v2225 = vadd.f32 %v2055, %v1885
      %v2226 = vadd.f32 %v2056, %v1886
      %v2227 = vadd.f32 %v2057, %v1887
      %v2228 = vadd.f32 %v2058, %v1888
      %v2229 = vadd.f32 %v2059, %v1889
      %v2230 = vadd.f32 %v2060, %v1890
      %v2231 = vadd.f32 %v2061, %v1891
      %v2232 = vadd.f32 %v2062, %v1892
      %v2233 = vadd.f32 %v2063, %v1893
      %v2234 = vadd.f32 %v2064, %v1894
      %v2235 = vadd.f32 %v2065, %v1895
      %v2236 = vadd.f32 %v2066, %v1896
      %v2237 = vadd.f32 %v2067, %v1897
      %v2238 = vadd.f32 %v2068, %v1898
      %v2239 = vadd.f32 %v2069, %v1899
      %v2240 = vadd.f32 %v2070, %v1900
      %v2241 = vadd.f32 %v2071, %v1901
      %v2242 = vadd.f32 %v2072, %v1902
      %v2243 = vadd.f32 %v2073, %v1903
      %v2244 = vadd.f32 %v2074, %v1904
      %v2245 = vadd.f32 %v2075, %v1905
      %v2246 = vadd.f32 %v2076, %v1906
      %v2247 = vadd.f32 %v2077, %v1907
      %v2248 = vadd.f32 %v2078, %v1908
      %v2249 = vadd.f32 %v2079, %v1909
      %v2250 = vadd.f32 %v2080, %v1910
      %v2251 = vadd.f32 %v2081, %v1911
      %v2252 = vadd.f32 %v2082, %v1912
      %v2253 = vadd.f32 %v2083, %v1913
      %v2254 = vadd.f32 %v2084, %v1914
      %v2255 = vadd.f32 %v2085, %v1915
      %v2256 = vadd.f32 %v2086, %v1916
      %v2257 = vadd.f32 %v2087, %v1917
      %v2258 = vadd.f32 %v2088, %v1918
      %v2259 = vadd.f32 %v2089, %v1919
      %v2260 = vadd.f32 %v2090, %v1920
      %v2261 = vadd.f32 %v2091, %v1921
      %v2262 = vadd.f32 %v2092, %v1922
      %v2263 = vadd.f32 %v2093, %v1923
      %v2264 = vadd.f32 %v2094, %v1924
      %v2265 = vadd.f32 %v2095, %v1925
      %v2266 = vadd.f32 %v2096, %v1926
      %v2267 = vadd.f32 %v2097, %v1927
      %v2268 = vld [vmem:[%s1] sm:$0xff]
      %v2269 = vld [vmem:[%s1 + $0x8] sm:$0xff]
      %v2270 = vld [vmem:[%s1 + $0x10] sm:$0xff]
      %v2271 = vld [vmem:[%s1 + $0x18] sm:$0xff]
      %v2272 = vld [vmem:[%s1 + $0x20] sm:$0x3]
      %v2273 = vld [vmem:[%s1 + $0x28] sm:$0xff]
      %v2274 = vld [vmem:[%s1 + $0x30] sm:$0xff]
      %v2275 = vld [vmem:[%s1 + $0x38] sm:$0xff]
      %v2276 = vld [vmem:[%s1 + $0x40] sm:$0xff]
      %v2277 = vld [vmem:[%s1 + $0x48] sm:$0x3]
      %v2278 = vld [vmem:[%s1 + $0x50] sm:$0xff]
      %v2279 = vld [vmem:[%s1 + $0x58] sm:$0xff]
      %v2280 = vld [vmem:[%s1 + $0x60] sm:$0xff]
      %v2281 = vld [vmem:[%s1 + $0x68] sm:$0xff]
      %v2282 = vld [vmem:[%s1 + $0x70] sm:$0x3]
      %v2283 = vld [vmem:[%s1 + $0x78] sm:$0xff]
      %v2284 = vld [vmem:[%s1 + $0x80] sm:$0xff]
      %v2285 = vld [vmem:[%s1 + $0x88] sm:$0xff]
      %v2286 = vld [vmem:[%s1 + $0x90] sm:$0xff]
      %v2287 = vld [vmem:[%s1 + $0x98] sm:$0x3]
      %v2288 = vld [vmem:[%s1 + $0xa0] sm:$0xff]
      %v2289 = vld [vmem:[%s1 + $0xa8] sm:$0xff]
      %v2290 = vld [vmem:[%s1 + $0xb0] sm:$0xff]
      %v2291 = vld [vmem:[%s1 + $0xb8] sm:$0xff]
      %v2292 = vld [vmem:[%s1 + $0xc0] sm:$0x3]
      %v2293 = vld [vmem:[%s1 + $0xc8] sm:$0xff]
      %v2294 = vld [vmem:[%s1 + $0xd0] sm:$0xff]
      %v2295 = vld [vmem:[%s1 + $0xd8] sm:$0xff]
      %v2296 = vld [vmem:[%s1 + $0xe0] sm:$0xff]
      %v2297 = vld [vmem:[%s1 + $0xe8] sm:$0x3]
      %v2298 = vld [vmem:[%s1 + $0xf0] sm:$0xff]
      %v2299 = vld [vmem:[%s1 + $0xf8] sm:$0xff]
      %v2300 = vld [vmem:[%s1 + $0x100] sm:$0xff]
      %v2301 = vld [vmem:[%s1 + $0x108] sm:$0xff]
      %v2302 = vld [vmem:[%s1 + $0x110] sm:$0x3]
      %v2303 = vld [vmem:[%s1 + $0x118] sm:$0xff]
      %v2304 = vld [vmem:[%s1 + $0x120] sm:$0xff]
      %v2305 = vld [vmem:[%s1 + $0x128] sm:$0xff]
      %v2306 = vld [vmem:[%s1 + $0x130] sm:$0xff]
      %v2307 = vld [vmem:[%s1 + $0x138] sm:$0x3]
      %v2308 = vld [vmem:[%s1 + $0x140] sm:$0xff]
      %v2309 = vld [vmem:[%s1 + $0x148] sm:$0xff]
      %v2310 = vld [vmem:[%s1 + $0x150] sm:$0xff]
      %v2311 = vld [vmem:[%s1 + $0x158] sm:$0xff]
      %v2312 = vld [vmem:[%s1 + $0x160] sm:$0x3]
      %v2313 = vld [vmem:[%s1 + $0x168] sm:$0xff]
      %v2314 = vld [vmem:[%s1 + $0x170] sm:$0xff]
      %v2315 = vld [vmem:[%s1 + $0x178] sm:$0xff]
      %v2316 = vld [vmem:[%s1 + $0x180] sm:$0xff]
      %v2317 = vld [vmem:[%s1 + $0x188] sm:$0x3]
      %v2318 = vld [vmem:[%s1 + $0x190] sm:$0xff]
      %v2319 = vld [vmem:[%s1 + $0x198] sm:$0xff]
      %v2320 = vld [vmem:[%s1 + $0x1a0] sm:$0xff]
      %v2321 = vld [vmem:[%s1 + $0x1a8] sm:$0xff]
      %v2322 = vld [vmem:[%s1 + $0x1b0] sm:$0x3]
      %v2323 = vld [vmem:[%s1 + $0x1b8] sm:$0xff]
      %v2324 = vld [vmem:[%s1 + $0x1c0] sm:$0xff]
      %v2325 = vld [vmem:[%s1 + $0x1c8] sm:$0xff]
      %v2326 = vld [vmem:[%s1 + $0x1d0] sm:$0xff]
      %v2327 = vld [vmem:[%s1 + $0x1d8] sm:$0x3]
      %v2328 = vld [vmem:[%s1 + $0x1e0] sm:$0xff]
      %v2329 = vld [vmem:[%s1 + $0x1e8] sm:$0xff]
      %v2330 = vld [vmem:[%s1 + $0x1f0] sm:$0xff]
      %v2331 = vld [vmem:[%s1 + $0x1f8] sm:$0xff]
      %v2332 = vld [vmem:[%s1 + $0x200] sm:$0x3]
      %v2333 = vld [vmem:[%s1 + $0x208] sm:$0xff]
      %v2334 = vld [vmem:[%s1 + $0x210] sm:$0xff]
      %v2335 = vld [vmem:[%s1 + $0x218] sm:$0xff]
      %v2336 = vld [vmem:[%s1 + $0x220] sm:$0xff]
      %v2337 = vld [vmem:[%s1 + $0x228] sm:$0x3]
      %v2338 = vld [vmem:[%s1 + $0x230] sm:$0xff]
      %v2339 = vld [vmem:[%s1 + $0x238] sm:$0xff]
      %v2340 = vld [vmem:[%s1 + $0x240] sm:$0xff]
      %v2341 = vld [vmem:[%s1 + $0x248] sm:$0xff]
      %v2342 = vld [vmem:[%s1 + $0x250] sm:$0x3]
      %v2343 = vld [vmem:[%s1 + $0x258] sm:$0xff]
      %v2344 = vld [vmem:[%s1 + $0x260] sm:$0xff]
      %v2345 = vld [vmem:[%s1 + $0x268] sm:$0xff]
      %v2346 = vld [vmem:[%s1 + $0x270] sm:$0xff]
      %v2347 = vld [vmem:[%s1 + $0x278] sm:$0x3]
      %v2348 = vld [vmem:[%s1 + $0x280] sm:$0xff]
      %v2349 = vld [vmem:[%s1 + $0x288] sm:$0xff]
      %v2350 = vld [vmem:[%s1 + $0x290] sm:$0xff]
      %v2351 = vld [vmem:[%s1 + $0x298] sm:$0xff]
      %v2352 = vld [vmem:[%s1 + $0x2a0] sm:$0x3]
      %v2353 = vld [vmem:[%s1 + $0x2a8] sm:$0xff]
      %v2354 = vld [vmem:[%s1 + $0x2b0] sm:$0xff]
      %v2355 = vld [vmem:[%s1 + $0x2b8] sm:$0xff]
      %v2356 = vld [vmem:[%s1 + $0x2c0] sm:$0xff]
      %v2357 = vld [vmem:[%s1 + $0x2c8] sm:$0x3]
      %v2358 = vld [vmem:[%s1 + $0x2d0] sm:$0xff]
      %v2359 = vld [vmem:[%s1 + $0x2d8] sm:$0xff]
      %v2360 = vld [vmem:[%s1 + $0x2e0] sm:$0xff]
      %v2361 = vld [vmem:[%s1 + $0x2e8] sm:$0xff]
      %v2362 = vld [vmem:[%s1 + $0x2f0] sm:$0x3]
      %v2363 = vld [vmem:[%s1 + $0x2f8] sm:$0xff]
      %v2364 = vld [vmem:[%s1 + $0x300] sm:$0xff]
      %v2365 = vld [vmem:[%s1 + $0x308] sm:$0xff]
      %v2366 = vld [vmem:[%s1 + $0x310] sm:$0xff]
      %v2367 = vld [vmem:[%s1 + $0x318] sm:$0x3]
      %v2368 = vld [vmem:[%s1 + $0x320] sm:$0xff]
      %v2369 = vld [vmem:[%s1 + $0x328] sm:$0xff]
      %v2370 = vld [vmem:[%s1 + $0x330] sm:$0xff]
      %v2371 = vld [vmem:[%s1 + $0x338] sm:$0xff]
      %v2372 = vld [vmem:[%s1 + $0x340] sm:$0x3]
      %v2373 = vld [vmem:[%s1 + $0x348] sm:$0xff]
      %v2374 = vld [vmem:[%s1 + $0x350] sm:$0xff]
      %v2375 = vld [vmem:[%s1 + $0x358] sm:$0xff]
      %v2376 = vld [vmem:[%s1 + $0x360] sm:$0xff]
      %v2377 = vld [vmem:[%s1 + $0x368] sm:$0x3]
      %v2378 = vld [vmem:[%s1 + $0x370] sm:$0xff]
      %v2379 = vld [vmem:[%s1 + $0x378] sm:$0xff]
      %v2380 = vld [vmem:[%s1 + $0x380] sm:$0xff]
      %v2381 = vld [vmem:[%s1 + $0x388] sm:$0xff]
      %v2382 = vld [vmem:[%s1 + $0x390] sm:$0x3]
      %v2383 = vld [vmem:[%s1 + $0x398] sm:$0xff]
      %v2384 = vld [vmem:[%s1 + $0x3a0] sm:$0xff]
      %v2385 = vld [vmem:[%s1 + $0x3a8] sm:$0xff]
      %v2386 = vld [vmem:[%s1 + $0x3b0] sm:$0xff]
      %v2387 = vld [vmem:[%s1 + $0x3b8] sm:$0x3]
      %v2388 = vld [vmem:[%s1 + $0x3c0] sm:$0xff]
      %v2389 = vld [vmem:[%s1 + $0x3c8] sm:$0xff]
      %v2390 = vld [vmem:[%s1 + $0x3d0] sm:$0xff]
      %v2391 = vld [vmem:[%s1 + $0x3d8] sm:$0xff]
      %v2392 = vld [vmem:[%s1 + $0x3e0] sm:$0x3]
      %v2393 = vld [vmem:[%s1 + $0x3e8] sm:$0xff]
      %v2394 = vld [vmem:[%s1 + $0x3f0] sm:$0xff]
      %v2395 = vld [vmem:[%s1 + $0x3f8] sm:$0xff]
      %v2396 = vld [vmem:[%s1 + $0x400] sm:$0xff]
      %v2397 = vld [vmem:[%s1 + $0x408] sm:$0x3]
      %v2398 = vld [vmem:[%s1 + $0x410] sm:$0xff]
      %v2399 = vld [vmem:[%s1 + $0x418] sm:$0xff]
      %v2400 = vld [vmem:[%s1 + $0x420] sm:$0xff]
      %v2401 = vld [vmem:[%s1 + $0x428] sm:$0xff]
      %v2402 = vld [vmem:[%s1 + $0x430] sm:$0x3]
      %v2403 = vld [vmem:[%s1 + $0x438] sm:$0xff]
      %v2404 = vld [vmem:[%s1 + $0x440] sm:$0xff]
      %v2405 = vld [vmem:[%s1 + $0x448] sm:$0xff]
      %v2406 = vld [vmem:[%s1 + $0x450] sm:$0xff]
      %v2407 = vld [vmem:[%s1 + $0x458] sm:$0x3]
      %v2408 = vld [vmem:[%s1 + $0x460] sm:$0xff]
      %v2409 = vld [vmem:[%s1 + $0x468] sm:$0xff]
      %v2410 = vld [vmem:[%s1 + $0x470] sm:$0xff]
      %v2411 = vld [vmem:[%s1 + $0x478] sm:$0xff]
      %v2412 = vld [vmem:[%s1 + $0x480] sm:$0x3]
      %v2413 = vld [vmem:[%s1 + $0x488] sm:$0xff]
      %v2414 = vld [vmem:[%s1 + $0x490] sm:$0xff]
      %v2415 = vld [vmem:[%s1 + $0x498] sm:$0xff]
      %v2416 = vld [vmem:[%s1 + $0x4a0] sm:$0xff]
      %v2417 = vld [vmem:[%s1 + $0x4a8] sm:$0x3]
      %v2418 = vld [vmem:[%s1 + $0x4b0] sm:$0xff]
      %v2419 = vld [vmem:[%s1 + $0x4b8] sm:$0xff]
      %v2420 = vld [vmem:[%s1 + $0x4c0] sm:$0xff]
      %v2421 = vld [vmem:[%s1 + $0x4c8] sm:$0xff]
      %v2422 = vld [vmem:[%s1 + $0x4d0] sm:$0x3]
      %v2423 = vld [vmem:[%s1 + $0x4d8] sm:$0xff]
      %v2424 = vld [vmem:[%s1 + $0x4e0] sm:$0xff]
      %v2425 = vld [vmem:[%s1 + $0x4e8] sm:$0xff]
      %v2426 = vld [vmem:[%s1 + $0x4f0] sm:$0xff]
      %v2427 = vld [vmem:[%s1 + $0x4f8] sm:$0x3]
      %v2428 = vld [vmem:[%s1 + $0x500] sm:$0xff]
      %v2429 = vld [vmem:[%s1 + $0x508] sm:$0xff]
      %v2430 = vld [vmem:[%s1 + $0x510] sm:$0xff]
      %v2431 = vld [vmem:[%s1 + $0x518] sm:$0xff]
      %v2432 = vld [vmem:[%s1 + $0x520] sm:$0x3]
      %v2433 = vld [vmem:[%s1 + $0x528] sm:$0xff]
      %v2434 = vld [vmem:[%s1 + $0x530] sm:$0xff]
      %v2435 = vld [vmem:[%s1 + $0x538] sm:$0xff]
      %v2436 = vld [vmem:[%s1 + $0x540] sm:$0xff]
      %v2437 = vld [vmem:[%s1 + $0x548] sm:$0x3]
      %v2438 = vmul.f32 %v2098, %v2268
      %v2439 = vmul.f32 %v2099, %v2269
      %v2440 = vmul.f32 %v2100, %v2270
      %v2441 = vmul.f32 %v2101, %v2271
      %v2442 = vmul.f32 %v2102, %v2272
      %v2443 = vmul.f32 %v2103, %v2273
      %v2444 = vmul.f32 %v2104, %v2274
      %v2445 = vmul.f32 %v2105, %v2275
      %v2446 = vmul.f32 %v2106, %v2276
      %v2447 = vmul.f32 %v2107, %v2277
      %v2448 = vmul.f32 %v2108, %v2278
      %v2449 = vmul.f32 %v2109, %v2279
      %v2450 = vmul.f32 %v2110, %v2280
      %v2451 = vmul.f32 %v2111, %v2281
      %v2452 = vmul.f32 %v2112, %v2282
      %v2453 = vmul.f32 %v2113, %v2283
      %v2454 = vmul.f32 %v2114, %v2284
      %v2455 = vmul.f32 %v2115, %v2285
      %v2456 = vmul.f32 %v2116, %v2286
      %v2457 = vmul.f32 %v2117, %v2287
      %v2458 = vmul.f32 %v2118, %v2288
      %v2459 = vmul.f32 %v2119, %v2289
      %v2460 = vmul.f32 %v2120, %v2290
      %v2461 = vmul.f32 %v2121, %v2291
      %v2462 = vmul.f32 %v2122, %v2292
      %v2463 = vmul.f32 %v2123, %v2293
      %v2464 = vmul.f32 %v2124, %v2294
      %v2465 = vmul.f32 %v2125, %v2295
      %v2466 = vmul.f32 %v2126, %v2296
      %v2467 = vmul.f32 %v2127, %v2297
      %v2468 = vmul.f32 %v2128, %v2298
      %v2469 = vmul.f32 %v2129, %v2299
      %v2470 = vmul.f32 %v2130, %v2300
      %v2471 = vmul.f32 %v2131, %v2301
      %v2472 = vmul.f32 %v2132, %v2302
      %v2473 = vmul.f32 %v2133, %v2303
      %v2474 = vmul.f32 %v2134, %v2304
      %v2475 = vmul.f32 %v2135, %v2305
      %v2476 = vmul.f32 %v2136, %v2306
      %v2477 = vmul.f32 %v2137, %v2307
      %v2478 = vmul.f32 %v2138, %v2308
      %v2479 = vmul.f32 %v2139, %v2309
      %v2480 = vmul.f32 %v2140, %v2310
      %v2481 = vmul.f32 %v2141, %v2311
      %v2482 = vmul.f32 %v2142, %v2312
      %v2483 = vmul.f32 %v2143, %v2313
      %v2484 = vmul.f32 %v2144, %v2314
      %v2485 = vmul.f32 %v2145, %v2315
      %v2486 = vmul.f32 %v2146, %v2316
      %v2487 = vmul.f32 %v2147, %v2317
      %v2488 = vmul.f32 %v2148, %v2318
      %v2489 = vmul.f32 %v2149, %v2319
      %v2490 = vmul.f32 %v2150, %v2320
      %v2491 = vmul.f32 %v2151, %v2321
      %v2492 = vmul.f32 %v2152, %v2322
      %v2493 = vmul.f32 %v2153, %v2323
      %v2494 = vmul.f32 %v2154, %v2324
      %v2495 = vmul.f32 %v2155, %v2325
      %v2496 = vmul.f32 %v2156, %v2326
      %v2497 = vmul.f32 %v2157, %v2327
      %v2498 = vmul.f32 %v2158, %v2328
      %v2499 = vmul.f32 %v2159, %v2329
      %v2500 = vmul.f32 %v2160, %v2330
      %v2501 = vmul.f32 %v2161, %v2331
      %v2502 = vmul.f32 %v2162, %v2332
      %v2503 = vmul.f32 %v2163, %v2333
      %v2504 = vmul.f32 %v2164, %v2334
      %v2505 = vmul.f32 %v2165, %v2335
      %v2506 = vmul.f32 %v2166, %v2336
      %v2507 = vmul.f32 %v2167, %v2337
      %v2508 = vmul.f32 %v2168, %v2338
      %v2509 = vmul.f32 %v2169, %v2339
      %v2510 = vmul.f32 %v2170, %v2340
      %v2511 = vmul.f32 %v2171, %v2341
      %v2512 = vmul.f32 %v2172, %v2342
      %v2513 = vmul.f32 %v2173, %v2343
      %v2514 = vmul.f32 %v2174, %v2344
      %v2515 = vmul.f32 %v2175, %v2345
      %v2516 = vmul.f32 %v2176, %v2346
      %v2517 = vmul.f32 %v2177, %v2347
      %v2518 = vmul.f32 %v2178, %v2348
      %v2519 = vmul.f32 %v2179, %v2349
      %v2520 = vmul.f32 %v2180, %v2350
      %v2521 = vmul.f32 %v2181, %v2351
      %v2522 = vmul.f32 %v2182, %v2352
      %v2523 = vmul.f32 %v2183, %v2353
      %v2524 = vmul.f32 %v2184, %v2354
      %v2525 = vmul.f32 %v2185, %v2355
      %v2526 = vmul.f32 %v2186, %v2356
      %v2527 = vmul.f32 %v2187, %v2357
      %v2528 = vmul.f32 %v2188, %v2358
      %v2529 = vmul.f32 %v2189, %v2359
      %v2530 = vmul.f32 %v2190, %v2360
      %v2531 = vmul.f32 %v2191, %v2361
      %v2532 = vmul.f32 %v2192, %v2362
      %v2533 = vmul.f32 %v2193, %v2363
      %v2534 = vmul.f32 %v2194, %v2364
      %v2535 = vmul.f32 %v2195, %v2365
      %v2536 = vmul.f32 %v2196, %v2366
      %v2537 = vmul.f32 %v2197, %v2367
      %v2538 = vmul.f32 %v2198, %v2368
      %v2539 = vmul.f32 %v2199, %v2369
      %v2540 = vmul.f32 %v2200, %v2370
      %v2541 = vmul.f32 %v2201, %v2371
      %v2542 = vmul.f32 %v2202, %v2372
      %v2543 = vmul.f32 %v2203, %v2373
      %v2544 = vmul.f32 %v2204, %v2374
      %v2545 = vmul.f32 %v2205, %v2375
      %v2546 = vmul.f32 %v2206, %v2376
      %v2547 = vmul.f32 %v2207, %v2377
      %v2548 = vmul.f32 %v2208, %v2378
      %v2549 = vmul.f32 %v2209, %v2379
      %v2550 = vmul.f32 %v2210, %v2380
      %v2551 = vmul.f32 %v2211, %v2381
      %v2552 = vmul.f32 %v2212, %v2382
      %v2553 = vmul.f32 %v2213, %v2383
      %v2554 = vmul.f32 %v2214, %v2384
      %v2555 = vmul.f32 %v2215, %v2385
      %v2556 = vmul.f32 %v2216, %v2386
      %v2557 = vmul.f32 %v2217, %v2387
      %v2558 = vmul.f32 %v2218, %v2388
      %v2559 = vmul.f32 %v2219, %v2389
      %v2560 = vmul.f32 %v2220, %v2390
      %v2561 = vmul.f32 %v2221, %v2391
      %v2562 = vmul.f32 %v2222, %v2392
      %v2563 = vmul.f32 %v2223, %v2393
      %v2564 = vmul.f32 %v2224, %v2394
      %v2565 = vmul.f32 %v2225, %v2395
      %v2566 = vmul.f32 %v2226, %v2396
      %v2567 = vmul.f32 %v2227, %v2397
      %v2568 = vmul.f32 %v2228, %v2398
      %v2569 = vmul.f32 %v2229, %v2399
      %v2570 = vmul.f32 %v2230, %v2400
      %v2571 = vmul.f32 %v2231, %v2401
      %v2572 = vmul.f32 %v2232, %v2402
      %v2573 = vmul.f32 %v2233, %v2403
      %v2574 = vmul.f32 %v2234, %v2404
      %v2575 = vmul.f32 %v2235, %v2405
      %v2576 = vmul.f32 %v2236, %v2406
      %v2577 = vmul.f32 %v2237, %v2407
      %v2578 = vmul.f32 %v2238, %v2408
      %v2579 = vmul.f32 %v2239, %v2409
      %v2580 = vmul.f32 %v2240, %v2410
      %v2581 = vmul.f32 %v2241, %v2411
      %v2582 = vmul.f32 %v2242, %v2412
      %v2583 = vmul.f32 %v2243, %v2413
      %v2584 = vmul.f32 %v2244, %v2414
      %v2585 = vmul.f32 %v2245, %v2415
      %v2586 = vmul.f32 %v2246, %v2416
      %v2587 = vmul.f32 %v2247, %v2417
      %v2588 = vmul.f32 %v2248, %v2418
      %v2589 = vmul.f32 %v2249, %v2419
      %v2590 = vmul.f32 %v2250, %v2420
      %v2591 = vmul.f32 %v2251, %v2421
      %v2592 = vmul.f32 %v2252, %v2422
      %v2593 = vmul.f32 %v2253, %v2423
      %v2594 = vmul.f32 %v2254, %v2424
      %v2595 = vmul.f32 %v2255, %v2425
      %v2596 = vmul.f32 %v2256, %v2426
      %v2597 = vmul.f32 %v2257, %v2427
      %v2598 = vmul.f32 %v2258, %v2428
      %v2599 = vmul.f32 %v2259, %v2429
      %v2600 = vmul.f32 %v2260, %v2430
      %v2601 = vmul.f32 %v2261, %v2431
      %v2602 = vmul.f32 %v2262, %v2432
      %v2603 = vmul.f32 %v2263, %v2433
      %v2604 = vmul.f32 %v2264, %v2434
      %v2605 = vmul.f32 %v2265, %v2435
      %v2606 = vmul.f32 %v2266, %v2436
      %v2607 = vmul.f32 %v2267, %v2437
      %v2608 = vld [vmem:[%s2] sm:$0x1]
      %v2609 = vlaneseq
      %v2610 = vshrl.u32 %v2609, 7
      %v2611 = vsub.s32 0, %v2610
      %v2612 = vrot.slane %v2608, %v2611
      %v2613 = vmul.f32 %v2612, %v2438
      %v2614 = vmul.f32 %v2612, %v2439
      %v2615 = vmul.f32 %v2612, %v2440
      %v2616 = vmul.f32 %v2612, %v2441
      %v2617 = vmul.f32 %v2612, %v2443
      %v2618 = vmul.f32 %v2612, %v2444
      %v2619 = vmul.f32 %v2612, %v2445
      %v2620 = vmul.f32 %v2612, %v2446
      %v2621 = vmul.f32 %v2612, %v2448
      %v2622 = vmul.f32 %v2612, %v2449
      %v2623 = vmul.f32 %v2612, %v2450
      %v2624 = vmul.f32 %v2612, %v2451
      %v2625 = vmul.f32 %v2612, %v2453
      %v2626 = vmul.f32 %v2612, %v2454
      %v2627 = vmul.f32 %v2612, %v2455
      %v2628 = vmul.f32 %v2612, %v2456
      %v2629 = vmul.f32 %v2612, %v2458
      %v2630 = vmul.f32 %v2612, %v2459
      %v2631 = vmul.f32 %v2612, %v2460
      %v2632 = vmul.f32 %v2612, %v2461
      %v2633 = vmul.f32 %v2612, %v2463
      %v2634 = vmul.f32 %v2612, %v2464
      %v2635 = vmul.f32 %v2612, %v2465
      %v2636 = vmul.f32 %v2612, %v2466
      %v2637 = vmul.f32 %v2612, %v2468
      %v2638 = vmul.f32 %v2612, %v2469
      %v2639 = vmul.f32 %v2612, %v2470
      %v2640 = vmul.f32 %v2612, %v2471
      %v2641 = vmul.f32 %v2612, %v2473
      %v2642 = vmul.f32 %v2612, %v2474
      %v2643 = vmul.f32 %v2612, %v2475
      %v2644 = vmul.f32 %v2612, %v2476
      %v2645 = vmul.f32 %v2612, %v2478
      %v2646 = vmul.f32 %v2612, %v2479
      %v2647 = vmul.f32 %v2612, %v2480
      %v2648 = vmul.f32 %v2612, %v2481
      %v2649 = vmul.f32 %v2612, %v2483
      %v2650 = vmul.f32 %v2612, %v2484
      %v2651 = vmul.f32 %v2612, %v2485
      %v2652 = vmul.f32 %v2612, %v2486
      %v2653 = vmul.f32 %v2612, %v2488
      %v2654 = vmul.f32 %v2612, %v2489
      %v2655 = vmul.f32 %v2612, %v2490
      %v2656 = vmul.f32 %v2612, %v2491
      %v2657 = vmul.f32 %v2612, %v2493
      %v2658 = vmul.f32 %v2612, %v2494
      %v2659 = vmul.f32 %v2612, %v2495
      %v2660 = vmul.f32 %v2612, %v2496
      %v2661 = vmul.f32 %v2612, %v2498
      %v2662 = vmul.f32 %v2612, %v2499
      %v2663 = vmul.f32 %v2612, %v2500
      %v2664 = vmul.f32 %v2612, %v2501
      %v2665 = vmul.f32 %v2612, %v2503
      %v2666 = vmul.f32 %v2612, %v2504
      %v2667 = vmul.f32 %v2612, %v2505
      %v2668 = vmul.f32 %v2612, %v2506
      %v2669 = vmul.f32 %v2612, %v2508
      %v2670 = vmul.f32 %v2612, %v2509
      %v2671 = vmul.f32 %v2612, %v2510
      %v2672 = vmul.f32 %v2612, %v2511
      %v2673 = vmul.f32 %v2612, %v2513
      %v2674 = vmul.f32 %v2612, %v2514
      %v2675 = vmul.f32 %v2612, %v2515
      %v2676 = vmul.f32 %v2612, %v2516
      %v2677 = vmul.f32 %v2612, %v2518
      %v2678 = vmul.f32 %v2612, %v2519
      %v2679 = vmul.f32 %v2612, %v2520
      %v2680 = vmul.f32 %v2612, %v2521
      %v2681 = vmul.f32 %v2612, %v2523
      %v2682 = vmul.f32 %v2612, %v2524
      %v2683 = vmul.f32 %v2612, %v2525
      %v2684 = vmul.f32 %v2612, %v2526
      %v2685 = vmul.f32 %v2612, %v2528
      %v2686 = vmul.f32 %v2612, %v2529
      %v2687 = vmul.f32 %v2612, %v2530
      %v2688 = vmul.f32 %v2612, %v2531
      %v2689 = vmul.f32 %v2612, %v2533
      %v2690 = vmul.f32 %v2612, %v2534
      %v2691 = vmul.f32 %v2612, %v2535
      %v2692 = vmul.f32 %v2612, %v2536
      %v2693 = vmul.f32 %v2612, %v2538
      %v2694 = vmul.f32 %v2612, %v2539
      %v2695 = vmul.f32 %v2612, %v2540
      %v2696 = vmul.f32 %v2612, %v2541
      %v2697 = vmul.f32 %v2612, %v2543
      %v2698 = vmul.f32 %v2612, %v2544
      %v2699 = vmul.f32 %v2612, %v2545
      %v2700 = vmul.f32 %v2612, %v2546
      %v2701 = vmul.f32 %v2612, %v2548
      %v2702 = vmul.f32 %v2612, %v2549
      %v2703 = vmul.f32 %v2612, %v2550
      %v2704 = vmul.f32 %v2612, %v2551
      %v2705 = vmul.f32 %v2612, %v2553
      %v2706 = vmul.f32 %v2612, %v2554
      %v2707 = vmul.f32 %v2612, %v2555
      %v2708 = vmul.f32 %v2612, %v2556
      %v2709 = vmul.f32 %v2612, %v2558
      %v2710 = vmul.f32 %v2612, %v2559
      %v2711 = vmul.f32 %v2612, %v2560
      %v2712 = vmul.f32 %v2612, %v2561
      %v2713 = vmul.f32 %v2612, %v2563
      %v2714 = vmul.f32 %v2612, %v2564
      %v2715 = vmul.f32 %v2612, %v2565
      %v2716 = vmul.f32 %v2612, %v2566
      %v2717 = vmul.f32 %v2612, %v2568
      %v2718 = vmul.f32 %v2612, %v2569
      %v2719 = vmul.f32 %v2612, %v2570
      %v2720 = vmul.f32 %v2612, %v2571
      %v2721 = vmul.f32 %v2612, %v2573
      %v2722 = vmul.f32 %v2612, %v2574
      %v2723 = vmul.f32 %v2612, %v2575
      %v2724 = vmul.f32 %v2612, %v2576
      %v2725 = vmul.f32 %v2612, %v2578
      %v2726 = vmul.f32 %v2612, %v2579
      %v2727 = vmul.f32 %v2612, %v2580
      %v2728 = vmul.f32 %v2612, %v2581
      %v2729 = vmul.f32 %v2612, %v2583
      %v2730 = vmul.f32 %v2612, %v2584
      %v2731 = vmul.f32 %v2612, %v2585
      %v2732 = vmul.f32 %v2612, %v2586
      %v2733 = vmul.f32 %v2612, %v2588
      %v2734 = vmul.f32 %v2612, %v2589
      %v2735 = vmul.f32 %v2612, %v2590
      %v2736 = vmul.f32 %v2612, %v2591
      %v2737 = vmul.f32 %v2612, %v2593
      %v2738 = vmul.f32 %v2612, %v2594
      %v2739 = vmul.f32 %v2612, %v2595
      %v2740 = vmul.f32 %v2612, %v2596
      %v2741 = vld [vmem:[%s2 + $0x3] sm:$0x1]
      %v2742 = vlaneseq
      %v2743 = vshrl.u32 %v2742, 7
      %v2744 = vsub.s32 0, %v2743
      %v2745 = vrot.slane %v2741, %v2744
      %v2746 = vmul.f32 %v2745, %v2443
      %v2747 = vmul.f32 %v2745, %v2444
      %v2748 = vmul.f32 %v2745, %v2445
      %v2749 = vmul.f32 %v2745, %v2446
      %v2750 = vmul.f32 %v2745, %v2448
      %v2751 = vmul.f32 %v2745, %v2449
      %v2752 = vmul.f32 %v2745, %v2450
      %v2753 = vmul.f32 %v2745, %v2451
      %v2754 = vmul.f32 %v2745, %v2453
      %v2755 = vmul.f32 %v2745, %v2454
      %v2756 = vmul.f32 %v2745, %v2455
      %v2757 = vmul.f32 %v2745, %v2456
      %v2758 = vmul.f32 %v2745, %v2458
      %v2759 = vmul.f32 %v2745, %v2459
      %v2760 = vmul.f32 %v2745, %v2460
      %v2761 = vmul.f32 %v2745, %v2461
      %v2762 = vmul.f32 %v2745, %v2463
      %v2763 = vmul.f32 %v2745, %v2464
      %v2764 = vmul.f32 %v2745, %v2465
      %v2765 = vmul.f32 %v2745, %v2466
      %v2766 = vmul.f32 %v2745, %v2468
      %v2767 = vmul.f32 %v2745, %v2469
      %v2768 = vmul.f32 %v2745, %v2470
      %v2769 = vmul.f32 %v2745, %v2471
      %v2770 = vmul.f32 %v2745, %v2473
      %v2771 = vmul.f32 %v2745, %v2474
      %v2772 = vmul.f32 %v2745, %v2475
      %v2773 = vmul.f32 %v2745, %v2476
      %v2774 = vmul.f32 %v2745, %v2478
      %v2775 = vmul.f32 %v2745, %v2479
      %v2776 = vmul.f32 %v2745, %v2480
      %v2777 = vmul.f32 %v2745, %v2481
      %v2778 = vmul.f32 %v2745, %v2483
      %v2779 = vmul.f32 %v2745, %v2484
      %v2780 = vmul.f32 %v2745, %v2485
      %v2781 = vmul.f32 %v2745, %v2486
      %v2782 = vmul.f32 %v2745, %v2488
      %v2783 = vmul.f32 %v2745, %v2489
      %v2784 = vmul.f32 %v2745, %v2490
      %v2785 = vmul.f32 %v2745, %v2491
      %v2786 = vmul.f32 %v2745, %v2493
      %v2787 = vmul.f32 %v2745, %v2494
      %v2788 = vmul.f32 %v2745, %v2495
      %v2789 = vmul.f32 %v2745, %v2496
      %v2790 = vmul.f32 %v2745, %v2498
      %v2791 = vmul.f32 %v2745, %v2499
      %v2792 = vmul.f32 %v2745, %v2500
      %v2793 = vmul.f32 %v2745, %v2501
      %v2794 = vmul.f32 %v2745, %v2503
      %v2795 = vmul.f32 %v2745, %v2504
      %v2796 = vmul.f32 %v2745, %v2505
      %v2797 = vmul.f32 %v2745, %v2506
      %v2798 = vmul.f32 %v2745, %v2508
      %v2799 = vmul.f32 %v2745, %v2509
      %v2800 = vmul.f32 %v2745, %v2510
      %v2801 = vmul.f32 %v2745, %v2511
      %v2802 = vmul.f32 %v2745, %v2513
      %v2803 = vmul.f32 %v2745, %v2514
      %v2804 = vmul.f32 %v2745, %v2515
      %v2805 = vmul.f32 %v2745, %v2516
      %v2806 = vmul.f32 %v2745, %v2518
      %v2807 = vmul.f32 %v2745, %v2519
      %v2808 = vmul.f32 %v2745, %v2520
      %v2809 = vmul.f32 %v2745, %v2521
      %v2810 = vmul.f32 %v2745, %v2523
      %v2811 = vmul.f32 %v2745, %v2524
      %v2812 = vmul.f32 %v2745, %v2525
      %v2813 = vmul.f32 %v2745, %v2526
      %v2814 = vmul.f32 %v2745, %v2528
      %v2815 = vmul.f32 %v2745, %v2529
      %v2816 = vmul.f32 %v2745, %v2530
      %v2817 = vmul.f32 %v2745, %v2531
      %v2818 = vmul.f32 %v2745, %v2533
      %v2819 = vmul.f32 %v2745, %v2534
      %v2820 = vmul.f32 %v2745, %v2535
      %v2821 = vmul.f32 %v2745, %v2536
      %v2822 = vmul.f32 %v2745, %v2538
      %v2823 = vmul.f32 %v2745, %v2539
      %v2824 = vmul.f32 %v2745, %v2540
      %v2825 = vmul.f32 %v2745, %v2541
      %v2826 = vmul.f32 %v2745, %v2543
      %v2827 = vmul.f32 %v2745, %v2544
      %v2828 = vmul.f32 %v2745, %v2545
      %v2829 = vmul.f32 %v2745, %v2546
      %v2830 = vmul.f32 %v2745, %v2548
      %v2831 = vmul.f32 %v2745, %v2549
      %v2832 = vmul.f32 %v2745, %v2550
      %v2833 = vmul.f32 %v2745, %v2551
      %v2834 = vmul.f32 %v2745, %v2553
      %v2835 = vmul.f32 %v2745, %v2554
      %v2836 = vmul.f32 %v2745, %v2555
      %v2837 = vmul.f32 %v2745, %v2556
      %v2838 = vmul.f32 %v2745, %v2558
      %v2839 = vmul.f32 %v2745, %v2559
      %v2840 = vmul.f32 %v2745, %v2560
      %v2841 = vmul.f32 %v2745, %v2561
      %v2842 = vmul.f32 %v2745, %v2563
      %v2843 = vmul.f32 %v2745, %v2564
      %v2844 = vmul.f32 %v2745, %v2565
      %v2845 = vmul.f32 %v2745, %v2566
      %v2846 = vmul.f32 %v2745, %v2568
      %v2847 = vmul.f32 %v2745, %v2569
      %v2848 = vmul.f32 %v2745, %v2570
      %v2849 = vmul.f32 %v2745, %v2571
      %v2850 = vmul.f32 %v2745, %v2573
      %v2851 = vmul.f32 %v2745, %v2574
      %v2852 = vmul.f32 %v2745, %v2575
      %v2853 = vmul.f32 %v2745, %v2576
      %v2854 = vmul.f32 %v2745, %v2578
      %v2855 = vmul.f32 %v2745, %v2579
      %v2856 = vmul.f32 %v2745, %v2580
      %v2857 = vmul.f32 %v2745, %v2581
      %v2858 = vmul.f32 %v2745, %v2583
      %v2859 = vmul.f32 %v2745, %v2584
      %v2860 = vmul.f32 %v2745, %v2585
      %v2861 = vmul.f32 %v2745, %v2586
      %v2862 = vmul.f32 %v2745, %v2588
      %v2863 = vmul.f32 %v2745, %v2589
      %v2864 = vmul.f32 %v2745, %v2590
      %v2865 = vmul.f32 %v2745, %v2591
      %v2866 = vmul.f32 %v2745, %v2593
      %v2867 = vmul.f32 %v2745, %v2594
      %v2868 = vmul.f32 %v2745, %v2595
      %v2869 = vmul.f32 %v2745, %v2596
      %v2870 = vmul.f32 %v2745, %v2598
      %v2871 = vmul.f32 %v2745, %v2599
      %v2872 = vmul.f32 %v2745, %v2600
      %v2873 = vmul.f32 %v2745, %v2601
      %v2874 = vadd.f32 %v2613, %v2746
      %v2875 = vadd.f32 %v2614, %v2747
      %v2876 = vadd.f32 %v2615, %v2748
      %v2877 = vadd.f32 %v2616, %v2749
      %v2878 = vadd.f32 %v2617, %v2750
      %v2879 = vadd.f32 %v2618, %v2751
      %v2880 = vadd.f32 %v2619, %v2752
      %v2881 = vadd.f32 %v2620, %v2753
      %v2882 = vadd.f32 %v2621, %v2754
      %v2883 = vadd.f32 %v2622, %v2755
      %v2884 = vadd.f32 %v2623, %v2756
      %v2885 = vadd.f32 %v2624, %v2757
      %v2886 = vadd.f32 %v2625, %v2758
      %v2887 = vadd.f32 %v2626, %v2759
      %v2888 = vadd.f32 %v2627, %v2760
      %v2889 = vadd.f32 %v2628, %v2761
      %v2890 = vadd.f32 %v2629, %v2762
      %v2891 = vadd.f32 %v2630, %v2763
      %v2892 = vadd.f32 %v2631, %v2764
      %v2893 = vadd.f32 %v2632, %v2765
      %v2894 = vadd.f32 %v2633, %v2766
      %v2895 = vadd.f32 %v2634, %v2767
      %v2896 = vadd.f32 %v2635, %v2768
      %v2897 = vadd.f32 %v2636, %v2769
      %v2898 = vadd.f32 %v2637, %v2770
      %v2899 = vadd.f32 %v2638, %v2771
      %v2900 = vadd.f32 %v2639, %v2772
      %v2901 = vadd.f32 %v2640, %v2773
      %v2902 = vadd.f32 %v2641, %v2774
      %v2903 = vadd.f32 %v2642, %v2775
      %v2904 = vadd.f32 %v2643, %v2776
      %v2905 = vadd.f32 %v2644, %v2777
      %v2906 = vadd.f32 %v2645, %v2778
      %v2907 = vadd.f32 %v2646, %v2779
      %v2908 = vadd.f32 %v2647, %v2780
      %v2909 = vadd.f32 %v2648, %v2781
      %v2910 = vadd.f32 %v2649, %v2782
      %v2911 = vadd.f32 %v2650, %v2783
      %v2912 = vadd.f32 %v2651, %v2784
      %v2913 = vadd.f32 %v2652, %v2785
      %v2914 = vadd.f32 %v2653, %v2786
      %v2915 = vadd.f32 %v2654, %v2787
      %v2916 = vadd.f32 %v2655, %v2788
      %v2917 = vadd.f32 %v2656, %v2789
      %v2918 = vadd.f32 %v2657, %v2790
      %v2919 = vadd.f32 %v2658, %v2791
      %v2920 = vadd.f32 %v2659, %v2792
      %v2921 = vadd.f32 %v2660, %v2793
      %v2922 = vadd.f32 %v2661, %v2794
      %v2923 = vadd.f32 %v2662, %v2795
      %v2924 = vadd.f32 %v2663, %v2796
      %v2925 = vadd.f32 %v2664, %v2797
      %v2926 = vadd.f32 %v2665, %v2798
      %v2927 = vadd.f32 %v2666, %v2799
      %v2928 = vadd.f32 %v2667, %v2800
      %v2929 = vadd.f32 %v2668, %v2801
      %v2930 = vadd.f32 %v2669, %v2802
      %v2931 = vadd.f32 %v2670, %v2803
      %v2932 = vadd.f32 %v2671, %v2804
      %v2933 = vadd.f32 %v2672, %v2805
      %v2934 = vadd.f32 %v2673, %v2806
      %v2935 = vadd.f32 %v2674, %v2807
      %v2936 = vadd.f32 %v2675, %v2808
      %v2937 = vadd.f32 %v2676, %v2809
      %v2938 = vadd.f32 %v2677, %v2810
      %v2939 = vadd.f32 %v2678, %v2811
      %v2940 = vadd.f32 %v2679, %v2812
      %v2941 = vadd.f32 %v2680, %v2813
      %v2942 = vadd.f32 %v2681, %v2814
      %v2943 = vadd.f32 %v2682, %v2815
      %v2944 = vadd.f32 %v2683, %v2816
      %v2945 = vadd.f32 %v2684, %v2817
      %v2946 = vadd.f32 %v2685, %v2818
      %v2947 = vadd.f32 %v2686, %v2819
      %v2948 = vadd.f32 %v2687, %v2820
      %v2949 = vadd.f32 %v2688, %v2821
      %v2950 = vadd.f32 %v2689, %v2822
      %v2951 = vadd.f32 %v2690, %v2823
      %v2952 = vadd.f32 %v2691, %v2824
      %v2953 = vadd.f32 %v2692, %v2825
      %v2954 = vadd.f32 %v2693, %v2826
      %v2955 = vadd.f32 %v2694, %v2827
      %v2956 = vadd.f32 %v2695, %v2828
      %v2957 = vadd.f32 %v2696, %v2829
      %v2958 = vadd.f32 %v2697, %v2830
      %v2959 = vadd.f32 %v2698, %v2831
      %v2960 = vadd.f32 %v2699, %v2832
      %v2961 = vadd.f32 %v2700, %v2833
      %v2962 = vadd.f32 %v2701, %v2834
      %v2963 = vadd.f32 %v2702, %v2835
      %v2964 = vadd.f32 %v2703, %v2836
      %v2965 = vadd.f32 %v2704, %v2837
      %v2966 = vadd.f32 %v2705, %v2838
      %v2967 = vadd.f32 %v2706, %v2839
      %v2968 = vadd.f32 %v2707, %v2840
      %v2969 = vadd.f32 %v2708, %v2841
      %v2970 = vadd.f32 %v2709, %v2842
      %v2971 = vadd.f32 %v2710, %v2843
      %v2972 = vadd.f32 %v2711, %v2844
      %v2973 = vadd.f32 %v2712, %v2845
      %v2974 = vadd.f32 %v2713, %v2846
      %v2975 = vadd.f32 %v2714, %v2847
      %v2976 = vadd.f32 %v2715, %v2848
      %v2977 = vadd.f32 %v2716, %v2849
      %v2978 = vadd.f32 %v2717, %v2850
      %v2979 = vadd.f32 %v2718, %v2851
      %v2980 = vadd.f32 %v2719, %v2852
      %v2981 = vadd.f32 %v2720, %v2853
      %v2982 = vadd.f32 %v2721, %v2854
      %v2983 = vadd.f32 %v2722, %v2855
      %v2984 = vadd.f32 %v2723, %v2856
      %v2985 = vadd.f32 %v2724, %v2857
      %v2986 = vadd.f32 %v2725, %v2858
      %v2987 = vadd.f32 %v2726, %v2859
      %v2988 = vadd.f32 %v2727, %v2860
      %v2989 = vadd.f32 %v2728, %v2861
      %v2990 = vadd.f32 %v2729, %v2862
      %v2991 = vadd.f32 %v2730, %v2863
      %v2992 = vadd.f32 %v2731, %v2864
      %v2993 = vadd.f32 %v2732, %v2865
      %v2994 = vadd.f32 %v2733, %v2866
      %v2995 = vadd.f32 %v2734, %v2867
      %v2996 = vadd.f32 %v2735, %v2868
      %v2997 = vadd.f32 %v2736, %v2869
      %v2998 = vadd.f32 %v2737, %v2870
      %v2999 = vadd.f32 %v2738, %v2871
      %v3000 = vadd.f32 %v2739, %v2872
      %v3001 = vadd.f32 %v2740, %v2873
      %v3002 = vld [vmem:[%s2 + $0x6] sm:$0x1]
      %v3003 = vlaneseq
      %v3004 = vshrl.u32 %v3003, 7
      %v3005 = vsub.s32 0, %v3004
      %v3006 = vrot.slane %v3002, %v3005
      %v3007 = vmul.f32 %v3006, %v2448
      %v3008 = vmul.f32 %v3006, %v2449
      %v3009 = vmul.f32 %v3006, %v2450
      %v3010 = vmul.f32 %v3006, %v2451
      %v3011 = vmul.f32 %v3006, %v2453
      %v3012 = vmul.f32 %v3006, %v2454
      %v3013 = vmul.f32 %v3006, %v2455
      %v3014 = vmul.f32 %v3006, %v2456
      %v3015 = vmul.f32 %v3006, %v2458
      %v3016 = vmul.f32 %v3006, %v2459
      %v3017 = vmul.f32 %v3006, %v2460
      %v3018 = vmul.f32 %v3006, %v2461
      %v3019 = vmul.f32 %v3006, %v2463
      %v3020 = vmul.f32 %v3006, %v2464
      %v3021 = vmul.f32 %v3006, %v2465
      %v3022 = vmul.f32 %v3006, %v2466
      %v3023 = vmul.f32 %v3006, %v2468
      %v3024 = vmul.f32 %v3006, %v2469
      %v3025 = vmul.f32 %v3006, %v2470
      %v3026 = vmul.f32 %v3006, %v2471
      %v3027 = vmul.f32 %v3006, %v2473
      %v3028 = vmul.f32 %v3006, %v2474
      %v3029 = vmul.f32 %v3006, %v2475
      %v3030 = vmul.f32 %v3006, %v2476
      %v3031 = vmul.f32 %v3006, %v2478
      %v3032 = vmul.f32 %v3006, %v2479
      %v3033 = vmul.f32 %v3006, %v2480
      %v3034 = vmul.f32 %v3006, %v2481
      %v3035 = vmul.f32 %v3006, %v2483
      %v3036 = vmul.f32 %v3006, %v2484
      %v3037 = vmul.f32 %v3006, %v2485
      %v3038 = vmul.f32 %v3006, %v2486
      %v3039 = vmul.f32 %v3006, %v2488
      %v3040 = vmul.f32 %v3006, %v2489
      %v3041 = vmul.f32 %v3006, %v2490
      %v3042 = vmul.f32 %v3006, %v2491
      %v3043 = vmul.f32 %v3006, %v2493
      %v3044 = vmul.f32 %v3006, %v2494
      %v3045 = vmul.f32 %v3006, %v2495
      %v3046 = vmul.f32 %v3006, %v2496
      %v3047 = vmul.f32 %v3006, %v2498
      %v3048 = vmul.f32 %v3006, %v2499
      %v3049 = vmul.f32 %v3006, %v2500
      %v3050 = vmul.f32 %v3006, %v2501
      %v3051 = vmul.f32 %v3006, %v2503
      %v3052 = vmul.f32 %v3006, %v2504
      %v3053 = vmul.f32 %v3006, %v2505
      %v3054 = vmul.f32 %v3006, %v2506
      %v3055 = vmul.f32 %v3006, %v2508
      %v3056 = vmul.f32 %v3006, %v2509
      %v3057 = vmul.f32 %v3006, %v2510
      %v3058 = vmul.f32 %v3006, %v2511
      %v3059 = vmul.f32 %v3006, %v2513
      %v3060 = vmul.f32 %v3006, %v2514
      %v3061 = vmul.f32 %v3006, %v2515
      %v3062 = vmul.f32 %v3006, %v2516
      %v3063 = vmul.f32 %v3006, %v2518
      %v3064 = vmul.f32 %v3006, %v2519
      %v3065 = vmul.f32 %v3006, %v2520
      %v3066 = vmul.f32 %v3006, %v2521
      %v3067 = vmul.f32 %v3006, %v2523
      %v3068 = vmul.f32 %v3006, %v2524
      %v3069 = vmul.f32 %v3006, %v2525
      %v3070 = vmul.f32 %v3006, %v2526
      %v3071 = vmul.f32 %v3006, %v2528
      %v3072 = vmul.f32 %v3006, %v2529
      %v3073 = vmul.f32 %v3006, %v2530
      %v3074 = vmul.f32 %v3006, %v2531
      %v3075 = vmul.f32 %v3006, %v2533
      %v3076 = vmul.f32 %v3006, %v2534
      %v3077 = vmul.f32 %v3006, %v2535
      %v3078 = vmul.f32 %v3006, %v2536
      %v3079 = vmul.f32 %v3006, %v2538
      %v3080 = vmul.f32 %v3006, %v2539
      %v3081 = vmul.f32 %v3006, %v2540
      %v3082 = vmul.f32 %v3006, %v2541
      %v3083 = vmul.f32 %v3006, %v2543
      %v3084 = vmul.f32 %v3006, %v2544
      %v3085 = vmul.f32 %v3006, %v2545
      %v3086 = vmul.f32 %v3006, %v2546
      %v3087 = vmul.f32 %v3006, %v2548
      %v3088 = vmul.f32 %v3006, %v2549
      %v3089 = vmul.f32 %v3006, %v2550
      %v3090 = vmul.f32 %v3006, %v2551
      %v3091 = vmul.f32 %v3006, %v2553
      %v3092 = vmul.f32 %v3006, %v2554
      %v3093 = vmul.f32 %v3006, %v2555
      %v3094 = vmul.f32 %v3006, %v2556
      %v3095 = vmul.f32 %v3006, %v2558
      %v3096 = vmul.f32 %v3006, %v2559
      %v3097 = vmul.f32 %v3006, %v2560
      %v3098 = vmul.f32 %v3006, %v2561
      %v3099 = vmul.f32 %v3006, %v2563
      %v3100 = vmul.f32 %v3006, %v2564
      %v3101 = vmul.f32 %v3006, %v2565
      %v3102 = vmul.f32 %v3006, %v2566
      %v3103 = vmul.f32 %v3006, %v2568
      %v3104 = vmul.f32 %v3006, %v2569
      %v3105 = vmul.f32 %v3006, %v2570
      %v3106 = vmul.f32 %v3006, %v2571
      %v3107 = vmul.f32 %v3006, %v2573
      %v3108 = vmul.f32 %v3006, %v2574
      %v3109 = vmul.f32 %v3006, %v2575
      %v3110 = vmul.f32 %v3006, %v2576
      %v3111 = vmul.f32 %v3006, %v2578
      %v3112 = vmul.f32 %v3006, %v2579
      %v3113 = vmul.f32 %v3006, %v2580
      %v3114 = vmul.f32 %v3006, %v2581
      %v3115 = vmul.f32 %v3006, %v2583
      %v3116 = vmul.f32 %v3006, %v2584
      %v3117 = vmul.f32 %v3006, %v2585
      %v3118 = vmul.f32 %v3006, %v2586
      %v3119 = vmul.f32 %v3006, %v2588
      %v3120 = vmul.f32 %v3006, %v2589
      %v3121 = vmul.f32 %v3006, %v2590
      %v3122 = vmul.f32 %v3006, %v2591
      %v3123 = vmul.f32 %v3006, %v2593
      %v3124 = vmul.f32 %v3006, %v2594
      %v3125 = vmul.f32 %v3006, %v2595
      %v3126 = vmul.f32 %v3006, %v2596
      %v3127 = vmul.f32 %v3006, %v2598
      %v3128 = vmul.f32 %v3006, %v2599
      %v3129 = vmul.f32 %v3006, %v2600
      %v3130 = vmul.f32 %v3006, %v2601
      %v3131 = vmul.f32 %v3006, %v2603
      %v3132 = vmul.f32 %v3006, %v2604
      %v3133 = vmul.f32 %v3006, %v2605
      %v3134 = vmul.f32 %v3006, %v2606
      %v3135 = vadd.f32 %v2874, %v3007
      %v3136 = vadd.f32 %v2875, %v3008
      %v3137 = vadd.f32 %v2876, %v3009
      %v3138 = vadd.f32 %v2877, %v3010
      %v3139 = vadd.f32 %v2878, %v3011
      %v3140 = vadd.f32 %v2879, %v3012
      %v3141 = vadd.f32 %v2880, %v3013
      %v3142 = vadd.f32 %v2881, %v3014
      %v3143 = vadd.f32 %v2882, %v3015
      %v3144 = vadd.f32 %v2883, %v3016
      %v3145 = vadd.f32 %v2884, %v3017
      %v3146 = vadd.f32 %v2885, %v3018
      %v3147 = vadd.f32 %v2886, %v3019
      %v3148 = vadd.f32 %v2887, %v3020
      %v3149 = vadd.f32 %v2888, %v3021
      %v3150 = vadd.f32 %v2889, %v3022
      %v3151 = vadd.f32 %v2890, %v3023
      %v3152 = vadd.f32 %v2891, %v3024
      %v3153 = vadd.f32 %v2892, %v3025
      %v3154 = vadd.f32 %v2893, %v3026
      %v3155 = vadd.f32 %v2894, %v3027
      %v3156 = vadd.f32 %v2895, %v3028
      %v3157 = vadd.f32 %v2896, %v3029
      %v3158 = vadd.f32 %v2897, %v3030
      %v3159 = vadd.f32 %v2898, %v3031
      %v3160 = vadd.f32 %v2899, %v3032
      %v3161 = vadd.f32 %v2900, %v3033
      %v3162 = vadd.f32 %v2901, %v3034
      %v3163 = vadd.f32 %v2902, %v3035
      %v3164 = vadd.f32 %v2903, %v3036
      %v3165 = vadd.f32 %v2904, %v3037
      %v3166 = vadd.f32 %v2905, %v3038
      %v3167 = vadd.f32 %v2906, %v3039
      %v3168 = vadd.f32 %v2907, %v3040
      %v3169 = vadd.f32 %v2908, %v3041
      %v3170 = vadd.f32 %v2909, %v3042
      %v3171 = vadd.f32 %v2910, %v3043
      %v3172 = vadd.f32 %v2911, %v3044
      %v3173 = vadd.f32 %v2912, %v3045
      %v3174 = vadd.f32 %v2913, %v3046
      %v3175 = vadd.f32 %v2914, %v3047
      %v3176 = vadd.f32 %v2915, %v3048
      %v3177 = vadd.f32 %v2916, %v3049
      %v3178 = vadd.f32 %v2917, %v3050
      %v3179 = vadd.f32 %v2918, %v3051
      %v3180 = vadd.f32 %v2919, %v3052
      %v3181 = vadd.f32 %v2920, %v3053
      %v3182 = vadd.f32 %v2921, %v3054
      %v3183 = vadd.f32 %v2922, %v3055
      %v3184 = vadd.f32 %v2923, %v3056
      %v3185 = vadd.f32 %v2924, %v3057
      %v3186 = vadd.f32 %v2925, %v3058
      %v3187 = vadd.f32 %v2926, %v3059
      %v3188 = vadd.f32 %v2927, %v3060
      %v3189 = vadd.f32 %v2928, %v3061
      %v3190 = vadd.f32 %v2929, %v3062
      %v3191 = vadd.f32 %v2930, %v3063
      %v3192 = vadd.f32 %v2931, %v3064
      %v3193 = vadd.f32 %v2932, %v3065
      %v3194 = vadd.f32 %v2933, %v3066
      %v3195 = vadd.f32 %v2934, %v3067
      %v3196 = vadd.f32 %v2935, %v3068
      %v3197 = vadd.f32 %v2936, %v3069
      %v3198 = vadd.f32 %v2937, %v3070
      %v3199 = vadd.f32 %v2938, %v3071
      %v3200 = vadd.f32 %v2939, %v3072
      %v3201 = vadd.f32 %v2940, %v3073
      %v3202 = vadd.f32 %v2941, %v3074
      %v3203 = vadd.f32 %v2942, %v3075
      %v3204 = vadd.f32 %v2943, %v3076
      %v3205 = vadd.f32 %v2944, %v3077
      %v3206 = vadd.f32 %v2945, %v3078
      %v3207 = vadd.f32 %v2946, %v3079
      %v3208 = vadd.f32 %v2947, %v3080
      %v3209 = vadd.f32 %v2948, %v3081
      %v3210 = vadd.f32 %v2949, %v3082
      %v3211 = vadd.f32 %v2950, %v3083
      %v3212 = vadd.f32 %v2951, %v3084
      %v3213 = vadd.f32 %v2952, %v3085
      %v3214 = vadd.f32 %v2953, %v3086
      %v3215 = vadd.f32 %v2954, %v3087
      %v3216 = vadd.f32 %v2955, %v3088
      %v3217 = vadd.f32 %v2956, %v3089
      %v3218 = vadd.f32 %v2957, %v3090
      %v3219 = vadd.f32 %v2958, %v3091
      %v3220 = vadd.f32 %v2959, %v3092
      %v3221 = vadd.f32 %v2960, %v3093
      %v3222 = vadd.f32 %v2961, %v3094
      %v3223 = vadd.f32 %v2962, %v3095
      %v3224 = vadd.f32 %v2963, %v3096
      %v3225 = vadd.f32 %v2964, %v3097
      %v3226 = vadd.f32 %v2965, %v3098
      %v3227 = vadd.f32 %v2966, %v3099
      %v3228 = vadd.f32 %v2967, %v3100
      %v3229 = vadd.f32 %v2968, %v3101
      %v3230 = vadd.f32 %v2969, %v3102
      %v3231 = vadd.f32 %v2970, %v3103
      %v3232 = vadd.f32 %v2971, %v3104
      %v3233 = vadd.f32 %v2972, %v3105
      %v3234 = vadd.f32 %v2973, %v3106
      %v3235 = vadd.f32 %v2974, %v3107
      %v3236 = vadd.f32 %v2975, %v3108
      %v3237 = vadd.f32 %v2976, %v3109
      %v3238 = vadd.f32 %v2977, %v3110
      %v3239 = vadd.f32 %v2978, %v3111
      %v3240 = vadd.f32 %v2979, %v3112
      %v3241 = vadd.f32 %v2980, %v3113
      %v3242 = vadd.f32 %v2981, %v3114
      %v3243 = vadd.f32 %v2982, %v3115
      %v3244 = vadd.f32 %v2983, %v3116
      %v3245 = vadd.f32 %v2984, %v3117
      %v3246 = vadd.f32 %v2985, %v3118
      %v3247 = vadd.f32 %v2986, %v3119
      %v3248 = vadd.f32 %v2987, %v3120
      %v3249 = vadd.f32 %v2988, %v3121
      %v3250 = vadd.f32 %v2989, %v3122
      %v3251 = vadd.f32 %v2990, %v3123
      %v3252 = vadd.f32 %v2991, %v3124
      %v3253 = vadd.f32 %v2992, %v3125
      %v3254 = vadd.f32 %v2993, %v3126
      %v3255 = vadd.f32 %v2994, %v3127
      %v3256 = vadd.f32 %v2995, %v3128
      %v3257 = vadd.f32 %v2996, %v3129
      %v3258 = vadd.f32 %v2997, %v3130
      %v3259 = vadd.f32 %v2998, %v3131
      %v3260 = vadd.f32 %v2999, %v3132
      %v3261 = vadd.f32 %v3000, %v3133
      %v3262 = vadd.f32 %v3001, %v3134
      %v3263 = vld [vmem:[%s2 + $0x1] sm:$0x1]
      %v3264 = vlaneseq
      %v3265 = vshrl.u32 %v3264, 7
      %v3266 = vsub.s32 0, %v3265
      %v3267 = vrot.slane %v3263, %v3266
      %v3268 = vmul.f32 %v3267, %v2438
      %v3269 = vmul.f32 %v3267, %v2439
      %v3270 = vmul.f32 %v3267, %v2440
      %v3271 = vmul.f32 %v3267, %v2441
      %v3272 = vmul.f32 %v3267, %v2442
      %v3273 = vmul.f32 %v3267, %v2443
      %v3274 = vmul.f32 %v3267, %v2444
      %v3275 = vmul.f32 %v3267, %v2445
      %v3276 = vmul.f32 %v3267, %v2446
      %v3277 = vmul.f32 %v3267, %v2447
      %v3278 = vmul.f32 %v3267, %v2448
      %v3279 = vmul.f32 %v3267, %v2449
      %v3280 = vmul.f32 %v3267, %v2450
      %v3281 = vmul.f32 %v3267, %v2451
      %v3282 = vmul.f32 %v3267, %v2452
      %v3283 = vmul.f32 %v3267, %v2453
      %v3284 = vmul.f32 %v3267, %v2454
      %v3285 = vmul.f32 %v3267, %v2455
      %v3286 = vmul.f32 %v3267, %v2456
      %v3287 = vmul.f32 %v3267, %v2457
      %v3288 = vmul.f32 %v3267, %v2458
      %v3289 = vmul.f32 %v3267, %v2459
      %v3290 = vmul.f32 %v3267, %v2460
      %v3291 = vmul.f32 %v3267, %v2461
      %v3292 = vmul.f32 %v3267, %v2462
      %v3293 = vmul.f32 %v3267, %v2463
      %v3294 = vmul.f32 %v3267, %v2464
      %v3295 = vmul.f32 %v3267, %v2465
      %v3296 = vmul.f32 %v3267, %v2466
      %v3297 = vmul.f32 %v3267, %v2467
      %v3298 = vmul.f32 %v3267, %v2468
      %v3299 = vmul.f32 %v3267, %v2469
      %v3300 = vmul.f32 %v3267, %v2470
      %v3301 = vmul.f32 %v3267, %v2471
      %v3302 = vmul.f32 %v3267, %v2472
      %v3303 = vmul.f32 %v3267, %v2473
      %v3304 = vmul.f32 %v3267, %v2474
      %v3305 = vmul.f32 %v3267, %v2475
      %v3306 = vmul.f32 %v3267, %v2476
      %v3307 = vmul.f32 %v3267, %v2477
      %v3308 = vmul.f32 %v3267, %v2478
      %v3309 = vmul.f32 %v3267, %v2479
      %v3310 = vmul.f32 %v3267, %v2480
      %v3311 = vmul.f32 %v3267, %v2481
      %v3312 = vmul.f32 %v3267, %v2482
      %v3313 = vmul.f32 %v3267, %v2483
      %v3314 = vmul.f32 %v3267, %v2484
      %v3315 = vmul.f32 %v3267, %v2485
      %v3316 = vmul.f32 %v3267, %v2486
      %v3317 = vmul.f32 %v3267, %v2487
      %v3318 = vmul.f32 %v3267, %v2488
      %v3319 = vmul.f32 %v3267, %v2489
      %v3320 = vmul.f32 %v3267, %v2490
      %v3321 = vmul.f32 %v3267, %v2491
      %v3322 = vmul.f32 %v3267, %v2492
      %v3323 = vmul.f32 %v3267, %v2493
      %v3324 = vmul.f32 %v3267, %v2494
      %v3325 = vmul.f32 %v3267, %v2495
      %v3326 = vmul.f32 %v3267, %v2496
      %v3327 = vmul.f32 %v3267, %v2497
      %v3328 = vmul.f32 %v3267, %v2498
      %v3329 = vmul.f32 %v3267, %v2499
      %v3330 = vmul.f32 %v3267, %v2500
      %v3331 = vmul.f32 %v3267, %v2501
      %v3332 = vmul.f32 %v3267, %v2502
      %v3333 = vmul.f32 %v3267, %v2503
      %v3334 = vmul.f32 %v3267, %v2504
      %v3335 = vmul.f32 %v3267, %v2505
      %v3336 = vmul.f32 %v3267, %v2506
      %v3337 = vmul.f32 %v3267, %v2507
      %v3338 = vmul.f32 %v3267, %v2508
      %v3339 = vmul.f32 %v3267, %v2509
      %v3340 = vmul.f32 %v3267, %v2510
      %v3341 = vmul.f32 %v3267, %v2511
      %v3342 = vmul.f32 %v3267, %v2512
      %v3343 = vmul.f32 %v3267, %v2513
      %v3344 = vmul.f32 %v3267, %v2514
      %v3345 = vmul.f32 %v3267, %v2515
      %v3346 = vmul.f32 %v3267, %v2516
      %v3347 = vmul.f32 %v3267, %v2517
      %v3348 = vmul.f32 %v3267, %v2518
      %v3349 = vmul.f32 %v3267, %v2519
      %v3350 = vmul.f32 %v3267, %v2520
      %v3351 = vmul.f32 %v3267, %v2521
      %v3352 = vmul.f32 %v3267, %v2522
      %v3353 = vmul.f32 %v3267, %v2523
      %v3354 = vmul.f32 %v3267, %v2524
      %v3355 = vmul.f32 %v3267, %v2525
      %v3356 = vmul.f32 %v3267, %v2526
      %v3357 = vmul.f32 %v3267, %v2527
      %v3358 = vmul.f32 %v3267, %v2528
      %v3359 = vmul.f32 %v3267, %v2529
      %v3360 = vmul.f32 %v3267, %v2530
      %v3361 = vmul.f32 %v3267, %v2531
      %v3362 = vmul.f32 %v3267, %v2532
      %v3363 = vmul.f32 %v3267, %v2533
      %v3364 = vmul.f32 %v3267, %v2534
      %v3365 = vmul.f32 %v3267, %v2535
      %v3366 = vmul.f32 %v3267, %v2536
      %v3367 = vmul.f32 %v3267, %v2537
      %v3368 = vmul.f32 %v3267, %v2538
      %v3369 = vmul.f32 %v3267, %v2539
      %v3370 = vmul.f32 %v3267, %v2540
      %v3371 = vmul.f32 %v3267, %v2541
      %v3372 = vmul.f32 %v3267, %v2542
      %v3373 = vmul.f32 %v3267, %v2543
      %v3374 = vmul.f32 %v3267, %v2544
      %v3375 = vmul.f32 %v3267, %v2545
      %v3376 = vmul.f32 %v3267, %v2546
      %v3377 = vmul.f32 %v3267, %v2547
      %v3378 = vmul.f32 %v3267, %v2548
      %v3379 = vmul.f32 %v3267, %v2549
      %v3380 = vmul.f32 %v3267, %v2550
      %v3381 = vmul.f32 %v3267, %v2551
      %v3382 = vmul.f32 %v3267, %v2552
      %v3383 = vmul.f32 %v3267, %v2553
      %v3384 = vmul.f32 %v3267, %v2554
      %v3385 = vmul.f32 %v3267, %v2555
      %v3386 = vmul.f32 %v3267, %v2556
      %v3387 = vmul.f32 %v3267, %v2557
      %v3388 = vmul.f32 %v3267, %v2558
      %v3389 = vmul.f32 %v3267, %v2559
      %v3390 = vmul.f32 %v3267, %v2560
      %v3391 = vmul.f32 %v3267, %v2561
      %v3392 = vmul.f32 %v3267, %v2562
      %v3393 = vmul.f32 %v3267, %v2563
      %v3394 = vmul.f32 %v3267, %v2564
      %v3395 = vmul.f32 %v3267, %v2565
      %v3396 = vmul.f32 %v3267, %v2566
      %v3397 = vmul.f32 %v3267, %v2567
      %v3398 = vmul.f32 %v3267, %v2568
      %v3399 = vmul.f32 %v3267, %v2569
      %v3400 = vmul.f32 %v3267, %v2570
      %v3401 = vmul.f32 %v3267, %v2571
      %v3402 = vmul.f32 %v3267, %v2572
      %v3403 = vmul.f32 %v3267, %v2573
      %v3404 = vmul.f32 %v3267, %v2574
      %v3405 = vmul.f32 %v3267, %v2575
      %v3406 = vmul.f32 %v3267, %v2576
      %v3407 = vmul.f32 %v3267, %v2577
      %v3408 = vmul.f32 %v3267, %v2578
      %v3409 = vmul.f32 %v3267, %v2579
      %v3410 = vmul.f32 %v3267, %v2580
      %v3411 = vmul.f32 %v3267, %v2581
      %v3412 = vmul.f32 %v3267, %v2582
      %v3413 = vmul.f32 %v3267, %v2583
      %v3414 = vmul.f32 %v3267, %v2584
      %v3415 = vmul.f32 %v3267, %v2585
      %v3416 = vmul.f32 %v3267, %v2586
      %v3417 = vmul.f32 %v3267, %v2587
      %v3418 = vmul.f32 %v3267, %v2588
      %v3419 = vmul.f32 %v3267, %v2589
      %v3420 = vmul.f32 %v3267, %v2590
      %v3421 = vmul.f32 %v3267, %v2591
      %v3422 = vmul.f32 %v3267, %v2592
      %v3423 = vmul.f32 %v3267, %v2593
      %v3424 = vmul.f32 %v3267, %v2594
      %v3425 = vmul.f32 %v3267, %v2595
      %v3426 = vmul.f32 %v3267, %v2596
      %v3427 = vmul.f32 %v3267, %v2597
      %v3428 = vld [vmem:[%s2 + $0x4] sm:$0x1]
      %v3429 = vlaneseq
      %v3430 = vshrl.u32 %v3429, 7
      %v3431 = vsub.s32 0, %v3430
      %v3432 = vrot.slane %v3428, %v3431
      %v3433 = vmul.f32 %v3432, %v2443
      %v3434 = vmul.f32 %v3432, %v2444
      %v3435 = vmul.f32 %v3432, %v2445
      %v3436 = vmul.f32 %v3432, %v2446
      %v3437 = vmul.f32 %v3432, %v2447
      %v3438 = vmul.f32 %v3432, %v2448
      %v3439 = vmul.f32 %v3432, %v2449
      %v3440 = vmul.f32 %v3432, %v2450
      %v3441 = vmul.f32 %v3432, %v2451
      %v3442 = vmul.f32 %v3432, %v2452
      %v3443 = vmul.f32 %v3432, %v2453
      %v3444 = vmul.f32 %v3432, %v2454
      %v3445 = vmul.f32 %v3432, %v2455
      %v3446 = vmul.f32 %v3432, %v2456
      %v3447 = vmul.f32 %v3432, %v2457
      %v3448 = vmul.f32 %v3432, %v2458
      %v3449 = vmul.f32 %v3432, %v2459
      %v3450 = vmul.f32 %v3432, %v2460
      %v3451 = vmul.f32 %v3432, %v2461
      %v3452 = vmul.f32 %v3432, %v2462
      %v3453 = vmul.f32 %v3432, %v2463
      %v3454 = vmul.f32 %v3432, %v2464
      %v3455 = vmul.f32 %v3432, %v2465
      %v3456 = vmul.f32 %v3432, %v2466
      %v3457 = vmul.f32 %v3432, %v2467
      %v3458 = vmul.f32 %v3432, %v2468
      %v3459 = vmul.f32 %v3432, %v2469
      %v3460 = vmul.f32 %v3432, %v2470
      %v3461 = vmul.f32 %v3432, %v2471
      %v3462 = vmul.f32 %v3432, %v2472
      %v3463 = vmul.f32 %v3432, %v2473
      %v3464 = vmul.f32 %v3432, %v2474
      %v3465 = vmul.f32 %v3432, %v2475
      %v3466 = vmul.f32 %v3432, %v2476
      %v3467 = vmul.f32 %v3432, %v2477
      %v3468 = vmul.f32 %v3432, %v2478
      %v3469 = vmul.f32 %v3432, %v2479
      %v3470 = vmul.f32 %v3432, %v2480
      %v3471 = vmul.f32 %v3432, %v2481
      %v3472 = vmul.f32 %v3432, %v2482
      %v3473 = vmul.f32 %v3432, %v2483
      %v3474 = vmul.f32 %v3432, %v2484
      %v3475 = vmul.f32 %v3432, %v2485
      %v3476 = vmul.f32 %v3432, %v2486
      %v3477 = vmul.f32 %v3432, %v2487
      %v3478 = vmul.f32 %v3432, %v2488
      %v3479 = vmul.f32 %v3432, %v2489
      %v3480 = vmul.f32 %v3432, %v2490
      %v3481 = vmul.f32 %v3432, %v2491
      %v3482 = vmul.f32 %v3432, %v2492
      %v3483 = vmul.f32 %v3432, %v2493
      %v3484 = vmul.f32 %v3432, %v2494
      %v3485 = vmul.f32 %v3432, %v2495
      %v3486 = vmul.f32 %v3432, %v2496
      %v3487 = vmul.f32 %v3432, %v2497
      %v3488 = vmul.f32 %v3432, %v2498
      %v3489 = vmul.f32 %v3432, %v2499
      %v3490 = vmul.f32 %v3432, %v2500
      %v3491 = vmul.f32 %v3432, %v2501
      %v3492 = vmul.f32 %v3432, %v2502
      %v3493 = vmul.f32 %v3432, %v2503
      %v3494 = vmul.f32 %v3432, %v2504
      %v3495 = vmul.f32 %v3432, %v2505
      %v3496 = vmul.f32 %v3432, %v2506
      %v3497 = vmul.f32 %v3432, %v2507
      %v3498 = vmul.f32 %v3432, %v2508
      %v3499 = vmul.f32 %v3432, %v2509
      %v3500 = vmul.f32 %v3432, %v2510
      %v3501 = vmul.f32 %v3432, %v2511
      %v3502 = vmul.f32 %v3432, %v2512
      %v3503 = vmul.f32 %v3432, %v2513
      %v3504 = vmul.f32 %v3432, %v2514
      %v3505 = vmul.f32 %v3432, %v2515
      %v3506 = vmul.f32 %v3432, %v2516
      %v3507 = vmul.f32 %v3432, %v2517
      %v3508 = vmul.f32 %v3432, %v2518
      %v3509 = vmul.f32 %v3432, %v2519
      %v3510 = vmul.f32 %v3432, %v2520
      %v3511 = vmul.f32 %v3432, %v2521
      %v3512 = vmul.f32 %v3432, %v2522
      %v3513 = vmul.f32 %v3432, %v2523
      %v3514 = vmul.f32 %v3432, %v2524
      %v3515 = vmul.f32 %v3432, %v2525
      %v3516 = vmul.f32 %v3432, %v2526
      %v3517 = vmul.f32 %v3432, %v2527
      %v3518 = vmul.f32 %v3432, %v2528
      %v3519 = vmul.f32 %v3432, %v2529
      %v3520 = vmul.f32 %v3432, %v2530
      %v3521 = vmul.f32 %v3432, %v2531
      %v3522 = vmul.f32 %v3432, %v2532
      %v3523 = vmul.f32 %v3432, %v2533
      %v3524 = vmul.f32 %v3432, %v2534
      %v3525 = vmul.f32 %v3432, %v2535
      %v3526 = vmul.f32 %v3432, %v2536
      %v3527 = vmul.f32 %v3432, %v2537
      %v3528 = vmul.f32 %v3432, %v2538
      %v3529 = vmul.f32 %v3432, %v2539
      %v3530 = vmul.f32 %v3432, %v2540
      %v3531 = vmul.f32 %v3432, %v2541
      %v3532 = vmul.f32 %v3432, %v2542
      %v3533 = vmul.f32 %v3432, %v2543
      %v3534 = vmul.f32 %v3432, %v2544
      %v3535 = vmul.f32 %v3432, %v2545
      %v3536 = vmul.f32 %v3432, %v2546
      %v3537 = vmul.f32 %v3432, %v2547
      %v3538 = vmul.f32 %v3432, %v2548
      %v3539 = vmul.f32 %v3432, %v2549
      %v3540 = vmul.f32 %v3432, %v2550
      %v3541 = vmul.f32 %v3432, %v2551
      %v3542 = vmul.f32 %v3432, %v2552
      %v3543 = vmul.f32 %v3432, %v2553
      %v3544 = vmul.f32 %v3432, %v2554
      %v3545 = vmul.f32 %v3432, %v2555
      %v3546 = vmul.f32 %v3432, %v2556
      %v3547 = vmul.f32 %v3432, %v2557
      %v3548 = vmul.f32 %v3432, %v2558
      %v3549 = vmul.f32 %v3432, %v2559
      %v3550 = vmul.f32 %v3432, %v2560
      %v3551 = vmul.f32 %v3432, %v2561
      %v3552 = vmul.f32 %v3432, %v2562
      %v3553 = vmul.f32 %v3432, %v2563
      %v3554 = vmul.f32 %v3432, %v2564
      %v3555 = vmul.f32 %v3432, %v2565
      %v3556 = vmul.f32 %v3432, %v2566
      %v3557 = vmul.f32 %v3432, %v2567
      %v3558 = vmul.f32 %v3432, %v2568
      %v3559 = vmul.f32 %v3432, %v2569
      %v3560 = vmul.f32 %v3432, %v2570
      %v3561 = vmul.f32 %v3432, %v2571
      %v3562 = vmul.f32 %v3432, %v2572
      %v3563 = vmul.f32 %v3432, %v2573
      %v3564 = vmul.f32 %v3432, %v2574
      %v3565 = vmul.f32 %v3432, %v2575
      %v3566 = vmul.f32 %v3432, %v2576
      %v3567 = vmul.f32 %v3432, %v2577
      %v3568 = vmul.f32 %v3432, %v2578
      %v3569 = vmul.f32 %v3432, %v2579
      %v3570 = vmul.f32 %v3432, %v2580
      %v3571 = vmul.f32 %v3432, %v2581
      %v3572 = vmul.f32 %v3432, %v2582
      %v3573 = vmul.f32 %v3432, %v2583
      %v3574 = vmul.f32 %v3432, %v2584
      %v3575 = vmul.f32 %v3432, %v2585
      %v3576 = vmul.f32 %v3432, %v2586
      %v3577 = vmul.f32 %v3432, %v2587
      %v3578 = vmul.f32 %v3432, %v2588
      %v3579 = vmul.f32 %v3432, %v2589
      %v3580 = vmul.f32 %v3432, %v2590
      %v3581 = vmul.f32 %v3432, %v2591
      %v3582 = vmul.f32 %v3432, %v2592
      %v3583 = vmul.f32 %v3432, %v2593
      %v3584 = vmul.f32 %v3432, %v2594
      %v3585 = vmul.f32 %v3432, %v2595
      %v3586 = vmul.f32 %v3432, %v2596
      %v3587 = vmul.f32 %v3432, %v2597
      %v3588 = vmul.f32 %v3432, %v2598
      %v3589 = vmul.f32 %v3432, %v2599
      %v3590 = vmul.f32 %v3432, %v2600
      %v3591 = vmul.f32 %v3432, %v2601
      %v3592 = vmul.f32 %v3432, %v2602
      %v3593 = vadd.f32 %v3268, %v3433
      %v3594 = vadd.f32 %v3269, %v3434
      %v3595 = vadd.f32 %v3270, %v3435
      %v3596 = vadd.f32 %v3271, %v3436
      %v3597 = vadd.f32 %v3272, %v3437
      %v3598 = vadd.f32 %v3273, %v3438
      %v3599 = vadd.f32 %v3274, %v3439
      %v3600 = vadd.f32 %v3275, %v3440
      %v3601 = vadd.f32 %v3276, %v3441
      %v3602 = vadd.f32 %v3277, %v3442
      %v3603 = vadd.f32 %v3278, %v3443
      %v3604 = vadd.f32 %v3279, %v3444
      %v3605 = vadd.f32 %v3280, %v3445
      %v3606 = vadd.f32 %v3281, %v3446
      %v3607 = vadd.f32 %v3282, %v3447
      %v3608 = vadd.f32 %v3283, %v3448
      %v3609 = vadd.f32 %v3284, %v3449
      %v3610 = vadd.f32 %v3285, %v3450
      %v3611 = vadd.f32 %v3286, %v3451
      %v3612 = vadd.f32 %v3287, %v3452
      %v3613 = vadd.f32 %v3288, %v3453
      %v3614 = vadd.f32 %v3289, %v3454
      %v3615 = vadd.f32 %v3290, %v3455
      %v3616 = vadd.f32 %v3291, %v3456
      %v3617 = vadd.f32 %v3292, %v3457
      %v3618 = vadd.f32 %v3293, %v3458
      %v3619 = vadd.f32 %v3294, %v3459
      %v3620 = vadd.f32 %v3295, %v3460
      %v3621 = vadd.f32 %v3296, %v3461
      %v3622 = vadd.f32 %v3297, %v3462
      %v3623 = vadd.f32 %v3298, %v3463
      %v3624 = vadd.f32 %v3299, %v3464
      %v3625 = vadd.f32 %v3300, %v3465
      %v3626 = vadd.f32 %v3301, %v3466
      %v3627 = vadd.f32 %v3302, %v3467
      %v3628 = vadd.f32 %v3303, %v3468
      %v3629 = vadd.f32 %v3304, %v3469
      %v3630 = vadd.f32 %v3305, %v3470
      %v3631 = vadd.f32 %v3306, %v3471
      %v3632 = vadd.f32 %v3307, %v3472
      %v3633 = vadd.f32 %v3308, %v3473
      %v3634 = vadd.f32 %v3309, %v3474
      %v3635 = vadd.f32 %v3310, %v3475
      %v3636 = vadd.f32 %v3311, %v3476
      %v3637 = vadd.f32 %v3312, %v3477
      %v3638 = vadd.f32 %v3313, %v3478
      %v3639 = vadd.f32 %v3314, %v3479
      %v3640 = vadd.f32 %v3315, %v3480
      %v3641 = vadd.f32 %v3316, %v3481
      %v3642 = vadd.f32 %v3317, %v3482
      %v3643 = vadd.f32 %v3318, %v3483
      %v3644 = vadd.f32 %v3319, %v3484
      %v3645 = vadd.f32 %v3320, %v3485
      %v3646 = vadd.f32 %v3321, %v3486
      %v3647 = vadd.f32 %v3322, %v3487
      %v3648 = vadd.f32 %v3323, %v3488
      %v3649 = vadd.f32 %v3324, %v3489
      %v3650 = vadd.f32 %v3325, %v3490
      %v3651 = vadd.f32 %v3326, %v3491
      %v3652 = vadd.f32 %v3327, %v3492
      %v3653 = vadd.f32 %v3328, %v3493
      %v3654 = vadd.f32 %v3329, %v3494
      %v3655 = vadd.f32 %v3330, %v3495
      %v3656 = vadd.f32 %v3331, %v3496
      %v3657 = vadd.f32 %v3332, %v3497
      %v3658 = vadd.f32 %v3333, %v3498
      %v3659 = vadd.f32 %v3334, %v3499
      %v3660 = vadd.f32 %v3335, %v3500
      %v3661 = vadd.f32 %v3336, %v3501
      %v3662 = vadd.f32 %v3337, %v3502
      %v3663 = vadd.f32 %v3338, %v3503
      %v3664 = vadd.f32 %v3339, %v3504
      %v3665 = vadd.f32 %v3340, %v3505
      %v3666 = vadd.f32 %v3341, %v3506
      %v3667 = vadd.f32 %v3342, %v3507
      %v3668 = vadd.f32 %v3343, %v3508
      %v3669 = vadd.f32 %v3344, %v3509
      %v3670 = vadd.f32 %v3345, %v3510
      %v3671 = vadd.f32 %v3346, %v3511
      %v3672 = vadd.f32 %v3347, %v3512
      %v3673 = vadd.f32 %v3348, %v3513
      %v3674 = vadd.f32 %v3349, %v3514
      %v3675 = vadd.f32 %v3350, %v3515
      %v3676 = vadd.f32 %v3351, %v3516
      %v3677 = vadd.f32 %v3352, %v3517
      %v3678 = vadd.f32 %v3353, %v3518
      %v3679 = vadd.f32 %v3354, %v3519
      %v3680 = vadd.f32 %v3355, %v3520
      %v3681 = vadd.f32 %v3356, %v3521
      %v3682 = vadd.f32 %v3357, %v3522
      %v3683 = vadd.f32 %v3358, %v3523
      %v3684 = vadd.f32 %v3359, %v3524
      %v3685 = vadd.f32 %v3360, %v3525
      %v3686 = vadd.f32 %v3361, %v3526
      %v3687 = vadd.f32 %v3362, %v3527
      %v3688 = vadd.f32 %v3363, %v3528
      %v3689 = vadd.f32 %v3364, %v3529
      %v3690 = vadd.f32 %v3365, %v3530
      %v3691 = vadd.f32 %v3366, %v3531
      %v3692 = vadd.f32 %v3367, %v3532
      %v3693 = vadd.f32 %v3368, %v3533
      %v3694 = vadd.f32 %v3369, %v3534
      %v3695 = vadd.f32 %v3370, %v3535
      %v3696 = vadd.f32 %v3371, %v3536
      %v3697 = vadd.f32 %v3372, %v3537
      %v3698 = vadd.f32 %v3373, %v3538
      %v3699 = vadd.f32 %v3374, %v3539
      %v3700 = vadd.f32 %v3375, %v3540
      %v3701 = vadd.f32 %v3376, %v3541
      %v3702 = vadd.f32 %v3377, %v3542
      %v3703 = vadd.f32 %v3378, %v3543
      %v3704 = vadd.f32 %v3379, %v3544
      %v3705 = vadd.f32 %v3380, %v3545
      %v3706 = vadd.f32 %v3381, %v3546
      %v3707 = vadd.f32 %v3382, %v3547
      %v3708 = vadd.f32 %v3383, %v3548
      %v3709 = vadd.f32 %v3384, %v3549
      %v3710 = vadd.f32 %v3385, %v3550
      %v3711 = vadd.f32 %v3386, %v3551
      %v3712 = vadd.f32 %v3387, %v3552
      %v3713 = vadd.f32 %v3388, %v3553
      %v3714 = vadd.f32 %v3389, %v3554
      %v3715 = vadd.f32 %v3390, %v3555
      %v3716 = vadd.f32 %v3391, %v3556
      %v3717 = vadd.f32 %v3392, %v3557
      %v3718 = vadd.f32 %v3393, %v3558
      %v3719 = vadd.f32 %v3394, %v3559
      %v3720 = vadd.f32 %v3395, %v3560
      %v3721 = vadd.f32 %v3396, %v3561
      %v3722 = vadd.f32 %v3397, %v3562
      %v3723 = vadd.f32 %v3398, %v3563
      %v3724 = vadd.f32 %v3399, %v3564
      %v3725 = vadd.f32 %v3400, %v3565
      %v3726 = vadd.f32 %v3401, %v3566
      %v3727 = vadd.f32 %v3402, %v3567
      %v3728 = vadd.f32 %v3403, %v3568
      %v3729 = vadd.f32 %v3404, %v3569
      %v3730 = vadd.f32 %v3405, %v3570
      %v3731 = vadd.f32 %v3406, %v3571
      %v3732 = vadd.f32 %v3407, %v3572
      %v3733 = vadd.f32 %v3408, %v3573
      %v3734 = vadd.f32 %v3409, %v3574
      %v3735 = vadd.f32 %v3410, %v3575
      %v3736 = vadd.f32 %v3411, %v3576
      %v3737 = vadd.f32 %v3412, %v3577
      %v3738 = vadd.f32 %v3413, %v3578
      %v3739 = vadd.f32 %v3414, %v3579
      %v3740 = vadd.f32 %v3415, %v3580
      %v3741 = vadd.f32 %v3416, %v3581
      %v3742 = vadd.f32 %v3417, %v3582
      %v3743 = vadd.f32 %v3418, %v3583
      %v3744 = vadd.f32 %v3419, %v3584
      %v3745 = vadd.f32 %v3420, %v3585
      %v3746 = vadd.f32 %v3421, %v3586
      %v3747 = vadd.f32 %v3422, %v3587
      %v3748 = vadd.f32 %v3423, %v3588
      %v3749 = vadd.f32 %v3424, %v3589
      %v3750 = vadd.f32 %v3425, %v3590
      %v3751 = vadd.f32 %v3426, %v3591
      %v3752 = vadd.f32 %v3427, %v3592
      %v3753 = vld [vmem:[%s2 + $0x7] sm:$0x1]
      %v3754 = vlaneseq
      %v3755 = vshrl.u32 %v3754, 7
      %v3756 = vsub.s32 0, %v3755
      %v3757 = vrot.slane %v3753, %v3756
      %v3758 = vmul.f32 %v3757, %v2448
      %v3759 = vmul.f32 %v3757, %v2449
      %v3760 = vmul.f32 %v3757, %v2450
      %v3761 = vmul.f32 %v3757, %v2451
      %v3762 = vmul.f32 %v3757, %v2452
      %v3763 = vmul.f32 %v3757, %v2453
      %v3764 = vmul.f32 %v3757, %v2454
      %v3765 = vmul.f32 %v3757, %v2455
      %v3766 = vmul.f32 %v3757, %v2456
      %v3767 = vmul.f32 %v3757, %v2457
      %v3768 = vmul.f32 %v3757, %v2458
      %v3769 = vmul.f32 %v3757, %v2459
      %v3770 = vmul.f32 %v3757, %v2460
      %v3771 = vmul.f32 %v3757, %v2461
      %v3772 = vmul.f32 %v3757, %v2462
      %v3773 = vmul.f32 %v3757, %v2463
      %v3774 = vmul.f32 %v3757, %v2464
      %v3775 = vmul.f32 %v3757, %v2465
      %v3776 = vmul.f32 %v3757, %v2466
      %v3777 = vmul.f32 %v3757, %v2467
      %v3778 = vmul.f32 %v3757, %v2468
      %v3779 = vmul.f32 %v3757, %v2469
      %v3780 = vmul.f32 %v3757, %v2470
      %v3781 = vmul.f32 %v3757, %v2471
      %v3782 = vmul.f32 %v3757, %v2472
      %v3783 = vmul.f32 %v3757, %v2473
      %v3784 = vmul.f32 %v3757, %v2474
      %v3785 = vmul.f32 %v3757, %v2475
      %v3786 = vmul.f32 %v3757, %v2476
      %v3787 = vmul.f32 %v3757, %v2477
      %v3788 = vmul.f32 %v3757, %v2478
      %v3789 = vmul.f32 %v3757, %v2479
      %v3790 = vmul.f32 %v3757, %v2480
      %v3791 = vmul.f32 %v3757, %v2481
      %v3792 = vmul.f32 %v3757, %v2482
      %v3793 = vmul.f32 %v3757, %v2483
      %v3794 = vmul.f32 %v3757, %v2484
      %v3795 = vmul.f32 %v3757, %v2485
      %v3796 = vmul.f32 %v3757, %v2486
      %v3797 = vmul.f32 %v3757, %v2487
      %v3798 = vmul.f32 %v3757, %v2488
      %v3799 = vmul.f32 %v3757, %v2489
      %v3800 = vmul.f32 %v3757, %v2490
      %v3801 = vmul.f32 %v3757, %v2491
      %v3802 = vmul.f32 %v3757, %v2492
      %v3803 = vmul.f32 %v3757, %v2493
      %v3804 = vmul.f32 %v3757, %v2494
      %v3805 = vmul.f32 %v3757, %v2495
      %v3806 = vmul.f32 %v3757, %v2496
      %v3807 = vmul.f32 %v3757, %v2497
      %v3808 = vmul.f32 %v3757, %v2498
      %v3809 = vmul.f32 %v3757, %v2499
      %v3810 = vmul.f32 %v3757, %v2500
      %v3811 = vmul.f32 %v3757, %v2501
      %v3812 = vmul.f32 %v3757, %v2502
      %v3813 = vmul.f32 %v3757, %v2503
      %v3814 = vmul.f32 %v3757, %v2504
      %v3815 = vmul.f32 %v3757, %v2505
      %v3816 = vmul.f32 %v3757, %v2506
      %v3817 = vmul.f32 %v3757, %v2507
      %v3818 = vmul.f32 %v3757, %v2508
      %v3819 = vmul.f32 %v3757, %v2509
      %v3820 = vmul.f32 %v3757, %v2510
      %v3821 = vmul.f32 %v3757, %v2511
      %v3822 = vmul.f32 %v3757, %v2512
      %v3823 = vmul.f32 %v3757, %v2513
      %v3824 = vmul.f32 %v3757, %v2514
      %v3825 = vmul.f32 %v3757, %v2515
      %v3826 = vmul.f32 %v3757, %v2516
      %v3827 = vmul.f32 %v3757, %v2517
      %v3828 = vmul.f32 %v3757, %v2518
      %v3829 = vmul.f32 %v3757, %v2519
      %v3830 = vmul.f32 %v3757, %v2520
      %v3831 = vmul.f32 %v3757, %v2521
      %v3832 = vmul.f32 %v3757, %v2522
      %v3833 = vmul.f32 %v3757, %v2523
      %v3834 = vmul.f32 %v3757, %v2524
      %v3835 = vmul.f32 %v3757, %v2525
      %v3836 = vmul.f32 %v3757, %v2526
      %v3837 = vmul.f32 %v3757, %v2527
      %v3838 = vmul.f32 %v3757, %v2528
      %v3839 = vmul.f32 %v3757, %v2529
      %v3840 = vmul.f32 %v3757, %v2530
      %v3841 = vmul.f32 %v3757, %v2531
      %v3842 = vmul.f32 %v3757, %v2532
      %v3843 = vmul.f32 %v3757, %v2533
      %v3844 = vmul.f32 %v3757, %v2534
      %v3845 = vmul.f32 %v3757, %v2535
      %v3846 = vmul.f32 %v3757, %v2536
      %v3847 = vmul.f32 %v3757, %v2537
      %v3848 = vmul.f32 %v3757, %v2538
      %v3849 = vmul.f32 %v3757, %v2539
      %v3850 = vmul.f32 %v3757, %v2540
      %v3851 = vmul.f32 %v3757, %v2541
      %v3852 = vmul.f32 %v3757, %v2542
      %v3853 = vmul.f32 %v3757, %v2543
      %v3854 = vmul.f32 %v3757, %v2544
      %v3855 = vmul.f32 %v3757, %v2545
      %v3856 = vmul.f32 %v3757, %v2546
      %v3857 = vmul.f32 %v3757, %v2547
      %v3858 = vmul.f32 %v3757, %v2548
      %v3859 = vmul.f32 %v3757, %v2549
      %v3860 = vmul.f32 %v3757, %v2550
      %v3861 = vmul.f32 %v3757, %v2551
      %v3862 = vmul.f32 %v3757, %v2552
      %v3863 = vmul.f32 %v3757, %v2553
      %v3864 = vmul.f32 %v3757, %v2554
      %v3865 = vmul.f32 %v3757, %v2555
      %v3866 = vmul.f32 %v3757, %v2556
      %v3867 = vmul.f32 %v3757, %v2557
      %v3868 = vmul.f32 %v3757, %v2558
      %v3869 = vmul.f32 %v3757, %v2559
      %v3870 = vmul.f32 %v3757, %v2560
      %v3871 = vmul.f32 %v3757, %v2561
      %v3872 = vmul.f32 %v3757, %v2562
      %v3873 = vmul.f32 %v3757, %v2563
      %v3874 = vmul.f32 %v3757, %v2564
      %v3875 = vmul.f32 %v3757, %v2565
      %v3876 = vmul.f32 %v3757, %v2566
      %v3877 = vmul.f32 %v3757, %v2567
      %v3878 = vmul.f32 %v3757, %v2568
      %v3879 = vmul.f32 %v3757, %v2569
      %v3880 = vmul.f32 %v3757, %v2570
      %v3881 = vmul.f32 %v3757, %v2571
      %v3882 = vmul.f32 %v3757, %v2572
      %v3883 = vmul.f32 %v3757, %v2573
      %v3884 = vmul.f32 %v3757, %v2574
      %v3885 = vmul.f32 %v3757, %v2575
      %v3886 = vmul.f32 %v3757, %v2576
      %v3887 = vmul.f32 %v3757, %v2577
      %v3888 = vmul.f32 %v3757, %v2578
      %v3889 = vmul.f32 %v3757, %v2579
      %v3890 = vmul.f32 %v3757, %v2580
      %v3891 = vmul.f32 %v3757, %v2581
      %v3892 = vmul.f32 %v3757, %v2582
      %v3893 = vmul.f32 %v3757, %v2583
      %v3894 = vmul.f32 %v3757, %v2584
      %v3895 = vmul.f32 %v3757, %v2585
      %v3896 = vmul.f32 %v3757, %v2586
      %v3897 = vmul.f32 %v3757, %v2587
      %v3898 = vmul.f32 %v3757, %v2588
      %v3899 = vmul.f32 %v3757, %v2589
      %v3900 = vmul.f32 %v3757, %v2590
      %v3901 = vmul.f32 %v3757, %v2591
      %v3902 = vmul.f32 %v3757, %v2592
      %v3903 = vmul.f32 %v3757, %v2593
      %v3904 = vmul.f32 %v3757, %v2594
      %v3905 = vmul.f32 %v3757, %v2595
      %v3906 = vmul.f32 %v3757, %v2596
      %v3907 = vmul.f32 %v3757, %v2597
      %v3908 = vmul.f32 %v3757, %v2598
      %v3909 = vmul.f32 %v3757, %v2599
      %v3910 = vmul.f32 %v3757, %v2600
      %v3911 = vmul.f32 %v3757, %v2601
      %v3912 = vmul.f32 %v3757, %v2602
      %v3913 = vmul.f32 %v3757, %v2603
      %v3914 = vmul.f32 %v3757, %v2604
      %v3915 = vmul.f32 %v3757, %v2605
      %v3916 = vmul.f32 %v3757, %v2606
      %v3917 = vmul.f32 %v3757, %v2607
      %v3918 = vadd.f32 %v3593, %v3758
      %v3919 = vadd.f32 %v3594, %v3759
      %v3920 = vadd.f32 %v3595, %v3760
      %v3921 = vadd.f32 %v3596, %v3761
      %v3922 = vadd.f32 %v3597, %v3762
      %v3923 = vadd.f32 %v3598, %v3763
      %v3924 = vadd.f32 %v3599, %v3764
      %v3925 = vadd.f32 %v3600, %v3765
      %v3926 = vadd.f32 %v3601, %v3766
      %v3927 = vadd.f32 %v3602, %v3767
      %v3928 = vadd.f32 %v3603, %v3768
      %v3929 = vadd.f32 %v3604, %v3769
      %v3930 = vadd.f32 %v3605, %v3770
      %v3931 = vadd.f32 %v3606, %v3771
      %v3932 = vadd.f32 %v3607, %v3772
      %v3933 = vadd.f32 %v3608, %v3773
      %v3934 = vadd.f32 %v3609, %v3774
      %v3935 = vadd.f32 %v3610, %v3775
      %v3936 = vadd.f32 %v3611, %v3776
      %v3937 = vadd.f32 %v3612, %v3777
      %v3938 = vadd.f32 %v3613, %v3778
      %v3939 = vadd.f32 %v3614, %v3779
      %v3940 = vadd.f32 %v3615, %v3780
      %v3941 = vadd.f32 %v3616, %v3781
      %v3942 = vadd.f32 %v3617, %v3782
      %v3943 = vadd.f32 %v3618, %v3783
      %v3944 = vadd.f32 %v3619, %v3784
      %v3945 = vadd.f32 %v3620, %v3785
      %v3946 = vadd.f32 %v3621, %v3786
      %v3947 = vadd.f32 %v3622, %v3787
      %v3948 = vadd.f32 %v3623, %v3788
      %v3949 = vadd.f32 %v3624, %v3789
      %v3950 = vadd.f32 %v3625, %v3790
      %v3951 = vadd.f32 %v3626, %v3791
      %v3952 = vadd.f32 %v3627, %v3792
      %v3953 = vadd.f32 %v3628, %v3793
      %v3954 = vadd.f32 %v3629, %v3794
      %v3955 = vadd.f32 %v3630, %v3795
      %v3956 = vadd.f32 %v3631, %v3796
      %v3957 = vadd.f32 %v3632, %v3797
      %v3958 = vadd.f32 %v3633, %v3798
      %v3959 = vadd.f32 %v3634, %v3799
      %v3960 = vadd.f32 %v3635, %v3800
      %v3961 = vadd.f32 %v3636, %v3801
      %v3962 = vadd.f32 %v3637, %v3802
      %v3963 = vadd.f32 %v3638, %v3803
      %v3964 = vadd.f32 %v3639, %v3804
      %v3965 = vadd.f32 %v3640, %v3805
      %v3966 = vadd.f32 %v3641, %v3806
      %v3967 = vadd.f32 %v3642, %v3807
      %v3968 = vadd.f32 %v3643, %v3808
      %v3969 = vadd.f32 %v3644, %v3809
      %v3970 = vadd.f32 %v3645, %v3810
      %v3971 = vadd.f32 %v3646, %v3811
      %v3972 = vadd.f32 %v3647, %v3812
      %v3973 = vadd.f32 %v3648, %v3813
      %v3974 = vadd.f32 %v3649, %v3814
      %v3975 = vadd.f32 %v3650, %v3815
      %v3976 = vadd.f32 %v3651, %v3816
      %v3977 = vadd.f32 %v3652, %v3817
      %v3978 = vadd.f32 %v3653, %v3818
      %v3979 = vadd.f32 %v3654, %v3819
      %v3980 = vadd.f32 %v3655, %v3820
      %v3981 = vadd.f32 %v3656, %v3821
      %v3982 = vadd.f32 %v3657, %v3822
      %v3983 = vadd.f32 %v3658, %v3823
      %v3984 = vadd.f32 %v3659, %v3824
      %v3985 = vadd.f32 %v3660, %v3825
      %v3986 = vadd.f32 %v3661, %v3826
      %v3987 = vadd.f32 %v3662, %v3827
      %v3988 = vadd.f32 %v3663, %v3828
      %v3989 = vadd.f32 %v3664, %v3829
      %v3990 = vadd.f32 %v3665, %v3830
      %v3991 = vadd.f32 %v3666, %v3831
      %v3992 = vadd.f32 %v3667, %v3832
      %v3993 = vadd.f32 %v3668, %v3833
      %v3994 = vadd.f32 %v3669, %v3834
      %v3995 = vadd.f32 %v3670, %v3835
      %v3996 = vadd.f32 %v3671, %v3836
      %v3997 = vadd.f32 %v3672, %v3837
      %v3998 = vadd.f32 %v3673, %v3838
      %v3999 = vadd.f32 %v3674, %v3839
      %v4000 = vadd.f32 %v3675, %v3840
      %v4001 = vadd.f32 %v3676, %v3841
      %v4002 = vadd.f32 %v3677, %v3842
      %v4003 = vadd.f32 %v3678, %v3843
      %v4004 = vadd.f32 %v3679, %v3844
      %v4005 = vadd.f32 %v3680, %v3845
      %v4006 = vadd.f32 %v3681, %v3846
      %v4007 = vadd.f32 %v3682, %v3847
      %v4008 = vadd.f32 %v3683, %v3848
      %v4009 = vadd.f32 %v3684, %v3849
      %v4010 = vadd.f32 %v3685, %v3850
      %v4011 = vadd.f32 %v3686, %v3851
      %v4012 = vadd.f32 %v3687, %v3852
      %v4013 = vadd.f32 %v3688, %v3853
      %v4014 = vadd.f32 %v3689, %v3854
      %v4015 = vadd.f32 %v3690, %v3855
      %v4016 = vadd.f32 %v3691, %v3856
      %v4017 = vadd.f32 %v3692, %v3857
      %v4018 = vadd.f32 %v3693, %v3858
      %v4019 = vadd.f32 %v3694, %v3859
      %v4020 = vadd.f32 %v3695, %v3860
      %v4021 = vadd.f32 %v3696, %v3861
      %v4022 = vadd.f32 %v3697, %v3862
      %v4023 = vadd.f32 %v3698, %v3863
      %v4024 = vadd.f32 %v3699, %v3864
      %v4025 = vadd.f32 %v3700, %v3865
      %v4026 = vadd.f32 %v3701, %v3866
      %v4027 = vadd.f32 %v3702, %v3867
      %v4028 = vadd.f32 %v3703, %v3868
      %v4029 = vadd.f32 %v3704, %v3869
      %v4030 = vadd.f32 %v3705, %v3870
      %v4031 = vadd.f32 %v3706, %v3871
      %v4032 = vadd.f32 %v3707, %v3872
      %v4033 = vadd.f32 %v3708, %v3873
      %v4034 = vadd.f32 %v3709, %v3874
      %v4035 = vadd.f32 %v3710, %v3875
      %v4036 = vadd.f32 %v3711, %v3876
      %v4037 = vadd.f32 %v3712, %v3877
      %v4038 = vadd.f32 %v3713, %v3878
      %v4039 = vadd.f32 %v3714, %v3879
      %v4040 = vadd.f32 %v3715, %v3880
      %v4041 = vadd.f32 %v3716, %v3881
      %v4042 = vadd.f32 %v3717, %v3882
      %v4043 = vadd.f32 %v3718, %v3883
      %v4044 = vadd.f32 %v3719, %v3884
      %v4045 = vadd.f32 %v3720, %v3885
      %v4046 = vadd.f32 %v3721, %v3886
      %v4047 = vadd.f32 %v3722, %v3887
      %v4048 = vadd.f32 %v3723, %v3888
      %v4049 = vadd.f32 %v3724, %v3889
      %v4050 = vadd.f32 %v3725, %v3890
      %v4051 = vadd.f32 %v3726, %v3891
      %v4052 = vadd.f32 %v3727, %v3892
      %v4053 = vadd.f32 %v3728, %v3893
      %v4054 = vadd.f32 %v3729, %v3894
      %v4055 = vadd.f32 %v3730, %v3895
      %v4056 = vadd.f32 %v3731, %v3896
      %v4057 = vadd.f32 %v3732, %v3897
      %v4058 = vadd.f32 %v3733, %v3898
      %v4059 = vadd.f32 %v3734, %v3899
      %v4060 = vadd.f32 %v3735, %v3900
      %v4061 = vadd.f32 %v3736, %v3901
      %v4062 = vadd.f32 %v3737, %v3902
      %v4063 = vadd.f32 %v3738, %v3903
      %v4064 = vadd.f32 %v3739, %v3904
      %v4065 = vadd.f32 %v3740, %v3905
      %v4066 = vadd.f32 %v3741, %v3906
      %v4067 = vadd.f32 %v3742, %v3907
      %v4068 = vadd.f32 %v3743, %v3908
      %v4069 = vadd.f32 %v3744, %v3909
      %v4070 = vadd.f32 %v3745, %v3910
      %v4071 = vadd.f32 %v3746, %v3911
      %v4072 = vadd.f32 %v3747, %v3912
      %v4073 = vadd.f32 %v3748, %v3913
      %v4074 = vadd.f32 %v3749, %v3914
      %v4075 = vadd.f32 %v3750, %v3915
      %v4076 = vadd.f32 %v3751, %v3916
      %v4077 = vadd.f32 %v3752, %v3917
      %v4238 = vrot.slane %v3918, 1
      %v4239 = vrot.slane %v3919, 1
      %v4240 = vsel %vm558, %v4238, %v4239
      %v4241 = vrot.slane %v3920, 1
      %v4242 = vsel %vm558, %v4239, %v4241
      %v4243 = vrot.slane %v3921, 1
      %v4244 = vsel %vm558, %v4241, %v4243
      %v4245 = vrot.slane %v3922, 1
      %v4246 = vsel %vm558, %v4243, %v4245
      %v4247 = vrot.slane %v3923, 1
      %v4248 = vrot.slane %v3924, 1
      %v4249 = vsel %vm558, %v4247, %v4248
      %v4250 = vrot.slane %v3925, 1
      %v4251 = vsel %vm558, %v4248, %v4250
      %v4252 = vrot.slane %v3926, 1
      %v4253 = vsel %vm558, %v4250, %v4252
      %v4254 = vrot.slane %v3927, 1
      %v4255 = vsel %vm558, %v4252, %v4254
      %v4256 = vrot.slane %v3928, 1
      %v4257 = vrot.slane %v3929, 1
      %v4258 = vsel %vm558, %v4256, %v4257
      %v4259 = vrot.slane %v3930, 1
      %v4260 = vsel %vm558, %v4257, %v4259
      %v4261 = vrot.slane %v3931, 1
      %v4262 = vsel %vm558, %v4259, %v4261
      %v4263 = vrot.slane %v3932, 1
      %v4264 = vsel %vm558, %v4261, %v4263
      %v4265 = vrot.slane %v3933, 1
      %v4266 = vrot.slane %v3934, 1
      %v4267 = vsel %vm558, %v4265, %v4266
      %v4268 = vrot.slane %v3935, 1
      %v4269 = vsel %vm558, %v4266, %v4268
      %v4270 = vrot.slane %v3936, 1
      %v4271 = vsel %vm558, %v4268, %v4270
      %v4272 = vrot.slane %v3937, 1
      %v4273 = vsel %vm558, %v4270, %v4272
      %v4274 = vrot.slane %v3938, 1
      %v4275 = vrot.slane %v3939, 1
      %v4276 = vsel %vm558, %v4274, %v4275
      %v4277 = vrot.slane %v3940, 1
      %v4278 = vsel %vm558, %v4275, %v4277
      %v4279 = vrot.slane %v3941, 1
      %v4280 = vsel %vm558, %v4277, %v4279
      %v4281 = vrot.slane %v3942, 1
      %v4282 = vsel %vm558, %v4279, %v4281
      %v4283 = vrot.slane %v3943, 1
      %v4284 = vrot.slane %v3944, 1
      %v4285 = vsel %vm558, %v4283, %v4284
      %v4286 = vrot.slane %v3945, 1
      %v4287 = vsel %vm558, %v4284, %v4286
      %v4288 = vrot.slane %v3946, 1
      %v4289 = vsel %vm558, %v4286, %v4288
      %v4290 = vrot.slane %v3947, 1
      %v4291 = vsel %vm558, %v4288, %v4290
      %v4292 = vrot.slane %v3948, 1
      %v4293 = vrot.slane %v3949, 1
      %v4294 = vsel %vm558, %v4292, %v4293
      %v4295 = vrot.slane %v3950, 1
      %v4296 = vsel %vm558, %v4293, %v4295
      %v4297 = vrot.slane %v3951, 1
      %v4298 = vsel %vm558, %v4295, %v4297
      %v4299 = vrot.slane %v3952, 1
      %v4300 = vsel %vm558, %v4297, %v4299
      %v4301 = vrot.slane %v3953, 1
      %v4302 = vrot.slane %v3954, 1
      %v4303 = vsel %vm558, %v4301, %v4302
      %v4304 = vrot.slane %v3955, 1
      %v4305 = vsel %vm558, %v4302, %v4304
      %v4306 = vrot.slane %v3956, 1
      %v4307 = vsel %vm558, %v4304, %v4306
      %v4308 = vrot.slane %v3957, 1
      %v4309 = vsel %vm558, %v4306, %v4308
      %v4310 = vrot.slane %v3958, 1
      %v4311 = vrot.slane %v3959, 1
      %v4312 = vsel %vm558, %v4310, %v4311
      %v4313 = vrot.slane %v3960, 1
      %v4314 = vsel %vm558, %v4311, %v4313
      %v4315 = vrot.slane %v3961, 1
      %v4316 = vsel %vm558, %v4313, %v4315
      %v4317 = vrot.slane %v3962, 1
      %v4318 = vsel %vm558, %v4315, %v4317
      %v4319 = vrot.slane %v3963, 1
      %v4320 = vrot.slane %v3964, 1
      %v4321 = vsel %vm558, %v4319, %v4320
      %v4322 = vrot.slane %v3965, 1
      %v4323 = vsel %vm558, %v4320, %v4322
      %v4324 = vrot.slane %v3966, 1
      %v4325 = vsel %vm558, %v4322, %v4324
      %v4326 = vrot.slane %v3967, 1
      %v4327 = vsel %vm558, %v4324, %v4326
      %v4328 = vrot.slane %v3968, 1
      %v4329 = vrot.slane %v3969, 1
      %v4330 = vsel %vm558, %v4328, %v4329
      %v4331 = vrot.slane %v3970, 1
      %v4332 = vsel %vm558, %v4329, %v4331
      %v4333 = vrot.slane %v3971, 1
      %v4334 = vsel %vm558, %v4331, %v4333
      %v4335 = vrot.slane %v3972, 1
      %v4336 = vsel %vm558, %v4333, %v4335
      %v4337 = vrot.slane %v3973, 1
      %v4338 = vrot.slane %v3974, 1
      %v4339 = vsel %vm558, %v4337, %v4338
      %v4340 = vrot.slane %v3975, 1
      %v4341 = vsel %vm558, %v4338, %v4340
      %v4342 = vrot.slane %v3976, 1
      %v4343 = vsel %vm558, %v4340, %v4342
      %v4344 = vrot.slane %v3977, 1
      %v4345 = vsel %vm558, %v4342, %v4344
      %v4346 = vrot.slane %v3978, 1
      %v4347 = vrot.slane %v3979, 1
      %v4348 = vsel %vm558, %v4346, %v4347
      %v4349 = vrot.slane %v3980, 1
      %v4350 = vsel %vm558, %v4347, %v4349
      %v4351 = vrot.slane %v3981, 1
      %v4352 = vsel %vm558, %v4349, %v4351
      %v4353 = vrot.slane %v3982, 1
      %v4354 = vsel %vm558, %v4351, %v4353
      %v4355 = vrot.slane %v3983, 1
      %v4356 = vrot.slane %v3984, 1
      %v4357 = vsel %vm558, %v4355, %v4356
      %v4358 = vrot.slane %v3985, 1
      %v4359 = vsel %vm558, %v4356, %v4358
      %v4360 = vrot.slane %v3986, 1
      %v4361 = vsel %vm558, %v4358, %v4360
      %v4362 = vrot.slane %v3987, 1
      %v4363 = vsel %vm558, %v4360, %v4362
      %v4364 = vrot.slane %v3988, 1
      %v4365 = vrot.slane %v3989, 1
      %v4366 = vsel %vm558, %v4364, %v4365
      %v4367 = vrot.slane %v3990, 1
      %v4368 = vsel %vm558, %v4365, %v4367
      %v4369 = vrot.slane %v3991, 1
      %v4370 = vsel %vm558, %v4367, %v4369
      %v4371 = vrot.slane %v3992, 1
      %v4372 = vsel %vm558, %v4369, %v4371
      %v4373 = vrot.slane %v3993, 1
      %v4374 = vrot.slane %v3994, 1
      %v4375 = vsel %vm558, %v4373, %v4374
      %v4376 = vrot.slane %v3995, 1
      %v4377 = vsel %vm558, %v4374, %v4376
      %v4378 = vrot.slane %v3996, 1
      %v4379 = vsel %vm558, %v4376, %v4378
      %v4380 = vrot.slane %v3997, 1
      %v4381 = vsel %vm558, %v4378, %v4380
      %v4382 = vrot.slane %v3998, 1
      %v4383 = vrot.slane %v3999, 1
      %v4384 = vsel %vm558, %v4382, %v4383
      %v4385 = vrot.slane %v4000, 1
      %v4386 = vsel %vm558, %v4383, %v4385
      %v4387 = vrot.slane %v4001, 1
      %v4388 = vsel %vm558, %v4385, %v4387
      %v4389 = vrot.slane %v4002, 1
      %v4390 = vsel %vm558, %v4387, %v4389
      %v4391 = vrot.slane %v4003, 1
      %v4392 = vrot.slane %v4004, 1
      %v4393 = vsel %vm558, %v4391, %v4392
      %v4394 = vrot.slane %v4005, 1
      %v4395 = vsel %vm558, %v4392, %v4394
      %v4396 = vrot.slane %v4006, 1
      %v4397 = vsel %vm558, %v4394, %v4396
      %v4398 = vrot.slane %v4007, 1
      %v4399 = vsel %vm558, %v4396, %v4398
      %v4400 = vrot.slane %v4008, 1
      %v4401 = vrot.slane %v4009, 1
      %v4402 = vsel %vm558, %v4400, %v4401
      %v4403 = vrot.slane %v4010, 1
      %v4404 = vsel %vm558, %v4401, %v4403
      %v4405 = vrot.slane %v4011, 1
      %v4406 = vsel %vm558, %v4403, %v4405
      %v4407 = vrot.slane %v4012, 1
      %v4408 = vsel %vm558, %v4405, %v4407
      %v4409 = vrot.slane %v4013, 1
      %v4410 = vrot.slane %v4014, 1
      %v4411 = vsel %vm558, %v4409, %v4410
      %v4412 = vrot.slane %v4015, 1
      %v4413 = vsel %vm558, %v4410, %v4412
      %v4414 = vrot.slane %v4016, 1
      %v4415 = vsel %vm558, %v4412, %v4414
      %v4416 = vrot.slane %v4017, 1
      %v4417 = vsel %vm558, %v4414, %v4416
      %v4418 = vrot.slane %v4018, 1
      %v4419 = vrot.slane %v4019, 1
      %v4420 = vsel %vm558, %v4418, %v4419
      %v4421 = vrot.slane %v4020, 1
      %v4422 = vsel %vm558, %v4419, %v4421
      %v4423 = vrot.slane %v4021, 1
      %v4424 = vsel %vm558, %v4421, %v4423
      %v4425 = vrot.slane %v4022, 1
      %v4426 = vsel %vm558, %v4423, %v4425
      %v4427 = vrot.slane %v4023, 1
      %v4428 = vrot.slane %v4024, 1
      %v4429 = vsel %vm558, %v4427, %v4428
      %v4430 = vrot.slane %v4025, 1
      %v4431 = vsel %vm558, %v4428, %v4430
      %v4432 = vrot.slane %v4026, 1
      %v4433 = vsel %vm558, %v4430, %v4432
      %v4434 = vrot.slane %v4027, 1
      %v4435 = vsel %vm558, %v4432, %v4434
      %v4436 = vrot.slane %v4028, 1
      %v4437 = vrot.slane %v4029, 1
      %v4438 = vsel %vm558, %v4436, %v4437
      %v4439 = vrot.slane %v4030, 1
      %v4440 = vsel %vm558, %v4437, %v4439
      %v4441 = vrot.slane %v4031, 1
      %v4442 = vsel %vm558, %v4439, %v4441
      %v4443 = vrot.slane %v4032, 1
      %v4444 = vsel %vm558, %v4441, %v4443
      %v4445 = vrot.slane %v4033, 1
      %v4446 = vrot.slane %v4034, 1
      %v4447 = vsel %vm558, %v4445, %v4446
      %v4448 = vrot.slane %v4035, 1
      %v4449 = vsel %vm558, %v4446, %v4448
      %v4450 = vrot.slane %v4036, 1
      %v4451 = vsel %vm558, %v4448, %v4450
      %v4452 = vrot.slane %v4037, 1
      %v4453 = vsel %vm558, %v4450, %v4452
      %v4454 = vrot.slane %v4038, 1
      %v4455 = vrot.slane %v4039, 1
      %v4456 = vsel %vm558, %v4454, %v4455
      %v4457 = vrot.slane %v4040, 1
      %v4458 = vsel %vm558, %v4455, %v4457
      %v4459 = vrot.slane %v4041, 1
      %v4460 = vsel %vm558, %v4457, %v4459
      %v4461 = vrot.slane %v4042, 1
      %v4462 = vsel %vm558, %v4459, %v4461
      %v4463 = vrot.slane %v4043, 1
      %v4464 = vrot.slane %v4044, 1
      %v4465 = vsel %vm558, %v4463, %v4464
      %v4466 = vrot.slane %v4045, 1
      %v4467 = vsel %vm558, %v4464, %v4466
      %v4468 = vrot.slane %v4046, 1
      %v4469 = vsel %vm558, %v4466, %v4468
      %v4470 = vrot.slane %v4047, 1
      %v4471 = vsel %vm558, %v4468, %v4470
      %v4472 = vrot.slane %v4048, 1
      %v4473 = vrot.slane %v4049, 1
      %v4474 = vsel %vm558, %v4472, %v4473
      %v4475 = vrot.slane %v4050, 1
      %v4476 = vsel %vm558, %v4473, %v4475
      %v4477 = vrot.slane %v4051, 1
      %v4478 = vsel %vm558, %v4475, %v4477
      %v4479 = vrot.slane %v4052, 1
      %v4480 = vsel %vm558, %v4477, %v4479
      %v4481 = vrot.slane %v4053, 1
      %v4482 = vrot.slane %v4054, 1
      %v4483 = vsel %vm558, %v4481, %v4482
      %v4484 = vrot.slane %v4055, 1
      %v4485 = vsel %vm558, %v4482, %v4484
      %v4486 = vrot.slane %v4056, 1
      %v4487 = vsel %vm558, %v4484, %v4486
      %v4488 = vrot.slane %v4057, 1
      %v4489 = vsel %vm558, %v4486, %v4488
      %v4490 = vrot.slane %v4058, 1
      %v4491 = vrot.slane %v4059, 1
      %v4492 = vsel %vm558, %v4490, %v4491
      %v4493 = vrot.slane %v4060, 1
      %v4494 = vsel %vm558, %v4491, %v4493
      %v4495 = vrot.slane %v4061, 1
      %v4496 = vsel %vm558, %v4493, %v4495
      %v4497 = vrot.slane %v4062, 1
      %v4498 = vsel %vm558, %v4495, %v4497
      %v4499 = vrot.slane %v4063, 1
      %v4500 = vrot.slane %v4064, 1
      %v4501 = vsel %vm558, %v4499, %v4500
      %v4502 = vrot.slane %v4065, 1
      %v4503 = vsel %vm558, %v4500, %v4502
      %v4504 = vrot.slane %v4066, 1
      %v4505 = vsel %vm558, %v4502, %v4504
      %v4506 = vrot.slane %v4067, 1
      %v4507 = vsel %vm558, %v4504, %v4506
      %v4508 = vrot.slane %v4068, 1
      %v4509 = vrot.slane %v4069, 1
      %v4510 = vsel %vm558, %v4508, %v4509
      %v4511 = vrot.slane %v4070, 1
      %v4512 = vsel %vm558, %v4509, %v4511
      %v4513 = vrot.slane %v4071, 1
      %v4514 = vsel %vm558, %v4511, %v4513
      %v4515 = vrot.slane %v4072, 1
      %v4516 = vsel %vm558, %v4513, %v4515
      %v4517 = vrot.slane %v4073, 1
      %v4518 = vrot.slane %v4074, 1
      %v4519 = vsel %vm558, %v4517, %v4518
      %v4520 = vrot.slane %v4075, 1
      %v4521 = vsel %vm558, %v4518, %v4520
      %v4522 = vrot.slane %v4076, 1
      %v4523 = vsel %vm558, %v4520, %v4522
      %v4524 = vrot.slane %v4077, 1
      %v4525 = vsel %vm558, %v4522, %v4524
      %v4654 = vadd.f32 %v3135, %v4240
      %v4655 = vadd.f32 %v3136, %v4242
      %v4656 = vadd.f32 %v3137, %v4244
      %v4657 = vadd.f32 %v3138, %v4246
      %v4658 = vadd.f32 %v3139, %v4249
      %v4659 = vadd.f32 %v3140, %v4251
      %v4660 = vadd.f32 %v3141, %v4253
      %v4661 = vadd.f32 %v3142, %v4255
      %v4662 = vadd.f32 %v3143, %v4258
      %v4663 = vadd.f32 %v3144, %v4260
      %v4664 = vadd.f32 %v3145, %v4262
      %v4665 = vadd.f32 %v3146, %v4264
      %v4666 = vadd.f32 %v3147, %v4267
      %v4667 = vadd.f32 %v3148, %v4269
      %v4668 = vadd.f32 %v3149, %v4271
      %v4669 = vadd.f32 %v3150, %v4273
      %v4670 = vadd.f32 %v3151, %v4276
      %v4671 = vadd.f32 %v3152, %v4278
      %v4672 = vadd.f32 %v3153, %v4280
      %v4673 = vadd.f32 %v3154, %v4282
      %v4674 = vadd.f32 %v3155, %v4285
      %v4675 = vadd.f32 %v3156, %v4287
      %v4676 = vadd.f32 %v3157, %v4289
      %v4677 = vadd.f32 %v3158, %v4291
      %v4678 = vadd.f32 %v3159, %v4294
      %v4679 = vadd.f32 %v3160, %v4296
      %v4680 = vadd.f32 %v3161, %v4298
      %v4681 = vadd.f32 %v3162, %v4300
      %v4682 = vadd.f32 %v3163, %v4303
      %v4683 = vadd.f32 %v3164, %v4305
      %v4684 = vadd.f32 %v3165, %v4307
      %v4685 = vadd.f32 %v3166, %v4309
      %v4686 = vadd.f32 %v3167, %v4312
      %v4687 = vadd.f32 %v3168, %v4314
      %v4688 = vadd.f32 %v3169, %v4316
      %v4689 = vadd.f32 %v3170, %v4318
      %v4690 = vadd.f32 %v3171, %v4321
      %v4691 = vadd.f32 %v3172, %v4323
      %v4692 = vadd.f32 %v3173, %v4325
      %v4693 = vadd.f32 %v3174, %v4327
      %v4694 = vadd.f32 %v3175, %v4330
      %v4695 = vadd.f32 %v3176, %v4332
      %v4696 = vadd.f32 %v3177, %v4334
      %v4697 = vadd.f32 %v3178, %v4336
      %v4698 = vadd.f32 %v3179, %v4339
      %v4699 = vadd.f32 %v3180, %v4341
      %v4700 = vadd.f32 %v3181, %v4343
      %v4701 = vadd.f32 %v3182, %v4345
      %v4702 = vadd.f32 %v3183, %v4348
      %v4703 = vadd.f32 %v3184, %v4350
      %v4704 = vadd.f32 %v3185, %v4352
      %v4705 = vadd.f32 %v3186, %v4354
      %v4706 = vadd.f32 %v3187, %v4357
      %v4707 = vadd.f32 %v3188, %v4359
      %v4708 = vadd.f32 %v3189, %v4361
      %v4709 = vadd.f32 %v3190, %v4363
      %v4710 = vadd.f32 %v3191, %v4366
      %v4711 = vadd.f32 %v3192, %v4368
      %v4712 = vadd.f32 %v3193, %v4370
      %v4713 = vadd.f32 %v3194, %v4372
      %v4714 = vadd.f32 %v3195, %v4375
      %v4715 = vadd.f32 %v3196, %v4377
      %v4716 = vadd.f32 %v3197, %v4379
      %v4717 = vadd.f32 %v3198, %v4381
      %v4718 = vadd.f32 %v3199, %v4384
      %v4719 = vadd.f32 %v3200, %v4386
      %v4720 = vadd.f32 %v3201, %v4388
      %v4721 = vadd.f32 %v3202, %v4390
      %v4722 = vadd.f32 %v3203, %v4393
      %v4723 = vadd.f32 %v3204, %v4395
      %v4724 = vadd.f32 %v3205, %v4397
      %v4725 = vadd.f32 %v3206, %v4399
      %v4726 = vadd.f32 %v3207, %v4402
      %v4727 = vadd.f32 %v3208, %v4404
      %v4728 = vadd.f32 %v3209, %v4406
      %v4729 = vadd.f32 %v3210, %v4408
      %v4730 = vadd.f32 %v3211, %v4411
      %v4731 = vadd.f32 %v3212, %v4413
      %v4732 = vadd.f32 %v3213, %v4415
      %v4733 = vadd.f32 %v3214, %v4417
      %v4734 = vadd.f32 %v3215, %v4420
      %v4735 = vadd.f32 %v3216, %v4422
      %v4736 = vadd.f32 %v3217, %v4424
      %v4737 = vadd.f32 %v3218, %v4426
      %v4738 = vadd.f32 %v3219, %v4429
      %v4739 = vadd.f32 %v3220, %v4431
      %v4740 = vadd.f32 %v3221, %v4433
      %v4741 = vadd.f32 %v3222, %v4435
      %v4742 = vadd.f32 %v3223, %v4438
      %v4743 = vadd.f32 %v3224, %v4440
      %v4744 = vadd.f32 %v3225, %v4442
      %v4745 = vadd.f32 %v3226, %v4444
      %v4746 = vadd.f32 %v3227, %v4447
      %v4747 = vadd.f32 %v3228, %v4449
      %v4748 = vadd.f32 %v3229, %v4451
      %v4749 = vadd.f32 %v3230, %v4453
      %v4750 = vadd.f32 %v3231, %v4456
      %v4751 = vadd.f32 %v3232, %v4458
      %v4752 = vadd.f32 %v3233, %v4460
      %v4753 = vadd.f32 %v3234, %v4462
      %v4754 = vadd.f32 %v3235, %v4465
      %v4755 = vadd.f32 %v3236, %v4467
      %v4756 = vadd.f32 %v3237, %v4469
      %v4757 = vadd.f32 %v3238, %v4471
      %v4758 = vadd.f32 %v3239, %v4474
      %v4759 = vadd.f32 %v3240, %v4476
      %v4760 = vadd.f32 %v3241, %v4478
      %v4761 = vadd.f32 %v3242, %v4480
      %v4762 = vadd.f32 %v3243, %v4483
      %v4763 = vadd.f32 %v3244, %v4485
      %v4764 = vadd.f32 %v3245, %v4487
      %v4765 = vadd.f32 %v3246, %v4489
      %v4766 = vadd.f32 %v3247, %v4492
      %v4767 = vadd.f32 %v3248, %v4494
      %v4768 = vadd.f32 %v3249, %v4496
      %v4769 = vadd.f32 %v3250, %v4498
      %v4770 = vadd.f32 %v3251, %v4501
      %v4771 = vadd.f32 %v3252, %v4503
      %v4772 = vadd.f32 %v3253, %v4505
      %v4773 = vadd.f32 %v3254, %v4507
      %v4774 = vadd.f32 %v3255, %v4510
      %v4775 = vadd.f32 %v3256, %v4512
      %v4776 = vadd.f32 %v3257, %v4514
      %v4777 = vadd.f32 %v3258, %v4516
      %v4778 = vadd.f32 %v3259, %v4519
      %v4779 = vadd.f32 %v3260, %v4521
      %v4780 = vadd.f32 %v3261, %v4523
      %v4781 = vadd.f32 %v3262, %v4525
      %v4782 = vld [vmem:[%s2 + $0x2] sm:$0x1]
      %v4783 = vlaneseq
      %v4784 = vshrl.u32 %v4783, 7
      %v4785 = vsub.s32 0, %v4784
      %v4786 = vrot.slane %v4782, %v4785
      %v4787 = vmul.f32 %v4786, %v2438
      %v4788 = vmul.f32 %v4786, %v2439
      %v4789 = vmul.f32 %v4786, %v2440
      %v4790 = vmul.f32 %v4786, %v2441
      %v4791 = vmul.f32 %v4786, %v2442
      %v4792 = vmul.f32 %v4786, %v2443
      %v4793 = vmul.f32 %v4786, %v2444
      %v4794 = vmul.f32 %v4786, %v2445
      %v4795 = vmul.f32 %v4786, %v2446
      %v4796 = vmul.f32 %v4786, %v2447
      %v4797 = vmul.f32 %v4786, %v2448
      %v4798 = vmul.f32 %v4786, %v2449
      %v4799 = vmul.f32 %v4786, %v2450
      %v4800 = vmul.f32 %v4786, %v2451
      %v4801 = vmul.f32 %v4786, %v2452
      %v4802 = vmul.f32 %v4786, %v2453
      %v4803 = vmul.f32 %v4786, %v2454
      %v4804 = vmul.f32 %v4786, %v2455
      %v4805 = vmul.f32 %v4786, %v2456
      %v4806 = vmul.f32 %v4786, %v2457
      %v4807 = vmul.f32 %v4786, %v2458
      %v4808 = vmul.f32 %v4786, %v2459
      %v4809 = vmul.f32 %v4786, %v2460
      %v4810 = vmul.f32 %v4786, %v2461
      %v4811 = vmul.f32 %v4786, %v2462
      %v4812 = vmul.f32 %v4786, %v2463
      %v4813 = vmul.f32 %v4786, %v2464
      %v4814 = vmul.f32 %v4786, %v2465
      %v4815 = vmul.f32 %v4786, %v2466
      %v4816 = vmul.f32 %v4786, %v2467
      %v4817 = vmul.f32 %v4786, %v2468
      %v4818 = vmul.f32 %v4786, %v2469
      %v4819 = vmul.f32 %v4786, %v2470
      %v4820 = vmul.f32 %v4786, %v2471
      %v4821 = vmul.f32 %v4786, %v2472
      %v4822 = vmul.f32 %v4786, %v2473
      %v4823 = vmul.f32 %v4786, %v2474
      %v4824 = vmul.f32 %v4786, %v2475
      %v4825 = vmul.f32 %v4786, %v2476
      %v4826 = vmul.f32 %v4786, %v2477
      %v4827 = vmul.f32 %v4786, %v2478
      %v4828 = vmul.f32 %v4786, %v2479
      %v4829 = vmul.f32 %v4786, %v2480
      %v4830 = vmul.f32 %v4786, %v2481
      %v4831 = vmul.f32 %v4786, %v2482
      %v4832 = vmul.f32 %v4786, %v2483
      %v4833 = vmul.f32 %v4786, %v2484
      %v4834 = vmul.f32 %v4786, %v2485
      %v4835 = vmul.f32 %v4786, %v2486
      %v4836 = vmul.f32 %v4786, %v2487
      %v4837 = vmul.f32 %v4786, %v2488
      %v4838 = vmul.f32 %v4786, %v2489
      %v4839 = vmul.f32 %v4786, %v2490
      %v4840 = vmul.f32 %v4786, %v2491
      %v4841 = vmul.f32 %v4786, %v2492
      %v4842 = vmul.f32 %v4786, %v2493
      %v4843 = vmul.f32 %v4786, %v2494
      %v4844 = vmul.f32 %v4786, %v2495
      %v4845 = vmul.f32 %v4786, %v2496
      %v4846 = vmul.f32 %v4786, %v2497
      %v4847 = vmul.f32 %v4786, %v2498
      %v4848 = vmul.f32 %v4786, %v2499
      %v4849 = vmul.f32 %v4786, %v2500
      %v4850 = vmul.f32 %v4786, %v2501
      %v4851 = vmul.f32 %v4786, %v2502
      %v4852 = vmul.f32 %v4786, %v2503
      %v4853 = vmul.f32 %v4786, %v2504
      %v4854 = vmul.f32 %v4786, %v2505
      %v4855 = vmul.f32 %v4786, %v2506
      %v4856 = vmul.f32 %v4786, %v2507
      %v4857 = vmul.f32 %v4786, %v2508
      %v4858 = vmul.f32 %v4786, %v2509
      %v4859 = vmul.f32 %v4786, %v2510
      %v4860 = vmul.f32 %v4786, %v2511
      %v4861 = vmul.f32 %v4786, %v2512
      %v4862 = vmul.f32 %v4786, %v2513
      %v4863 = vmul.f32 %v4786, %v2514
      %v4864 = vmul.f32 %v4786, %v2515
      %v4865 = vmul.f32 %v4786, %v2516
      %v4866 = vmul.f32 %v4786, %v2517
      %v4867 = vmul.f32 %v4786, %v2518
      %v4868 = vmul.f32 %v4786, %v2519
      %v4869 = vmul.f32 %v4786, %v2520
      %v4870 = vmul.f32 %v4786, %v2521
      %v4871 = vmul.f32 %v4786, %v2522
      %v4872 = vmul.f32 %v4786, %v2523
      %v4873 = vmul.f32 %v4786, %v2524
      %v4874 = vmul.f32 %v4786, %v2525
      %v4875 = vmul.f32 %v4786, %v2526
      %v4876 = vmul.f32 %v4786, %v2527
      %v4877 = vmul.f32 %v4786, %v2528
      %v4878 = vmul.f32 %v4786, %v2529
      %v4879 = vmul.f32 %v4786, %v2530
      %v4880 = vmul.f32 %v4786, %v2531
      %v4881 = vmul.f32 %v4786, %v2532
      %v4882 = vmul.f32 %v4786, %v2533
      %v4883 = vmul.f32 %v4786, %v2534
      %v4884 = vmul.f32 %v4786, %v2535
      %v4885 = vmul.f32 %v4786, %v2536
      %v4886 = vmul.f32 %v4786, %v2537
      %v4887 = vmul.f32 %v4786, %v2538
      %v4888 = vmul.f32 %v4786, %v2539
      %v4889 = vmul.f32 %v4786, %v2540
      %v4890 = vmul.f32 %v4786, %v2541
      %v4891 = vmul.f32 %v4786, %v2542
      %v4892 = vmul.f32 %v4786, %v2543
      %v4893 = vmul.f32 %v4786, %v2544
      %v4894 = vmul.f32 %v4786, %v2545
      %v4895 = vmul.f32 %v4786, %v2546
      %v4896 = vmul.f32 %v4786, %v2547
      %v4897 = vmul.f32 %v4786, %v2548
      %v4898 = vmul.f32 %v4786, %v2549
      %v4899 = vmul.f32 %v4786, %v2550
      %v4900 = vmul.f32 %v4786, %v2551
      %v4901 = vmul.f32 %v4786, %v2552
      %v4902 = vmul.f32 %v4786, %v2553
      %v4903 = vmul.f32 %v4786, %v2554
      %v4904 = vmul.f32 %v4786, %v2555
      %v4905 = vmul.f32 %v4786, %v2556
      %v4906 = vmul.f32 %v4786, %v2557
      %v4907 = vmul.f32 %v4786, %v2558
      %v4908 = vmul.f32 %v4786, %v2559
      %v4909 = vmul.f32 %v4786, %v2560
      %v4910 = vmul.f32 %v4786, %v2561
      %v4911 = vmul.f32 %v4786, %v2562
      %v4912 = vmul.f32 %v4786, %v2563
      %v4913 = vmul.f32 %v4786, %v2564
      %v4914 = vmul.f32 %v4786, %v2565
      %v4915 = vmul.f32 %v4786, %v2566
      %v4916 = vmul.f32 %v4786, %v2567
      %v4917 = vmul.f32 %v4786, %v2568
      %v4918 = vmul.f32 %v4786, %v2569
      %v4919 = vmul.f32 %v4786, %v2570
      %v4920 = vmul.f32 %v4786, %v2571
      %v4921 = vmul.f32 %v4786, %v2572
      %v4922 = vmul.f32 %v4786, %v2573
      %v4923 = vmul.f32 %v4786, %v2574
      %v4924 = vmul.f32 %v4786, %v2575
      %v4925 = vmul.f32 %v4786, %v2576
      %v4926 = vmul.f32 %v4786, %v2577
      %v4927 = vmul.f32 %v4786, %v2578
      %v4928 = vmul.f32 %v4786, %v2579
      %v4929 = vmul.f32 %v4786, %v2580
      %v4930 = vmul.f32 %v4786, %v2581
      %v4931 = vmul.f32 %v4786, %v2582
      %v4932 = vmul.f32 %v4786, %v2583
      %v4933 = vmul.f32 %v4786, %v2584
      %v4934 = vmul.f32 %v4786, %v2585
      %v4935 = vmul.f32 %v4786, %v2586
      %v4936 = vmul.f32 %v4786, %v2587
      %v4937 = vmul.f32 %v4786, %v2588
      %v4938 = vmul.f32 %v4786, %v2589
      %v4939 = vmul.f32 %v4786, %v2590
      %v4940 = vmul.f32 %v4786, %v2591
      %v4941 = vmul.f32 %v4786, %v2592
      %v4942 = vmul.f32 %v4786, %v2593
      %v4943 = vmul.f32 %v4786, %v2594
      %v4944 = vmul.f32 %v4786, %v2595
      %v4945 = vmul.f32 %v4786, %v2596
      %v4946 = vmul.f32 %v4786, %v2597
      %v4947 = vld [vmem:[%s2 + $0x5] sm:$0x1]
      %v4948 = vlaneseq
      %v4949 = vshrl.u32 %v4948, 7
      %v4950 = vsub.s32 0, %v4949
      %v4951 = vrot.slane %v4947, %v4950
      %v4952 = vmul.f32 %v4951, %v2443
      %v4953 = vmul.f32 %v4951, %v2444
      %v4954 = vmul.f32 %v4951, %v2445
      %v4955 = vmul.f32 %v4951, %v2446
      %v4956 = vmul.f32 %v4951, %v2447
      %v4957 = vmul.f32 %v4951, %v2448
      %v4958 = vmul.f32 %v4951, %v2449
      %v4959 = vmul.f32 %v4951, %v2450
      %v4960 = vmul.f32 %v4951, %v2451
      %v4961 = vmul.f32 %v4951, %v2452
      %v4962 = vmul.f32 %v4951, %v2453
      %v4963 = vmul.f32 %v4951, %v2454
      %v4964 = vmul.f32 %v4951, %v2455
      %v4965 = vmul.f32 %v4951, %v2456
      %v4966 = vmul.f32 %v4951, %v2457
      %v4967 = vmul.f32 %v4951, %v2458
      %v4968 = vmul.f32 %v4951, %v2459
      %v4969 = vmul.f32 %v4951, %v2460
      %v4970 = vmul.f32 %v4951, %v2461
      %v4971 = vmul.f32 %v4951, %v2462
      %v4972 = vmul.f32 %v4951, %v2463
      %v4973 = vmul.f32 %v4951, %v2464
      %v4974 = vmul.f32 %v4951, %v2465
      %v4975 = vmul.f32 %v4951, %v2466
      %v4976 = vmul.f32 %v4951, %v2467
      %v4977 = vmul.f32 %v4951, %v2468
      %v4978 = vmul.f32 %v4951, %v2469
      %v4979 = vmul.f32 %v4951, %v2470
      %v4980 = vmul.f32 %v4951, %v2471
      %v4981 = vmul.f32 %v4951, %v2472
      %v4982 = vmul.f32 %v4951, %v2473
      %v4983 = vmul.f32 %v4951, %v2474
      %v4984 = vmul.f32 %v4951, %v2475
      %v4985 = vmul.f32 %v4951, %v2476
      %v4986 = vmul.f32 %v4951, %v2477
      %v4987 = vmul.f32 %v4951, %v2478
      %v4988 = vmul.f32 %v4951, %v2479
      %v4989 = vmul.f32 %v4951, %v2480
      %v4990 = vmul.f32 %v4951, %v2481
      %v4991 = vmul.f32 %v4951, %v2482
      %v4992 = vmul.f32 %v4951, %v2483
      %v4993 = vmul.f32 %v4951, %v2484
      %v4994 = vmul.f32 %v4951, %v2485
      %v4995 = vmul.f32 %v4951, %v2486
      %v4996 = vmul.f32 %v4951, %v2487
      %v4997 = vmul.f32 %v4951, %v2488
      %v4998 = vmul.f32 %v4951, %v2489
      %v4999 = vmul.f32 %v4951, %v2490
      %v5000 = vmul.f32 %v4951, %v2491
      %v5001 = vmul.f32 %v4951, %v2492
      %v5002 = vmul.f32 %v4951, %v2493
      %v5003 = vmul.f32 %v4951, %v2494
      %v5004 = vmul.f32 %v4951, %v2495
      %v5005 = vmul.f32 %v4951, %v2496
      %v5006 = vmul.f32 %v4951, %v2497
      %v5007 = vmul.f32 %v4951, %v2498
      %v5008 = vmul.f32 %v4951, %v2499
      %v5009 = vmul.f32 %v4951, %v2500
      %v5010 = vmul.f32 %v4951, %v2501
      %v5011 = vmul.f32 %v4951, %v2502
      %v5012 = vmul.f32 %v4951, %v2503
      %v5013 = vmul.f32 %v4951, %v2504
      %v5014 = vmul.f32 %v4951, %v2505
      %v5015 = vmul.f32 %v4951, %v2506
      %v5016 = vmul.f32 %v4951, %v2507
      %v5017 = vmul.f32 %v4951, %v2508
      %v5018 = vmul.f32 %v4951, %v2509
      %v5019 = vmul.f32 %v4951, %v2510
      %v5020 = vmul.f32 %v4951, %v2511
      %v5021 = vmul.f32 %v4951, %v2512
      %v5022 = vmul.f32 %v4951, %v2513
      %v5023 = vmul.f32 %v4951, %v2514
      %v5024 = vmul.f32 %v4951, %v2515
      %v5025 = vmul.f32 %v4951, %v2516
      %v5026 = vmul.f32 %v4951, %v2517
      %v5027 = vmul.f32 %v4951, %v2518
      %v5028 = vmul.f32 %v4951, %v2519
      %v5029 = vmul.f32 %v4951, %v2520
      %v5030 = vmul.f32 %v4951, %v2521
      %v5031 = vmul.f32 %v4951, %v2522
      %v5032 = vmul.f32 %v4951, %v2523
      %v5033 = vmul.f32 %v4951, %v2524
      %v5034 = vmul.f32 %v4951, %v2525
      %v5035 = vmul.f32 %v4951, %v2526
      %v5036 = vmul.f32 %v4951, %v2527
      %v5037 = vmul.f32 %v4951, %v2528
      %v5038 = vmul.f32 %v4951, %v2529
      %v5039 = vmul.f32 %v4951, %v2530
      %v5040 = vmul.f32 %v4951, %v2531
      %v5041 = vmul.f32 %v4951, %v2532
      %v5042 = vmul.f32 %v4951, %v2533
      %v5043 = vmul.f32 %v4951, %v2534
      %v5044 = vmul.f32 %v4951, %v2535
      %v5045 = vmul.f32 %v4951, %v2536
      %v5046 = vmul.f32 %v4951, %v2537
      %v5047 = vmul.f32 %v4951, %v2538
      %v5048 = vmul.f32 %v4951, %v2539
      %v5049 = vmul.f32 %v4951, %v2540
      %v5050 = vmul.f32 %v4951, %v2541
      %v5051 = vmul.f32 %v4951, %v2542
      %v5052 = vmul.f32 %v4951, %v2543
      %v5053 = vmul.f32 %v4951, %v2544
      %v5054 = vmul.f32 %v4951, %v2545
      %v5055 = vmul.f32 %v4951, %v2546
      %v5056 = vmul.f32 %v4951, %v2547
      %v5057 = vmul.f32 %v4951, %v2548
      %v5058 = vmul.f32 %v4951, %v2549
      %v5059 = vmul.f32 %v4951, %v2550
      %v5060 = vmul.f32 %v4951, %v2551
      %v5061 = vmul.f32 %v4951, %v2552
      %v5062 = vmul.f32 %v4951, %v2553
      %v5063 = vmul.f32 %v4951, %v2554
      %v5064 = vmul.f32 %v4951, %v2555
      %v5065 = vmul.f32 %v4951, %v2556
      %v5066 = vmul.f32 %v4951, %v2557
      %v5067 = vmul.f32 %v4951, %v2558
      %v5068 = vmul.f32 %v4951, %v2559
      %v5069 = vmul.f32 %v4951, %v2560
      %v5070 = vmul.f32 %v4951, %v2561
      %v5071 = vmul.f32 %v4951, %v2562
      %v5072 = vmul.f32 %v4951, %v2563
      %v5073 = vmul.f32 %v4951, %v2564
      %v5074 = vmul.f32 %v4951, %v2565
      %v5075 = vmul.f32 %v4951, %v2566
      %v5076 = vmul.f32 %v4951, %v2567
      %v5077 = vmul.f32 %v4951, %v2568
      %v5078 = vmul.f32 %v4951, %v2569
      %v5079 = vmul.f32 %v4951, %v2570
      %v5080 = vmul.f32 %v4951, %v2571
      %v5081 = vmul.f32 %v4951, %v2572
      %v5082 = vmul.f32 %v4951, %v2573
      %v5083 = vmul.f32 %v4951, %v2574
      %v5084 = vmul.f32 %v4951, %v2575
      %v5085 = vmul.f32 %v4951, %v2576
      %v5086 = vmul.f32 %v4951, %v2577
      %v5087 = vmul.f32 %v4951, %v2578
      %v5088 = vmul.f32 %v4951, %v2579
      %v5089 = vmul.f32 %v4951, %v2580
      %v5090 = vmul.f32 %v4951, %v2581
      %v5091 = vmul.f32 %v4951, %v2582
      %v5092 = vmul.f32 %v4951, %v2583
      %v5093 = vmul.f32 %v4951, %v2584
      %v5094 = vmul.f32 %v4951, %v2585
      %v5095 = vmul.f32 %v4951, %v2586
      %v5096 = vmul.f32 %v4951, %v2587
      %v5097 = vmul.f32 %v4951, %v2588
      %v5098 = vmul.f32 %v4951, %v2589
      %v5099 = vmul.f32 %v4951, %v2590
      %v5100 = vmul.f32 %v4951, %v2591
      %v5101 = vmul.f32 %v4951, %v2592
      %v5102 = vmul.f32 %v4951, %v2593
      %v5103 = vmul.f32 %v4951, %v2594
      %v5104 = vmul.f32 %v4951, %v2595
      %v5105 = vmul.f32 %v4951, %v2596
      %v5106 = vmul.f32 %v4951, %v2597
      %v5107 = vmul.f32 %v4951, %v2598
      %v5108 = vmul.f32 %v4951, %v2599
      %v5109 = vmul.f32 %v4951, %v2600
      %v5110 = vmul.f32 %v4951, %v2601
      %v5111 = vmul.f32 %v4951, %v2602
      %v5112 = vadd.f32 %v4787, %v4952
      %v5113 = vadd.f32 %v4788, %v4953
      %v5114 = vadd.f32 %v4789, %v4954
      %v5115 = vadd.f32 %v4790, %v4955
      %v5116 = vadd.f32 %v4791, %v4956
      %v5117 = vadd.f32 %v4792, %v4957
      %v5118 = vadd.f32 %v4793, %v4958
      %v5119 = vadd.f32 %v4794, %v4959
      %v5120 = vadd.f32 %v4795, %v4960
      %v5121 = vadd.f32 %v4796, %v4961
      %v5122 = vadd.f32 %v4797, %v4962
      %v5123 = vadd.f32 %v4798, %v4963
      %v5124 = vadd.f32 %v4799, %v4964
      %v5125 = vadd.f32 %v4800, %v4965
      %v5126 = vadd.f32 %v4801, %v4966
      %v5127 = vadd.f32 %v4802, %v4967
      %v5128 = vadd.f32 %v4803, %v4968
      %v5129 = vadd.f32 %v4804, %v4969
      %v5130 = vadd.f32 %v4805, %v4970
      %v5131 = vadd.f32 %v4806, %v4971
      %v5132 = vadd.f32 %v4807, %v4972
      %v5133 = vadd.f32 %v4808, %v4973
      %v5134 = vadd.f32 %v4809, %v4974
      %v5135 = vadd.f32 %v4810, %v4975
      %v5136 = vadd.f32 %v4811, %v4976
      %v5137 = vadd.f32 %v4812, %v4977
      %v5138 = vadd.f32 %v4813, %v4978
      %v5139 = vadd.f32 %v4814, %v4979
      %v5140 = vadd.f32 %v4815, %v4980
      %v5141 = vadd.f32 %v4816, %v4981
      %v5142 = vadd.f32 %v4817, %v4982
      %v5143 = vadd.f32 %v4818, %v4983
      %v5144 = vadd.f32 %v4819, %v4984
      %v5145 = vadd.f32 %v4820, %v4985
      %v5146 = vadd.f32 %v4821, %v4986
      %v5147 = vadd.f32 %v4822, %v4987
      %v5148 = vadd.f32 %v4823, %v4988
      %v5149 = vadd.f32 %v4824, %v4989
      %v5150 = vadd.f32 %v4825, %v4990
      %v5151 = vadd.f32 %v4826, %v4991
      %v5152 = vadd.f32 %v4827, %v4992
      %v5153 = vadd.f32 %v4828, %v4993
      %v5154 = vadd.f32 %v4829, %v4994
      %v5155 = vadd.f32 %v4830, %v4995
      %v5156 = vadd.f32 %v4831, %v4996
      %v5157 = vadd.f32 %v4832, %v4997
      %v5158 = vadd.f32 %v4833, %v4998
      %v5159 = vadd.f32 %v4834, %v4999
      %v5160 = vadd.f32 %v4835, %v5000
      %v5161 = vadd.f32 %v4836, %v5001
      %v5162 = vadd.f32 %v4837, %v5002
      %v5163 = vadd.f32 %v4838, %v5003
      %v5164 = vadd.f32 %v4839, %v5004
      %v5165 = vadd.f32 %v4840, %v5005
      %v5166 = vadd.f32 %v4841, %v5006
      %v5167 = vadd.f32 %v4842, %v5007
      %v5168 = vadd.f32 %v4843, %v5008
      %v5169 = vadd.f32 %v4844, %v5009
      %v5170 = vadd.f32 %v4845, %v5010
      %v5171 = vadd.f32 %v4846, %v5011
      %v5172 = vadd.f32 %v4847, %v5012
      %v5173 = vadd.f32 %v4848, %v5013
      %v5174 = vadd.f32 %v4849, %v5014
      %v5175 = vadd.f32 %v4850, %v5015
      %v5176 = vadd.f32 %v4851, %v5016
      %v5177 = vadd.f32 %v4852, %v5017
      %v5178 = vadd.f32 %v4853, %v5018
      %v5179 = vadd.f32 %v4854, %v5019
      %v5180 = vadd.f32 %v4855, %v5020
      %v5181 = vadd.f32 %v4856, %v5021
      %v5182 = vadd.f32 %v4857, %v5022
      %v5183 = vadd.f32 %v4858, %v5023
      %v5184 = vadd.f32 %v4859, %v5024
      %v5185 = vadd.f32 %v4860, %v5025
      %v5186 = vadd.f32 %v4861, %v5026
      %v5187 = vadd.f32 %v4862, %v5027
      %v5188 = vadd.f32 %v4863, %v5028
      %v5189 = vadd.f32 %v4864, %v5029
      %v5190 = vadd.f32 %v4865, %v5030
      %v5191 = vadd.f32 %v4866, %v5031
      %v5192 = vadd.f32 %v4867, %v5032
      %v5193 = vadd.f32 %v4868, %v5033
      %v5194 = vadd.f32 %v4869, %v5034
      %v5195 = vadd.f32 %v4870, %v5035
      %v5196 = vadd.f32 %v4871, %v5036
      %v5197 = vadd.f32 %v4872, %v5037
      %v5198 = vadd.f32 %v4873, %v5038
      %v5199 = vadd.f32 %v4874, %v5039
      %v5200 = vadd.f32 %v4875, %v5040
      %v5201 = vadd.f32 %v4876, %v5041
      %v5202 = vadd.f32 %v4877, %v5042
      %v5203 = vadd.f32 %v4878, %v5043
      %v5204 = vadd.f32 %v4879, %v5044
      %v5205 = vadd.f32 %v4880, %v5045
      %v5206 = vadd.f32 %v4881, %v5046
      %v5207 = vadd.f32 %v4882, %v5047
      %v5208 = vadd.f32 %v4883, %v5048
      %v5209 = vadd.f32 %v4884, %v5049
      %v5210 = vadd.f32 %v4885, %v5050
      %v5211 = vadd.f32 %v4886, %v5051
      %v5212 = vadd.f32 %v4887, %v5052
      %v5213 = vadd.f32 %v4888, %v5053
      %v5214 = vadd.f32 %v4889, %v5054
      %v5215 = vadd.f32 %v4890, %v5055
      %v5216 = vadd.f32 %v4891, %v5056
      %v5217 = vadd.f32 %v4892, %v5057
      %v5218 = vadd.f32 %v4893, %v5058
      %v5219 = vadd.f32 %v4894, %v5059
      %v5220 = vadd.f32 %v4895, %v5060
      %v5221 = vadd.f32 %v4896, %v5061
      %v5222 = vadd.f32 %v4897, %v5062
      %v5223 = vadd.f32 %v4898, %v5063
      %v5224 = vadd.f32 %v4899, %v5064
      %v5225 = vadd.f32 %v4900, %v5065
      %v5226 = vadd.f32 %v4901, %v5066
      %v5227 = vadd.f32 %v4902, %v5067
      %v5228 = vadd.f32 %v4903, %v5068
      %v5229 = vadd.f32 %v4904, %v5069
      %v5230 = vadd.f32 %v4905, %v5070
      %v5231 = vadd.f32 %v4906, %v5071
      %v5232 = vadd.f32 %v4907, %v5072
      %v5233 = vadd.f32 %v4908, %v5073
      %v5234 = vadd.f32 %v4909, %v5074
      %v5235 = vadd.f32 %v4910, %v5075
      %v5236 = vadd.f32 %v4911, %v5076
      %v5237 = vadd.f32 %v4912, %v5077
      %v5238 = vadd.f32 %v4913, %v5078
      %v5239 = vadd.f32 %v4914, %v5079
      %v5240 = vadd.f32 %v4915, %v5080
      %v5241 = vadd.f32 %v4916, %v5081
      %v5242 = vadd.f32 %v4917, %v5082
      %v5243 = vadd.f32 %v4918, %v5083
      %v5244 = vadd.f32 %v4919, %v5084
      %v5245 = vadd.f32 %v4920, %v5085
      %v5246 = vadd.f32 %v4921, %v5086
      %v5247 = vadd.f32 %v4922, %v5087
      %v5248 = vadd.f32 %v4923, %v5088
      %v5249 = vadd.f32 %v4924, %v5089
      %v5250 = vadd.f32 %v4925, %v5090
      %v5251 = vadd.f32 %v4926, %v5091
      %v5252 = vadd.f32 %v4927, %v5092
      %v5253 = vadd.f32 %v4928, %v5093
      %v5254 = vadd.f32 %v4929, %v5094
      %v5255 = vadd.f32 %v4930, %v5095
      %v5256 = vadd.f32 %v4931, %v5096
      %v5257 = vadd.f32 %v4932, %v5097
      %v5258 = vadd.f32 %v4933, %v5098
      %v5259 = vadd.f32 %v4934, %v5099
      %v5260 = vadd.f32 %v4935, %v5100
      %v5261 = vadd.f32 %v4936, %v5101
      %v5262 = vadd.f32 %v4937, %v5102
      %v5263 = vadd.f32 %v4938, %v5103
      %v5264 = vadd.f32 %v4939, %v5104
      %v5265 = vadd.f32 %v4940, %v5105
      %v5266 = vadd.f32 %v4941, %v5106
      %v5267 = vadd.f32 %v4942, %v5107
      %v5268 = vadd.f32 %v4943, %v5108
      %v5269 = vadd.f32 %v4944, %v5109
      %v5270 = vadd.f32 %v4945, %v5110
      %v5271 = vadd.f32 %v4946, %v5111
      %v5272 = vld [vmem:[%s2 + $0x8] sm:$0x1]
      %v5273 = vlaneseq
      %v5274 = vshrl.u32 %v5273, 7
      %v5275 = vsub.s32 0, %v5274
      %v5276 = vrot.slane %v5272, %v5275
      %v5277 = vmul.f32 %v5276, %v2448
      %v5278 = vmul.f32 %v5276, %v2449
      %v5279 = vmul.f32 %v5276, %v2450
      %v5280 = vmul.f32 %v5276, %v2451
      %v5281 = vmul.f32 %v5276, %v2452
      %v5282 = vmul.f32 %v5276, %v2453
      %v5283 = vmul.f32 %v5276, %v2454
      %v5284 = vmul.f32 %v5276, %v2455
      %v5285 = vmul.f32 %v5276, %v2456
      %v5286 = vmul.f32 %v5276, %v2457
      %v5287 = vmul.f32 %v5276, %v2458
      %v5288 = vmul.f32 %v5276, %v2459
      %v5289 = vmul.f32 %v5276, %v2460
      %v5290 = vmul.f32 %v5276, %v2461
      %v5291 = vmul.f32 %v5276, %v2462
      %v5292 = vmul.f32 %v5276, %v2463
      %v5293 = vmul.f32 %v5276, %v2464
      %v5294 = vmul.f32 %v5276, %v2465
      %v5295 = vmul.f32 %v5276, %v2466
      %v5296 = vmul.f32 %v5276, %v2467
      %v5297 = vmul.f32 %v5276, %v2468
      %v5298 = vmul.f32 %v5276, %v2469
      %v5299 = vmul.f32 %v5276, %v2470
      %v5300 = vmul.f32 %v5276, %v2471
      %v5301 = vmul.f32 %v5276, %v2472
      %v5302 = vmul.f32 %v5276, %v2473
      %v5303 = vmul.f32 %v5276, %v2474
      %v5304 = vmul.f32 %v5276, %v2475
      %v5305 = vmul.f32 %v5276, %v2476
      %v5306 = vmul.f32 %v5276, %v2477
      %v5307 = vmul.f32 %v5276, %v2478
      %v5308 = vmul.f32 %v5276, %v2479
      %v5309 = vmul.f32 %v5276, %v2480
      %v5310 = vmul.f32 %v5276, %v2481
      %v5311 = vmul.f32 %v5276, %v2482
      %v5312 = vmul.f32 %v5276, %v2483
      %v5313 = vmul.f32 %v5276, %v2484
      %v5314 = vmul.f32 %v5276, %v2485
      %v5315 = vmul.f32 %v5276, %v2486
      %v5316 = vmul.f32 %v5276, %v2487
      %v5317 = vmul.f32 %v5276, %v2488
      %v5318 = vmul.f32 %v5276, %v2489
      %v5319 = vmul.f32 %v5276, %v2490
      %v5320 = vmul.f32 %v5276, %v2491
      %v5321 = vmul.f32 %v5276, %v2492
      %v5322 = vmul.f32 %v5276, %v2493
      %v5323 = vmul.f32 %v5276, %v2494
      %v5324 = vmul.f32 %v5276, %v2495
      %v5325 = vmul.f32 %v5276, %v2496
      %v5326 = vmul.f32 %v5276, %v2497
      %v5327 = vmul.f32 %v5276, %v2498
      %v5328 = vmul.f32 %v5276, %v2499
      %v5329 = vmul.f32 %v5276, %v2500
      %v5330 = vmul.f32 %v5276, %v2501
      %v5331 = vmul.f32 %v5276, %v2502
      %v5332 = vmul.f32 %v5276, %v2503
      %v5333 = vmul.f32 %v5276, %v2504
      %v5334 = vmul.f32 %v5276, %v2505
      %v5335 = vmul.f32 %v5276, %v2506
      %v5336 = vmul.f32 %v5276, %v2507
      %v5337 = vmul.f32 %v5276, %v2508
      %v5338 = vmul.f32 %v5276, %v2509
      %v5339 = vmul.f32 %v5276, %v2510
      %v5340 = vmul.f32 %v5276, %v2511
      %v5341 = vmul.f32 %v5276, %v2512
      %v5342 = vmul.f32 %v5276, %v2513
      %v5343 = vmul.f32 %v5276, %v2514
      %v5344 = vmul.f32 %v5276, %v2515
      %v5345 = vmul.f32 %v5276, %v2516
      %v5346 = vmul.f32 %v5276, %v2517
      %v5347 = vmul.f32 %v5276, %v2518
      %v5348 = vmul.f32 %v5276, %v2519
      %v5349 = vmul.f32 %v5276, %v2520
      %v5350 = vmul.f32 %v5276, %v2521
      %v5351 = vmul.f32 %v5276, %v2522
      %v5352 = vmul.f32 %v5276, %v2523
      %v5353 = vmul.f32 %v5276, %v2524
      %v5354 = vmul.f32 %v5276, %v2525
      %v5355 = vmul.f32 %v5276, %v2526
      %v5356 = vmul.f32 %v5276, %v2527
      %v5357 = vmul.f32 %v5276, %v2528
      %v5358 = vmul.f32 %v5276, %v2529
      %v5359 = vmul.f32 %v5276, %v2530
      %v5360 = vmul.f32 %v5276, %v2531
      %v5361 = vmul.f32 %v5276, %v2532
      %v5362 = vmul.f32 %v5276, %v2533
      %v5363 = vmul.f32 %v5276, %v2534
      %v5364 = vmul.f32 %v5276, %v2535
      %v5365 = vmul.f32 %v5276, %v2536
      %v5366 = vmul.f32 %v5276, %v2537
      %v5367 = vmul.f32 %v5276, %v2538
      %v5368 = vmul.f32 %v5276, %v2539
      %v5369 = vmul.f32 %v5276, %v2540
      %v5370 = vmul.f32 %v5276, %v2541
      %v5371 = vmul.f32 %v5276, %v2542
      %v5372 = vmul.f32 %v5276, %v2543
      %v5373 = vmul.f32 %v5276, %v2544
      %v5374 = vmul.f32 %v5276, %v2545
      %v5375 = vmul.f32 %v5276, %v2546
      %v5376 = vmul.f32 %v5276, %v2547
      %v5377 = vmul.f32 %v5276, %v2548
      %v5378 = vmul.f32 %v5276, %v2549
      %v5379 = vmul.f32 %v5276, %v2550
      %v5380 = vmul.f32 %v5276, %v2551
      %v5381 = vmul.f32 %v5276, %v2552
      %v5382 = vmul.f32 %v5276, %v2553
      %v5383 = vmul.f32 %v5276, %v2554
      %v5384 = vmul.f32 %v5276, %v2555
      %v5385 = vmul.f32 %v5276, %v2556
      %v5386 = vmul.f32 %v5276, %v2557
      %v5387 = vmul.f32 %v5276, %v2558
      %v5388 = vmul.f32 %v5276, %v2559
      %v5389 = vmul.f32 %v5276, %v2560
      %v5390 = vmul.f32 %v5276, %v2561
      %v5391 = vmul.f32 %v5276, %v2562
      %v5392 = vmul.f32 %v5276, %v2563
      %v5393 = vmul.f32 %v5276, %v2564
      %v5394 = vmul.f32 %v5276, %v2565
      %v5395 = vmul.f32 %v5276, %v2566
      %v5396 = vmul.f32 %v5276, %v2567
      %v5397 = vmul.f32 %v5276, %v2568
      %v5398 = vmul.f32 %v5276, %v2569
      %v5399 = vmul.f32 %v5276, %v2570
      %v5400 = vmul.f32 %v5276, %v2571
      %v5401 = vmul.f32 %v5276, %v2572
      %v5402 = vmul.f32 %v5276, %v2573
      %v5403 = vmul.f32 %v5276, %v2574
      %v5404 = vmul.f32 %v5276, %v2575
      %v5405 = vmul.f32 %v5276, %v2576
      %v5406 = vmul.f32 %v5276, %v2577
      %v5407 = vmul.f32 %v5276, %v2578
      %v5408 = vmul.f32 %v5276, %v2579
      %v5409 = vmul.f32 %v5276, %v2580
      %v5410 = vmul.f32 %v5276, %v2581
      %v5411 = vmul.f32 %v5276, %v2582
      %v5412 = vmul.f32 %v5276, %v2583
      %v5413 = vmul.f32 %v5276, %v2584
      %v5414 = vmul.f32 %v5276, %v2585
      %v5415 = vmul.f32 %v5276, %v2586
      %v5416 = vmul.f32 %v5276, %v2587
      %v5417 = vmul.f32 %v5276, %v2588
      %v5418 = vmul.f32 %v5276, %v2589
      %v5419 = vmul.f32 %v5276, %v2590
      %v5420 = vmul.f32 %v5276, %v2591
      %v5421 = vmul.f32 %v5276, %v2592
      %v5422 = vmul.f32 %v5276, %v2593
      %v5423 = vmul.f32 %v5276, %v2594
      %v5424 = vmul.f32 %v5276, %v2595
      %v5425 = vmul.f32 %v5276, %v2596
      %v5426 = vmul.f32 %v5276, %v2597
      %v5427 = vmul.f32 %v5276, %v2598
      %v5428 = vmul.f32 %v5276, %v2599
      %v5429 = vmul.f32 %v5276, %v2600
      %v5430 = vmul.f32 %v5276, %v2601
      %v5431 = vmul.f32 %v5276, %v2602
      %v5432 = vmul.f32 %v5276, %v2603
      %v5433 = vmul.f32 %v5276, %v2604
      %v5434 = vmul.f32 %v5276, %v2605
      %v5435 = vmul.f32 %v5276, %v2606
      %v5436 = vmul.f32 %v5276, %v2607
      %v5437 = vadd.f32 %v5112, %v5277
      %v5438 = vadd.f32 %v5113, %v5278
      %v5439 = vadd.f32 %v5114, %v5279
      %v5440 = vadd.f32 %v5115, %v5280
      %v5441 = vadd.f32 %v5116, %v5281
      %v5442 = vadd.f32 %v5117, %v5282
      %v5443 = vadd.f32 %v5118, %v5283
      %v5444 = vadd.f32 %v5119, %v5284
      %v5445 = vadd.f32 %v5120, %v5285
      %v5446 = vadd.f32 %v5121, %v5286
      %v5447 = vadd.f32 %v5122, %v5287
      %v5448 = vadd.f32 %v5123, %v5288
      %v5449 = vadd.f32 %v5124, %v5289
      %v5450 = vadd.f32 %v5125, %v5290
      %v5451 = vadd.f32 %v5126, %v5291
      %v5452 = vadd.f32 %v5127, %v5292
      %v5453 = vadd.f32 %v5128, %v5293
      %v5454 = vadd.f32 %v5129, %v5294
      %v5455 = vadd.f32 %v5130, %v5295
      %v5456 = vadd.f32 %v5131, %v5296
      %v5457 = vadd.f32 %v5132, %v5297
      %v5458 = vadd.f32 %v5133, %v5298
      %v5459 = vadd.f32 %v5134, %v5299
      %v5460 = vadd.f32 %v5135, %v5300
      %v5461 = vadd.f32 %v5136, %v5301
      %v5462 = vadd.f32 %v5137, %v5302
      %v5463 = vadd.f32 %v5138, %v5303
      %v5464 = vadd.f32 %v5139, %v5304
      %v5465 = vadd.f32 %v5140, %v5305
      %v5466 = vadd.f32 %v5141, %v5306
      %v5467 = vadd.f32 %v5142, %v5307
      %v5468 = vadd.f32 %v5143, %v5308
      %v5469 = vadd.f32 %v5144, %v5309
      %v5470 = vadd.f32 %v5145, %v5310
      %v5471 = vadd.f32 %v5146, %v5311
      %v5472 = vadd.f32 %v5147, %v5312
      %v5473 = vadd.f32 %v5148, %v5313
      %v5474 = vadd.f32 %v5149, %v5314
      %v5475 = vadd.f32 %v5150, %v5315
      %v5476 = vadd.f32 %v5151, %v5316
      %v5477 = vadd.f32 %v5152, %v5317
      %v5478 = vadd.f32 %v5153, %v5318
      %v5479 = vadd.f32 %v5154, %v5319
      %v5480 = vadd.f32 %v5155, %v5320
      %v5481 = vadd.f32 %v5156, %v5321
      %v5482 = vadd.f32 %v5157, %v5322
      %v5483 = vadd.f32 %v5158, %v5323
      %v5484 = vadd.f32 %v5159, %v5324
      %v5485 = vadd.f32 %v5160, %v5325
      %v5486 = vadd.f32 %v5161, %v5326
      %v5487 = vadd.f32 %v5162, %v5327
      %v5488 = vadd.f32 %v5163, %v5328
      %v5489 = vadd.f32 %v5164, %v5329
      %v5490 = vadd.f32 %v5165, %v5330
      %v5491 = vadd.f32 %v5166, %v5331
      %v5492 = vadd.f32 %v5167, %v5332
      %v5493 = vadd.f32 %v5168, %v5333
      %v5494 = vadd.f32 %v5169, %v5334
      %v5495 = vadd.f32 %v5170, %v5335
      %v5496 = vadd.f32 %v5171, %v5336
      %v5497 = vadd.f32 %v5172, %v5337
      %v5498 = vadd.f32 %v5173, %v5338
      %v5499 = vadd.f32 %v5174, %v5339
      %v5500 = vadd.f32 %v5175, %v5340
      %v5501 = vadd.f32 %v5176, %v5341
      %v5502 = vadd.f32 %v5177, %v5342
      %v5503 = vadd.f32 %v5178, %v5343
      %v5504 = vadd.f32 %v5179, %v5344
      %v5505 = vadd.f32 %v5180, %v5345
      %v5506 = vadd.f32 %v5181, %v5346
      %v5507 = vadd.f32 %v5182, %v5347
      %v5508 = vadd.f32 %v5183, %v5348
      %v5509 = vadd.f32 %v5184, %v5349
      %v5510 = vadd.f32 %v5185, %v5350
      %v5511 = vadd.f32 %v5186, %v5351
      %v5512 = vadd.f32 %v5187, %v5352
      %v5513 = vadd.f32 %v5188, %v5353
      %v5514 = vadd.f32 %v5189, %v5354
      %v5515 = vadd.f32 %v5190, %v5355
      %v5516 = vadd.f32 %v5191, %v5356
      %v5517 = vadd.f32 %v5192, %v5357
      %v5518 = vadd.f32 %v5193, %v5358
      %v5519 = vadd.f32 %v5194, %v5359
      %v5520 = vadd.f32 %v5195, %v5360
      %v5521 = vadd.f32 %v5196, %v5361
      %v5522 = vadd.f32 %v5197, %v5362
      %v5523 = vadd.f32 %v5198, %v5363
      %v5524 = vadd.f32 %v5199, %v5364
      %v5525 = vadd.f32 %v5200, %v5365
      %v5526 = vadd.f32 %v5201, %v5366
      %v5527 = vadd.f32 %v5202, %v5367
      %v5528 = vadd.f32 %v5203, %v5368
      %v5529 = vadd.f32 %v5204, %v5369
      %v5530 = vadd.f32 %v5205, %v5370
      %v5531 = vadd.f32 %v5206, %v5371
      %v5532 = vadd.f32 %v5207, %v5372
      %v5533 = vadd.f32 %v5208, %v5373
      %v5534 = vadd.f32 %v5209, %v5374
      %v5535 = vadd.f32 %v5210, %v5375
      %v5536 = vadd.f32 %v5211, %v5376
      %v5537 = vadd.f32 %v5212, %v5377
      %v5538 = vadd.f32 %v5213, %v5378
      %v5539 = vadd.f32 %v5214, %v5379
      %v5540 = vadd.f32 %v5215, %v5380
      %v5541 = vadd.f32 %v5216, %v5381
      %v5542 = vadd.f32 %v5217, %v5382
      %v5543 = vadd.f32 %v5218, %v5383
      %v5544 = vadd.f32 %v5219, %v5384
      %v5545 = vadd.f32 %v5220, %v5385
      %v5546 = vadd.f32 %v5221, %v5386
      %v5547 = vadd.f32 %v5222, %v5387
      %v5548 = vadd.f32 %v5223, %v5388
      %v5549 = vadd.f32 %v5224, %v5389
      %v5550 = vadd.f32 %v5225, %v5390
      %v5551 = vadd.f32 %v5226, %v5391
      %v5552 = vadd.f32 %v5227, %v5392
      %v5553 = vadd.f32 %v5228, %v5393
      %v5554 = vadd.f32 %v5229, %v5394
      %v5555 = vadd.f32 %v5230, %v5395
      %v5556 = vadd.f32 %v5231, %v5396
      %v5557 = vadd.f32 %v5232, %v5397
      %v5558 = vadd.f32 %v5233, %v5398
      %v5559 = vadd.f32 %v5234, %v5399
      %v5560 = vadd.f32 %v5235, %v5400
      %v5561 = vadd.f32 %v5236, %v5401
      %v5562 = vadd.f32 %v5237, %v5402
      %v5563 = vadd.f32 %v5238, %v5403
      %v5564 = vadd.f32 %v5239, %v5404
      %v5565 = vadd.f32 %v5240, %v5405
      %v5566 = vadd.f32 %v5241, %v5406
      %v5567 = vadd.f32 %v5242, %v5407
      %v5568 = vadd.f32 %v5243, %v5408
      %v5569 = vadd.f32 %v5244, %v5409
      %v5570 = vadd.f32 %v5245, %v5410
      %v5571 = vadd.f32 %v5246, %v5411
      %v5572 = vadd.f32 %v5247, %v5412
      %v5573 = vadd.f32 %v5248, %v5413
      %v5574 = vadd.f32 %v5249, %v5414
      %v5575 = vadd.f32 %v5250, %v5415
      %v5576 = vadd.f32 %v5251, %v5416
      %v5577 = vadd.f32 %v5252, %v5417
      %v5578 = vadd.f32 %v5253, %v5418
      %v5579 = vadd.f32 %v5254, %v5419
      %v5580 = vadd.f32 %v5255, %v5420
      %v5581 = vadd.f32 %v5256, %v5421
      %v5582 = vadd.f32 %v5257, %v5422
      %v5583 = vadd.f32 %v5258, %v5423
      %v5584 = vadd.f32 %v5259, %v5424
      %v5585 = vadd.f32 %v5260, %v5425
      %v5586 = vadd.f32 %v5261, %v5426
      %v5587 = vadd.f32 %v5262, %v5427
      %v5588 = vadd.f32 %v5263, %v5428
      %v5589 = vadd.f32 %v5264, %v5429
      %v5590 = vadd.f32 %v5265, %v5430
      %v5591 = vadd.f32 %v5266, %v5431
      %v5592 = vadd.f32 %v5267, %v5432
      %v5593 = vadd.f32 %v5268, %v5433
      %v5594 = vadd.f32 %v5269, %v5434
      %v5595 = vadd.f32 %v5270, %v5435
      %v5596 = vadd.f32 %v5271, %v5436
      %v5757 = vrot.slane %v5437, 2
      %v5758 = vrot.slane %v5438, 2
      %v5759 = vsel %vm1243, %v5757, %v5758
      %v5760 = vrot.slane %v5439, 2
      %v5761 = vsel %vm1243, %v5758, %v5760
      %v5762 = vrot.slane %v5440, 2
      %v5763 = vsel %vm1243, %v5760, %v5762
      %v5764 = vrot.slane %v5441, 2
      %v5765 = vsel %vm1243, %v5762, %v5764
      %v5766 = vrot.slane %v5442, 2
      %v5767 = vrot.slane %v5443, 2
      %v5768 = vsel %vm1243, %v5766, %v5767
      %v5769 = vrot.slane %v5444, 2
      %v5770 = vsel %vm1243, %v5767, %v5769
      %v5771 = vrot.slane %v5445, 2
      %v5772 = vsel %vm1243, %v5769, %v5771
      %v5773 = vrot.slane %v5446, 2
      %v5774 = vsel %vm1243, %v5771, %v5773
      %v5775 = vrot.slane %v5447, 2
      %v5776 = vrot.slane %v5448, 2
      %v5777 = vsel %vm1243, %v5775, %v5776
      %v5778 = vrot.slane %v5449, 2
      %v5779 = vsel %vm1243, %v5776, %v5778
      %v5780 = vrot.slane %v5450, 2
      %v5781 = vsel %vm1243, %v5778, %v5780
      %v5782 = vrot.slane %v5451, 2
      %v5783 = vsel %vm1243, %v5780, %v5782
      %v5784 = vrot.slane %v5452, 2
      %v5785 = vrot.slane %v5453, 2
      %v5786 = vsel %vm1243, %v5784, %v5785
      %v5787 = vrot.slane %v5454, 2
      %v5788 = vsel %vm1243, %v5785, %v5787
      %v5789 = vrot.slane %v5455, 2
      %v5790 = vsel %vm1243, %v5787, %v5789
      %v5791 = vrot.slane %v5456, 2
      %v5792 = vsel %vm1243, %v5789, %v5791
      %v5793 = vrot.slane %v5457, 2
      %v5794 = vrot.slane %v5458, 2
      %v5795 = vsel %vm1243, %v5793, %v5794
      %v5796 = vrot.slane %v5459, 2
      %v5797 = vsel %vm1243, %v5794, %v5796
      %v5798 = vrot.slane %v5460, 2
      %v5799 = vsel %vm1243, %v5796, %v5798
      %v5800 = vrot.slane %v5461, 2
      %v5801 = vsel %vm1243, %v5798, %v5800
      %v5802 = vrot.slane %v5462, 2
      %v5803 = vrot.slane %v5463, 2
      %v5804 = vsel %vm1243, %v5802, %v5803
      %v5805 = vrot.slane %v5464, 2
      %v5806 = vsel %vm1243, %v5803, %v5805
      %v5807 = vrot.slane %v5465, 2
      %v5808 = vsel %vm1243, %v5805, %v5807
      %v5809 = vrot.slane %v5466, 2
      %v5810 = vsel %vm1243, %v5807, %v5809
      %v5811 = vrot.slane %v5467, 2
      %v5812 = vrot.slane %v5468, 2
      %v5813 = vsel %vm1243, %v5811, %v5812
      %v5814 = vrot.slane %v5469, 2
      %v5815 = vsel %vm1243, %v5812, %v5814
      %v5816 = vrot.slane %v5470, 2
      %v5817 = vsel %vm1243, %v5814, %v5816
      %v5818 = vrot.slane %v5471, 2
      %v5819 = vsel %vm1243, %v5816, %v5818
      %v5820 = vrot.slane %v5472, 2
      %v5821 = vrot.slane %v5473, 2
      %v5822 = vsel %vm1243, %v5820, %v5821
      %v5823 = vrot.slane %v5474, 2
      %v5824 = vsel %vm1243, %v5821, %v5823
      %v5825 = vrot.slane %v5475, 2
      %v5826 = vsel %vm1243, %v5823, %v5825
      %v5827 = vrot.slane %v5476, 2
      %v5828 = vsel %vm1243, %v5825, %v5827
      %v5829 = vrot.slane %v5477, 2
      %v5830 = vrot.slane %v5478, 2
      %v5831 = vsel %vm1243, %v5829, %v5830
      %v5832 = vrot.slane %v5479, 2
      %v5833 = vsel %vm1243, %v5830, %v5832
      %v5834 = vrot.slane %v5480, 2
      %v5835 = vsel %vm1243, %v5832, %v5834
      %v5836 = vrot.slane %v5481, 2
      %v5837 = vsel %vm1243, %v5834, %v5836
      %v5838 = vrot.slane %v5482, 2
      %v5839 = vrot.slane %v5483, 2
      %v5840 = vsel %vm1243, %v5838, %v5839
      %v5841 = vrot.slane %v5484, 2
      %v5842 = vsel %vm1243, %v5839, %v5841
      %v5843 = vrot.slane %v5485, 2
      %v5844 = vsel %vm1243, %v5841, %v5843
      %v5845 = vrot.slane %v5486, 2
      %v5846 = vsel %vm1243, %v5843, %v5845
      %v5847 = vrot.slane %v5487, 2
      %v5848 = vrot.slane %v5488, 2
      %v5849 = vsel %vm1243, %v5847, %v5848
      %v5850 = vrot.slane %v5489, 2
      %v5851 = vsel %vm1243, %v5848, %v5850
      %v5852 = vrot.slane %v5490, 2
      %v5853 = vsel %vm1243, %v5850, %v5852
      %v5854 = vrot.slane %v5491, 2
      %v5855 = vsel %vm1243, %v5852, %v5854
      %v5856 = vrot.slane %v5492, 2
      %v5857 = vrot.slane %v5493, 2
      %v5858 = vsel %vm1243, %v5856, %v5857
      %v5859 = vrot.slane %v5494, 2
      %v5860 = vsel %vm1243, %v5857, %v5859
      %v5861 = vrot.slane %v5495, 2
      %v5862 = vsel %vm1243, %v5859, %v5861
      %v5863 = vrot.slane %v5496, 2
      %v5864 = vsel %vm1243, %v5861, %v5863
      %v5865 = vrot.slane %v5497, 2
      %v5866 = vrot.slane %v5498, 2
      %v5867 = vsel %vm1243, %v5865, %v5866
      %v5868 = vrot.slane %v5499, 2
      %v5869 = vsel %vm1243, %v5866, %v5868
      %v5870 = vrot.slane %v5500, 2
      %v5871 = vsel %vm1243, %v5868, %v5870
      %v5872 = vrot.slane %v5501, 2
      %v5873 = vsel %vm1243, %v5870, %v5872
      %v5874 = vrot.slane %v5502, 2
      %v5875 = vrot.slane %v5503, 2
      %v5876 = vsel %vm1243, %v5874, %v5875
      %v5877 = vrot.slane %v5504, 2
      %v5878 = vsel %vm1243, %v5875, %v5877
      %v5879 = vrot.slane %v5505, 2
      %v5880 = vsel %vm1243, %v5877, %v5879
      %v5881 = vrot.slane %v5506, 2
      %v5882 = vsel %vm1243, %v5879, %v5881
      %v5883 = vrot.slane %v5507, 2
      %v5884 = vrot.slane %v5508, 2
      %v5885 = vsel %vm1243, %v5883, %v5884
      %v5886 = vrot.slane %v5509, 2
      %v5887 = vsel %vm1243, %v5884, %v5886
      %v5888 = vrot.slane %v5510, 2
      %v5889 = vsel %vm1243, %v5886, %v5888
      %v5890 = vrot.slane %v5511, 2
      %v5891 = vsel %vm1243, %v5888, %v5890
      %v5892 = vrot.slane %v5512, 2
      %v5893 = vrot.slane %v5513, 2
      %v5894 = vsel %vm1243, %v5892, %v5893
      %v5895 = vrot.slane %v5514, 2
      %v5896 = vsel %vm1243, %v5893, %v5895
      %v5897 = vrot.slane %v5515, 2
      %v5898 = vsel %vm1243, %v5895, %v5897
      %v5899 = vrot.slane %v5516, 2
      %v5900 = vsel %vm1243, %v5897, %v5899
      %v5901 = vrot.slane %v5517, 2
      %v5902 = vrot.slane %v5518, 2
      %v5903 = vsel %vm1243, %v5901, %v5902
      %v5904 = vrot.slane %v5519, 2
      %v5905 = vsel %vm1243, %v5902, %v5904
      %v5906 = vrot.slane %v5520, 2
      %v5907 = vsel %vm1243, %v5904, %v5906
      %v5908 = vrot.slane %v5521, 2
      %v5909 = vsel %vm1243, %v5906, %v5908
      %v5910 = vrot.slane %v5522, 2
      %v5911 = vrot.slane %v5523, 2
      %v5912 = vsel %vm1243, %v5910, %v5911
      %v5913 = vrot.slane %v5524, 2
      %v5914 = vsel %vm1243, %v5911, %v5913
      %v5915 = vrot.slane %v5525, 2
      %v5916 = vsel %vm1243, %v5913, %v5915
      %v5917 = vrot.slane %v5526, 2
      %v5918 = vsel %vm1243, %v5915, %v5917
      %v5919 = vrot.slane %v5527, 2
      %v5920 = vrot.slane %v5528, 2
      %v5921 = vsel %vm1243, %v5919, %v5920
      %v5922 = vrot.slane %v5529, 2
      %v5923 = vsel %vm1243, %v5920, %v5922
      %v5924 = vrot.slane %v5530, 2
      %v5925 = vsel %vm1243, %v5922, %v5924
      %v5926 = vrot.slane %v5531, 2
      %v5927 = vsel %vm1243, %v5924, %v5926
      %v5928 = vrot.slane %v5532, 2
      %v5929 = vrot.slane %v5533, 2
      %v5930 = vsel %vm1243, %v5928, %v5929
      %v5931 = vrot.slane %v5534, 2
      %v5932 = vsel %vm1243, %v5929, %v5931
      %v5933 = vrot.slane %v5535, 2
      %v5934 = vsel %vm1243, %v5931, %v5933
      %v5935 = vrot.slane %v5536, 2
      %v5936 = vsel %vm1243, %v5933, %v5935
      %v5937 = vrot.slane %v5537, 2
      %v5938 = vrot.slane %v5538, 2
      %v5939 = vsel %vm1243, %v5937, %v5938
      %v5940 = vrot.slane %v5539, 2
      %v5941 = vsel %vm1243, %v5938, %v5940
      %v5942 = vrot.slane %v5540, 2
      %v5943 = vsel %vm1243, %v5940, %v5942
      %v5944 = vrot.slane %v5541, 2
      %v5945 = vsel %vm1243, %v5942, %v5944
      %v5946 = vrot.slane %v5542, 2
      %v5947 = vrot.slane %v5543, 2
      %v5948 = vsel %vm1243, %v5946, %v5947
      %v5949 = vrot.slane %v5544, 2
      %v5950 = vsel %vm1243, %v5947, %v5949
      %v5951 = vrot.slane %v5545, 2
      %v5952 = vsel %vm1243, %v5949, %v5951
      %v5953 = vrot.slane %v5546, 2
      %v5954 = vsel %vm1243, %v5951, %v5953
      %v5955 = vrot.slane %v5547, 2
      %v5956 = vrot.slane %v5548, 2
      %v5957 = vsel %vm1243, %v5955, %v5956
      %v5958 = vrot.slane %v5549, 2
      %v5959 = vsel %vm1243, %v5956, %v5958
      %v5960 = vrot.slane %v5550, 2
      %v5961 = vsel %vm1243, %v5958, %v5960
      %v5962 = vrot.slane %v5551, 2
      %v5963 = vsel %vm1243, %v5960, %v5962
      %v5964 = vrot.slane %v5552, 2
      %v5965 = vrot.slane %v5553, 2
      %v5966 = vsel %vm1243, %v5964, %v5965
      %v5967 = vrot.slane %v5554, 2
      %v5968 = vsel %vm1243, %v5965, %v5967
      %v5969 = vrot.slane %v5555, 2
      %v5970 = vsel %vm1243, %v5967, %v5969
      %v5971 = vrot.slane %v5556, 2
      %v5972 = vsel %vm1243, %v5969, %v5971
      %v5973 = vrot.slane %v5557, 2
      %v5974 = vrot.slane %v5558, 2
      %v5975 = vsel %vm1243, %v5973, %v5974
      %v5976 = vrot.slane %v5559, 2
      %v5977 = vsel %vm1243, %v5974, %v5976
      %v5978 = vrot.slane %v5560, 2
      %v5979 = vsel %vm1243, %v5976, %v5978
      %v5980 = vrot.slane %v5561, 2
      %v5981 = vsel %vm1243, %v5978, %v5980
      %v5982 = vrot.slane %v5562, 2
      %v5983 = vrot.slane %v5563, 2
      %v5984 = vsel %vm1243, %v5982, %v5983
      %v5985 = vrot.slane %v5564, 2
      %v5986 = vsel %vm1243, %v5983, %v5985
      %v5987 = vrot.slane %v5565, 2
      %v5988 = vsel %vm1243, %v5985, %v5987
      %v5989 = vrot.slane %v5566, 2
      %v5990 = vsel %vm1243, %v5987, %v5989
      %v5991 = vrot.slane %v5567, 2
      %v5992 = vrot.slane %v5568, 2
      %v5993 = vsel %vm1243, %v5991, %v5992
      %v5994 = vrot.slane %v5569, 2
      %v5995 = vsel %vm1243, %v5992, %v5994
      %v5996 = vrot.slane %v5570, 2
      %v5997 = vsel %vm1243, %v5994, %v5996
      %v5998 = vrot.slane %v5571, 2
      %v5999 = vsel %vm1243, %v5996, %v5998
      %v6000 = vrot.slane %v5572, 2
      %v6001 = vrot.slane %v5573, 2
      %v6002 = vsel %vm1243, %v6000, %v6001
      %v6003 = vrot.slane %v5574, 2
      %v6004 = vsel %vm1243, %v6001, %v6003
      %v6005 = vrot.slane %v5575, 2
      %v6006 = vsel %vm1243, %v6003, %v6005
      %v6007 = vrot.slane %v5576, 2
      %v6008 = vsel %vm1243, %v6005, %v6007
      %v6009 = vrot.slane %v5577, 2
      %v6010 = vrot.slane %v5578, 2
      %v6011 = vsel %vm1243, %v6009, %v6010
      %v6012 = vrot.slane %v5579, 2
      %v6013 = vsel %vm1243, %v6010, %v6012
      %v6014 = vrot.slane %v5580, 2
      %v6015 = vsel %vm1243, %v6012, %v6014
      %v6016 = vrot.slane %v5581, 2
      %v6017 = vsel %vm1243, %v6014, %v6016
      %v6018 = vrot.slane %v5582, 2
      %v6019 = vrot.slane %v5583, 2
      %v6020 = vsel %vm1243, %v6018, %v6019
      %v6021 = vrot.slane %v5584, 2
      %v6022 = vsel %vm1243, %v6019, %v6021
      %v6023 = vrot.slane %v5585, 2
      %v6024 = vsel %vm1243, %v6021, %v6023
      %v6025 = vrot.slane %v5586, 2
      %v6026 = vsel %vm1243, %v6023, %v6025
      %v6027 = vrot.slane %v5587, 2
      %v6028 = vrot.slane %v5588, 2
      %v6029 = vsel %vm1243, %v6027, %v6028
      %v6030 = vrot.slane %v5589, 2
      %v6031 = vsel %vm1243, %v6028, %v6030
      %v6032 = vrot.slane %v5590, 2
      %v6033 = vsel %vm1243, %v6030, %v6032
      %v6034 = vrot.slane %v5591, 2
      %v6035 = vsel %vm1243, %v6032, %v6034
      %v6036 = vrot.slane %v5592, 2
      %v6037 = vrot.slane %v5593, 2
      %v6038 = vsel %vm1243, %v6036, %v6037
      %v6039 = vrot.slane %v5594, 2
      %v6040 = vsel %vm1243, %v6037, %v6039
      %v6041 = vrot.slane %v5595, 2
      %v6042 = vsel %vm1243, %v6039, %v6041
      %v6043 = vrot.slane %v5596, 2
      %v6044 = vsel %vm1243, %v6041, %v6043
      %v6173 = vadd.f32 %v4654, %v5759
      %v6174 = vadd.f32 %v4655, %v5761
      %v6175 = vadd.f32 %v4656, %v5763
      %v6176 = vadd.f32 %v4657, %v5765
      %v6177 = vadd.f32 %v4658, %v5768
      %v6178 = vadd.f32 %v4659, %v5770
      %v6179 = vadd.f32 %v4660, %v5772
      %v6180 = vadd.f32 %v4661, %v5774
      %v6181 = vadd.f32 %v4662, %v5777
      %v6182 = vadd.f32 %v4663, %v5779
      %v6183 = vadd.f32 %v4664, %v5781
      %v6184 = vadd.f32 %v4665, %v5783
      %v6185 = vadd.f32 %v4666, %v5786
      %v6186 = vadd.f32 %v4667, %v5788
      %v6187 = vadd.f32 %v4668, %v5790
      %v6188 = vadd.f32 %v4669, %v5792
      %v6189 = vadd.f32 %v4670, %v5795
      %v6190 = vadd.f32 %v4671, %v5797
      %v6191 = vadd.f32 %v4672, %v5799
      %v6192 = vadd.f32 %v4673, %v5801
      %v6193 = vadd.f32 %v4674, %v5804
      %v6194 = vadd.f32 %v4675, %v5806
      %v6195 = vadd.f32 %v4676, %v5808
      %v6196 = vadd.f32 %v4677, %v5810
      %v6197 = vadd.f32 %v4678, %v5813
      %v6198 = vadd.f32 %v4679, %v5815
      %v6199 = vadd.f32 %v4680, %v5817
      %v6200 = vadd.f32 %v4681, %v5819
      %v6201 = vadd.f32 %v4682, %v5822
      %v6202 = vadd.f32 %v4683, %v5824
      %v6203 = vadd.f32 %v4684, %v5826
      %v6204 = vadd.f32 %v4685, %v5828
      %v6205 = vadd.f32 %v4686, %v5831
      %v6206 = vadd.f32 %v4687, %v5833
      %v6207 = vadd.f32 %v4688, %v5835
      %v6208 = vadd.f32 %v4689, %v5837
      %v6209 = vadd.f32 %v4690, %v5840
      %v6210 = vadd.f32 %v4691, %v5842
      %v6211 = vadd.f32 %v4692, %v5844
      %v6212 = vadd.f32 %v4693, %v5846
      %v6213 = vadd.f32 %v4694, %v5849
      %v6214 = vadd.f32 %v4695, %v5851
      %v6215 = vadd.f32 %v4696, %v5853
      %v6216 = vadd.f32 %v4697, %v5855
      %v6217 = vadd.f32 %v4698, %v5858
      %v6218 = vadd.f32 %v4699, %v5860
      %v6219 = vadd.f32 %v4700, %v5862
      %v6220 = vadd.f32 %v4701, %v5864
      %v6221 = vadd.f32 %v4702, %v5867
      %v6222 = vadd.f32 %v4703, %v5869
      %v6223 = vadd.f32 %v4704, %v5871
      %v6224 = vadd.f32 %v4705, %v5873
      %v6225 = vadd.f32 %v4706, %v5876
      %v6226 = vadd.f32 %v4707, %v5878
      %v6227 = vadd.f32 %v4708, %v5880
      %v6228 = vadd.f32 %v4709, %v5882
      %v6229 = vadd.f32 %v4710, %v5885
      %v6230 = vadd.f32 %v4711, %v5887
      %v6231 = vadd.f32 %v4712, %v5889
      %v6232 = vadd.f32 %v4713, %v5891
      %v6233 = vadd.f32 %v4714, %v5894
      %v6234 = vadd.f32 %v4715, %v5896
      %v6235 = vadd.f32 %v4716, %v5898
      %v6236 = vadd.f32 %v4717, %v5900
      %v6237 = vadd.f32 %v4718, %v5903
      %v6238 = vadd.f32 %v4719, %v5905
      %v6239 = vadd.f32 %v4720, %v5907
      %v6240 = vadd.f32 %v4721, %v5909
      %v6241 = vadd.f32 %v4722, %v5912
      %v6242 = vadd.f32 %v4723, %v5914
      %v6243 = vadd.f32 %v4724, %v5916
      %v6244 = vadd.f32 %v4725, %v5918
      %v6245 = vadd.f32 %v4726, %v5921
      %v6246 = vadd.f32 %v4727, %v5923
      %v6247 = vadd.f32 %v4728, %v5925
      %v6248 = vadd.f32 %v4729, %v5927
      %v6249 = vadd.f32 %v4730, %v5930
      %v6250 = vadd.f32 %v4731, %v5932
      %v6251 = vadd.f32 %v4732, %v5934
      %v6252 = vadd.f32 %v4733, %v5936
      %v6253 = vadd.f32 %v4734, %v5939
      %v6254 = vadd.f32 %v4735, %v5941
      %v6255 = vadd.f32 %v4736, %v5943
      %v6256 = vadd.f32 %v4737, %v5945
      %v6257 = vadd.f32 %v4738, %v5948
      %v6258 = vadd.f32 %v4739, %v5950
      %v6259 = vadd.f32 %v4740, %v5952
      %v6260 = vadd.f32 %v4741, %v5954
      %v6261 = vadd.f32 %v4742, %v5957
      %v6262 = vadd.f32 %v4743, %v5959
      %v6263 = vadd.f32 %v4744, %v5961
      %v6264 = vadd.f32 %v4745, %v5963
      %v6265 = vadd.f32 %v4746, %v5966
      %v6266 = vadd.f32 %v4747, %v5968
      %v6267 = vadd.f32 %v4748, %v5970
      %v6268 = vadd.f32 %v4749, %v5972
      %v6269 = vadd.f32 %v4750, %v5975
      %v6270 = vadd.f32 %v4751, %v5977
      %v6271 = vadd.f32 %v4752, %v5979
      %v6272 = vadd.f32 %v4753, %v5981
      %v6273 = vadd.f32 %v4754, %v5984
      %v6274 = vadd.f32 %v4755, %v5986
      %v6275 = vadd.f32 %v4756, %v5988
      %v6276 = vadd.f32 %v4757, %v5990
      %v6277 = vadd.f32 %v4758, %v5993
      %v6278 = vadd.f32 %v4759, %v5995
      %v6279 = vadd.f32 %v4760, %v5997
      %v6280 = vadd.f32 %v4761, %v5999
      %v6281 = vadd.f32 %v4762, %v6002
      %v6282 = vadd.f32 %v4763, %v6004
      %v6283 = vadd.f32 %v4764, %v6006
      %v6284 = vadd.f32 %v4765, %v6008
      %v6285 = vadd.f32 %v4766, %v6011
      %v6286 = vadd.f32 %v4767, %v6013
      %v6287 = vadd.f32 %v4768, %v6015
      %v6288 = vadd.f32 %v4769, %v6017
      %v6289 = vadd.f32 %v4770, %v6020
      %v6290 = vadd.f32 %v4771, %v6022
      %v6291 = vadd.f32 %v4772, %v6024
      %v6292 = vadd.f32 %v4773, %v6026
      %v6293 = vadd.f32 %v4774, %v6029
      %v6294 = vadd.f32 %v4775, %v6031
      %v6295 = vadd.f32 %v4776, %v6033
      %v6296 = vadd.f32 %v4777, %v6035
      %v6297 = vadd.f32 %v4778, %v6038
      %v6298 = vadd.f32 %v4779, %v6040
      %v6299 = vadd.f32 %v4780, %v6042
      %v6300 = vadd.f32 %v4781, %v6044
      %v6301 = vld [vmem:[%s3] sm:$0x1]
      %v6303 = vlaneseq
      %v6304 = vshrl.u32 %v6303, 7
      %v6305 = vsub.s32 0, %v6304
      %v6306 = vrot.slane %v6301, %v6305
      %v6308 = vadd.f32 %v6173, %v6306
      %v6309 = vadd.f32 %v6174, %v6306
      %v6310 = vadd.f32 %v6175, %v6306
      %v6311 = vadd.f32 %v6176, %v6306
      %v6312 = vadd.f32 %v6177, %v6306
      %v6313 = vadd.f32 %v6178, %v6306
      %v6314 = vadd.f32 %v6179, %v6306
      %v6315 = vadd.f32 %v6180, %v6306
      %v6316 = vadd.f32 %v6181, %v6306
      %v6317 = vadd.f32 %v6182, %v6306
      %v6318 = vadd.f32 %v6183, %v6306
      %v6319 = vadd.f32 %v6184, %v6306
      %v6320 = vadd.f32 %v6185, %v6306
      %v6321 = vadd.f32 %v6186, %v6306
      %v6322 = vadd.f32 %v6187, %v6306
      %v6323 = vadd.f32 %v6188, %v6306
      %v6324 = vadd.f32 %v6189, %v6306
      %v6325 = vadd.f32 %v6190, %v6306
      %v6326 = vadd.f32 %v6191, %v6306
      %v6327 = vadd.f32 %v6192, %v6306
      %v6328 = vadd.f32 %v6193, %v6306
      %v6329 = vadd.f32 %v6194, %v6306
      %v6330 = vadd.f32 %v6195, %v6306
      %v6331 = vadd.f32 %v6196, %v6306
      %v6332 = vadd.f32 %v6197, %v6306
      %v6333 = vadd.f32 %v6198, %v6306
      %v6334 = vadd.f32 %v6199, %v6306
      %v6335 = vadd.f32 %v6200, %v6306
      %v6336 = vadd.f32 %v6201, %v6306
      %v6337 = vadd.f32 %v6202, %v6306
      %v6338 = vadd.f32 %v6203, %v6306
      %v6339 = vadd.f32 %v6204, %v6306
      %v6340 = vadd.f32 %v6205, %v6306
      %v6341 = vadd.f32 %v6206, %v6306
      %v6342 = vadd.f32 %v6207, %v6306
      %v6343 = vadd.f32 %v6208, %v6306
      %v6344 = vadd.f32 %v6209, %v6306
      %v6345 = vadd.f32 %v6210, %v6306
      %v6346 = vadd.f32 %v6211, %v6306
      %v6347 = vadd.f32 %v6212, %v6306
      %v6348 = vadd.f32 %v6213, %v6306
      %v6349 = vadd.f32 %v6214, %v6306
      %v6350 = vadd.f32 %v6215, %v6306
      %v6351 = vadd.f32 %v6216, %v6306
      %v6352 = vadd.f32 %v6217, %v6306
      %v6353 = vadd.f32 %v6218, %v6306
      %v6354 = vadd.f32 %v6219, %v6306
      %v6355 = vadd.f32 %v6220, %v6306
      %v6356 = vadd.f32 %v6221, %v6306
      %v6357 = vadd.f32 %v6222, %v6306
      %v6358 = vadd.f32 %v6223, %v6306
      %v6359 = vadd.f32 %v6224, %v6306
      %v6360 = vadd.f32 %v6225, %v6306
      %v6361 = vadd.f32 %v6226, %v6306
      %v6362 = vadd.f32 %v6227, %v6306
      %v6363 = vadd.f32 %v6228, %v6306
      %v6364 = vadd.f32 %v6229, %v6306
      %v6365 = vadd.f32 %v6230, %v6306
      %v6366 = vadd.f32 %v6231, %v6306
      %v6367 = vadd.f32 %v6232, %v6306
      %v6368 = vadd.f32 %v6233, %v6306
      %v6369 = vadd.f32 %v6234, %v6306
      %v6370 = vadd.f32 %v6235, %v6306
      %v6371 = vadd.f32 %v6236, %v6306
      %v6372 = vadd.f32 %v6237, %v6306
      %v6373 = vadd.f32 %v6238, %v6306
      %v6374 = vadd.f32 %v6239, %v6306
      %v6375 = vadd.f32 %v6240, %v6306
      %v6376 = vadd.f32 %v6241, %v6306
      %v6377 = vadd.f32 %v6242, %v6306
      %v6378 = vadd.f32 %v6243, %v6306
      %v6379 = vadd.f32 %v6244, %v6306
      %v6380 = vadd.f32 %v6245, %v6306
      %v6381 = vadd.f32 %v6246, %v6306
      %v6382 = vadd.f32 %v6247, %v6306
      %v6383 = vadd.f32 %v6248, %v6306
      %v6384 = vadd.f32 %v6249, %v6306
      %v6385 = vadd.f32 %v6250, %v6306
      %v6386 = vadd.f32 %v6251, %v6306
      %v6387 = vadd.f32 %v6252, %v6306
      %v6388 = vadd.f32 %v6253, %v6306
      %v6389 = vadd.f32 %v6254, %v6306
      %v6390 = vadd.f32 %v6255, %v6306
      %v6391 = vadd.f32 %v6256, %v6306
      %v6392 = vadd.f32 %v6257, %v6306
      %v6393 = vadd.f32 %v6258, %v6306
      %v6394 = vadd.f32 %v6259, %v6306
      %v6395 = vadd.f32 %v6260, %v6306
      %v6396 = vadd.f32 %v6261, %v6306
      %v6397 = vadd.f32 %v6262, %v6306
      %v6398 = vadd.f32 %v6263, %v6306
      %v6399 = vadd.f32 %v6264, %v6306
      %v6400 = vadd.f32 %v6265, %v6306
      %v6401 = vadd.f32 %v6266, %v6306
      %v6402 = vadd.f32 %v6267, %v6306
      %v6403 = vadd.f32 %v6268, %v6306
      %v6404 = vadd.f32 %v6269, %v6306
      %v6405 = vadd.f32 %v6270, %v6306
      %v6406 = vadd.f32 %v6271, %v6306
      %v6407 = vadd.f32 %v6272, %v6306
      %v6408 = vadd.f32 %v6273, %v6306
      %v6409 = vadd.f32 %v6274, %v6306
      %v6410 = vadd.f32 %v6275, %v6306
      %v6411 = vadd.f32 %v6276, %v6306
      %v6412 = vadd.f32 %v6277, %v6306
      %v6413 = vadd.f32 %v6278, %v6306
      %v6414 = vadd.f32 %v6279, %v6306
      %v6415 = vadd.f32 %v6280, %v6306
      %v6416 = vadd.f32 %v6281, %v6306
      %v6417 = vadd.f32 %v6282, %v6306
      %v6418 = vadd.f32 %v6283, %v6306
      %v6419 = vadd.f32 %v6284, %v6306
      %v6420 = vadd.f32 %v6285, %v6306
      %v6421 = vadd.f32 %v6286, %v6306
      %v6422 = vadd.f32 %v6287, %v6306
      %v6423 = vadd.f32 %v6288, %v6306
      %v6424 = vadd.f32 %v6289, %v6306
      %v6425 = vadd.f32 %v6290, %v6306
      %v6426 = vadd.f32 %v6291, %v6306
      %v6427 = vadd.f32 %v6292, %v6306
      %v6428 = vadd.f32 %v6293, %v6306
      %v6429 = vadd.f32 %v6294, %v6306
      %v6430 = vadd.f32 %v6295, %v6306
      %v6431 = vadd.f32 %v6296, %v6306
      %v6432 = vadd.f32 %v6297, %v6306
      %v6433 = vadd.f32 %v6298, %v6306
      %v6434 = vadd.f32 %v6299, %v6306
      %v6435 = vadd.f32 %v6300, %v6306
      %v6436 = vsub.f32 %v6308, %v1264
      %v6437 = vsub.f32 %v6309, %v1266
      %v6438 = vsub.f32 %v6310, %v1268
      %v6439 = vsub.f32 %v6311, %v1270
      %v6440 = vsub.f32 %v6312, %v1273
      %v6441 = vsub.f32 %v6313, %v1275
      %v6442 = vsub.f32 %v6314, %v1277
      %v6443 = vsub.f32 %v6315, %v1279
      %v6444 = vsub.f32 %v6316, %v1282
      %v6445 = vsub.f32 %v6317, %v1284
      %v6446 = vsub.f32 %v6318, %v1286
      %v6447 = vsub.f32 %v6319, %v1288
      %v6448 = vsub.f32 %v6320, %v1291
      %v6449 = vsub.f32 %v6321, %v1293
      %v6450 = vsub.f32 %v6322, %v1295
      %v6451 = vsub.f32 %v6323, %v1297
      %v6452 = vsub.f32 %v6324, %v1300
      %v6453 = vsub.f32 %v6325, %v1302
      %v6454 = vsub.f32 %v6326, %v1304
      %v6455 = vsub.f32 %v6327, %v1306
      %v6456 = vsub.f32 %v6328, %v1309
      %v6457 = vsub.f32 %v6329, %v1311
      %v6458 = vsub.f32 %v6330, %v1313
      %v6459 = vsub.f32 %v6331, %v1315
      %v6460 = vsub.f32 %v6332, %v1318
      %v6461 = vsub.f32 %v6333, %v1320
      %v6462 = vsub.f32 %v6334, %v1322
      %v6463 = vsub.f32 %v6335, %v1324
      %v6464 = vsub.f32 %v6336, %v1327
      %v6465 = vsub.f32 %v6337, %v1329
      %v6466 = vsub.f32 %v6338, %v1331
      %v6467 = vsub.f32 %v6339, %v1333
      %v6468 = vsub.f32 %v6340, %v1336
      %v6469 = vsub.f32 %v6341, %v1338
      %v6470 = vsub.f32 %v6342, %v1340
      %v6471 = vsub.f32 %v6343, %v1342
      %v6472 = vsub.f32 %v6344, %v1345
      %v6473 = vsub.f32 %v6345, %v1347
      %v6474 = vsub.f32 %v6346, %v1349
      %v6475 = vsub.f32 %v6347, %v1351
      %v6476 = vsub.f32 %v6348, %v1354
      %v6477 = vsub.f32 %v6349, %v1356
      %v6478 = vsub.f32 %v6350, %v1358
      %v6479 = vsub.f32 %v6351, %v1360
      %v6480 = vsub.f32 %v6352, %v1363
      %v6481 = vsub.f32 %v6353, %v1365
      %v6482 = vsub.f32 %v6354, %v1367
      %v6483 = vsub.f32 %v6355, %v1369
      %v6484 = vsub.f32 %v6356, %v1372
      %v6485 = vsub.f32 %v6357, %v1374
      %v6486 = vsub.f32 %v6358, %v1376
      %v6487 = vsub.f32 %v6359, %v1378
      %v6488 = vsub.f32 %v6360, %v1381
      %v6489 = vsub.f32 %v6361, %v1383
      %v6490 = vsub.f32 %v6362, %v1385
      %v6491 = vsub.f32 %v6363, %v1387
      %v6492 = vsub.f32 %v6364, %v1390
      %v6493 = vsub.f32 %v6365, %v1392
      %v6494 = vsub.f32 %v6366, %v1394
      %v6495 = vsub.f32 %v6367, %v1396
      %v6496 = vsub.f32 %v6368, %v1399
      %v6497 = vsub.f32 %v6369, %v1401
      %v6498 = vsub.f32 %v6370, %v1403
      %v6499 = vsub.f32 %v6371, %v1405
      %v6500 = vsub.f32 %v6372, %v1408
      %v6501 = vsub.f32 %v6373, %v1410
      %v6502 = vsub.f32 %v6374, %v1412
      %v6503 = vsub.f32 %v6375, %v1414
      %v6504 = vsub.f32 %v6376, %v1417
      %v6505 = vsub.f32 %v6377, %v1419
      %v6506 = vsub.f32 %v6378, %v1421
      %v6507 = vsub.f32 %v6379, %v1423
      %v6508 = vsub.f32 %v6380, %v1426
      %v6509 = vsub.f32 %v6381, %v1428
      %v6510 = vsub.f32 %v6382, %v1430
      %v6511 = vsub.f32 %v6383, %v1432
      %v6512 = vsub.f32 %v6384, %v1435
      %v6513 = vsub.f32 %v6385, %v1437
      %v6514 = vsub.f32 %v6386, %v1439
      %v6515 = vsub.f32 %v6387, %v1441
      %v6516 = vsub.f32 %v6388, %v1444
      %v6517 = vsub.f32 %v6389, %v1446
      %v6518 = vsub.f32 %v6390, %v1448
      %v6519 = vsub.f32 %v6391, %v1450
      %v6520 = vsub.f32 %v6392, %v1453
      %v6521 = vsub.f32 %v6393, %v1455
      %v6522 = vsub.f32 %v6394, %v1457
      %v6523 = vsub.f32 %v6395, %v1459
      %v6524 = vsub.f32 %v6396, %v1462
      %v6525 = vsub.f32 %v6397, %v1464
      %v6526 = vsub.f32 %v6398, %v1466
      %v6527 = vsub.f32 %v6399, %v1468
      %v6528 = vsub.f32 %v6400, %v1471
      %v6529 = vsub.f32 %v6401, %v1473
      %v6530 = vsub.f32 %v6402, %v1475
      %v6531 = vsub.f32 %v6403, %v1477
      %v6532 = vsub.f32 %v6404, %v1480
      %v6533 = vsub.f32 %v6405, %v1482
      %v6534 = vsub.f32 %v6406, %v1484
      %v6535 = vsub.f32 %v6407, %v1486
      %v6536 = vsub.f32 %v6408, %v1489
      %v6537 = vsub.f32 %v6409, %v1491
      %v6538 = vsub.f32 %v6410, %v1493
      %v6539 = vsub.f32 %v6411, %v1495
      %v6540 = vsub.f32 %v6412, %v1498
      %v6541 = vsub.f32 %v6413, %v1500
      %v6542 = vsub.f32 %v6414, %v1502
      %v6543 = vsub.f32 %v6415, %v1504
      %v6544 = vsub.f32 %v6416, %v1507
      %v6545 = vsub.f32 %v6417, %v1509
      %v6546 = vsub.f32 %v6418, %v1511
      %v6547 = vsub.f32 %v6419, %v1513
      %v6548 = vsub.f32 %v6420, %v1516
      %v6549 = vsub.f32 %v6421, %v1518
      %v6550 = vsub.f32 %v6422, %v1520
      %v6551 = vsub.f32 %v6423, %v1522
      %v6552 = vsub.f32 %v6424, %v1525
      %v6553 = vsub.f32 %v6425, %v1527
      %v6554 = vsub.f32 %v6426, %v1529
      %v6555 = vsub.f32 %v6427, %v1531
      %v6556 = vsub.f32 %v6428, %v1534
      %v6557 = vsub.f32 %v6429, %v1536
      %v6558 = vsub.f32 %v6430, %v1538
      %v6559 = vsub.f32 %v6431, %v1540
      %v6560 = vsub.f32 %v6432, %v1543
      %v6561 = vsub.f32 %v6433, %v1545
      %v6562 = vsub.f32 %v6434, %v1547
      %v6563 = vsub.f32 %v6435, %v1549
      %vm6564 = vcmask 31744
      %6565 = vst.msk [vmem:[%s197] sm:$0xff] %vm6564, %v6436
      %6566 = vst.msk [vmem:[%s197 + $0x8] sm:$0xff] %vm6564, %v6437
      %6567 = vst.msk [vmem:[%s197 + $0x10] sm:$0xff] %vm6564, %v6438
      %6568 = vst.msk [vmem:[%s197 + $0x18] sm:$0xff] %vm6564, %v6439
      %6569 = vst.msk [vmem:[%s197 + $0x20] sm:$0xff] %vm6564, %v6440
      %6570 = vst.msk [vmem:[%s197 + $0x28] sm:$0xff] %vm6564, %v6441
      %6571 = vst.msk [vmem:[%s197 + $0x30] sm:$0xff] %vm6564, %v6442
      %6572 = vst.msk [vmem:[%s197 + $0x38] sm:$0xff] %vm6564, %v6443
      %6573 = vst.msk [vmem:[%s197 + $0x40] sm:$0xff] %vm6564, %v6444
      %6574 = vst.msk [vmem:[%s197 + $0x48] sm:$0xff] %vm6564, %v6445
      %6575 = vst.msk [vmem:[%s197 + $0x50] sm:$0xff] %vm6564, %v6446
      %6576 = vst.msk [vmem:[%s197 + $0x58] sm:$0xff] %vm6564, %v6447
      %6577 = vst.msk [vmem:[%s197 + $0x60] sm:$0xff] %vm6564, %v6448
      %6578 = vst.msk [vmem:[%s197 + $0x68] sm:$0xff] %vm6564, %v6449
      %6579 = vst.msk [vmem:[%s197 + $0x70] sm:$0xff] %vm6564, %v6450
      %6580 = vst.msk [vmem:[%s197 + $0x78] sm:$0xff] %vm6564, %v6451
      %6581 = vst.msk [vmem:[%s197 + $0x80] sm:$0xff] %vm6564, %v6452
      %6582 = vst.msk [vmem:[%s197 + $0x88] sm:$0xff] %vm6564, %v6453
      %6583 = vst.msk [vmem:[%s197 + $0x90] sm:$0xff] %vm6564, %v6454
      %6584 = vst.msk [vmem:[%s197 + $0x98] sm:$0xff] %vm6564, %v6455
      %6585 = vst.msk [vmem:[%s197 + $0xa0] sm:$0xff] %vm6564, %v6456
      %6586 = vst.msk [vmem:[%s197 + $0xa8] sm:$0xff] %vm6564, %v6457
      %6587 = vst.msk [vmem:[%s197 + $0xb0] sm:$0xff] %vm6564, %v6458
      %6588 = vst.msk [vmem:[%s197 + $0xb8] sm:$0xff] %vm6564, %v6459
      %6589 = vst.msk [vmem:[%s197 + $0xc0] sm:$0xff] %vm6564, %v6460
      %6590 = vst.msk [vmem:[%s197 + $0xc8] sm:$0xff] %vm6564, %v6461
      %6591 = vst.msk [vmem:[%s197 + $0xd0] sm:$0xff] %vm6564, %v6462
      %6592 = vst.msk [vmem:[%s197 + $0xd8] sm:$0xff] %vm6564, %v6463
      %6593 = vst.msk [vmem:[%s197 + $0xe0] sm:$0xff] %vm6564, %v6464
      %6594 = vst.msk [vmem:[%s197 + $0xe8] sm:$0xff] %vm6564, %v6465
      %6595 = vst.msk [vmem:[%s197 + $0xf0] sm:$0xff] %vm6564, %v6466
      %6596 = vst.msk [vmem:[%s197 + $0xf8] sm:$0xff] %vm6564, %v6467
      %6597 = vst.msk [vmem:[%s197 + $0x100] sm:$0xff] %vm6564, %v6468
      %6598 = vst.msk [vmem:[%s197 + $0x108] sm:$0xff] %vm6564, %v6469
      %6599 = vst.msk [vmem:[%s197 + $0x110] sm:$0xff] %vm6564, %v6470
      %6600 = vst.msk [vmem:[%s197 + $0x118] sm:$0xff] %vm6564, %v6471
      %6601 = vst.msk [vmem:[%s197 + $0x120] sm:$0xff] %vm6564, %v6472
      %6602 = vst.msk [vmem:[%s197 + $0x128] sm:$0xff] %vm6564, %v6473
      %6603 = vst.msk [vmem:[%s197 + $0x130] sm:$0xff] %vm6564, %v6474
      %6604 = vst.msk [vmem:[%s197 + $0x138] sm:$0xff] %vm6564, %v6475
      %6605 = vst.msk [vmem:[%s197 + $0x140] sm:$0xff] %vm6564, %v6476
      %6606 = vst.msk [vmem:[%s197 + $0x148] sm:$0xff] %vm6564, %v6477
      %6607 = vst.msk [vmem:[%s197 + $0x150] sm:$0xff] %vm6564, %v6478
      %6608 = vst.msk [vmem:[%s197 + $0x158] sm:$0xff] %vm6564, %v6479
      %6609 = vst.msk [vmem:[%s197 + $0x160] sm:$0xff] %vm6564, %v6480
      %6610 = vst.msk [vmem:[%s197 + $0x168] sm:$0xff] %vm6564, %v6481
      %6611 = vst.msk [vmem:[%s197 + $0x170] sm:$0xff] %vm6564, %v6482
      %6612 = vst.msk [vmem:[%s197 + $0x178] sm:$0xff] %vm6564, %v6483
      %6613 = vst.msk [vmem:[%s197 + $0x180] sm:$0xff] %vm6564, %v6484
      %6614 = vst.msk [vmem:[%s197 + $0x188] sm:$0xff] %vm6564, %v6485
      %6615 = vst.msk [vmem:[%s197 + $0x190] sm:$0xff] %vm6564, %v6486
      %6616 = vst.msk [vmem:[%s197 + $0x198] sm:$0xff] %vm6564, %v6487
      %6617 = vst.msk [vmem:[%s197 + $0x1a0] sm:$0xff] %vm6564, %v6488
      %6618 = vst.msk [vmem:[%s197 + $0x1a8] sm:$0xff] %vm6564, %v6489
      %6619 = vst.msk [vmem:[%s197 + $0x1b0] sm:$0xff] %vm6564, %v6490
      %6620 = vst.msk [vmem:[%s197 + $0x1b8] sm:$0xff] %vm6564, %v6491
      %6621 = vst.msk [vmem:[%s197 + $0x1c0] sm:$0xff] %vm6564, %v6492
      %6622 = vst.msk [vmem:[%s197 + $0x1c8] sm:$0xff] %vm6564, %v6493
      %6623 = vst.msk [vmem:[%s197 + $0x1d0] sm:$0xff] %vm6564, %v6494
      %6624 = vst.msk [vmem:[%s197 + $0x1d8] sm:$0xff] %vm6564, %v6495
      %6625 = vst.msk [vmem:[%s197 + $0x1e0] sm:$0xff] %vm6564, %v6496
      %6626 = vst.msk [vmem:[%s197 + $0x1e8] sm:$0xff] %vm6564, %v6497
      %6627 = vst.msk [vmem:[%s197 + $0x1f0] sm:$0xff] %vm6564, %v6498
      %6628 = vst.msk [vmem:[%s197 + $0x1f8] sm:$0xff] %vm6564, %v6499
      %6629 = vst.msk [vmem:[%s197 + $0x200] sm:$0xff] %vm6564, %v6500
      %6630 = vst.msk [vmem:[%s197 + $0x208] sm:$0xff] %vm6564, %v6501
      %6631 = vst.msk [vmem:[%s197 + $0x210] sm:$0xff] %vm6564, %v6502
      %6632 = vst.msk [vmem:[%s197 + $0x218] sm:$0xff] %vm6564, %v6503
      %6633 = vst.msk [vmem:[%s197 + $0x220] sm:$0xff] %vm6564, %v6504
      %6634 = vst.msk [vmem:[%s197 + $0x228] sm:$0xff] %vm6564, %v6505
      %6635 = vst.msk [vmem:[%s197 + $0x230] sm:$0xff] %vm6564, %v6506
      %6636 = vst.msk [vmem:[%s197 + $0x238] sm:$0xff] %vm6564, %v6507
      %6637 = vst.msk [vmem:[%s197 + $0x240] sm:$0xff] %vm6564, %v6508
      %6638 = vst.msk [vmem:[%s197 + $0x248] sm:$0xff] %vm6564, %v6509
      %6639 = vst.msk [vmem:[%s197 + $0x250] sm:$0xff] %vm6564, %v6510
      %6640 = vst.msk [vmem:[%s197 + $0x258] sm:$0xff] %vm6564, %v6511
      %6641 = vst.msk [vmem:[%s197 + $0x260] sm:$0xff] %vm6564, %v6512
      %6642 = vst.msk [vmem:[%s197 + $0x268] sm:$0xff] %vm6564, %v6513
      %6643 = vst.msk [vmem:[%s197 + $0x270] sm:$0xff] %vm6564, %v6514
      %6644 = vst.msk [vmem:[%s197 + $0x278] sm:$0xff] %vm6564, %v6515
      %6645 = vst.msk [vmem:[%s197 + $0x280] sm:$0xff] %vm6564, %v6516
      %6646 = vst.msk [vmem:[%s197 + $0x288] sm:$0xff] %vm6564, %v6517
      %6647 = vst.msk [vmem:[%s197 + $0x290] sm:$0xff] %vm6564, %v6518
      %6648 = vst.msk [vmem:[%s197 + $0x298] sm:$0xff] %vm6564, %v6519
      %6649 = vst.msk [vmem:[%s197 + $0x2a0] sm:$0xff] %vm6564, %v6520
      %6650 = vst.msk [vmem:[%s197 + $0x2a8] sm:$0xff] %vm6564, %v6521
      %6651 = vst.msk [vmem:[%s197 + $0x2b0] sm:$0xff] %vm6564, %v6522
      %6652 = vst.msk [vmem:[%s197 + $0x2b8] sm:$0xff] %vm6564, %v6523
      %6653 = vst.msk [vmem:[%s197 + $0x2c0] sm:$0xff] %vm6564, %v6524
      %6654 = vst.msk [vmem:[%s197 + $0x2c8] sm:$0xff] %vm6564, %v6525
      %6655 = vst.msk [vmem:[%s197 + $0x2d0] sm:$0xff] %vm6564, %v6526
      %6656 = vst.msk [vmem:[%s197 + $0x2d8] sm:$0xff] %vm6564, %v6527
      %6657 = vst.msk [vmem:[%s197 + $0x2e0] sm:$0xff] %vm6564, %v6528
      %6658 = vst.msk [vmem:[%s197 + $0x2e8] sm:$0xff] %vm6564, %v6529
      %6659 = vst.msk [vmem:[%s197 + $0x2f0] sm:$0xff] %vm6564, %v6530
      %6660 = vst.msk [vmem:[%s197 + $0x2f8] sm:$0xff] %vm6564, %v6531
      %6661 = vst.msk [vmem:[%s197 + $0x300] sm:$0xff] %vm6564, %v6532
      %6662 = vst.msk [vmem:[%s197 + $0x308] sm:$0xff] %vm6564, %v6533
      %6663 = vst.msk [vmem:[%s197 + $0x310] sm:$0xff] %vm6564, %v6534
      %6664 = vst.msk [vmem:[%s197 + $0x318] sm:$0xff] %vm6564, %v6535
      %6665 = vst.msk [vmem:[%s197 + $0x320] sm:$0xff] %vm6564, %v6536
      %6666 = vst.msk [vmem:[%s197 + $0x328] sm:$0xff] %vm6564, %v6537
      %6667 = vst.msk [vmem:[%s197 + $0x330] sm:$0xff] %vm6564, %v6538
      %6668 = vst.msk [vmem:[%s197 + $0x338] sm:$0xff] %vm6564, %v6539
      %6669 = vst.msk [vmem:[%s197 + $0x340] sm:$0xff] %vm6564, %v6540
      %6670 = vst.msk [vmem:[%s197 + $0x348] sm:$0xff] %vm6564, %v6541
      %6671 = vst.msk [vmem:[%s197 + $0x350] sm:$0xff] %vm6564, %v6542
      %6672 = vst.msk [vmem:[%s197 + $0x358] sm:$0xff] %vm6564, %v6543
      %6673 = vst.msk [vmem:[%s197 + $0x360] sm:$0xff] %vm6564, %v6544
      %6674 = vst.msk [vmem:[%s197 + $0x368] sm:$0xff] %vm6564, %v6545
      %6675 = vst.msk [vmem:[%s197 + $0x370] sm:$0xff] %vm6564, %v6546
      %6676 = vst.msk [vmem:[%s197 + $0x378] sm:$0xff] %vm6564, %v6547
      %6677 = vst.msk [vmem:[%s197 + $0x380] sm:$0xff] %vm6564, %v6548
      %6678 = vst.msk [vmem:[%s197 + $0x388] sm:$0xff] %vm6564, %v6549
      %6679 = vst.msk [vmem:[%s197 + $0x390] sm:$0xff] %vm6564, %v6550
      %6680 = vst.msk [vmem:[%s197 + $0x398] sm:$0xff] %vm6564, %v6551
      %6681 = vst.msk [vmem:[%s197 + $0x3a0] sm:$0xff] %vm6564, %v6552
      %6682 = vst.msk [vmem:[%s197 + $0x3a8] sm:$0xff] %vm6564, %v6553
      %6683 = vst.msk [vmem:[%s197 + $0x3b0] sm:$0xff] %vm6564, %v6554
      %6684 = vst.msk [vmem:[%s197 + $0x3b8] sm:$0xff] %vm6564, %v6555
      %6685 = vst.msk [vmem:[%s197 + $0x3c0] sm:$0xff] %vm6564, %v6556
      %6686 = vst.msk [vmem:[%s197 + $0x3c8] sm:$0xff] %vm6564, %v6557
      %6687 = vst.msk [vmem:[%s197 + $0x3d0] sm:$0xff] %vm6564, %v6558
      %6688 = vst.msk [vmem:[%s197 + $0x3d8] sm:$0xff] %vm6564, %v6559
      %6689 = vst.msk [vmem:[%s197 + $0x3e0] sm:$0xff] %vm6564, %v6560
      %6690 = vst.msk [vmem:[%s197 + $0x3e8] sm:$0xff] %vm6564, %v6561
      %6691 = vst.msk [vmem:[%s197 + $0x3f0] sm:$0xff] %vm6564, %v6562
      %6692 = vst.msk [vmem:[%s197 + $0x3f8] sm:$0xff] %vm6564, %v6563
      %p6693 = scmp.lt.s32.totalorder %s15, 1
      %s6694 = scalar_select %p6693, %s15, 1
      %s6695 = smul.addr %s6694, 128
      %s6696 = smul.addr %s6695, 8
      %s6697 = scalar_lea.vmem %s4, %s6696
      // Predicated region
      $region37: #{metaformer_block_forward.4} parent=35 // pred_check
        %p6698 = pneg %p122
      $region38: #{metaformer_block_forward.4} parent=35 // pred_check_branch
        %6700 = sbr.rel (%p6698) target = $region40
      $region39: #{metaformer_block_forward.4} parent=35 // pred_region
        _
      $region40: #{metaformer_block_forward.4} parent=35 // pred_fallthru
        _
    $region36: #{metaformer_block_forward.4} parent=5 // pred_fallthru
      _
    %p6701 = scmp.le.s32.totalorder 2, %s10
    // Predicated region
    $region41: #{metaformer_block_forward.4} parent=5 // pred_check
      %p6702 = pneg %p6701
    $region42: #{metaformer_block_forward.4} parent=5 // pred_check_branch
      %6704 = sbr.rel (%p6702) target = $region44
    $region43: #{metaformer_block_forward.4} parent=5 // pred_region
      %s6705 = ssub.s32 %s10, 2
      // Predicated region
      $region45: #{metaformer_block_forward.4} parent=43 // pred_check
        %p6706 = pneg %p128
      $region46: #{metaformer_block_forward.4} parent=43 // pred_check_branch
        %6708 = sbr.rel (%p6706) target = $region48
      $region47: #{metaformer_block_forward.4} parent=43 // pred_region
        %p6709 = scmp.lt.s32.totalorder %s16, 1
        %s6710 = scalar_select %p6709, %s16, 1
        %s6711 = smul.addr %s6710, 128
        %s6712 = smul.addr %s6711, 8
        %s6713 = scalar_lea.vmem %s4, %s6712
      $region48: #{metaformer_block_forward.4} parent=43 // pred_fallthru
        _
    $region44: #{metaformer_block_forward.4} parent=5 // pred_fallthru
      _
  $region6: #{metaformer_block_forward.4} parent=0 // loop_footer
    %s14 = sadd.s32 1, %s10
  $region7: #{metaformer_block_forward.4} parent=0 // loop_footer_branch
    %9 = sbr.rel target = $region3
  $region8: #{metaformer_block_forward.4} parent=0 // loop_exit
    _

</llo_original>
